<compile_context>
chip_gen: v7x
topology: tpu7x:2x2x1
jax: 0.10.0
libtpu: 0.0.40
codegen_flags: <defaults>
</compile_context>

<pallas_src>
import functools
import math

import jax
import jax.numpy as jnp
from jax.experimental import pallas as pl
from jax.experimental.pallas import tpu as pltpu

_INV_SQRT_2 = 1.0 / math.sqrt(2.0)


def _erf(z):
    # Abramowitz & Stegun 7.1.26, |abs error| <= 1.5e-7 (effectively exact at bf16/f32
    # matmul precision).  Uses only mul/add/div/exp/abs/where, all supported by Mosaic.
    a1, a2, a3, a4, a5 = (0.254829592, -0.284496736, 1.421413741,
                          -1.453152027, 1.061405429)
    p = 0.3275911
    sgn = jnp.where(z < 0.0, -1.0, 1.0)
    za = jnp.abs(z)
    t = 1.0 / (1.0 + p * za)
    poly = ((((a5 * t + a4) * t + a3) * t + a2) * t + a1) * t
    return sgn * (1.0 - poly * jnp.exp(-za * za))


def _gelu_exact(x):
    return 0.5 * x * (1.0 + _erf(x * _INV_SQRT_2))


def _vit_block_kernel(num_heads, head_dim, tn, compute_dtype,
                      x_ref,
                      wq_ref, bq_ref, wk_ref, bk_ref, wv_ref, bv_ref,
                      wo_ref, bo_ref,
                      ln1w_ref, ln1b_ref,
                      w1_ref, b1_ref, w2_ref, b2_ref,
                      ln2w_ref, ln2b_ref,
                      o_ref,
                      k_sc, v_sc, st_sc):
    _, N, E = x_ref.shape
    H, D = num_heads, head_dim
    t = pl.program_id(1)
    cdt = compute_dtype
    eps = 1e-5

    def layer_norm(v, w, b):
        mu = jnp.mean(v, axis=-1, keepdims=True)
        var = jnp.mean((v - mu) ** 2, axis=-1, keepdims=True)
        return (v - mu) * jax.lax.rsqrt(var + eps) * w + b

    # ---- K/V projection for the full sequence, once per batch element (tile 0) ----
    # Correctness relies on the token-tile axis being "arbitrary" (sequential) and inner
    # to the batch axis so tile 0 runs first for each batch element on its core.
    @pl.when(t == 0)
    def _():
        x_all = x_ref[0]                                                   # (N, E) bf16
        # Lane-dense (N, E) @ (E, E) projections -> full MXU width.
        k = jnp.dot(x_all, wk_ref[...],
                    preferred_element_type=jnp.float32) + bk_ref[...]      # (N, E) f32
        st_sc[...] = k
        for h in range(H):
            # K stored pre-transposed (D, N): one transpose per head per batch element,
            # so the per-tile score matmul needs no K relayout.
            k_sc[h] = st_sc[:, h * D:(h + 1) * D].T.astype(cdt)
        v = jnp.dot(x_all, wv_ref[...],
                    preferred_element_type=jnp.float32) + bv_ref[...]      # (N, E) f32
        st_sc[...] = v
        for h in range(H):
            v_sc[h] = st_sc[:, h * D:(h + 1) * D].astype(cdt)              # (N, D)

    # ---- current token tile ----
    start = pl.multiple_of(t * tn, tn)
    x_t = x_ref[0, pl.ds(start, tn), :]                                    # (TN, E) bf16
    x_f = x_t.astype(jnp.float32)

    # Q projection (1/sqrt(D) pre-folded into wq/bq), lane-dense (TN, E) @ (E, E).
    q = jnp.dot(x_t, wq_ref[...],
                preferred_element_type=jnp.float32) + bq_ref[...]          # (TN, E) f32
    st_sc[0:tn, :] = q
    q_h = jnp.stack([st_sc[0:tn, h * D:(h + 1) * D] for h in range(H)],
                    axis=0).astype(cdt)                                    # (H, TN, D)

    # ---- attention, batched over heads ----
    s = jnp.einsum("hnd,hdm->hnm", q_h, k_sc[...],
                   preferred_element_type=jnp.float32)                     # (H, TN, N)
    s = s - jnp.max(s, axis=-1, keepdims=True)
    p = jnp.exp(s)
    # approx reciprocal: ~2^-12 relative error on attention weights (documented; fine
    # under the test tolerance).
    p = p * pl.reciprocal(jnp.sum(p, axis=-1, keepdims=True), approx=True)
    ctx = jnp.einsum("hnm,hmd->hnd", p.astype(cdt), v_sc[...],
                     preferred_element_type=jnp.float32)                   # (H, TN, D)

    # Merge heads into a (TN, E) slab, then a single K=E out-projection: the head
    # reduction happens inside the MXU f32 accumulator.
    for h in range(H):
        st_sc[0:tn, h * D:(h + 1) * D] = ctx[h]
    attn = jnp.dot(st_sc[0:tn, :].astype(cdt), wo_ref[...],
                   preferred_element_type=jnp.float32) + bo_ref[...]       # (TN, E)

    # ---- residual + LayerNorm 1 ----
    y = layer_norm(x_f + attn, ln1w_ref[...], ln1b_ref[...])

    # ---- MLP (Linear -> exact erf-GELU -> Linear) + residual, LayerNorm 2 ----
    h1 = jnp.dot(y.astype(cdt), w1_ref[...],
                 preferred_element_type=jnp.float32) + b1_ref[...]
    h1 = _gelu_exact(h1)
    h2 = jnp.dot(h1.astype(cdt), w2_ref[...],
                 preferred_element_type=jnp.float32) + b2_ref[...]
    out = layer_norm(y + h2, ln2w_ref[...], ln2b_ref[...])

    o_ref[0] = out.astype(o_ref.dtype)


def vit_block_forward(x_nchw, params, num_heads, *, tn=None,
                      compute_dtype=jnp.bfloat16):
    B, C, Himg, Wimg = x_nchw.shape
    E, N = C, Himg * Wimg
    assert E % num_heads == 0
    H, D = num_heads, E // num_heads
    if tn is None:
        tn = N          # v5e/v6e: prefer tn = N (one grid step per batch element)
    assert N % tn == 0 and (tn == N or tn % 8 == 0)
    n_tiles = N // tn
    cdt = compute_dtype

    # NCHW -> (B, tokens, E), passed in the compute dtype (halves input DMA / VMEM).
    x_tok = jnp.transpose(x_nchw.reshape(B, C, N), (0, 2, 1)).astype(cdt)

    # Host-side weight prep: transpose to [in_features, out_features], fold the
    # 1/sqrt(head_dim) attention scale into wq/bq, cast MXU operands to the compute dtype.
    wqkv, bqkv = params["wqkv"], params["bqkv"]
    scale = 1.0 / math.sqrt(D)
    f32 = jnp.float32

    wq = (wqkv[:E].T * scale).astype(cdt)                  # (E, E)
    wk = wqkv[E:2 * E].T.astype(cdt)                       # (E, E)
    wv = wqkv[2 * E:].T.astype(cdt)                        # (E, E)
    bq = (bqkv[:, :E] * scale).astype(f32)                 # (1, E)
    bk = bqkv[:, E:2 * E].astype(f32)
    bv = bqkv[:, 2 * E:].astype(f32)
    wo = params["wo"].T.astype(cdt)                        # (E, E)
    w1 = params["w1"].T.astype(cdt)                        # (E, 4E)
    w2 = params["w2"].T.astype(cdt)                        # (4E, E)

    weights = (wq, bq, wk, bk, wv, bv,
               wo, params["bo"].astype(f32),
               params["ln1_w"].astype(f32), params["ln1_b"].astype(f32),
               w1, params["b1"].astype(f32),
               w2, params["b2"].astype(f32),
               params["ln2_w"].astype(f32), params["ln2_b"].astype(f32))

    kernel = functools.partial(_vit_block_kernel, H, D, tn, cdt)

    # Generation-aware VMEM budget: ~96 MiB on v5e/v6e (128 MiB physical), ~48 MiB on v7x.
    try:
        vmem_cap = int(pltpu.get_tpu_info().vmem_capacity_bytes)
    except Exception:  # pragma: no cover - conservative fallback
        vmem_cap = 64 * 1024 * 1024
    vmem_limit = min(100 * 1024 * 1024, (vmem_cap * 3) // 4)

    itemsize = jnp.dtype(cdt).itemsize
    flops = int(B * (24 * N * E * E + 4 * N * N * E))
    transcendentals = int(B * (H * N * N + 4 * N * E))
    bytes_accessed = int(B * N * E * (itemsize + 4)
                         + 12 * E * E * itemsize + 32 * E * 4)

    def build(weight_pipeline_mode):
        def const_spec(a):
            kw = {} if weight_pipeline_mode is None else dict(
                pipeline_mode=weight_pipeline_mode)
            # Constant index_map: each weight is DMA'd into VMEM once per core.
            return pl.BlockSpec(a.shape, lambda b, t: (0,) * a.ndim, **kw)

        return pl.pallas_call(
            kernel,
            out_shape=jax.ShapeDtypeStruct((B, N, E), jnp.float32),
            grid_spec=pltpu.PrefetchScalarGridSpec(
                num_scalar_prefetch=0,
                grid=(B, n_tiles),
                in_specs=[pl.BlockSpec((1, N, E), lambda b, t: (b, 0, 0))]
                         + [const_spec(a) for a in weights],
                out_specs=pl.BlockSpec((1, tn, E), lambda b, t: (b, t, 0)),
                scratch_shapes=[pltpu.VMEM((H, D, N), cdt),       # K, pre-transposed
                                pltpu.VMEM((H, N, D), cdt),       # V
                                pltpu.VMEM((N, E), jnp.float32)], # head split/merge staging
            ),
            compiler_params=pltpu.CompilerParams(
                dimension_semantics=("parallel", "arbitrary"),
                vmem_limit_bytes=vmem_limit),
            cost_estimate=pl.CostEstimate(flops=flops,
                                          transcendentals=transcendentals,
                                          bytes_accessed=bytes_accessed),
        )

    try:
        # Single-buffer the constant (never re-indexed) weights to halve their VMEM.
        out_tok = build(pl.Buffered(1))(x_tok, *weights)
    except Exception:
        # Fallback if single-buffering of constant blocks is not supported.
        out_tok = build(None)(x_tok, *weights)

    # (B, tokens, E) -> NCHW
    return jnp.transpose(out_tok, (0, 2, 1)).reshape(B, C, Himg, Wimg)


def reference_forward(x_nchw, params, num_heads):
    """Pure-JAX f32 reference mirroring the PyTorch module."""
    B, C, Himg, Wimg = x_nchw.shape
    E, N = C, Himg * Wimg
    head_dim = E // num_heads
    eps = 1e-5
    x = jnp.transpose(x_nchw.reshape(B, C, N), (0, 2, 1)).astype(jnp.float32)

    qkv = x @ params["wqkv"].T + params["bqkv"]
    q, k, v = qkv[..., :E], qkv[..., E:2 * E], qkv[..., 2 * E:]

    def split(t):
        return jnp.transpose(t.reshape(B, N, num_heads, head_dim), (0, 2, 1, 3))

    qh, kh, vh = split(q), split(k), split(v)
    s = jnp.einsum("bhnd,bhmd->bhnm", qh, kh) / math.sqrt(head_dim)
    p = jax.nn.softmax(s, axis=-1)
    attn = jnp.einsum("bhnm,bhmd->bhnd", p, vh)
    attn = jnp.transpose(attn, (0, 2, 1, 3)).reshape(B, N, E)
    attn = attn @ params["wo"].T + params["bo"]

    def ln(t, w, b):
        mu = jnp.mean(t, axis=-1, keepdims=True)
        var = jnp.mean((t - mu) ** 2, axis=-1, keepdims=True)
        return (t - mu) * jax.lax.rsqrt(var + eps) * w + b

    x = ln(x + attn, params["ln1_w"], params["ln1_b"])
    h1 = x @ params["w1"].T + params["b1"]
    h1 = 0.5 * h1 * (1.0 + jax.lax.erf(h1 / math.sqrt(2.0)))
    x = ln(x + (h1 @ params["w2"].T + params["b2"]), params["ln2_w"], params["ln2_b"])
    return jnp.transpose(x, (0, 2, 1)).reshape(B, C, Himg, Wimg)


def init_params(key, embed_dim):
    E = embed_dim
    ks = jax.random.split(key, 8)
    s = 0.02
    return {
        "wqkv": jax.random.normal(ks[0], (3 * E, E), jnp.float32) * s,
        "bqkv": jax.random.normal(ks[1], (1, 3 * E), jnp.float32) * s,
        "wo":   jax.random.normal(ks[2], (E, E), jnp.float32) * s,
        "bo":   jax.random.normal(ks[3], (1, E), jnp.float32) * s,
        "ln1_w": jnp.ones((1, E), jnp.float32),
        "ln1_b": jnp.zeros((1, E), jnp.float32),
        "ln2_w": jnp.ones((1, E), jnp.float32),
        "ln2_b": jnp.zeros((1, E), jnp.float32),
        "w1":   jax.random.normal(ks[4], (4 * E, E), jnp.float32) * s,
        "b1":   jax.random.normal(ks[5], (1, 4 * E), jnp.float32) * s,
        "w2":   jax.random.normal(ks[6], (E, 4 * E), jnp.float32) * s,
        "b2":   jax.random.normal(ks[7], (1, E), jnp.float32) * s,
    }


if __name__ == "__main__":
    B, embed_dim, num_heads, Himg, Wimg = 2, 32, 4, 8, 8
    key = jax.random.PRNGKey(0)
    k_x, k_p = jax.random.split(key)
    x = jax.random.normal(k_x, (B, embed_dim, Himg, Wimg), jnp.float32)
    params = init_params(k_p, embed_dim)

    # grid = (2 batch elements [parallel], 2 token tiles of 32 [arbitrary/sequential])
    out = vit_block_forward(x, params, num_heads, tn=32)
    out = jax.block_until_ready(out)

    ref = jax.block_until_ready(reference_forward(x, params, num_heads))
    assert out.shape == (B, embed_dim, Himg, Wimg)
    err = float(jnp.max(jnp.abs(out - ref)))
    # bf16 residual input + bf16 matmul operands (f32 accumulation) + approx softmax
    # reciprocal vs. the pure-f32 reference -> relaxed tolerance.
    assert err < 3e-2, err
    print("KERNEL_OK")
</pallas_src>

<mosaic_0001>
module attributes {stable_mosaic.version = 11 : i64} {
  func.func @_vit_block_kernel(%arg0: i32, %arg1: i32, %arg2: memref<1x64x32xbf16, #tpu.memory_space<vmem>>, %arg3: memref<32x32xbf16, #tpu.memory_space<vmem>>, %arg4: memref<1x32xf32, #tpu.memory_space<vmem>>, %arg5: memref<32x32xbf16, #tpu.memory_space<vmem>>, %arg6: memref<1x32xf32, #tpu.memory_space<vmem>>, %arg7: memref<32x32xbf16, #tpu.memory_space<vmem>>, %arg8: memref<1x32xf32, #tpu.memory_space<vmem>>, %arg9: memref<32x32xbf16, #tpu.memory_space<vmem>>, %arg10: memref<1x32xf32, #tpu.memory_space<vmem>>, %arg11: memref<1x32xf32, #tpu.memory_space<vmem>>, %arg12: memref<1x32xf32, #tpu.memory_space<vmem>>, %arg13: memref<32x128xbf16, #tpu.memory_space<vmem>>, %arg14: memref<1x128xf32, #tpu.memory_space<vmem>>, %arg15: memref<128x32xbf16, #tpu.memory_space<vmem>>, %arg16: memref<1x32xf32, #tpu.memory_space<vmem>>, %arg17: memref<1x32xf32, #tpu.memory_space<vmem>>, %arg18: memref<1x32xf32, #tpu.memory_space<vmem>>, %arg19: memref<1x32x32xf32, #tpu.memory_space<vmem>>, %arg20: memref<4x8x64xbf16, #tpu.memory_space<vmem>>, %arg21: memref<4x64x8xbf16, #tpu.memory_space<vmem>>, %arg22: memref<64x32xf32, #tpu.memory_space<vmem>>) attributes {dimension_semantics = [#tpu.dimension_semantics<parallel>, #tpu.dimension_semantics<arbitrary>], iteration_bounds = array<i64: 2, 2>, scalar_prefetch = 0 : i64, scratch_operands = 3 : i64, tpu.core_type = #tpu.core_type<tc>, window_params = [{transform_indices = @transform_0, window_bounds = array<i64: 1, 64, 32>}, {pipeline_mode = #tpu.pipeline_mode<synchronous>, transform_indices = @transform_1, window_bounds = array<i64: 32, 32>}, {pipeline_mode = #tpu.pipeline_mode<synchronous>, transform_indices = @transform_2, window_bounds = array<i64: 1, 32>}, {pipeline_mode = #tpu.pipeline_mode<synchronous>, transform_indices = @transform_3, window_bounds = array<i64: 32, 32>}, {pipeline_mode = #tpu.pipeline_mode<synchronous>, transform_indices = @transform_4, window_bounds = array<i64: 1, 32>}, {pipeline_mode = #tpu.pipeline_mode<synchronous>, transform_indices = @transform_5, window_bounds = array<i64: 32, 32>}, {pipeline_mode = #tpu.pipeline_mode<synchronous>, transform_indices = @transform_6, window_bounds = array<i64: 1, 32>}, {pipeline_mode = #tpu.pipeline_mode<synchronous>, transform_indices = @transform_7, window_bounds = array<i64: 32, 32>}, {pipeline_mode = #tpu.pipeline_mode<synchronous>, transform_indices = @transform_8, window_bounds = array<i64: 1, 32>}, {pipeline_mode = #tpu.pipeline_mode<synchronous>, transform_indices = @transform_9, window_bounds = array<i64: 1, 32>}, {pipeline_mode = #tpu.pipeline_mode<synchronous>, transform_indices = @transform_10, window_bounds = array<i64: 1, 32>}, {pipeline_mode = #tpu.pipeline_mode<synchronous>, transform_indices = @transform_11, window_bounds = array<i64: 32, 128>}, {pipeline_mode = #tpu.pipeline_mode<synchronous>, transform_indices = @transform_12, window_bounds = array<i64: 1, 128>}, {pipeline_mode = #tpu.pipeline_mode<synchronous>, transform_indices = @transform_13, window_bounds = array<i64: 128, 32>}, {pipeline_mode = #tpu.pipeline_mode<synchronous>, transform_indices = @transform_14, window_bounds = array<i64: 1, 32>}, {pipeline_mode = #tpu.pipeline_mode<synchronous>, transform_indices = @transform_15, window_bounds = array<i64: 1, 32>}, {pipeline_mode = #tpu.pipeline_mode<synchronous>, transform_indices = @transform_16, window_bounds = array<i64: 1, 32>}, {transform_indices = @transform_17, window_bounds = array<i64: 1, 32, 32>}]} {
    %c0_i32 = arith.constant 0 : i32
    %0 = arith.cmpi eq, %arg1, %c0_i32 : i32
    %1 = arith.extui %0 : i1 to i32
    %c0_i32_0 = arith.constant 0 : i32
    %2 = arith.cmpi ne, %1, %c0_i32_0 : i32
    scf.if %2 {
      %c0_85 = arith.constant 0 : index
      %c0_86 = arith.constant 0 : index
      %c0_87 = arith.constant 0 : index
      %165 = vector.load %arg2[%c0_85, %c0_86, %c0_87] : memref<1x64x32xbf16, #tpu.memory_space<vmem>>, vector<1x64x32xbf16>
      %166 = vector.shape_cast %165 : vector<1x64x32xbf16> to vector<64x32xbf16>
      %c0_88 = arith.constant 0 : index
      %c0_89 = arith.constant 0 : index
      %167 = vector.load %arg5[%c0_88, %c0_89] : memref<32x32xbf16, #tpu.memory_space<vmem>>, vector<32x32xbf16>
      %cst_90 = arith.constant dense<0.000000e+00> : vector<64x32xf32>
      %168 = tpu.matmul %166, %167, %cst_90 {dimension_numbers = #tpu.dot_dimension_numbers<[1], [0], [0], [1], [0, 0, 1, 1], [], []>} : vector<64x32xbf16>, vector<32x32xbf16>, vector<64x32xf32> -> vector<64x32xf32>
      %c0_91 = arith.constant 0 : index
      %c0_92 = arith.constant 0 : index
      %169 = vector.load %arg6[%c0_91, %c0_92] : memref<1x32xf32, #tpu.memory_space<vmem>>, vector<1x32xf32>
      %170 = vector.broadcast %169 : vector<1x32xf32> to vector<64x32xf32>
      %171 = arith.addf %168, %170 : vector<64x32xf32>
      %c0_93 = arith.constant 0 : index
      %c0_94 = arith.constant 0 : index
      %172 = vector.load %arg22[%c0_93, %c0_94] : memref<64x32xf32, #tpu.memory_space<vmem>>, vector<64x32xf32>
      tpu.vector_store %arg22[%c0_93, %c0_94], %171 {strides = array<i32>} : memref<64x32xf32, #tpu.memory_space<vmem>>, vector<64x32xf32>,
      %c0_95 = arith.constant 0 : index
      %c0_96 = arith.constant 0 : index
      %173 = vector.load %arg22[%c0_95, %c0_96] : memref<64x32xf32, #tpu.memory_space<vmem>>, vector<64x8xf32>
      %174 = tpu.transpose %173, [1, 0] : vector<64x8xf32> -> vector<8x64xf32>
      %175 = arith.truncf %174 : vector<8x64xf32> to vector<8x64xbf16>
      %c0_97 = arith.constant 0 : index
      %c0_98 = arith.constant 0 : index
      %c0_99 = arith.constant 0 : index
      %176 = vector.load %arg20[%c0_97, %c0_98, %c0_99] : memref<4x8x64xbf16, #tpu.memory_space<vmem>>, vector<1x8x64xbf16>
      %177 = vector.shape_cast %176 : vector<1x8x64xbf16> to vector<8x64xbf16>
      %178 = vector.shape_cast %175 : vector<8x64xbf16> to vector<1x8x64xbf16>
      tpu.vector_store %arg20[%c0_97, %c0_98, %c0_99], %178 {strides = array<i32>} : memref<4x8x64xbf16, #tpu.memory_space<vmem>>, vector<1x8x64xbf16>,
      %c0_100 = arith.constant 0 : index
      %c8_101 = arith.constant 8 : index
      %179 = vector.load %arg22[%c0_100, %c8_101] : memref<64x32xf32, #tpu.memory_space<vmem>>, vector<64x8xf32>
      %180 = tpu.transpose %179, [1, 0] : vector<64x8xf32> -> vector<8x64xf32>
      %181 = arith.truncf %180 : vector<8x64xf32> to vector<8x64xbf16>
      %c1 = arith.constant 1 : index
      %c0_102 = arith.constant 0 : index
      %c0_103 = arith.constant 0 : index
      %182 = vector.load %arg20[%c1, %c0_102, %c0_103] : memref<4x8x64xbf16, #tpu.memory_space<vmem>>, vector<1x8x64xbf16>
      %183 = vector.shape_cast %182 : vector<1x8x64xbf16> to vector<8x64xbf16>
      %184 = vector.shape_cast %181 : vector<8x64xbf16> to vector<1x8x64xbf16>
      tpu.vector_store %arg20[%c1, %c0_102, %c0_103], %184 {strides = array<i32>} : memref<4x8x64xbf16, #tpu.memory_space<vmem>>, vector<1x8x64xbf16>,
      %c0_104 = arith.constant 0 : index
      %c16_105 = arith.constant 16 : index
      %185 = vector.load %arg22[%c0_104, %c16_105] : memref<64x32xf32, #tpu.memory_space<vmem>>, vector<64x8xf32>
      %186 = tpu.transpose %185, [1, 0] : vector<64x8xf32> -> vector<8x64xf32>
      %187 = arith.truncf %186 : vector<8x64xf32> to vector<8x64xbf16>
      %c2 = arith.constant 2 : index
      %c0_106 = arith.constant 0 : index
      %c0_107 = arith.constant 0 : index
      %188 = vector.load %arg20[%c2, %c0_106, %c0_107] : memref<4x8x64xbf16, #tpu.memory_space<vmem>>, vector<1x8x64xbf16>
      %189 = vector.shape_cast %188 : vector<1x8x64xbf16> to vector<8x64xbf16>
      %190 = vector.shape_cast %187 : vector<8x64xbf16> to vector<1x8x64xbf16>
      tpu.vector_store %arg20[%c2, %c0_106, %c0_107], %190 {strides = array<i32>} : memref<4x8x64xbf16, #tpu.memory_space<vmem>>, vector<1x8x64xbf16>,
      %c0_108 = arith.constant 0 : index
      %c24_109 = arith.constant 24 : index
      %191 = vector.load %arg22[%c0_108, %c24_109] : memref<64x32xf32, #tpu.memory_space<vmem>>, vector<64x8xf32>
      %192 = tpu.transpose %191, [1, 0] : vector<64x8xf32> -> vector<8x64xf32>
      %193 = arith.truncf %192 : vector<8x64xf32> to vector<8x64xbf16>
      %c3 = arith.constant 3 : index
      %c0_110 = arith.constant 0 : index
      %c0_111 = arith.constant 0 : index
      %194 = vector.load %arg20[%c3, %c0_110, %c0_111] : memref<4x8x64xbf16, #tpu.memory_space<vmem>>, vector<1x8x64xbf16>
      %195 = vector.shape_cast %194 : vector<1x8x64xbf16> to vector<8x64xbf16>
      %196 = vector.shape_cast %193 : vector<8x64xbf16> to vector<1x8x64xbf16>
      tpu.vector_store %arg20[%c3, %c0_110, %c0_111], %196 {strides = array<i32>} : memref<4x8x64xbf16, #tpu.memory_space<vmem>>, vector<1x8x64xbf16>,
      %c0_112 = arith.constant 0 : index
      %c0_113 = arith.constant 0 : index
      %197 = vector.load %arg7[%c0_112, %c0_113] : memref<32x32xbf16, #tpu.memory_space<vmem>>, vector<32x32xbf16>
      %cst_114 = arith.constant dense<0.000000e+00> : vector<64x32xf32>
      %198 = tpu.matmul %166, %197, %cst_114 {dimension_numbers = #tpu.dot_dimension_numbers<[1], [0], [0], [1], [0, 0, 1, 1], [], []>} : vector<64x32xbf16>, vector<32x32xbf16>, vector<64x32xf32> -> vector<64x32xf32>
      %c0_115 = arith.constant 0 : index
      %c0_116 = arith.constant 0 : index
      %199 = vector.load %arg8[%c0_115, %c0_116] : memref<1x32xf32, #tpu.memory_space<vmem>>, vector<1x32xf32>
      %200 = vector.broadcast %199 : vector<1x32xf32> to vector<64x32xf32>
      %201 = arith.addf %198, %200 : vector<64x32xf32>
      %c0_117 = arith.constant 0 : index
      %c0_118 = arith.constant 0 : index
      %202 = vector.load %arg22[%c0_117, %c0_118] : memref<64x32xf32, #tpu.memory_space<vmem>>, vector<64x32xf32>
      tpu.vector_store %arg22[%c0_117, %c0_118], %201 {strides = array<i32>} : memref<64x32xf32, #tpu.memory_space<vmem>>, vector<64x32xf32>,
      %c0_119 = arith.constant 0 : index
      %c0_120 = arith.constant 0 : index
      %203 = vector.load %arg22[%c0_119, %c0_120] : memref<64x32xf32, #tpu.memory_space<vmem>>, vector<64x8xf32>
      %204 = arith.truncf %203 : vector<64x8xf32> to vector<64x8xbf16>
      %c0_121 = arith.constant 0 : index
      %c0_122 = arith.constant 0 : index
      %c0_123 = arith.constant 0 : index
      %205 = vector.load %arg21[%c0_121, %c0_122, %c0_123] : memref<4x64x8xbf16, #tpu.memory_space<vmem>>, vector<1x64x8xbf16>
      %206 = vector.shape_cast %205 : vector<1x64x8xbf16> to vector<64x8xbf16>
      %207 = vector.shape_cast %204 : vector<64x8xbf16> to vector<1x64x8xbf16>
      tpu.vector_store %arg21[%c0_121, %c0_122, %c0_123], %207 {strides = array<i32>} : memref<4x64x8xbf16, #tpu.memory_space<vmem>>, vector<1x64x8xbf16>,
      %c0_124 = arith.constant 0 : index
      %c8_125 = arith.constant 8 : index
      %208 = vector.load %arg22[%c0_124, %c8_125] : memref<64x32xf32, #tpu.memory_space<vmem>>, vector<64x8xf32>
      %209 = arith.truncf %208 : vector<64x8xf32> to vector<64x8xbf16>
      %c1_126 = arith.constant 1 : index
      %c0_127 = arith.constant 0 : index
      %c0_128 = arith.constant 0 : index
      %210 = vector.load %arg21[%c1_126, %c0_127, %c0_128] : memref<4x64x8xbf16, #tpu.memory_space<vmem>>, vector<1x64x8xbf16>
      %211 = vector.shape_cast %210 : vector<1x64x8xbf16> to vector<64x8xbf16>
      %212 = vector.shape_cast %209 : vector<64x8xbf16> to vector<1x64x8xbf16>
      tpu.vector_store %arg21[%c1_126, %c0_127, %c0_128], %212 {strides = array<i32>} : memref<4x64x8xbf16, #tpu.memory_space<vmem>>, vector<1x64x8xbf16>,
      %c0_129 = arith.constant 0 : index
      %c16_130 = arith.constant 16 : index
      %213 = vector.load %arg22[%c0_129, %c16_130] : memref<64x32xf32, #tpu.memory_space<vmem>>, vector<64x8xf32>
      %214 = arith.truncf %213 : vector<64x8xf32> to vector<64x8xbf16>
      %c2_131 = arith.constant 2 : index
      %c0_132 = arith.constant 0 : index
      %c0_133 = arith.constant 0 : index
      %215 = vector.load %arg21[%c2_131, %c0_132, %c0_133] : memref<4x64x8xbf16, #tpu.memory_space<vmem>>, vector<1x64x8xbf16>
      %216 = vector.shape_cast %215 : vector<1x64x8xbf16> to vector<64x8xbf16>
      %217 = vector.shape_cast %214 : vector<64x8xbf16> to vector<1x64x8xbf16>
      tpu.vector_store %arg21[%c2_131, %c0_132, %c0_133], %217 {strides = array<i32>} : memref<4x64x8xbf16, #tpu.memory_space<vmem>>, vector<1x64x8xbf16>,
      %c0_134 = arith.constant 0 : index
      %c24_135 = arith.constant 24 : index
      %218 = vector.load %arg22[%c0_134, %c24_135] : memref<64x32xf32, #tpu.memory_space<vmem>>, vector<64x8xf32>
      %219 = arith.truncf %218 : vector<64x8xf32> to vector<64x8xbf16>
      %c3_136 = arith.constant 3 : index
      %c0_137 = arith.constant 0 : index
      %c0_138 = arith.constant 0 : index
      %220 = vector.load %arg21[%c3_136, %c0_137, %c0_138] : memref<4x64x8xbf16, #tpu.memory_space<vmem>>, vector<1x64x8xbf16>
      %221 = vector.shape_cast %220 : vector<1x64x8xbf16> to vector<64x8xbf16>
      %222 = vector.shape_cast %219 : vector<64x8xbf16> to vector<1x64x8xbf16>
      tpu.vector_store %arg21[%c3_136, %c0_137, %c0_138], %222 {strides = array<i32>} : memref<4x64x8xbf16, #tpu.memory_space<vmem>>, vector<1x64x8xbf16>,
    } else {
    }
    %c32_i32 = arith.constant 32 : i32
    %3 = arith.muli %arg1, %c32_i32 : i32
    %4 = tpu.assume_multiple %3, 32 : i32
    %c0 = arith.constant 0 : index
    %5 = arith.index_cast %4 : i32 to index
    %c0_1 = arith.constant 0 : index
    %6 = vector.load %arg2[%c0, %5, %c0_1] : memref<1x64x32xbf16, #tpu.memory_space<vmem>>, vector<1x32x32xbf16>
    %7 = vector.shape_cast %6 : vector<1x32x32xbf16> to vector<32x32xbf16>
    %8 = arith.extf %7 : vector<32x32xbf16> to vector<32x32xf32>
    %c0_2 = arith.constant 0 : index
    %c0_3 = arith.constant 0 : index
    %9 = vector.load %arg3[%c0_2, %c0_3] : memref<32x32xbf16, #tpu.memory_space<vmem>>, vector<32x32xbf16>
    %cst = arith.constant dense<0.000000e+00> : vector<32x32xf32>
    %10 = tpu.matmul %7, %9, %cst {dimension_numbers = #tpu.dot_dimension_numbers<[1], [0], [0], [1], [0, 0, 1, 1], [], []>} : vector<32x32xbf16>, vector<32x32xbf16>, vector<32x32xf32> -> vector<32x32xf32>
    %c0_4 = arith.constant 0 : index
    %c0_5 = arith.constant 0 : index
    %11 = vector.load %arg4[%c0_4, %c0_5] : memref<1x32xf32, #tpu.memory_space<vmem>>, vector<1x32xf32>
    %12 = vector.broadcast %11 : vector<1x32xf32> to vector<32x32xf32>
    %13 = arith.addf %10, %12 : vector<32x32xf32>
    %c0_6 = arith.constant 0 : index
    %c0_7 = arith.constant 0 : index
    %14 = vector.load %arg22[%c0_6, %c0_7] : memref<64x32xf32, #tpu.memory_space<vmem>>, vector<32x32xf32>
    tpu.vector_store %arg22[%c0_6, %c0_7], %13 {strides = array<i32>} : memref<64x32xf32, #tpu.memory_space<vmem>>, vector<32x32xf32>,
    %c0_8 = arith.constant 0 : index
    %c0_9 = arith.constant 0 : index
    %15 = vector.load %arg22[%c0_8, %c0_9] : memref<64x32xf32, #tpu.memory_space<vmem>>, vector<32x8xf32>
    %c0_10 = arith.constant 0 : index
    %c8 = arith.constant 8 : index
    %16 = vector.load %arg22[%c0_10, %c8] : memref<64x32xf32, #tpu.memory_space<vmem>>, vector<32x8xf32>
    %c0_11 = arith.constant 0 : index
    %c16 = arith.constant 16 : index
    %17 = vector.load %arg22[%c0_11, %c16] : memref<64x32xf32, #tpu.memory_space<vmem>>, vector<32x8xf32>
    %c0_12 = arith.constant 0 : index
    %c24 = arith.constant 24 : index
    %18 = vector.load %arg22[%c0_12, %c24] : memref<64x32xf32, #tpu.memory_space<vmem>>, vector<32x8xf32>
    %19 = vector.shape_cast %15 : vector<32x8xf32> to vector<1x32x8xf32>
    %20 = vector.shape_cast %16 : vector<32x8xf32> to vector<1x32x8xf32>
    %21 = vector.shape_cast %17 : vector<32x8xf32> to vector<1x32x8xf32>
    %22 = vector.shape_cast %18 : vector<32x8xf32> to vector<1x32x8xf32>
    %23 = tpu.concatenate %19, %20, %21, %22 in 0 : vector<1x32x8xf32>, vector<1x32x8xf32>, vector<1x32x8xf32>, vector<1x32x8xf32> -> vector<4x32x8xf32>
    %24 = arith.truncf %23 : vector<4x32x8xf32> to vector<4x32x8xbf16>
    %c0_13 = arith.constant 0 : index
    %c0_14 = arith.constant 0 : index
    %c0_15 = arith.constant 0 : index
    %25 = vector.load %arg20[%c0_13, %c0_14, %c0_15] : memref<4x8x64xbf16, #tpu.memory_space<vmem>>, vector<4x8x64xbf16>
    "tpu.trace_start"() <{level = 10 : i32, message = "hnd,hdm->hnm"}> : () -> ()
    %cst_16 = arith.constant dense<0.000000e+00> : vector<4x32x64xf32>
    %26 = tpu.matmul %24, %25, %cst_16 {dimension_numbers = #tpu.dot_dimension_numbers<[2], [1], [1], [2], [0, 0, 0, 1, 1, 2], [0], [0]>} : vector<4x32x8xbf16>, vector<4x8x64xbf16>, vector<4x32x64xf32> -> vector<4x32x64xf32>
    "tpu.trace_stop"() : () -> ()
    %cst_17 = arith.constant dense<0xFF800000> : vector<4x32xf32>
    %27 = vector.multi_reduction <maximumf>, %26, %cst_17 [2] : vector<4x32x64xf32> to vector<4x32xf32>
    %28 = vector.shape_cast %27 : vector<4x32xf32> to vector<4x32x1xf32>
    %29 = vector.broadcast %28 : vector<4x32x1xf32> to vector<4x32x64xf32>
    %30 = arith.subf %26, %29 : vector<4x32x64xf32>
    %31 = math.exp %30 : vector<4x32x64xf32>
    %cst_18 = arith.constant dense<0.000000e+00> : vector<4x32xf32>
    %32 = vector.multi_reduction <add>, %31, %cst_18 [2] : vector<4x32x64xf32> to vector<4x32xf32>
    %33 = vector.shape_cast %32 : vector<4x32xf32> to vector<4x32x1xf32>
    %34 = tpu.reciprocal %33 {approx = true} : vector<4x32x1xf32> -> vector<4x32x1xf32>
    %35 = vector.broadcast %34 : vector<4x32x1xf32> to vector<4x32x64xf32>
    %36 = arith.mulf %31, %35 : vector<4x32x64xf32>
    %37 = arith.truncf %36 : vector<4x32x64xf32> to vector<4x32x64xbf16>
    %c0_19 = arith.constant 0 : index
    %c0_20 = arith.constant 0 : index
    %c0_21 = arith.constant 0 : index
    %38 = vector.load %arg21[%c0_19, %c0_20, %c0_21] : memref<4x64x8xbf16, #tpu.memory_space<vmem>>, vector<4x64x8xbf16>
    "tpu.trace_start"() <{level = 10 : i32, message = "hnm,hmd->hnd"}> : () -> ()
    %cst_22 = arith.constant dense<0.000000e+00> : vector<4x32x8xf32>
    %39 = tpu.matmul %37, %38, %cst_22 {dimension_numbers = #tpu.dot_dimension_numbers<[2], [1], [1], [2], [0, 0, 0, 1, 1, 2], [0], [0]>} : vector<4x32x64xbf16>, vector<4x64x8xbf16>, vector<4x32x8xf32> -> vector<4x32x8xf32>
    "tpu.trace_stop"() : () -> ()
    %40 = vector.extract_strided_slice %39 {offsets = [0, 0, 0], sizes = [1, 32, 8], strides = [1, 1, 1]} : vector<4x32x8xf32> to vector<1x32x8xf32>
    %41 = vector.shape_cast %40 : vector<1x32x8xf32> to vector<32x8xf32>
    %c0_23 = arith.constant 0 : index
    %c0_24 = arith.constant 0 : index
    %42 = vector.load %arg22[%c0_23, %c0_24] : memref<64x32xf32, #tpu.memory_space<vmem>>, vector<32x8xf32>
    tpu.vector_store %arg22[%c0_23, %c0_24], %41 {strides = array<i32>} : memref<64x32xf32, #tpu.memory_space<vmem>>, vector<32x8xf32>,
    %43 = vector.extract_strided_slice %39 {offsets = [1, 0, 0], sizes = [1, 32, 8], strides = [1, 1, 1]} : vector<4x32x8xf32> to vector<1x32x8xf32>
    %44 = vector.shape_cast %43 : vector<1x32x8xf32> to vector<32x8xf32>
    %c0_25 = arith.constant 0 : index
    %c8_26 = arith.constant 8 : index
    %45 = vector.load %arg22[%c0_25, %c8_26] : memref<64x32xf32, #tpu.memory_space<vmem>>, vector<32x8xf32>
    tpu.vector_store %arg22[%c0_25, %c8_26], %44 {strides = array<i32>} : memref<64x32xf32, #tpu.memory_space<vmem>>, vector<32x8xf32>,
    %46 = vector.extract_strided_slice %39 {offsets = [2, 0, 0], sizes = [1, 32, 8], strides = [1, 1, 1]} : vector<4x32x8xf32> to vector<1x32x8xf32>
    %47 = vector.shape_cast %46 : vector<1x32x8xf32> to vector<32x8xf32>
    %c0_27 = arith.constant 0 : index
    %c16_28 = arith.constant 16 : index
    %48 = vector.load %arg22[%c0_27, %c16_28] : memref<64x32xf32, #tpu.memory_space<vmem>>, vector<32x8xf32>
    tpu.vector_store %arg22[%c0_27, %c16_28], %47 {strides = array<i32>} : memref<64x32xf32, #tpu.memory_space<vmem>>, vector<32x8xf32>,
    %49 = vector.extract_strided_slice %39 {offsets = [3, 0, 0], sizes = [1, 32, 8], strides = [1, 1, 1]} : vector<4x32x8xf32> to vector<1x32x8xf32>
    %50 = vector.shape_cast %49 : vector<1x32x8xf32> to vector<32x8xf32>
    %c0_29 = arith.constant 0 : index
    %c24_30 = arith.constant 24 : index
    %51 = vector.load %arg22[%c0_29, %c24_30] : memref<64x32xf32, #tpu.memory_space<vmem>>, vector<32x8xf32>
    tpu.vector_store %arg22[%c0_29, %c24_30], %50 {strides = array<i32>} : memref<64x32xf32, #tpu.memory_space<vmem>>, vector<32x8xf32>,
    %c0_31 = arith.constant 0 : index
    %c0_32 = arith.constant 0 : index
    %52 = vector.load %arg22[%c0_31, %c0_32] : memref<64x32xf32, #tpu.memory_space<vmem>>, vector<32x32xf32>
    %53 = arith.truncf %52 : vector<32x32xf32> to vector<32x32xbf16>
    %c0_33 = arith.constant 0 : index
    %c0_34 = arith.constant 0 : index
    %54 = vector.load %arg9[%c0_33, %c0_34] : memref<32x32xbf16, #tpu.memory_space<vmem>>, vector<32x32xbf16>
    %cst_35 = arith.constant dense<0.000000e+00> : vector<32x32xf32>
    %55 = tpu.matmul %53, %54, %cst_35 {dimension_numbers = #tpu.dot_dimension_numbers<[1], [0], [0], [1], [0, 0, 1, 1], [], []>} : vector<32x32xbf16>, vector<32x32xbf16>, vector<32x32xf32> -> vector<32x32xf32>
    %c0_36 = arith.constant 0 : index
    %c0_37 = arith.constant 0 : index
    %56 = vector.load %arg10[%c0_36, %c0_37] : memref<1x32xf32, #tpu.memory_space<vmem>>, vector<1x32xf32>
    %57 = vector.broadcast %56 : vector<1x32xf32> to vector<32x32xf32>
    %58 = arith.addf %55, %57 : vector<32x32xf32>
    %59 = arith.addf %8, %58 : vector<32x32xf32>
    %c0_38 = arith.constant 0 : index
    %c0_39 = arith.constant 0 : index
    %60 = vector.load %arg11[%c0_38, %c0_39] : memref<1x32xf32, #tpu.memory_space<vmem>>, vector<1x32xf32>
    %c0_40 = arith.constant 0 : index
    %c0_41 = arith.constant 0 : index
    %61 = vector.load %arg12[%c0_40, %c0_41] : memref<1x32xf32, #tpu.memory_space<vmem>>, vector<1x32xf32>
    %cst_42 = arith.constant dense<0.000000e+00> : vector<32xf32>
    %62 = vector.multi_reduction <add>, %59, %cst_42 [1] : vector<32x32xf32> to vector<32xf32>
    %63 = vector.shape_cast %62 : vector<32xf32> to vector<32x1xf32>
    %cst_43 = arith.constant 3.200000e+01 : f32
    %64 = vector.broadcast %cst_43 : f32 to vector<32x1xf32>
    %65 = arith.divf %63, %64 : vector<32x1xf32>
    %66 = vector.broadcast %65 : vector<32x1xf32> to vector<32x32xf32>
    %67 = arith.subf %59, %66 : vector<32x32xf32>
    %68 = arith.mulf %67, %67 : vector<32x32xf32>
    %cst_44 = arith.constant dense<0.000000e+00> : vector<32xf32>
    %69 = vector.multi_reduction <add>, %68, %cst_44 [1] : vector<32x32xf32> to vector<32xf32>
    %70 = vector.shape_cast %69 : vector<32xf32> to vector<32x1xf32>
    %cst_45 = arith.constant 3.200000e+01 : f32
    %71 = vector.broadcast %cst_45 : f32 to vector<32x1xf32>
    %72 = arith.divf %70, %71 : vector<32x1xf32>
    %73 = vector.broadcast %65 : vector<32x1xf32> to vector<32x32xf32>
    %74 = arith.subf %59, %73 : vector<32x32xf32>
    %cst_46 = arith.constant 9.99999974E-6 : f32
    %75 = vector.broadcast %cst_46 : f32 to vector<32x1xf32>
    %76 = arith.addf %72, %75 : vector<32x1xf32>
    %77 = math.rsqrt %76 : vector<32x1xf32>
    %78 = vector.broadcast %77 : vector<32x1xf32> to vector<32x32xf32>
    %79 = arith.mulf %74, %78 : vector<32x32xf32>
    %80 = vector.broadcast %60 : vector<1x32xf32> to vector<32x32xf32>
    %81 = arith.mulf %79, %80 : vector<32x32xf32>
    %82 = vector.broadcast %61 : vector<1x32xf32> to vector<32x32xf32>
    %83 = arith.addf %81, %82 : vector<32x32xf32>
    %84 = arith.truncf %83 : vector<32x32xf32> to vector<32x32xbf16>
    %c0_47 = arith.constant 0 : index
    %c0_48 = arith.constant 0 : index
    %85 = vector.load %arg13[%c0_47, %c0_48] : memref<32x128xbf16, #tpu.memory_space<vmem>>, vector<32x128xbf16>
    %cst_49 = arith.constant dense<0.000000e+00> : vector<32x128xf32>
    %86 = tpu.matmul %84, %85, %cst_49 {dimension_numbers = #tpu.dot_dimension_numbers<[1], [0], [0], [1], [0, 0, 1, 1], [], []>} : vector<32x32xbf16>, vector<32x128xbf16>, vector<32x128xf32> -> vector<32x128xf32>
    %c0_50 = arith.constant 0 : index
    %c0_51 = arith.constant 0 : index
    %87 = vector.load %arg14[%c0_50, %c0_51] : memref<1x128xf32, #tpu.memory_space<vmem>>, vector<1x128xf32>
    %88 = vector.broadcast %87 : vector<1x128xf32> to vector<32x128xf32>
    %89 = arith.addf %86, %88 : vector<32x128xf32>
    %cst_52 = arith.constant 5.000000e-01 : f32
    %90 = vector.broadcast %cst_52 : f32 to vector<32x128xf32>
    %91 = arith.mulf %90, %89 : vector<32x128xf32>
    %cst_53 = arith.constant 0.707106769 : f32
    %92 = vector.broadcast %cst_53 : f32 to vector<32x128xf32>
    %93 = arith.mulf %89, %92 : vector<32x128xf32>
    %cst_54 = arith.constant 0.000000e+00 : f32
    %94 = vector.broadcast %cst_54 : f32 to vector<32x128xf32>
    %95 = arith.cmpf olt, %93, %94 : vector<32x128xf32>
    %cst_55 = arith.constant -1.000000e+00 : f32
    %cst_56 = arith.constant 1.000000e+00 : f32
    %96 = vector.broadcast %cst_55 : f32 to vector<32x128xf32>
    %97 = vector.broadcast %cst_56 : f32 to vector<32x128xf32>
    %98 = arith.select %95, %96, %97 : vector<32x128xi1>, vector<32x128xf32>
    %99 = math.absf %93 : vector<32x128xf32>
    %cst_57 = arith.constant 0.327591091 : f32
    %100 = vector.broadcast %cst_57 : f32 to vector<32x128xf32>
    %101 = arith.mulf %100, %99 : vector<32x128xf32>
    %cst_58 = arith.constant 1.000000e+00 : f32
    %102 = vector.broadcast %cst_58 : f32 to vector<32x128xf32>
    %103 = arith.addf %102, %101 : vector<32x128xf32>
    %cst_59 = arith.constant 1.000000e+00 : f32
    %104 = vector.broadcast %cst_59 : f32 to vector<32x128xf32>
    %105 = arith.divf %104, %103 : vector<32x128xf32>
    %cst_60 = arith.constant 1.06140542 : f32
    %106 = vector.broadcast %cst_60 : f32 to vector<32x128xf32>
    %107 = arith.mulf %106, %105 : vector<32x128xf32>
    %cst_61 = arith.constant -1.45315206 : f32
    %108 = vector.broadcast %cst_61 : f32 to vector<32x128xf32>
    %109 = arith.addf %107, %108 : vector<32x128xf32>
    %110 = arith.mulf %109, %105 : vector<32x128xf32>
    %cst_62 = arith.constant 1.42141378 : f32
    %111 = vector.broadcast %cst_62 : f32 to vector<32x128xf32>
    %112 = arith.addf %110, %111 : vector<32x128xf32>
    %113 = arith.mulf %112, %105 : vector<32x128xf32>
    %cst_63 = arith.constant -0.284496725 : f32
    %114 = vector.broadcast %cst_63 : f32 to vector<32x128xf32>
    %115 = arith.addf %113, %114 : vector<32x128xf32>
    %116 = arith.mulf %115, %105 : vector<32x128xf32>
    %cst_64 = arith.constant 0.254829586 : f32
    %117 = vector.broadcast %cst_64 : f32 to vector<32x128xf32>
    %118 = arith.addf %116, %117 : vector<32x128xf32>
    %119 = arith.mulf %118, %105 : vector<32x128xf32>
    %cst_65 = arith.constant 0.000000e+00 : f32
    %120 = vector.broadcast %cst_65 : f32 to vector<32x128xf32>
    %121 = arith.subf %120, %99 : vector<32x128xf32>
    %122 = arith.mulf %121, %99 : vector<32x128xf32>
    %123 = math.exp %122 : vector<32x128xf32>
    %124 = arith.mulf %119, %123 : vector<32x128xf32>
    %cst_66 = arith.constant 1.000000e+00 : f32
    %125 = vector.broadcast %cst_66 : f32 to vector<32x128xf32>
    %126 = arith.subf %125, %124 : vector<32x128xf32>
    %127 = arith.mulf %98, %126 : vector<32x128xf32>
    %cst_67 = arith.constant 1.000000e+00 : f32
    %128 = vector.broadcast %cst_67 : f32 to vector<32x128xf32>
    %129 = arith.addf %128, %127 : vector<32x128xf32>
    %130 = arith.mulf %91, %129 : vector<32x128xf32>
    %131 = arith.truncf %130 : vector<32x128xf32> to vector<32x128xbf16>
    %c0_68 = arith.constant 0 : index
    %c0_69 = arith.constant 0 : index
    %132 = vector.load %arg15[%c0_68, %c0_69] : memref<128x32xbf16, #tpu.memory_space<vmem>>, vector<128x32xbf16>
    %cst_70 = arith.constant dense<0.000000e+00> : vector<32x32xf32>
    %133 = tpu.matmul %131, %132, %cst_70 {dimension_numbers = #tpu.dot_dimension_numbers<[1], [0], [0], [1], [0, 0, 1, 1], [], []>} : vector<32x128xbf16>, vector<128x32xbf16>, vector<32x32xf32> -> vector<32x32xf32>
    %c0_71 = arith.constant 0 : index
    %c0_72 = arith.constant 0 : index
    %134 = vector.load %arg16[%c0_71, %c0_72] : memref<1x32xf32, #tpu.memory_space<vmem>>, vector<1x32xf32>
    %135 = vector.broadcast %134 : vector<1x32xf32> to vector<32x32xf32>
    %136 = arith.addf %133, %135 : vector<32x32xf32>
    %137 = arith.addf %83, %136 : vector<32x32xf32>
    %c0_73 = arith.constant 0 : index
    %c0_74 = arith.constant 0 : index
    %138 = vector.load %arg17[%c0_73, %c0_74] : memref<1x32xf32, #tpu.memory_space<vmem>>, vector<1x32xf32>
    %c0_75 = arith.constant 0 : index
    %c0_76 = arith.constant 0 : index
    %139 = vector.load %arg18[%c0_75, %c0_76] : memref<1x32xf32, #tpu.memory_space<vmem>>, vector<1x32xf32>
    %cst_77 = arith.constant dense<0.000000e+00> : vector<32xf32>
    %140 = vector.multi_reduction <add>, %137, %cst_77 [1] : vector<32x32xf32> to vector<32xf32>
    %141 = vector.shape_cast %140 : vector<32xf32> to vector<32x1xf32>
    %cst_78 = arith.constant 3.200000e+01 : f32
    %142 = vector.broadcast %cst_78 : f32 to vector<32x1xf32>
    %143 = arith.divf %141, %142 : vector<32x1xf32>
    %144 = vector.broadcast %143 : vector<32x1xf32> to vector<32x32xf32>
    %145 = arith.subf %137, %144 : vector<32x32xf32>
    %146 = arith.mulf %145, %145 : vector<32x32xf32>
    %cst_79 = arith.constant dense<0.000000e+00> : vector<32xf32>
    %147 = vector.multi_reduction <add>, %146, %cst_79 [1] : vector<32x32xf32> to vector<32xf32>
    %148 = vector.shape_cast %147 : vector<32xf32> to vector<32x1xf32>
    %cst_80 = arith.constant 3.200000e+01 : f32
    %149 = vector.broadcast %cst_80 : f32 to vector<32x1xf32>
    %150 = arith.divf %148, %149 : vector<32x1xf32>
    %151 = vector.broadcast %143 : vector<32x1xf32> to vector<32x32xf32>
    %152 = arith.subf %137, %151 : vector<32x32xf32>
    %cst_81 = arith.constant 9.99999974E-6 : f32
    %153 = vector.broadcast %cst_81 : f32 to vector<32x1xf32>
    %154 = arith.addf %150, %153 : vector<32x1xf32>
    %155 = math.rsqrt %154 : vector<32x1xf32>
    %156 = vector.broadcast %155 : vector<32x1xf32> to vector<32x32xf32>
    %157 = arith.mulf %152, %156 : vector<32x32xf32>
    %158 = vector.broadcast %138 : vector<1x32xf32> to vector<32x32xf32>
    %159 = arith.mulf %157, %158 : vector<32x32xf32>
    %160 = vector.broadcast %139 : vector<1x32xf32> to vector<32x32xf32>
    %161 = arith.addf %159, %160 : vector<32x32xf32>
    %c0_82 = arith.constant 0 : index
    %c0_83 = arith.constant 0 : index
    %c0_84 = arith.constant 0 : index
    %162 = vector.load %arg19[%c0_82, %c0_83, %c0_84] : memref<1x32x32xf32, #tpu.memory_space<vmem>>, vector<1x32x32xf32>
    %163 = vector.shape_cast %162 : vector<1x32x32xf32> to vector<32x32xf32>
    %164 = vector.shape_cast %161 : vector<32x32xf32> to vector<1x32x32xf32>
    tpu.vector_store %arg19[%c0_82, %c0_83, %c0_84], %164 {strides = array<i32>} : memref<1x32x32xf32, #tpu.memory_space<vmem>>, vector<1x32x32xf32>,
    return
  }
  func.func @transform_0(%arg0: i32, %arg1: i32) -> (i32, i32, i32) {
    %c0_i32 = arith.constant 0 : i32
    %c0_i32_0 = arith.constant 0 : i32
    %c0_i32_1 = arith.constant 0 : i32
    return %arg0, %c0_i32, %c0_i32_0 : i32, i32, i32
  }
  func.func @transform_1(%arg0: i32, %arg1: i32) -> (i32, i32) {
    %c0_i32 = arith.constant 0 : i32
    %c0_i32_0 = arith.constant 0 : i32
    %c0_i32_1 = arith.constant 0 : i32
    return %c0_i32, %c0_i32_0 : i32, i32
  }
  func.func @transform_2(%arg0: i32, %arg1: i32) -> (i32, i32) {
    %c0_i32 = arith.constant 0 : i32
    %c0_i32_0 = arith.constant 0 : i32
    %c0_i32_1 = arith.constant 0 : i32
    return %c0_i32, %c0_i32_0 : i32, i32
  }
  func.func @transform_3(%arg0: i32, %arg1: i32) -> (i32, i32) {
    %c0_i32 = arith.constant 0 : i32
    %c0_i32_0 = arith.constant 0 : i32
    %c0_i32_1 = arith.constant 0 : i32
    return %c0_i32, %c0_i32_0 : i32, i32
  }
  func.func @transform_4(%arg0: i32, %arg1: i32) -> (i32, i32) {
    %c0_i32 = arith.constant 0 : i32
    %c0_i32_0 = arith.constant 0 : i32
    %c0_i32_1 = arith.constant 0 : i32
    return %c0_i32, %c0_i32_0 : i32, i32
  }
  func.func @transform_5(%arg0: i32, %arg1: i32) -> (i32, i32) {
    %c0_i32 = arith.constant 0 : i32
    %c0_i32_0 = arith.constant 0 : i32
    %c0_i32_1 = arith.constant 0 : i32
    return %c0_i32, %c0_i32_0 : i32, i32
  }
  func.func @transform_6(%arg0: i32, %arg1: i32) -> (i32, i32) {
    %c0_i32 = arith.constant 0 : i32
    %c0_i32_0 = arith.constant 0 : i32
    %c0_i32_1 = arith.constant 0 : i32
    return %c0_i32, %c0_i32_0 : i32, i32
  }
  func.func @transform_7(%arg0: i32, %arg1: i32) -> (i32, i32) {
    %c0_i32 = arith.constant 0 : i32
    %c0_i32_0 = arith.constant 0 : i32
    %c0_i32_1 = arith.constant 0 : i32
    return %c0_i32, %c0_i32_0 : i32, i32
  }
  func.func @transform_8(%arg0: i32, %arg1: i32) -> (i32, i32) {
    %c0_i32 = arith.constant 0 : i32
    %c0_i32_0 = arith.constant 0 : i32
    %c0_i32_1 = arith.constant 0 : i32
    return %c0_i32, %c0_i32_0 : i32, i32
  }
  func.func @transform_9(%arg0: i32, %arg1: i32) -> (i32, i32) {
    %c0_i32 = arith.constant 0 : i32
    %c0_i32_0 = arith.constant 0 : i32
    %c0_i32_1 = arith.constant 0 : i32
    return %c0_i32, %c0_i32_0 : i32, i32
  }
  func.func @transform_10(%arg0: i32, %arg1: i32) -> (i32, i32) {
    %c0_i32 = arith.constant 0 : i32
    %c0_i32_0 = arith.constant 0 : i32
    %c0_i32_1 = arith.constant 0 : i32
    return %c0_i32, %c0_i32_0 : i32, i32
  }
  func.func @transform_11(%arg0: i32, %arg1: i32) -> (i32, i32) {
    %c0_i32 = arith.constant 0 : i32
    %c0_i32_0 = arith.constant 0 : i32
    %c0_i32_1 = arith.constant 0 : i32
    return %c0_i32, %c0_i32_0 : i32, i32
  }
  func.func @transform_12(%arg0: i32, %arg1: i32) -> (i32, i32) {
    %c0_i32 = arith.constant 0 : i32
    %c0_i32_0 = arith.constant 0 : i32
    %c0_i32_1 = arith.constant 0 : i32
    return %c0_i32, %c0_i32_0 : i32, i32
  }
  func.func @transform_13(%arg0: i32, %arg1: i32) -> (i32, i32) {
    %c0_i32 = arith.constant 0 : i32
    %c0_i32_0 = arith.constant 0 : i32
    %c0_i32_1 = arith.constant 0 : i32
    return %c0_i32, %c0_i32_0 : i32, i32
  }
  func.func @transform_14(%arg0: i32, %arg1: i32) -> (i32, i32) {
    %c0_i32 = arith.constant 0 : i32
    %c0_i32_0 = arith.constant 0 : i32
    %c0_i32_1 = arith.constant 0 : i32
    return %c0_i32, %c0_i32_0 : i32, i32
  }
  func.func @transform_15(%arg0: i32, %arg1: i32) -> (i32, i32) {
    %c0_i32 = arith.constant 0 : i32
    %c0_i32_0 = arith.constant 0 : i32
    %c0_i32_1 = arith.constant 0 : i32
    return %c0_i32, %c0_i32_0 : i32, i32
  }
  func.func @transform_16(%arg0: i32, %arg1: i32) -> (i32, i32) {
    %c0_i32 = arith.constant 0 : i32
    %c0_i32_0 = arith.constant 0 : i32
    %c0_i32_1 = arith.constant 0 : i32
    return %c0_i32, %c0_i32_0 : i32, i32
  }
  func.func @transform_17(%arg0: i32, %arg1: i32) -> (i32, i32, i32) {
    %c0_i32 = arith.constant 0 : i32
    %c0_i32_0 = arith.constant 0 : i32
    return %arg0, %arg1, %c0_i32 : i32, i32, i32
  }
}

module attributes {stable_mosaic.version = 11 : i64} {
  func.func @_vit_block_kernel(%arg0: i32, %arg1: i32, %arg2: memref<1x64x32xbf16, #tpu.memory_space<vmem>>, %arg3: memref<32x32xbf16, #tpu.memory_space<vmem>>, %arg4: memref<1x32xf32, #tpu.memory_space<vmem>>, %arg5: memref<32x32xbf16, #tpu.memory_space<vmem>>, %arg6: memref<1x32xf32, #tpu.memory_space<vmem>>, %arg7: memref<32x32xbf16, #tpu.memory_space<vmem>>, %arg8: memref<1x32xf32, #tpu.memory_space<vmem>>, %arg9: memref<32x32xbf16, #tpu.memory_space<vmem>>, %arg10: memref<1x32xf32, #tpu.memory_space<vmem>>, %arg11: memref<1x32xf32, #tpu.memory_space<vmem>>, %arg12: memref<1x32xf32, #tpu.memory_space<vmem>>, %arg13: memref<32x128xbf16, #tpu.memory_space<vmem>>, %arg14: memref<1x128xf32, #tpu.memory_space<vmem>>, %arg15: memref<128x32xbf16, #tpu.memory_space<vmem>>, %arg16: memref<1x32xf32, #tpu.memory_space<vmem>>, %arg17: memref<1x32xf32, #tpu.memory_space<vmem>>, %arg18: memref<1x32xf32, #tpu.memory_space<vmem>>, %arg19: memref<1x32x32xf32, #tpu.memory_space<vmem>>, %arg20: memref<4x8x64xbf16, #tpu.memory_space<vmem>>, %arg21: memref<4x64x8xbf16, #tpu.memory_space<vmem>>, %arg22: memref<64x32xf32, #tpu.memory_space<vmem>>) attributes {dimension_semantics = [#tpu.dimension_semantics<parallel>, #tpu.dimension_semantics<arbitrary>], iteration_bounds = array<i64: 2, 2>, scalar_prefetch = 0 : i64, scratch_operands = 3 : i64, tpu.core_type = #tpu.core_type<tc>, window_params = [{transform_indices = @transform_0, window_bounds = array<i64: 1, 64, 32>}, {pipeline_mode = #tpu.pipeline_mode<synchronous>, transform_indices = @transform_1, window_bounds = array<i64: 32, 32>}, {pipeline_mode = #tpu.pipeline_mode<synchronous>, transform_indices = @transform_2, window_bounds = array<i64: 1, 32>}, {pipeline_mode = #tpu.pipeline_mode<synchronous>, transform_indices = @transform_3, window_bounds = array<i64: 32, 32>}, {pipeline_mode = #tpu.pipeline_mode<synchronous>, transform_indices = @transform_4, window_bounds = array<i64: 1, 32>}, {pipeline_mode = #tpu.pipeline_mode<synchronous>, transform_indices = @transform_5, window_bounds = array<i64: 32, 32>}, {pipeline_mode = #tpu.pipeline_mode<synchronous>, transform_indices = @transform_6, window_bounds = array<i64: 1, 32>}, {pipeline_mode = #tpu.pipeline_mode<synchronous>, transform_indices = @transform_7, window_bounds = array<i64: 32, 32>}, {pipeline_mode = #tpu.pipeline_mode<synchronous>, transform_indices = @transform_8, window_bounds = array<i64: 1, 32>}, {pipeline_mode = #tpu.pipeline_mode<synchronous>, transform_indices = @transform_9, window_bounds = array<i64: 1, 32>}, {pipeline_mode = #tpu.pipeline_mode<synchronous>, transform_indices = @transform_10, window_bounds = array<i64: 1, 32>}, {pipeline_mode = #tpu.pipeline_mode<synchronous>, transform_indices = @transform_11, window_bounds = array<i64: 32, 128>}, {pipeline_mode = #tpu.pipeline_mode<synchronous>, transform_indices = @transform_12, window_bounds = array<i64: 1, 128>}, {pipeline_mode = #tpu.pipeline_mode<synchronous>, transform_indices = @transform_13, window_bounds = array<i64: 128, 32>}, {pipeline_mode = #tpu.pipeline_mode<synchronous>, transform_indices = @transform_14, window_bounds = array<i64: 1, 32>}, {pipeline_mode = #tpu.pipeline_mode<synchronous>, transform_indices = @transform_15, window_bounds = array<i64: 1, 32>}, {pipeline_mode = #tpu.pipeline_mode<synchronous>, transform_indices = @transform_16, window_bounds = array<i64: 1, 32>}, {transform_indices = @transform_17, window_bounds = array<i64: 1, 32, 32>}]} {
    %c0_i32 = arith.constant 0 : i32
    %0 = arith.cmpi eq, %arg1, %c0_i32 : i32
    %1 = arith.extui %0 : i1 to i32
    %c0_i32_0 = arith.constant 0 : i32
    %2 = arith.cmpi ne, %1, %c0_i32_0 : i32
    scf.if %2 {
      %c0_85 = arith.constant 0 : index
      %c0_86 = arith.constant 0 : index
      %c0_87 = arith.constant 0 : index
      %165 = vector.load %arg2[%c0_85, %c0_86, %c0_87] : memref<1x64x32xbf16, #tpu.memory_space<vmem>>, vector<1x64x32xbf16>
      %166 = vector.shape_cast %165 : vector<1x64x32xbf16> to vector<64x32xbf16>
      %c0_88 = arith.constant 0 : index
      %c0_89 = arith.constant 0 : index
      %167 = vector.load %arg5[%c0_88, %c0_89] : memref<32x32xbf16, #tpu.memory_space<vmem>>, vector<32x32xbf16>
      %cst_90 = arith.constant dense<0.000000e+00> : vector<64x32xf32>
      %168 = tpu.matmul %166, %167, %cst_90 {dimension_numbers = #tpu.dot_dimension_numbers<[1], [0], [0], [1], [0, 0, 1, 1], [], []>} : vector<64x32xbf16>, vector<32x32xbf16>, vector<64x32xf32> -> vector<64x32xf32>
      %c0_91 = arith.constant 0 : index
      %c0_92 = arith.constant 0 : index
      %169 = vector.load %arg6[%c0_91, %c0_92] : memref<1x32xf32, #tpu.memory_space<vmem>>, vector<1x32xf32>
      %170 = vector.broadcast %169 : vector<1x32xf32> to vector<64x32xf32>
      %171 = arith.addf %168, %170 : vector<64x32xf32>
      %c0_93 = arith.constant 0 : index
      %c0_94 = arith.constant 0 : index
      %172 = vector.load %arg22[%c0_93, %c0_94] : memref<64x32xf32, #tpu.memory_space<vmem>>, vector<64x32xf32>
      tpu.vector_store %arg22[%c0_93, %c0_94], %171 {strides = array<i32>} : memref<64x32xf32, #tpu.memory_space<vmem>>, vector<64x32xf32>,
      %c0_95 = arith.constant 0 : index
      %c0_96 = arith.constant 0 : index
      %173 = vector.load %arg22[%c0_95, %c0_96] : memref<64x32xf32, #tpu.memory_space<vmem>>, vector<64x8xf32>
      %174 = tpu.transpose %173, [1, 0] : vector<64x8xf32> -> vector<8x64xf32>
      %175 = arith.truncf %174 : vector<8x64xf32> to vector<8x64xbf16>
      %c0_97 = arith.constant 0 : index
      %c0_98 = arith.constant 0 : index
      %c0_99 = arith.constant 0 : index
      %176 = vector.load %arg20[%c0_97, %c0_98, %c0_99] : memref<4x8x64xbf16, #tpu.memory_space<vmem>>, vector<1x8x64xbf16>
      %177 = vector.shape_cast %176 : vector<1x8x64xbf16> to vector<8x64xbf16>
      %178 = vector.shape_cast %175 : vector<8x64xbf16> to vector<1x8x64xbf16>
      tpu.vector_store %arg20[%c0_97, %c0_98, %c0_99], %178 {strides = array<i32>} : memref<4x8x64xbf16, #tpu.memory_space<vmem>>, vector<1x8x64xbf16>,
      %c0_100 = arith.constant 0 : index
      %c8_101 = arith.constant 8 : index
      %179 = vector.load %arg22[%c0_100, %c8_101] : memref<64x32xf32, #tpu.memory_space<vmem>>, vector<64x8xf32>
      %180 = tpu.transpose %179, [1, 0] : vector<64x8xf32> -> vector<8x64xf32>
      %181 = arith.truncf %180 : vector<8x64xf32> to vector<8x64xbf16>
      %c1 = arith.constant 1 : index
      %c0_102 = arith.constant 0 : index
      %c0_103 = arith.constant 0 : index
      %182 = vector.load %arg20[%c1, %c0_102, %c0_103] : memref<4x8x64xbf16, #tpu.memory_space<vmem>>, vector<1x8x64xbf16>
      %183 = vector.shape_cast %182 : vector<1x8x64xbf16> to vector<8x64xbf16>
      %184 = vector.shape_cast %181 : vector<8x64xbf16> to vector<1x8x64xbf16>
      tpu.vector_store %arg20[%c1, %c0_102, %c0_103], %184 {strides = array<i32>} : memref<4x8x64xbf16, #tpu.memory_space<vmem>>, vector<1x8x64xbf16>,
      %c0_104 = arith.constant 0 : index
      %c16_105 = arith.constant 16 : index
      %185 = vector.load %arg22[%c0_104, %c16_105] : memref<64x32xf32, #tpu.memory_space<vmem>>, vector<64x8xf32>
      %186 = tpu.transpose %185, [1, 0] : vector<64x8xf32> -> vector<8x64xf32>
      %187 = arith.truncf %186 : vector<8x64xf32> to vector<8x64xbf16>
      %c2 = arith.constant 2 : index
      %c0_106 = arith.constant 0 : index
      %c0_107 = arith.constant 0 : index
      %188 = vector.load %arg20[%c2, %c0_106, %c0_107] : memref<4x8x64xbf16, #tpu.memory_space<vmem>>, vector<1x8x64xbf16>
      %189 = vector.shape_cast %188 : vector<1x8x64xbf16> to vector<8x64xbf16>
      %190 = vector.shape_cast %187 : vector<8x64xbf16> to vector<1x8x64xbf16>
      tpu.vector_store %arg20[%c2, %c0_106, %c0_107], %190 {strides = array<i32>} : memref<4x8x64xbf16, #tpu.memory_space<vmem>>, vector<1x8x64xbf16>,
      %c0_108 = arith.constant 0 : index
      %c24_109 = arith.constant 24 : index
      %191 = vector.load %arg22[%c0_108, %c24_109] : memref<64x32xf32, #tpu.memory_space<vmem>>, vector<64x8xf32>
      %192 = tpu.transpose %191, [1, 0] : vector<64x8xf32> -> vector<8x64xf32>
      %193 = arith.truncf %192 : vector<8x64xf32> to vector<8x64xbf16>
      %c3 = arith.constant 3 : index
      %c0_110 = arith.constant 0 : index
      %c0_111 = arith.constant 0 : index
      %194 = vector.load %arg20[%c3, %c0_110, %c0_111] : memref<4x8x64xbf16, #tpu.memory_space<vmem>>, vector<1x8x64xbf16>
      %195 = vector.shape_cast %194 : vector<1x8x64xbf16> to vector<8x64xbf16>
      %196 = vector.shape_cast %193 : vector<8x64xbf16> to vector<1x8x64xbf16>
      tpu.vector_store %arg20[%c3, %c0_110, %c0_111], %196 {strides = array<i32>} : memref<4x8x64xbf16, #tpu.memory_space<vmem>>, vector<1x8x64xbf16>,
      %c0_112 = arith.constant 0 : index
      %c0_113 = arith.constant 0 : index
      %197 = vector.load %arg7[%c0_112, %c0_113] : memref<32x32xbf16, #tpu.memory_space<vmem>>, vector<32x32xbf16>
      %cst_114 = arith.constant dense<0.000000e+00> : vector<64x32xf32>
      %198 = tpu.matmul %166, %197, %cst_114 {dimension_numbers = #tpu.dot_dimension_numbers<[1], [0], [0], [1], [0, 0, 1, 1], [], []>} : vector<64x32xbf16>, vector<32x32xbf16>, vector<64x32xf32> -> vector<64x32xf32>
      %c0_115 = arith.constant 0 : index
      %c0_116 = arith.constant 0 : index
      %199 = vector.load %arg8[%c0_115, %c0_116] : memref<1x32xf32, #tpu.memory_space<vmem>>, vector<1x32xf32>
      %200 = vector.broadcast %199 : vector<1x32xf32> to vector<64x32xf32>
      %201 = arith.addf %198, %200 : vector<64x32xf32>
      %c0_117 = arith.constant 0 : index
      %c0_118 = arith.constant 0 : index
      %202 = vector.load %arg22[%c0_117, %c0_118] : memref<64x32xf32, #tpu.memory_space<vmem>>, vector<64x32xf32>
      tpu.vector_store %arg22[%c0_117, %c0_118], %201 {strides = array<i32>} : memref<64x32xf32, #tpu.memory_space<vmem>>, vector<64x32xf32>,
      %c0_119 = arith.constant 0 : index
      %c0_120 = arith.constant 0 : index
      %203 = vector.load %arg22[%c0_119, %c0_120] : memref<64x32xf32, #tpu.memory_space<vmem>>, vector<64x8xf32>
      %204 = arith.truncf %203 : vector<64x8xf32> to vector<64x8xbf16>
      %c0_121 = arith.constant 0 : index
      %c0_122 = arith.constant 0 : index
      %c0_123 = arith.constant 0 : index
      %205 = vector.load %arg21[%c0_121, %c0_122, %c0_123] : memref<4x64x8xbf16, #tpu.memory_space<vmem>>, vector<1x64x8xbf16>
      %206 = vector.shape_cast %205 : vector<1x64x8xbf16> to vector<64x8xbf16>
      %207 = vector.shape_cast %204 : vector<64x8xbf16> to vector<1x64x8xbf16>
      tpu.vector_store %arg21[%c0_121, %c0_122, %c0_123], %207 {strides = array<i32>} : memref<4x64x8xbf16, #tpu.memory_space<vmem>>, vector<1x64x8xbf16>,
      %c0_124 = arith.constant 0 : index
      %c8_125 = arith.constant 8 : index
      %208 = vector.load %arg22[%c0_124, %c8_125] : memref<64x32xf32, #tpu.memory_space<vmem>>, vector<64x8xf32>
      %209 = arith.truncf %208 : vector<64x8xf32> to vector<64x8xbf16>
      %c1_126 = arith.constant 1 : index
      %c0_127 = arith.constant 0 : index
      %c0_128 = arith.constant 0 : index
      %210 = vector.load %arg21[%c1_126, %c0_127, %c0_128] : memref<4x64x8xbf16, #tpu.memory_space<vmem>>, vector<1x64x8xbf16>
      %211 = vector.shape_cast %210 : vector<1x64x8xbf16> to vector<64x8xbf16>
      %212 = vector.shape_cast %209 : vector<64x8xbf16> to vector<1x64x8xbf16>
      tpu.vector_store %arg21[%c1_126, %c0_127, %c0_128], %212 {strides = array<i32>} : memref<4x64x8xbf16, #tpu.memory_space<vmem>>, vector<1x64x8xbf16>,
      %c0_129 = arith.constant 0 : index
      %c16_130 = arith.constant 16 : index
      %213 = vector.load %arg22[%c0_129, %c16_130] : memref<64x32xf32, #tpu.memory_space<vmem>>, vector<64x8xf32>
      %214 = arith.truncf %213 : vector<64x8xf32> to vector<64x8xbf16>
      %c2_131 = arith.constant 2 : index
      %c0_132 = arith.constant 0 : index
      %c0_133 = arith.constant 0 : index
      %215 = vector.load %arg21[%c2_131, %c0_132, %c0_133] : memref<4x64x8xbf16, #tpu.memory_space<vmem>>, vector<1x64x8xbf16>
      %216 = vector.shape_cast %215 : vector<1x64x8xbf16> to vector<64x8xbf16>
      %217 = vector.shape_cast %214 : vector<64x8xbf16> to vector<1x64x8xbf16>
      tpu.vector_store %arg21[%c2_131, %c0_132, %c0_133], %217 {strides = array<i32>} : memref<4x64x8xbf16, #tpu.memory_space<vmem>>, vector<1x64x8xbf16>,
      %c0_134 = arith.constant 0 : index
      %c24_135 = arith.constant 24 : index
      %218 = vector.load %arg22[%c0_134, %c24_135] : memref<64x32xf32, #tpu.memory_space<vmem>>, vector<64x8xf32>
      %219 = arith.truncf %218 : vector<64x8xf32> to vector<64x8xbf16>
      %c3_136 = arith.constant 3 : index
      %c0_137 = arith.constant 0 : index
      %c0_138 = arith.constant 0 : index
      %220 = vector.load %arg21[%c3_136, %c0_137, %c0_138] : memref<4x64x8xbf16, #tpu.memory_space<vmem>>, vector<1x64x8xbf16>
      %221 = vector.shape_cast %220 : vector<1x64x8xbf16> to vector<64x8xbf16>
      %222 = vector.shape_cast %219 : vector<64x8xbf16> to vector<1x64x8xbf16>
      tpu.vector_store %arg21[%c3_136, %c0_137, %c0_138], %222 {strides = array<i32>} : memref<4x64x8xbf16, #tpu.memory_space<vmem>>, vector<1x64x8xbf16>,
    } else {
    }
    %c32_i32 = arith.constant 32 : i32
    %3 = arith.muli %arg1, %c32_i32 : i32
    %4 = tpu.assume_multiple %3, 32 : i32
    %c0 = arith.constant 0 : index
    %5 = arith.index_cast %4 : i32 to index
    %c0_1 = arith.constant 0 : index
    %6 = vector.load %arg2[%c0, %5, %c0_1] : memref<1x64x32xbf16, #tpu.memory_space<vmem>>, vector<1x32x32xbf16>
    %7 = vector.shape_cast %6 : vector<1x32x32xbf16> to vector<32x32xbf16>
    %8 = arith.extf %7 : vector<32x32xbf16> to vector<32x32xf32>
    %c0_2 = arith.constant 0 : index
    %c0_3 = arith.constant 0 : index
    %9 = vector.load %arg3[%c0_2, %c0_3] : memref<32x32xbf16, #tpu.memory_space<vmem>>, vector<32x32xbf16>
    %cst = arith.constant dense<0.000000e+00> : vector<32x32xf32>
    %10 = tpu.matmul %7, %9, %cst {dimension_numbers = #tpu.dot_dimension_numbers<[1], [0], [0], [1], [0, 0, 1, 1], [], []>} : vector<32x32xbf16>, vector<32x32xbf16>, vector<32x32xf32> -> vector<32x32xf32>
    %c0_4 = arith.constant 0 : index
    %c0_5 = arith.constant 0 : index
    %11 = vector.load %arg4[%c0_4, %c0_5] : memref<1x32xf32, #tpu.memory_space<vmem>>, vector<1x32xf32>
    %12 = vector.broadcast %11 : vector<1x32xf32> to vector<32x32xf32>
    %13 = arith.addf %10, %12 : vector<32x32xf32>
    %c0_6 = arith.constant 0 : index
    %c0_7 = arith.constant 0 : index
    %14 = vector.load %arg22[%c0_6, %c0_7] : memref<64x32xf32, #tpu.memory_space<vmem>>, vector<32x32xf32>
    tpu.vector_store %arg22[%c0_6, %c0_7], %13 {strides = array<i32>} : memref<64x32xf32, #tpu.memory_space<vmem>>, vector<32x32xf32>,
    %c0_8 = arith.constant 0 : index
    %c0_9 = arith.constant 0 : index
    %15 = vector.load %arg22[%c0_8, %c0_9] : memref<64x32xf32, #tpu.memory_space<vmem>>, vector<32x8xf32>
    %c0_10 = arith.constant 0 : index
    %c8 = arith.constant 8 : index
    %16 = vector.load %arg22[%c0_10, %c8] : memref<64x32xf32, #tpu.memory_space<vmem>>, vector<32x8xf32>
    %c0_11 = arith.constant 0 : index
    %c16 = arith.constant 16 : index
    %17 = vector.load %arg22[%c0_11, %c16] : memref<64x32xf32, #tpu.memory_space<vmem>>, vector<32x8xf32>
    %c0_12 = arith.constant 0 : index
    %c24 = arith.constant 24 : index
    %18 = vector.load %arg22[%c0_12, %c24] : memref<64x32xf32, #tpu.memory_space<vmem>>, vector<32x8xf32>
    %19 = vector.shape_cast %15 : vector<32x8xf32> to vector<1x32x8xf32>
    %20 = vector.shape_cast %16 : vector<32x8xf32> to vector<1x32x8xf32>
    %21 = vector.shape_cast %17 : vector<32x8xf32> to vector<1x32x8xf32>
    %22 = vector.shape_cast %18 : vector<32x8xf32> to vector<1x32x8xf32>
    %23 = tpu.concatenate %19, %20, %21, %22 in 0 : vector<1x32x8xf32>, vector<1x32x8xf32>, vector<1x32x8xf32>, vector<1x32x8xf32> -> vector<4x32x8xf32>
    %24 = arith.truncf %23 : vector<4x32x8xf32> to vector<4x32x8xbf16>
    %c0_13 = arith.constant 0 : index
    %c0_14 = arith.constant 0 : index
    %c0_15 = arith.constant 0 : index
    %25 = vector.load %arg20[%c0_13, %c0_14, %c0_15] : memref<4x8x64xbf16, #tpu.memory_space<vmem>>, vector<4x8x64xbf16>
    "tpu.trace_start"() <{level = 10 : i32, message = "hnd,hdm->hnm"}> : () -> ()
    %cst_16 = arith.constant dense<0.000000e+00> : vector<4x32x64xf32>
    %26 = tpu.matmul %24, %25, %cst_16 {dimension_numbers = #tpu.dot_dimension_numbers<[2], [1], [1], [2], [0, 0, 0, 1, 1, 2], [0], [0]>} : vector<4x32x8xbf16>, vector<4x8x64xbf16>, vector<4x32x64xf32> -> vector<4x32x64xf32>
    "tpu.trace_stop"() : () -> ()
    %cst_17 = arith.constant dense<0xFF800000> : vector<4x32xf32>
    %27 = vector.multi_reduction <maximumf>, %26, %cst_17 [2] : vector<4x32x64xf32> to vector<4x32xf32>
    %28 = vector.shape_cast %27 : vector<4x32xf32> to vector<4x32x1xf32>
    %29 = vector.broadcast %28 : vector<4x32x1xf32> to vector<4x32x64xf32>
    %30 = arith.subf %26, %29 : vector<4x32x64xf32>
    %31 = math.exp %30 : vector<4x32x64xf32>
    %cst_18 = arith.constant dense<0.000000e+00> : vector<4x32xf32>
    %32 = vector.multi_reduction <add>, %31, %cst_18 [2] : vector<4x32x64xf32> to vector<4x32xf32>
    %33 = vector.shape_cast %32 : vector<4x32xf32> to vector<4x32x1xf32>
    %34 = tpu.reciprocal %33 {approx = true} : vector<4x32x1xf32> -> vector<4x32x1xf32>
    %35 = vector.broadcast %34 : vector<4x32x1xf32> to vector<4x32x64xf32>
    %36 = arith.mulf %31, %35 : vector<4x32x64xf32>
    %37 = arith.truncf %36 : vector<4x32x64xf32> to vector<4x32x64xbf16>
    %c0_19 = arith.constant 0 : index
    %c0_20 = arith.constant 0 : index
    %c0_21 = arith.constant 0 : index
    %38 = vector.load %arg21[%c0_19, %c0_20, %c0_21] : memref<4x64x8xbf16, #tpu.memory_space<vmem>>, vector<4x64x8xbf16>
    "tpu.trace_start"() <{level = 10 : i32, message = "hnm,hmd->hnd"}> : () -> ()
    %cst_22 = arith.constant dense<0.000000e+00> : vector<4x32x8xf32>
    %39 = tpu.matmul %37, %38, %cst_22 {dimension_numbers = #tpu.dot_dimension_numbers<[2], [1], [1], [2], [0, 0, 0, 1, 1, 2], [0], [0]>} : vector<4x32x64xbf16>, vector<4x64x8xbf16>, vector<4x32x8xf32> -> vector<4x32x8xf32>
    "tpu.trace_stop"() : () -> ()
    %40 = vector.extract_strided_slice %39 {offsets = [0, 0, 0], sizes = [1, 32, 8], strides = [1, 1, 1]} : vector<4x32x8xf32> to vector<1x32x8xf32>
    %41 = vector.shape_cast %40 : vector<1x32x8xf32> to vector<32x8xf32>
    %c0_23 = arith.constant 0 : index
    %c0_24 = arith.constant 0 : index
    %42 = vector.load %arg22[%c0_23, %c0_24] : memref<64x32xf32, #tpu.memory_space<vmem>>, vector<32x8xf32>
    tpu.vector_store %arg22[%c0_23, %c0_24], %41 {strides = array<i32>} : memref<64x32xf32, #tpu.memory_space<vmem>>, vector<32x8xf32>,
    %43 = vector.extract_strided_slice %39 {offsets = [1, 0, 0], sizes = [1, 32, 8], strides = [1, 1, 1]} : vector<4x32x8xf32> to vector<1x32x8xf32>
    %44 = vector.shape_cast %43 : vector<1x32x8xf32> to vector<32x8xf32>
    %c0_25 = arith.constant 0 : index
    %c8_26 = arith.constant 8 : index
    %45 = vector.load %arg22[%c0_25, %c8_26] : memref<64x32xf32, #tpu.memory_space<vmem>>, vector<32x8xf32>
    tpu.vector_store %arg22[%c0_25, %c8_26], %44 {strides = array<i32>} : memref<64x32xf32, #tpu.memory_space<vmem>>, vector<32x8xf32>,
    %46 = vector.extract_strided_slice %39 {offsets = [2, 0, 0], sizes = [1, 32, 8], strides = [1, 1, 1]} : vector<4x32x8xf32> to vector<1x32x8xf32>
    %47 = vector.shape_cast %46 : vector<1x32x8xf32> to vector<32x8xf32>
    %c0_27 = arith.constant 0 : index
    %c16_28 = arith.constant 16 : index
    %48 = vector.load %arg22[%c0_27, %c16_28] : memref<64x32xf32, #tpu.memory_space<vmem>>, vector<32x8xf32>
    tpu.vector_store %arg22[%c0_27, %c16_28], %47 {strides = array<i32>} : memref<64x32xf32, #tpu.memory_space<vmem>>, vector<32x8xf32>,
    %49 = vector.extract_strided_slice %39 {offsets = [3, 0, 0], sizes = [1, 32, 8], strides = [1, 1, 1]} : vector<4x32x8xf32> to vector<1x32x8xf32>
    %50 = vector.shape_cast %49 : vector<1x32x8xf32> to vector<32x8xf32>
    %c0_29 = arith.constant 0 : index
    %c24_30 = arith.constant 24 : index
    %51 = vector.load %arg22[%c0_29, %c24_30] : memref<64x32xf32, #tpu.memory_space<vmem>>, vector<32x8xf32>
    tpu.vector_store %arg22[%c0_29, %c24_30], %50 {strides = array<i32>} : memref<64x32xf32, #tpu.memory_space<vmem>>, vector<32x8xf32>,
    %c0_31 = arith.constant 0 : index
    %c0_32 = arith.constant 0 : index
    %52 = vector.load %arg22[%c0_31, %c0_32] : memref<64x32xf32, #tpu.memory_space<vmem>>, vector<32x32xf32>
    %53 = arith.truncf %52 : vector<32x32xf32> to vector<32x32xbf16>
    %c0_33 = arith.constant 0 : index
    %c0_34 = arith.constant 0 : index
    %54 = vector.load %arg9[%c0_33, %c0_34] : memref<32x32xbf16, #tpu.memory_space<vmem>>, vector<32x32xbf16>
    %cst_35 = arith.constant dense<0.000000e+00> : vector<32x32xf32>
    %55 = tpu.matmul %53, %54, %cst_35 {dimension_numbers = #tpu.dot_dimension_numbers<[1], [0], [0], [1], [0, 0, 1, 1], [], []>} : vector<32x32xbf16>, vector<32x32xbf16>, vector<32x32xf32> -> vector<32x32xf32>
    %c0_36 = arith.constant 0 : index
    %c0_37 = arith.constant 0 : index
    %56 = vector.load %arg10[%c0_36, %c0_37] : memref<1x32xf32, #tpu.memory_space<vmem>>, vector<1x32xf32>
    %57 = vector.broadcast %56 : vector<1x32xf32> to vector<32x32xf32>
    %58 = arith.addf %55, %57 : vector<32x32xf32>
    %59 = arith.addf %8, %58 : vector<32x32xf32>
    %c0_38 = arith.constant 0 : index
    %c0_39 = arith.constant 0 : index
    %60 = vector.load %arg11[%c0_38, %c0_39] : memref<1x32xf32, #tpu.memory_space<vmem>>, vector<1x32xf32>
    %c0_40 = arith.constant 0 : index
    %c0_41 = arith.constant 0 : index
    %61 = vector.load %arg12[%c0_40, %c0_41] : memref<1x32xf32, #tpu.memory_space<vmem>>, vector<1x32xf32>
    %cst_42 = arith.constant dense<0.000000e+00> : vector<32xf32>
    %62 = vector.multi_reduction <add>, %59, %cst_42 [1] : vector<32x32xf32> to vector<32xf32>
    %63 = vector.shape_cast %62 : vector<32xf32> to vector<32x1xf32>
    %cst_43 = arith.constant 3.200000e+01 : f32
    %64 = vector.broadcast %cst_43 : f32 to vector<32x1xf32>
    %65 = arith.divf %63, %64 : vector<32x1xf32>
    %66 = vector.broadcast %65 : vector<32x1xf32> to vector<32x32xf32>
    %67 = arith.subf %59, %66 : vector<32x32xf32>
    %68 = arith.mulf %67, %67 : vector<32x32xf32>
    %cst_44 = arith.constant dense<0.000000e+00> : vector<32xf32>
    %69 = vector.multi_reduction <add>, %68, %cst_44 [1] : vector<32x32xf32> to vector<32xf32>
    %70 = vector.shape_cast %69 : vector<32xf32> to vector<32x1xf32>
    %cst_45 = arith.constant 3.200000e+01 : f32
    %71 = vector.broadcast %cst_45 : f32 to vector<32x1xf32>
    %72 = arith.divf %70, %71 : vector<32x1xf32>
    %73 = vector.broadcast %65 : vector<32x1xf32> to vector<32x32xf32>
    %74 = arith.subf %59, %73 : vector<32x32xf32>
    %cst_46 = arith.constant 9.99999974E-6 : f32
    %75 = vector.broadcast %cst_46 : f32 to vector<32x1xf32>
    %76 = arith.addf %72, %75 : vector<32x1xf32>
    %77 = math.rsqrt %76 : vector<32x1xf32>
    %78 = vector.broadcast %77 : vector<32x1xf32> to vector<32x32xf32>
    %79 = arith.mulf %74, %78 : vector<32x32xf32>
    %80 = vector.broadcast %60 : vector<1x32xf32> to vector<32x32xf32>
    %81 = arith.mulf %79, %80 : vector<32x32xf32>
    %82 = vector.broadcast %61 : vector<1x32xf32> to vector<32x32xf32>
    %83 = arith.addf %81, %82 : vector<32x32xf32>
    %84 = arith.truncf %83 : vector<32x32xf32> to vector<32x32xbf16>
    %c0_47 = arith.constant 0 : index
    %c0_48 = arith.constant 0 : index
    %85 = vector.load %arg13[%c0_47, %c0_48] : memref<32x128xbf16, #tpu.memory_space<vmem>>, vector<32x128xbf16>
    %cst_49 = arith.constant dense<0.000000e+00> : vector<32x128xf32>
    %86 = tpu.matmul %84, %85, %cst_49 {dimension_numbers = #tpu.dot_dimension_numbers<[1], [0], [0], [1], [0, 0, 1, 1], [], []>} : vector<32x32xbf16>, vector<32x128xbf16>, vector<32x128xf32> -> vector<32x128xf32>
    %c0_50 = arith.constant 0 : index
    %c0_51 = arith.constant 0 : index
    %87 = vector.load %arg14[%c0_50, %c0_51] : memref<1x128xf32, #tpu.memory_space<vmem>>, vector<1x128xf32>
    %88 = vector.broadcast %87 : vector<1x128xf32> to vector<32x128xf32>
    %89 = arith.addf %86, %88 : vector<32x128xf32>
    %cst_52 = arith.constant 5.000000e-01 : f32
    %90 = vector.broadcast %cst_52 : f32 to vector<32x128xf32>
    %91 = arith.mulf %90, %89 : vector<32x128xf32>
    %cst_53 = arith.constant 0.707106769 : f32
    %92 = vector.broadcast %cst_53 : f32 to vector<32x128xf32>
    %93 = arith.mulf %89, %92 : vector<32x128xf32>
    %cst_54 = arith.constant 0.000000e+00 : f32
    %94 = vector.broadcast %cst_54 : f32 to vector<32x128xf32>
    %95 = arith.cmpf olt, %93, %94 : vector<32x128xf32>
    %cst_55 = arith.constant -1.000000e+00 : f32
    %cst_56 = arith.constant 1.000000e+00 : f32
    %96 = vector.broadcast %cst_55 : f32 to vector<32x128xf32>
    %97 = vector.broadcast %cst_56 : f32 to vector<32x128xf32>
    %98 = arith.select %95, %96, %97 : vector<32x128xi1>, vector<32x128xf32>
    %99 = math.absf %93 : vector<32x128xf32>
    %cst_57 = arith.constant 0.327591091 : f32
    %100 = vector.broadcast %cst_57 : f32 to vector<32x128xf32>
    %101 = arith.mulf %100, %99 : vector<32x128xf32>
    %cst_58 = arith.constant 1.000000e+00 : f32
    %102 = vector.broadcast %cst_58 : f32 to vector<32x128xf32>
    %103 = arith.addf %102, %101 : vector<32x128xf32>
    %cst_59 = arith.constant 1.000000e+00 : f32
    %104 = vector.broadcast %cst_59 : f32 to vector<32x128xf32>
    %105 = arith.divf %104, %103 : vector<32x128xf32>
    %cst_60 = arith.constant 1.06140542 : f32
    %106 = vector.broadcast %cst_60 : f32 to vector<32x128xf32>
    %107 = arith.mulf %106, %105 : vector<32x128xf32>
    %cst_61 = arith.constant -1.45315206 : f32
    %108 = vector.broadcast %cst_61 : f32 to vector<32x128xf32>
    %109 = arith.addf %107, %108 : vector<32x128xf32>
    %110 = arith.mulf %109, %105 : vector<32x128xf32>
    %cst_62 = arith.constant 1.42141378 : f32
    %111 = vector.broadcast %cst_62 : f32 to vector<32x128xf32>
    %112 = arith.addf %110, %111 : vector<32x128xf32>
    %113 = arith.mulf %112, %105 : vector<32x128xf32>
    %cst_63 = arith.constant -0.284496725 : f32
    %114 = vector.broadcast %cst_63 : f32 to vector<32x128xf32>
    %115 = arith.addf %113, %114 : vector<32x128xf32>
    %116 = arith.mulf %115, %105 : vector<32x128xf32>
    %cst_64 = arith.constant 0.254829586 : f32
    %117 = vector.broadcast %cst_64 : f32 to vector<32x128xf32>
    %118 = arith.addf %116, %117 : vector<32x128xf32>
    %119 = arith.mulf %118, %105 : vector<32x128xf32>
    %cst_65 = arith.constant 0.000000e+00 : f32
    %120 = vector.broadcast %cst_65 : f32 to vector<32x128xf32>
    %121 = arith.subf %120, %99 : vector<32x128xf32>
    %122 = arith.mulf %121, %99 : vector<32x128xf32>
    %123 = math.exp %122 : vector<32x128xf32>
    %124 = arith.mulf %119, %123 : vector<32x128xf32>
    %cst_66 = arith.constant 1.000000e+00 : f32
    %125 = vector.broadcast %cst_66 : f32 to vector<32x128xf32>
    %126 = arith.subf %125, %124 : vector<32x128xf32>
    %127 = arith.mulf %98, %126 : vector<32x128xf32>
    %cst_67 = arith.constant 1.000000e+00 : f32
    %128 = vector.broadcast %cst_67 : f32 to vector<32x128xf32>
    %129 = arith.addf %128, %127 : vector<32x128xf32>
    %130 = arith.mulf %91, %129 : vector<32x128xf32>
    %131 = arith.truncf %130 : vector<32x128xf32> to vector<32x128xbf16>
    %c0_68 = arith.constant 0 : index
    %c0_69 = arith.constant 0 : index
    %132 = vector.load %arg15[%c0_68, %c0_69] : memref<128x32xbf16, #tpu.memory_space<vmem>>, vector<128x32xbf16>
    %cst_70 = arith.constant dense<0.000000e+00> : vector<32x32xf32>
    %133 = tpu.matmul %131, %132, %cst_70 {dimension_numbers = #tpu.dot_dimension_numbers<[1], [0], [0], [1], [0, 0, 1, 1], [], []>} : vector<32x128xbf16>, vector<128x32xbf16>, vector<32x32xf32> -> vector<32x32xf32>
    %c0_71 = arith.constant 0 : index
    %c0_72 = arith.constant 0 : index
    %134 = vector.load %arg16[%c0_71, %c0_72] : memref<1x32xf32, #tpu.memory_space<vmem>>, vector<1x32xf32>
    %135 = vector.broadcast %134 : vector<1x32xf32> to vector<32x32xf32>
    %136 = arith.addf %133, %135 : vector<32x32xf32>
    %137 = arith.addf %83, %136 : vector<32x32xf32>
    %c0_73 = arith.constant 0 : index
    %c0_74 = arith.constant 0 : index
    %138 = vector.load %arg17[%c0_73, %c0_74] : memref<1x32xf32, #tpu.memory_space<vmem>>, vector<1x32xf32>
    %c0_75 = arith.constant 0 : index
    %c0_76 = arith.constant 0 : index
    %139 = vector.load %arg18[%c0_75, %c0_76] : memref<1x32xf32, #tpu.memory_space<vmem>>, vector<1x32xf32>
    %cst_77 = arith.constant dense<0.000000e+00> : vector<32xf32>
    %140 = vector.multi_reduction <add>, %137, %cst_77 [1] : vector<32x32xf32> to vector<32xf32>
    %141 = vector.shape_cast %140 : vector<32xf32> to vector<32x1xf32>
    %cst_78 = arith.constant 3.200000e+01 : f32
    %142 = vector.broadcast %cst_78 : f32 to vector<32x1xf32>
    %143 = arith.divf %141, %142 : vector<32x1xf32>
    %144 = vector.broadcast %143 : vector<32x1xf32> to vector<32x32xf32>
    %145 = arith.subf %137, %144 : vector<32x32xf32>
    %146 = arith.mulf %145, %145 : vector<32x32xf32>
    %cst_79 = arith.constant dense<0.000000e+00> : vector<32xf32>
    %147 = vector.multi_reduction <add>, %146, %cst_79 [1] : vector<32x32xf32> to vector<32xf32>
    %148 = vector.shape_cast %147 : vector<32xf32> to vector<32x1xf32>
    %cst_80 = arith.constant 3.200000e+01 : f32
    %149 = vector.broadcast %cst_80 : f32 to vector<32x1xf32>
    %150 = arith.divf %148, %149 : vector<32x1xf32>
    %151 = vector.broadcast %143 : vector<32x1xf32> to vector<32x32xf32>
    %152 = arith.subf %137, %151 : vector<32x32xf32>
    %cst_81 = arith.constant 9.99999974E-6 : f32
    %153 = vector.broadcast %cst_81 : f32 to vector<32x1xf32>
    %154 = arith.addf %150, %153 : vector<32x1xf32>
    %155 = math.rsqrt %154 : vector<32x1xf32>
    %156 = vector.broadcast %155 : vector<32x1xf32> to vector<32x32xf32>
    %157 = arith.mulf %152, %156 : vector<32x32xf32>
    %158 = vector.broadcast %138 : vector<1x32xf32> to vector<32x32xf32>
    %159 = arith.mulf %157, %158 : vector<32x32xf32>
    %160 = vector.broadcast %139 : vector<1x32xf32> to vector<32x32xf32>
    %161 = arith.addf %159, %160 : vector<32x32xf32>
    %c0_82 = arith.constant 0 : index
    %c0_83 = arith.constant 0 : index
    %c0_84 = arith.constant 0 : index
    %162 = vector.load %arg19[%c0_82, %c0_83, %c0_84] : memref<1x32x32xf32, #tpu.memory_space<vmem>>, vector<1x32x32xf32>
    %163 = vector.shape_cast %162 : vector<1x32x32xf32> to vector<32x32xf32>
    %164 = vector.shape_cast %161 : vector<32x32xf32> to vector<1x32x32xf32>
    tpu.vector_store %arg19[%c0_82, %c0_83, %c0_84], %164 {strides = array<i32>} : memref<1x32x32xf32, #tpu.memory_space<vmem>>, vector<1x32x32xf32>,
    return
  }
  func.func @transform_0(%arg0: i32, %arg1: i32) -> (i32, i32, i32) {
    %c0_i32 = arith.constant 0 : i32
    %c0_i32_0 = arith.constant 0 : i32
    %c0_i32_1 = arith.constant 0 : i32
    return %arg0, %c0_i32, %c0_i32_0 : i32, i32, i32
  }
  func.func @transform_1(%arg0: i32, %arg1: i32) -> (i32, i32) {
    %c0_i32 = arith.constant 0 : i32
    %c0_i32_0 = arith.constant 0 : i32
    %c0_i32_1 = arith.constant 0 : i32
    return %c0_i32, %c0_i32_0 : i32, i32
  }
  func.func @transform_2(%arg0: i32, %arg1: i32) -> (i32, i32) {
    %c0_i32 = arith.constant 0 : i32
    %c0_i32_0 = arith.constant 0 : i32
    %c0_i32_1 = arith.constant 0 : i32
    return %c0_i32, %c0_i32_0 : i32, i32
  }
  func.func @transform_3(%arg0: i32, %arg1: i32) -> (i32, i32) {
    %c0_i32 = arith.constant 0 : i32
    %c0_i32_0 = arith.constant 0 : i32
    %c0_i32_1 = arith.constant 0 : i32
    return %c0_i32, %c0_i32_0 : i32, i32
  }
  func.func @transform_4(%arg0: i32, %arg1: i32) -> (i32, i32) {
    %c0_i32 = arith.constant 0 : i32
    %c0_i32_0 = arith.constant 0 : i32
    %c0_i32_1 = arith.constant 0 : i32
    return %c0_i32, %c0_i32_0 : i32, i32
  }
  func.func @transform_5(%arg0: i32, %arg1: i32) -> (i32, i32) {
    %c0_i32 = arith.constant 0 : i32
    %c0_i32_0 = arith.constant 0 : i32
    %c0_i32_1 = arith.constant 0 : i32
    return %c0_i32, %c0_i32_0 : i32, i32
  }
  func.func @transform_6(%arg0: i32, %arg1: i32) -> (i32, i32) {
    %c0_i32 = arith.constant 0 : i32
    %c0_i32_0 = arith.constant 0 : i32
    %c0_i32_1 = arith.constant 0 : i32
    return %c0_i32, %c0_i32_0 : i32, i32
  }
  func.func @transform_7(%arg0: i32, %arg1: i32) -> (i32, i32) {
    %c0_i32 = arith.constant 0 : i32
    %c0_i32_0 = arith.constant 0 : i32
    %c0_i32_1 = arith.constant 0 : i32
    return %c0_i32, %c0_i32_0 : i32, i32
  }
  func.func @transform_8(%arg0: i32, %arg1: i32) -> (i32, i32) {
    %c0_i32 = arith.constant 0 : i32
    %c0_i32_0 = arith.constant 0 : i32
    %c0_i32_1 = arith.constant 0 : i32
    return %c0_i32, %c0_i32_0 : i32, i32
  }
  func.func @transform_9(%arg0: i32, %arg1: i32) -> (i32, i32) {
    %c0_i32 = arith.constant 0 : i32
    %c0_i32_0 = arith.constant 0 : i32
    %c0_i32_1 = arith.constant 0 : i32
    return %c0_i32, %c0_i32_0 : i32, i32
  }
  func.func @transform_10(%arg0: i32, %arg1: i32) -> (i32, i32) {
    %c0_i32 = arith.constant 0 : i32
    %c0_i32_0 = arith.constant 0 : i32
    %c0_i32_1 = arith.constant 0 : i32
    return %c0_i32, %c0_i32_0 : i32, i32
  }
  func.func @transform_11(%arg0: i32, %arg1: i32) -> (i32, i32) {
    %c0_i32 = arith.constant 0 : i32
    %c0_i32_0 = arith.constant 0 : i32
    %c0_i32_1 = arith.constant 0 : i32
    return %c0_i32, %c0_i32_0 : i32, i32
  }
  func.func @transform_12(%arg0: i32, %arg1: i32) -> (i32, i32) {
    %c0_i32 = arith.constant 0 : i32
    %c0_i32_0 = arith.constant 0 : i32
    %c0_i32_1 = arith.constant 0 : i32
    return %c0_i32, %c0_i32_0 : i32, i32
  }
  func.func @transform_13(%arg0: i32, %arg1: i32) -> (i32, i32) {
    %c0_i32 = arith.constant 0 : i32
    %c0_i32_0 = arith.constant 0 : i32
    %c0_i32_1 = arith.constant 0 : i32
    return %c0_i32, %c0_i32_0 : i32, i32
  }
  func.func @transform_14(%arg0: i32, %arg1: i32) -> (i32, i32) {
    %c0_i32 = arith.constant 0 : i32
    %c0_i32_0 = arith.constant 0 : i32
    %c0_i32_1 = arith.constant 0 : i32
    return %c0_i32, %c0_i32_0 : i32, i32
  }
  func.func @transform_15(%arg0: i32, %arg1: i32) -> (i32, i32) {
    %c0_i32 = arith.constant 0 : i32
    %c0_i32_0 = arith.constant 0 : i32
    %c0_i32_1 = arith.constant 0 : i32
    return %c0_i32, %c0_i32_0 : i32, i32
  }
  func.func @transform_16(%arg0: i32, %arg1: i32) -> (i32, i32) {
    %c0_i32 = arith.constant 0 : i32
    %c0_i32_0 = arith.constant 0 : i32
    %c0_i32_1 = arith.constant 0 : i32
    return %c0_i32, %c0_i32_0 : i32, i32
  }
  func.func @transform_17(%arg0: i32, %arg1: i32) -> (i32, i32, i32) {
    %c0_i32 = arith.constant 0 : i32
    %c0_i32_0 = arith.constant 0 : i32
    return %arg0, %arg1, %c0_i32 : i32, i32, i32
  }
}

</mosaic_0001>

<llo_original>
// kernel: tpu_custom_call.1
$region0: #{tpu_custom_call.1}
  #allocation0 [shape = 'u32[]', space=smem, size = 0x4, offset = 0x4, fixed_abs, tag = 'smem constant byte address 0x4 - core index']
  #allocation1 [shape = 'u32[144,128]{1,0:T(1,128)}', space=vmem, size = 0x12000, scoped, tag = 'internal scratch']
  #allocation2 [shape = 'bf16[4,8,64]{2,1,0:T(8,128)(2,1)}', space=vmem, size = 0x2000, scoped, tag = 'scratch operand']
  #allocation3 [shape = 'bf16[4,64,8]{2,1,0:T(16,128)(2,1)}', space=vmem, size = 0x10000, scoped, tag = 'scratch operand']
  #allocation4 [shape = 'f32[64,32]{1,0:T(8,128)}', space=vmem, size = 0x8000, scoped, tag = 'scratch operand']
  %s0 = inlined_call_operand.vmem [shape: bf16[2,64,32], index: 0, kind: input, shape index: {}]
  %s1 = inlined_call_operand.vmem [shape: bf16[32,32], index: 1, kind: input, shape index: {}]
  %s2 = inlined_call_operand.vmem [shape: f32[1,32], index: 2, kind: input, shape index: {}]
  %s3 = inlined_call_operand.vmem [shape: bf16[32,32], index: 3, kind: input, shape index: {}]
  %s4 = inlined_call_operand.vmem [shape: f32[1,32], index: 4, kind: input, shape index: {}]
  %s5 = inlined_call_operand.vmem [shape: bf16[32,32], index: 5, kind: input, shape index: {}]
  %s6 = inlined_call_operand.vmem [shape: f32[1,32], index: 6, kind: input, shape index: {}]
  %s7 = inlined_call_operand.vmem [shape: bf16[32,32], index: 7, kind: input, shape index: {}]
  %s8 = inlined_call_operand.vmem [shape: f32[1,32], index: 8, kind: input, shape index: {}]
  %s9 = inlined_call_operand.vmem [shape: f32[1,32], index: 9, kind: input, shape index: {}]
  %s10 = inlined_call_operand.vmem [shape: f32[1,32], index: 10, kind: input, shape index: {}]
  %s11 = inlined_call_operand.vmem [shape: bf16[32,128], index: 11, kind: input, shape index: {}]
  %s12 = inlined_call_operand.vmem [shape: f32[1,128], index: 12, kind: input, shape index: {}]
  %s13 = inlined_call_operand.vmem [shape: bf16[128,32], index: 13, kind: input, shape index: {}]
  %s14 = inlined_call_operand.vmem [shape: f32[1,32], index: 14, kind: input, shape index: {}]
  %s15 = inlined_call_operand.vmem [shape: f32[1,32], index: 15, kind: input, shape index: {}]
  %s16 = inlined_call_operand.vmem [shape: f32[1,32], index: 16, kind: input, shape index: {}]
  %s17 = inlined_call_operand.vmem [shape: f32[2,64,32], index: 17, kind: output, shape index: {}]
  %s18 = sld [smem:[#allocation0]]
  $region105: #{tpu_custom_call.1} parent=0
    _
  %s20 = ssub.s32 1, %s18
  %s21 = scalar_select 0, %s20, %s18
  loop: start=0, step=1, limit=6
  $region2: #{tpu_custom_call.1} parent=0 // loop_pre_header
    _
  $region3: #{tpu_custom_call.1} parent=0 // loop_header
    %s23 = sphi 0, %s27
    %p24 = scmp.ge.s32.totalorder %s23, 6
    %s30 = sphi 0, %s42
    %s31 = sphi 0, %s38
    %s32 = sphi 0, %s30
    %s33 = sphi 0, %s31
    %s34 = sphi 0, %s32
    %s35 = sphi 0, %s33
    %s45 = sphi 0, %s47
    %s48 = sphi 0, %s45
    %s49 = sphi 0, %s48
    %s65 = sphi 0, %s49
    %s69 = sphi 0, %s69
    %s71 = sphi 0, %s69
    %s72 = sphi 0, %s71
    %s86 = sphi 0, %s72
    %s90 = sphi 0, %s90
    %s92 = sphi 0, %s90
    %s93 = sphi 0, %s92
    %s107 = sphi 0, %s93
    %s111 = sphi 0, %s111
    %s113 = sphi 0, %s111
    %s114 = sphi 0, %s113
    %s128 = sphi 0, %s114
    %s132 = sphi 0, %s132
    %s134 = sphi 0, %s132
    %s135 = sphi 0, %s134
    %s149 = sphi 0, %s135
    %s153 = sphi 0, %s153
    %s155 = sphi 0, %s153
    %s156 = sphi 0, %s155
    %s170 = sphi 0, %s156
    %s174 = sphi 0, %s174
    %s176 = sphi 0, %s174
    %s177 = sphi 0, %s176
    %s191 = sphi 0, %s177
    %s195 = sphi 0, %s195
    %s197 = sphi 0, %s195
    %s198 = sphi 0, %s197
    %s212 = sphi 0, %s198
    %s216 = sphi 0, %s216
    %s218 = sphi 0, %s216
    %s219 = sphi 0, %s218
    %s233 = sphi 0, %s219
    %s237 = sphi 0, %s237
    %s239 = sphi 0, %s237
    %s240 = sphi 0, %s239
    %s254 = sphi 0, %s240
    %s258 = sphi 0, %s258
    %s260 = sphi 0, %s258
    %s261 = sphi 0, %s260
    %s275 = sphi 0, %s261
    %s279 = sphi 0, %s279
    %s281 = sphi 0, %s279
    %s282 = sphi 0, %s281
    %s296 = sphi 0, %s282
    %s300 = sphi 0, %s300
    %s302 = sphi 0, %s300
    %s303 = sphi 0, %s302
    %s317 = sphi 0, %s303
    %s321 = sphi 0, %s321
    %s323 = sphi 0, %s321
    %s324 = sphi 0, %s323
    %s338 = sphi 0, %s324
    %s342 = sphi 0, %s342
    %s344 = sphi 0, %s342
    %s345 = sphi 0, %s344
    %s359 = sphi 0, %s345
    %s363 = sphi 0, %s363
    %s365 = sphi 0, %s363
    %s366 = sphi 0, %s365
    %s380 = sphi 0, %s366
    %s384 = sphi 0, %s384
    %s386 = sphi 0, %s384
    %s387 = sphi 0, %s386
    %s401 = sphi 0, %s387
    %s409 = sphi 0, %s411
    %s412 = sphi 0, %s409
    %s413 = sphi 0, %s412
    %s429 = sphi 0, %s413
  $region4: #{tpu_custom_call.1} parent=0 // loop_header_branch
    %26 = sbr.rel (%p24) target = $region8
  $region5: #{tpu_custom_call.1} parent=0 // loop_body
    %s28 = ssub.s32 %s23, 1
    %s29 = ssub.s32 %s23, 2
    %s36 = sadd.s32 1, %s31
    %p37 = scmp.ge.s32.totalorder %s36, 2
    %s38 = scalar_select %p37, 0, %s36
    %s39 = sadd.s32 1, %s30
    %s40 = scalar_select %p37, %s39, %s30
    %p41 = scmp.ge.s32.totalorder %s40, 2
    %s42 = scalar_select %p41, 0, %s40
    %s43 = ssub.s32 %s30, %s42
    %p44 = scmp.eq.s32.totalorder %s43, 0
    %s46 = sadd.s32 %s45, 1
    %s47 = scalar_select %p44, %s45, %s46
    %p50 = pneg %p44
    %p51 = scmp.eq.s32.totalorder %s23, 3
    %p52 = por %p50, %p51
    %p53 = scmp.ne.s32.totalorder %s45, %s48
    %p54 = scmp.eq.s32.totalorder %s23, 0
    %p55 = por %p53, %p54
    %p56 = scmp.ne.s32.totalorder %s45, %s48
    %p57 = scmp.eq.s32.totalorder %s28, 3
    %p58 = por %p56, %p57
    %p59 = scmp.ne.s32.totalorder %s48, %s49
    %p60 = scmp.eq.s32.totalorder %s28, 0
    %p61 = por %p59, %p60
    %p62 = scmp.ne.s32.totalorder %s48, %s49
    %p63 = scmp.eq.s32.totalorder %s29, 3
    %p64 = por %p62, %p63
    %p66 = scmp.ne.s32.totalorder %s49, %s65
    %p67 = scmp.eq.s32.totalorder %s29, 0
    %p68 = por %p66, %p67
    %s70 = sadd.s32 %s69, 1
    %p73 = scmp.eq.s32.totalorder %s23, 3
    %p74 = scmp.ne.s32.totalorder %s69, %s71
    %p75 = scmp.eq.s32.totalorder %s23, 0
    %p76 = por %p74, %p75
    %p77 = scmp.ne.s32.totalorder %s69, %s71
    %p78 = scmp.eq.s32.totalorder %s28, 3
    %p79 = por %p77, %p78
    %p80 = scmp.ne.s32.totalorder %s71, %s72
    %p81 = scmp.eq.s32.totalorder %s28, 0
    %p82 = por %p80, %p81
    %p83 = scmp.ne.s32.totalorder %s71, %s72
    %p84 = scmp.eq.s32.totalorder %s29, 3
    %p85 = por %p83, %p84
    %p87 = scmp.ne.s32.totalorder %s72, %s86
    %p88 = scmp.eq.s32.totalorder %s29, 0
    %p89 = por %p87, %p88
    %s91 = sadd.s32 %s90, 1
    %p94 = scmp.eq.s32.totalorder %s23, 3
    %p95 = scmp.ne.s32.totalorder %s90, %s92
    %p96 = scmp.eq.s32.totalorder %s23, 0
    %p97 = por %p95, %p96
    %p98 = scmp.ne.s32.totalorder %s90, %s92
    %p99 = scmp.eq.s32.totalorder %s28, 3
    %p100 = por %p98, %p99
    %p101 = scmp.ne.s32.totalorder %s92, %s93
    %p102 = scmp.eq.s32.totalorder %s28, 0
    %p103 = por %p101, %p102
    %p104 = scmp.ne.s32.totalorder %s92, %s93
    %p105 = scmp.eq.s32.totalorder %s29, 3
    %p106 = por %p104, %p105
    %p108 = scmp.ne.s32.totalorder %s93, %s107
    %p109 = scmp.eq.s32.totalorder %s29, 0
    %p110 = por %p108, %p109
    %s112 = sadd.s32 %s111, 1
    %p115 = scmp.eq.s32.totalorder %s23, 3
    %p116 = scmp.ne.s32.totalorder %s111, %s113
    %p117 = scmp.eq.s32.totalorder %s23, 0
    %p118 = por %p116, %p117
    %p119 = scmp.ne.s32.totalorder %s111, %s113
    %p120 = scmp.eq.s32.totalorder %s28, 3
    %p121 = por %p119, %p120
    %p122 = scmp.ne.s32.totalorder %s113, %s114
    %p123 = scmp.eq.s32.totalorder %s28, 0
    %p124 = por %p122, %p123
    %p125 = scmp.ne.s32.totalorder %s113, %s114
    %p126 = scmp.eq.s32.totalorder %s29, 3
    %p127 = por %p125, %p126
    %p129 = scmp.ne.s32.totalorder %s114, %s128
    %p130 = scmp.eq.s32.totalorder %s29, 0
    %p131 = por %p129, %p130
    %s133 = sadd.s32 %s132, 1
    %p136 = scmp.eq.s32.totalorder %s23, 3
    %p137 = scmp.ne.s32.totalorder %s132, %s134
    %p138 = scmp.eq.s32.totalorder %s23, 0
    %p139 = por %p137, %p138
    %p140 = scmp.ne.s32.totalorder %s132, %s134
    %p141 = scmp.eq.s32.totalorder %s28, 3
    %p142 = por %p140, %p141
    %p143 = scmp.ne.s32.totalorder %s134, %s135
    %p144 = scmp.eq.s32.totalorder %s28, 0
    %p145 = por %p143, %p144
    %p146 = scmp.ne.s32.totalorder %s134, %s135
    %p147 = scmp.eq.s32.totalorder %s29, 3
    %p148 = por %p146, %p147
    %p150 = scmp.ne.s32.totalorder %s135, %s149
    %p151 = scmp.eq.s32.totalorder %s29, 0
    %p152 = por %p150, %p151
    %s154 = sadd.s32 %s153, 1
    %p157 = scmp.eq.s32.totalorder %s23, 3
    %p158 = scmp.ne.s32.totalorder %s153, %s155
    %p159 = scmp.eq.s32.totalorder %s23, 0
    %p160 = por %p158, %p159
    %p161 = scmp.ne.s32.totalorder %s153, %s155
    %p162 = scmp.eq.s32.totalorder %s28, 3
    %p163 = por %p161, %p162
    %p164 = scmp.ne.s32.totalorder %s155, %s156
    %p165 = scmp.eq.s32.totalorder %s28, 0
    %p166 = por %p164, %p165
    %p167 = scmp.ne.s32.totalorder %s155, %s156
    %p168 = scmp.eq.s32.totalorder %s29, 3
    %p169 = por %p167, %p168
    %p171 = scmp.ne.s32.totalorder %s156, %s170
    %p172 = scmp.eq.s32.totalorder %s29, 0
    %p173 = por %p171, %p172
    %s175 = sadd.s32 %s174, 1
    %p178 = scmp.eq.s32.totalorder %s23, 3
    %p179 = scmp.ne.s32.totalorder %s174, %s176
    %p180 = scmp.eq.s32.totalorder %s23, 0
    %p181 = por %p179, %p180
    %p182 = scmp.ne.s32.totalorder %s174, %s176
    %p183 = scmp.eq.s32.totalorder %s28, 3
    %p184 = por %p182, %p183
    %p185 = scmp.ne.s32.totalorder %s176, %s177
    %p186 = scmp.eq.s32.totalorder %s28, 0
    %p187 = por %p185, %p186
    %p188 = scmp.ne.s32.totalorder %s176, %s177
    %p189 = scmp.eq.s32.totalorder %s29, 3
    %p190 = por %p188, %p189
    %p192 = scmp.ne.s32.totalorder %s177, %s191
    %p193 = scmp.eq.s32.totalorder %s29, 0
    %p194 = por %p192, %p193
    %s196 = sadd.s32 %s195, 1
    %p199 = scmp.eq.s32.totalorder %s23, 3
    %p200 = scmp.ne.s32.totalorder %s195, %s197
    %p201 = scmp.eq.s32.totalorder %s23, 0
    %p202 = por %p200, %p201
    %p203 = scmp.ne.s32.totalorder %s195, %s197
    %p204 = scmp.eq.s32.totalorder %s28, 3
    %p205 = por %p203, %p204
    %p206 = scmp.ne.s32.totalorder %s197, %s198
    %p207 = scmp.eq.s32.totalorder %s28, 0
    %p208 = por %p206, %p207
    %p209 = scmp.ne.s32.totalorder %s197, %s198
    %p210 = scmp.eq.s32.totalorder %s29, 3
    %p211 = por %p209, %p210
    %p213 = scmp.ne.s32.totalorder %s198, %s212
    %p214 = scmp.eq.s32.totalorder %s29, 0
    %p215 = por %p213, %p214
    %s217 = sadd.s32 %s216, 1
    %p220 = scmp.eq.s32.totalorder %s23, 3
    %p221 = scmp.ne.s32.totalorder %s216, %s218
    %p222 = scmp.eq.s32.totalorder %s23, 0
    %p223 = por %p221, %p222
    %p224 = scmp.ne.s32.totalorder %s216, %s218
    %p225 = scmp.eq.s32.totalorder %s28, 3
    %p226 = por %p224, %p225
    %p227 = scmp.ne.s32.totalorder %s218, %s219
    %p228 = scmp.eq.s32.totalorder %s28, 0
    %p229 = por %p227, %p228
    %p230 = scmp.ne.s32.totalorder %s218, %s219
    %p231 = scmp.eq.s32.totalorder %s29, 3
    %p232 = por %p230, %p231
    %p234 = scmp.ne.s32.totalorder %s219, %s233
    %p235 = scmp.eq.s32.totalorder %s29, 0
    %p236 = por %p234, %p235
    %s238 = sadd.s32 %s237, 1
    %p241 = scmp.eq.s32.totalorder %s23, 3
    %p242 = scmp.ne.s32.totalorder %s237, %s239
    %p243 = scmp.eq.s32.totalorder %s23, 0
    %p244 = por %p242, %p243
    %p245 = scmp.ne.s32.totalorder %s237, %s239
    %p246 = scmp.eq.s32.totalorder %s28, 3
    %p247 = por %p245, %p246
    %p248 = scmp.ne.s32.totalorder %s239, %s240
    %p249 = scmp.eq.s32.totalorder %s28, 0
    %p250 = por %p248, %p249
    %p251 = scmp.ne.s32.totalorder %s239, %s240
    %p252 = scmp.eq.s32.totalorder %s29, 3
    %p253 = por %p251, %p252
    %p255 = scmp.ne.s32.totalorder %s240, %s254
    %p256 = scmp.eq.s32.totalorder %s29, 0
    %p257 = por %p255, %p256
    %s259 = sadd.s32 %s258, 1
    %p262 = scmp.eq.s32.totalorder %s23, 3
    %p263 = scmp.ne.s32.totalorder %s258, %s260
    %p264 = scmp.eq.s32.totalorder %s23, 0
    %p265 = por %p263, %p264
    %p266 = scmp.ne.s32.totalorder %s258, %s260
    %p267 = scmp.eq.s32.totalorder %s28, 3
    %p268 = por %p266, %p267
    %p269 = scmp.ne.s32.totalorder %s260, %s261
    %p270 = scmp.eq.s32.totalorder %s28, 0
    %p271 = por %p269, %p270
    %p272 = scmp.ne.s32.totalorder %s260, %s261
    %p273 = scmp.eq.s32.totalorder %s29, 3
    %p274 = por %p272, %p273
    %p276 = scmp.ne.s32.totalorder %s261, %s275
    %p277 = scmp.eq.s32.totalorder %s29, 0
    %p278 = por %p276, %p277
    %s280 = sadd.s32 %s279, 1
    %p283 = scmp.eq.s32.totalorder %s23, 3
    %p284 = scmp.ne.s32.totalorder %s279, %s281
    %p285 = scmp.eq.s32.totalorder %s23, 0
    %p286 = por %p284, %p285
    %p287 = scmp.ne.s32.totalorder %s279, %s281
    %p288 = scmp.eq.s32.totalorder %s28, 3
    %p289 = por %p287, %p288
    %p290 = scmp.ne.s32.totalorder %s281, %s282
    %p291 = scmp.eq.s32.totalorder %s28, 0
    %p292 = por %p290, %p291
    %p293 = scmp.ne.s32.totalorder %s281, %s282
    %p294 = scmp.eq.s32.totalorder %s29, 3
    %p295 = por %p293, %p294
    %p297 = scmp.ne.s32.totalorder %s282, %s296
    %p298 = scmp.eq.s32.totalorder %s29, 0
    %p299 = por %p297, %p298
    %s301 = sadd.s32 %s300, 1
    %p304 = scmp.eq.s32.totalorder %s23, 3
    %p305 = scmp.ne.s32.totalorder %s300, %s302
    %p306 = scmp.eq.s32.totalorder %s23, 0
    %p307 = por %p305, %p306
    %p308 = scmp.ne.s32.totalorder %s300, %s302
    %p309 = scmp.eq.s32.totalorder %s28, 3
    %p310 = por %p308, %p309
    %p311 = scmp.ne.s32.totalorder %s302, %s303
    %p312 = scmp.eq.s32.totalorder %s28, 0
    %p313 = por %p311, %p312
    %p314 = scmp.ne.s32.totalorder %s302, %s303
    %p315 = scmp.eq.s32.totalorder %s29, 3
    %p316 = por %p314, %p315
    %p318 = scmp.ne.s32.totalorder %s303, %s317
    %p319 = scmp.eq.s32.totalorder %s29, 0
    %p320 = por %p318, %p319
    %s322 = sadd.s32 %s321, 1
    %p325 = scmp.eq.s32.totalorder %s23, 3
    %p326 = scmp.ne.s32.totalorder %s321, %s323
    %p327 = scmp.eq.s32.totalorder %s23, 0
    %p328 = por %p326, %p327
    %p329 = scmp.ne.s32.totalorder %s321, %s323
    %p330 = scmp.eq.s32.totalorder %s28, 3
    %p331 = por %p329, %p330
    %p332 = scmp.ne.s32.totalorder %s323, %s324
    %p333 = scmp.eq.s32.totalorder %s28, 0
    %p334 = por %p332, %p333
    %p335 = scmp.ne.s32.totalorder %s323, %s324
    %p336 = scmp.eq.s32.totalorder %s29, 3
    %p337 = por %p335, %p336
    %p339 = scmp.ne.s32.totalorder %s324, %s338
    %p340 = scmp.eq.s32.totalorder %s29, 0
    %p341 = por %p339, %p340
    %s343 = sadd.s32 %s342, 1
    %p346 = scmp.eq.s32.totalorder %s23, 3
    %p347 = scmp.ne.s32.totalorder %s342, %s344
    %p348 = scmp.eq.s32.totalorder %s23, 0
    %p349 = por %p347, %p348
    %p350 = scmp.ne.s32.totalorder %s342, %s344
    %p351 = scmp.eq.s32.totalorder %s28, 3
    %p352 = por %p350, %p351
    %p353 = scmp.ne.s32.totalorder %s344, %s345
    %p354 = scmp.eq.s32.totalorder %s28, 0
    %p355 = por %p353, %p354
    %p356 = scmp.ne.s32.totalorder %s344, %s345
    %p357 = scmp.eq.s32.totalorder %s29, 3
    %p358 = por %p356, %p357
    %p360 = scmp.ne.s32.totalorder %s345, %s359
    %p361 = scmp.eq.s32.totalorder %s29, 0
    %p362 = por %p360, %p361
    %s364 = sadd.s32 %s363, 1
    %p367 = scmp.eq.s32.totalorder %s23, 3
    %p368 = scmp.ne.s32.totalorder %s363, %s365
    %p369 = scmp.eq.s32.totalorder %s23, 0
    %p370 = por %p368, %p369
    %p371 = scmp.ne.s32.totalorder %s363, %s365
    %p372 = scmp.eq.s32.totalorder %s28, 3
    %p373 = por %p371, %p372
    %p374 = scmp.ne.s32.totalorder %s365, %s366
    %p375 = scmp.eq.s32.totalorder %s28, 0
    %p376 = por %p374, %p375
    %p377 = scmp.ne.s32.totalorder %s365, %s366
    %p378 = scmp.eq.s32.totalorder %s29, 3
    %p379 = por %p377, %p378
    %p381 = scmp.ne.s32.totalorder %s366, %s380
    %p382 = scmp.eq.s32.totalorder %s29, 0
    %p383 = por %p381, %p382
    %s385 = sadd.s32 %s384, 1
    %p388 = scmp.eq.s32.totalorder %s23, 3
    %p389 = scmp.ne.s32.totalorder %s384, %s386
    %p390 = scmp.eq.s32.totalorder %s23, 0
    %p391 = por %p389, %p390
    %p392 = scmp.ne.s32.totalorder %s384, %s386
    %p393 = scmp.eq.s32.totalorder %s28, 3
    %p394 = por %p392, %p393
    %p395 = scmp.ne.s32.totalorder %s386, %s387
    %p396 = scmp.eq.s32.totalorder %s28, 0
    %p397 = por %p395, %p396
    %p398 = scmp.ne.s32.totalorder %s386, %s387
    %p399 = scmp.eq.s32.totalorder %s29, 3
    %p400 = por %p398, %p399
    %p402 = scmp.ne.s32.totalorder %s387, %s401
    %p403 = scmp.eq.s32.totalorder %s29, 0
    %p404 = por %p402, %p403
    %s405 = ssub.s32 %s30, %s42
    %s406 = ssub.s32 %s31, %s38
    %s407 = sor.u32 %s405, %s406
    %p408 = scmp.eq.s32.totalorder %s407, 0
    %s410 = sadd.s32 %s409, 1
    %s411 = scalar_select %p408, %s409, %s410
    %p414 = pneg %p408
    %p415 = scmp.eq.s32.totalorder %s23, 3
    %p416 = por %p414, %p415
    %p417 = scmp.ne.s32.totalorder %s409, %s412
    %p418 = scmp.eq.s32.totalorder %s23, 0
    %p419 = por %p417, %p418
    %p420 = scmp.ne.s32.totalorder %s409, %s412
    %p421 = scmp.eq.s32.totalorder %s28, 3
    %p422 = por %p420, %p421
    %p423 = scmp.ne.s32.totalorder %s412, %s413
    %p424 = scmp.eq.s32.totalorder %s28, 0
    %p425 = por %p423, %p424
    %p426 = scmp.ne.s32.totalorder %s412, %s413
    %p427 = scmp.eq.s32.totalorder %s29, 3
    %p428 = por %p426, %p427
    %p430 = scmp.ne.s32.totalorder %s413, %s429
    %p431 = scmp.eq.s32.totalorder %s29, 0
    %p432 = por %p430, %p431
    %p433 = scmp.le.s32.totalorder 1, %s23
    %p434 = scmp.lt.s32.totalorder %s23, 5
    %p435 = pnand %p433, %p434
    %p436 = pneg %p435
    // Predicated region
    $region9: #{tpu_custom_call.1} parent=5 // pred_check
      _
    $region10: #{tpu_custom_call.1} parent=5 // pred_check_branch
      %438 = sbr.rel (%p435) target = $region12
    $region11: #{tpu_custom_call.1} parent=5 // pred_region
      %s439 = ssub.s32 %s23, 1
      // Predicated region
      $region13: #{tpu_custom_call.1} parent=11 // pred_check
        %p440 = pneg %p82
      $region14: #{tpu_custom_call.1} parent=11 // pred_check_branch
        %442 = sbr.rel (%p440) target = $region16
      $region15: #{tpu_custom_call.1} parent=11 // pred_region
        _
      $region16: #{tpu_custom_call.1} parent=11 // pred_fallthru
        _
      // Predicated region
      $region17: #{tpu_custom_call.1} parent=11 // pred_check
        %p443 = pneg %p103
      $region18: #{tpu_custom_call.1} parent=11 // pred_check_branch
        %445 = sbr.rel (%p443) target = $region20
      $region19: #{tpu_custom_call.1} parent=11 // pred_region
        _
      $region20: #{tpu_custom_call.1} parent=11 // pred_fallthru
        _
      // Predicated region
      $region21: #{tpu_custom_call.1} parent=11 // pred_check
        %p446 = pneg %p124
      $region22: #{tpu_custom_call.1} parent=11 // pred_check_branch
        %448 = sbr.rel (%p446) target = $region24
      $region23: #{tpu_custom_call.1} parent=11 // pred_region
        _
      $region24: #{tpu_custom_call.1} parent=11 // pred_fallthru
        _
      // Predicated region
      $region25: #{tpu_custom_call.1} parent=11 // pred_check
        %p449 = pneg %p145
      $region26: #{tpu_custom_call.1} parent=11 // pred_check_branch
        %451 = sbr.rel (%p449) target = $region28
      $region27: #{tpu_custom_call.1} parent=11 // pred_region
        _
      $region28: #{tpu_custom_call.1} parent=11 // pred_fallthru
        _
      // Predicated region
      $region29: #{tpu_custom_call.1} parent=11 // pred_check
        %p452 = pneg %p166
      $region30: #{tpu_custom_call.1} parent=11 // pred_check_branch
        %454 = sbr.rel (%p452) target = $region32
      $region31: #{tpu_custom_call.1} parent=11 // pred_region
        _
      $region32: #{tpu_custom_call.1} parent=11 // pred_fallthru
        _
      // Predicated region
      $region33: #{tpu_custom_call.1} parent=11 // pred_check
        %p455 = pneg %p187
      $region34: #{tpu_custom_call.1} parent=11 // pred_check_branch
        %457 = sbr.rel (%p455) target = $region36
      $region35: #{tpu_custom_call.1} parent=11 // pred_region
        _
      $region36: #{tpu_custom_call.1} parent=11 // pred_fallthru
        _
      // Predicated region
      $region37: #{tpu_custom_call.1} parent=11 // pred_check
        %p458 = pneg %p208
      $region38: #{tpu_custom_call.1} parent=11 // pred_check_branch
        %460 = sbr.rel (%p458) target = $region40
      $region39: #{tpu_custom_call.1} parent=11 // pred_region
        _
      $region40: #{tpu_custom_call.1} parent=11 // pred_fallthru
        _
      // Predicated region
      $region41: #{tpu_custom_call.1} parent=11 // pred_check
        %p461 = pneg %p229
      $region42: #{tpu_custom_call.1} parent=11 // pred_check_branch
        %463 = sbr.rel (%p461) target = $region44
      $region43: #{tpu_custom_call.1} parent=11 // pred_region
        _
      $region44: #{tpu_custom_call.1} parent=11 // pred_fallthru
        _
      // Predicated region
      $region45: #{tpu_custom_call.1} parent=11 // pred_check
        %p464 = pneg %p250
      $region46: #{tpu_custom_call.1} parent=11 // pred_check_branch
        %466 = sbr.rel (%p464) target = $region48
      $region47: #{tpu_custom_call.1} parent=11 // pred_region
        _
      $region48: #{tpu_custom_call.1} parent=11 // pred_fallthru
        _
      // Predicated region
      $region49: #{tpu_custom_call.1} parent=11 // pred_check
        %p467 = pneg %p271
      $region50: #{tpu_custom_call.1} parent=11 // pred_check_branch
        %469 = sbr.rel (%p467) target = $region52
      $region51: #{tpu_custom_call.1} parent=11 // pred_region
        _
      $region52: #{tpu_custom_call.1} parent=11 // pred_fallthru
        _
      // Predicated region
      $region53: #{tpu_custom_call.1} parent=11 // pred_check
        %p470 = pneg %p292
      $region54: #{tpu_custom_call.1} parent=11 // pred_check_branch
        %472 = sbr.rel (%p470) target = $region56
      $region55: #{tpu_custom_call.1} parent=11 // pred_region
        _
      $region56: #{tpu_custom_call.1} parent=11 // pred_fallthru
        _
      // Predicated region
      $region57: #{tpu_custom_call.1} parent=11 // pred_check
        %p473 = pneg %p313
      $region58: #{tpu_custom_call.1} parent=11 // pred_check_branch
        %475 = sbr.rel (%p473) target = $region60
      $region59: #{tpu_custom_call.1} parent=11 // pred_region
        _
      $region60: #{tpu_custom_call.1} parent=11 // pred_fallthru
        _
      // Predicated region
      $region61: #{tpu_custom_call.1} parent=11 // pred_check
        %p476 = pneg %p334
      $region62: #{tpu_custom_call.1} parent=11 // pred_check_branch
        %478 = sbr.rel (%p476) target = $region64
      $region63: #{tpu_custom_call.1} parent=11 // pred_region
        _
      $region64: #{tpu_custom_call.1} parent=11 // pred_fallthru
        _
      // Predicated region
      $region65: #{tpu_custom_call.1} parent=11 // pred_check
        %p479 = pneg %p355
      $region66: #{tpu_custom_call.1} parent=11 // pred_check_branch
        %481 = sbr.rel (%p479) target = $region68
      $region67: #{tpu_custom_call.1} parent=11 // pred_region
        _
      $region68: #{tpu_custom_call.1} parent=11 // pred_fallthru
        _
      // Predicated region
      $region69: #{tpu_custom_call.1} parent=11 // pred_check
        %p482 = pneg %p376
      $region70: #{tpu_custom_call.1} parent=11 // pred_check_branch
        %484 = sbr.rel (%p482) target = $region72
      $region71: #{tpu_custom_call.1} parent=11 // pred_region
        _
      $region72: #{tpu_custom_call.1} parent=11 // pred_fallthru
        _
      // Predicated region
      $region73: #{tpu_custom_call.1} parent=11 // pred_check
        %p485 = pneg %p397
      $region74: #{tpu_custom_call.1} parent=11 // pred_check_branch
        %487 = sbr.rel (%p485) target = $region76
      $region75: #{tpu_custom_call.1} parent=11 // pred_region
        _
      $region76: #{tpu_custom_call.1} parent=11 // pred_fallthru
        _
    $region12: #{tpu_custom_call.1} parent=5 // pred_fallthru
      _
    %p488 = scmp.lt.s32.totalorder %s23, 4
    // Predicated region
    $region77: #{tpu_custom_call.1} parent=5 // pred_check
      %p489 = pneg %p488
    $region78: #{tpu_custom_call.1} parent=5 // pred_check_branch
      %491 = sbr.rel (%p489) target = $region80
    $region79: #{tpu_custom_call.1} parent=5 // pred_region
      // Predicated region
      $region81: #{tpu_custom_call.1} parent=79 // pred_check
        %p492 = pneg %p55
      $region82: #{tpu_custom_call.1} parent=79 // pred_check_branch
        %494 = sbr.rel (%p492) target = $region84
      $region83: #{tpu_custom_call.1} parent=79 // pred_region
        %p495 = scmp.lt.s32.totalorder %s30, 1
        %s496 = scalar_select %p495, %s30, 1
        %s497 = smul.addr %s496, 8
        %s498 = smul.addr %s497, 4
        %s499 = scalar_lea.vmem %s0, %s498
      $region84: #{tpu_custom_call.1} parent=79 // pred_fallthru
        _
    $region80: #{tpu_custom_call.1} parent=5 // pred_fallthru
      _
    %p500 = scmp.le.s32.totalorder 1, %s23
    %p501 = scmp.lt.s32.totalorder %s23, 5
    %p502 = pnand %p500, %p501
    %p503 = pneg %p502
    // Predicated region
    $region85: #{tpu_custom_call.1} parent=5 // pred_check
      _
    $region86: #{tpu_custom_call.1} parent=5 // pred_check_branch
      %505 = sbr.rel (%p502) target = $region88
    $region87: #{tpu_custom_call.1} parent=5 // pred_region
      %s506 = ssub.s32 %s23, 1
      %p507 = scmp.lt.s32.totalorder %s32, 1
      %s508 = scalar_select %p507, %s32, 1
      %s509 = smul.addr %s508, 8
      %s510 = smul.addr %s509, 4
      %s511 = scalar_lea.vmem %s0, %s510
      %p512 = pneg %p61
      %p513 = pneg %p58
      %p514 = pneg %p82
      %p515 = pneg %p79
      %p516 = pneg %p103
      %p517 = pneg %p100
      %p518 = pneg %p124
      %p519 = pneg %p121
      %p520 = pneg %p145
      %p521 = pneg %p142
      %p522 = pneg %p166
      %p523 = pneg %p163
      %p524 = pneg %p187
      %p525 = pneg %p184
      %p526 = pneg %p208
      %p527 = pneg %p205
      %p528 = pneg %p229
      %p529 = pneg %p226
      %p530 = pneg %p250
      %p531 = pneg %p247
      %p532 = pneg %p271
      %p533 = pneg %p268
      %p534 = pneg %p292
      %p535 = pneg %p289
      %p536 = pneg %p313
      %p537 = pneg %p310
      %p538 = pneg %p334
      %p539 = pneg %p331
      %p540 = pneg %p355
      %p541 = pneg %p352
      %p542 = pneg %p376
      %p543 = pneg %p373
      %p544 = pneg %p397
      %p545 = pneg %p394
      %p546 = pneg %p425
      %p547 = pneg %p422
      %s548 = smul.u32 4, %s33
      %p549 = scmp.lt.s32.totalorder %s32, 1
      %s550 = scalar_select %p549, %s32, 1
      %p551 = scmp.lt.s32.totalorder %s548, 7
      %s552 = scalar_select %p551, %s548, 7
      %s553 = smul.addr %s550, 8
      %s554 = sadd.s32 %s552, %s553
      %s555 = smul.addr %s554, 8
      %s556 = scalar_lea.vmem %s17, %s555
      %p557 = scmp.lt.s32.totalorder %s32, 1
      %s558 = scalar_select %p557, %s32, 1
      %s559 = smul.addr %s558, 8
      %s560 = smul.addr %s559, 4
      %s561 = scalar_lea.vmem %s0, %s560
      %s562 = smul.u32 4, %s33
      %p563 = scmp.lt.s32.totalorder %s32, 1
      %s564 = scalar_select %p563, %s32, 1
      %p565 = scmp.lt.s32.totalorder %s562, 7
      %s566 = scalar_select %p565, %s562, 7
      %s567 = smul.addr %s564, 8
      %s568 = sadd.s32 %s566, %s567
      %s569 = smul.addr %s568, 8
      %s570 = scalar_lea.vmem %s17, %s569
      %s571 = smul.u32 4, %s33
      %p573 = scmp.eq.s32.totalorder %s33, 0
      // Predicated region
      $region89: #{tpu_custom_call.1} parent=87 // pred_check
        %p574 = pneg %p573
      $region90: #{tpu_custom_call.1} parent=87 // pred_check_branch
        %576 = sbr.rel (%p574) target = $region92
      $region91: #{tpu_custom_call.1} parent=87 // pred_region
        %v577 = vld [vmem:[%s561] sm:$0xf]
        %v578 = vld [vmem:[%s561 + $0x4] sm:$0xf]
        %v579 = vld [vmem:[%s561 + $0x8] sm:$0xf]
        %v580 = vld [vmem:[%s561 + $0xc] sm:$0xf]
        %v581 = vld [vmem:[%s561 + $0x10] sm:$0xf]
        %v582 = vld [vmem:[%s561 + $0x14] sm:$0xf]
        %v583 = vld [vmem:[%s561 + $0x18] sm:$0xf]
        %v584 = vld [vmem:[%s561 + $0x1c] sm:$0xf]
        %v585 = vld [vmem:[%s3] sm:$0xf]
        %v586 = vld [vmem:[%s3 + $0x4] sm:$0xf]
        %v587 = vld [vmem:[%s3 + $0x8] sm:$0xf]
        %v588 = vld [vmem:[%s3 + $0xc] sm:$0xf]
        %v589 = vld [vmem:[%s4] sm:$0x1]
        %v591 = vlaneseq
        %v592 = vshrl.u32 %v591, 7
        %v593 = vsub.s32 0, %v592
        %v594 = vrot.slane %v589, %v593
        %v604 = vunpack.c.l.b16 %v577
        %v605 = vunpack.c.l.b16 %v578
        %v606 = vunpack.c.l.b16 %v579
        %v607 = vunpack.c.l.b16 %v580
        %v608 = vunpack.c.l.b16 %v581
        %v609 = vunpack.c.l.b16 %v582
        %v610 = vunpack.c.l.b16 %v583
        %v611 = vunpack.c.l.b16 %v584
        %v612 = vpack.c.b16 %v605, %v604
        %v613 = vpack.c.b16 %v607, %v606
        %v614 = vpack.c.b16 %v609, %v608
        %v615 = vpack.c.b16 %v611, %v610
        %v620 = vunpack.c.l.b16 %v585
        %v621 = vunpack.c.l.b16 %v586
        %v622 = vunpack.c.l.b16 %v587
        %v623 = vunpack.c.l.b16 %v588
        %v624 = vpack.c.b16 %v621, %v620
        %v625 = vpack.c.b16 %v623, %v622
        %vm628 = vcmask 261120
        %v630 = vsel %vm628, %v612, 0
        %v633 = vsel %vm628, %v613, 0
        %v636 = vsel %vm628, %v614, 0
        %v639 = vsel %vm628, %v615, 0
        %641 = vmatprep.subr.bf16.mxu0 0
        %642 = vmatpush1.bf16.msra.mxu0 %v624
        %643 = vmatprep.subr.bf16.mxu0 0
        %644 = vmatpush1.bf16.msra.mxu0 %v625
        %645 = vmatprep.subr.bf16.mxu0 0
        %646 = vmatpush1.bf16.msra.mxu0 0
        %647 = vmatprep.subr.bf16.mxu0 0
        %648 = vmatpush1.bf16.msra.mxu0 0
        %649 = vmatprep.subr.bf16.mxu0 0
        %650 = vmatpush1.bf16.msra.mxu0 0
        %651 = vmatprep.subr.bf16.mxu0 0
        %652 = vmatpush1.bf16.msra.mxu0 0
        %653 = vmatprep.subr.bf16.mxu0 0
        %654 = vmatpush1.bf16.msra.mxu0 0
        %655 = vmatprep.subr.bf16.mxu0 0
        %656 = vmatpush1.bf16.msra.mxu0 0
        %657 = vmatprep.subr.bf16.mxu0 0
        %658 = vmatpush1.bf16.msra.mxu0 0
        %659 = vmatprep.subr.bf16.mxu0 0
        %660 = vmatpush1.bf16.msra.mxu0 0
        %661 = vmatprep.subr.bf16.mxu0 0
        %662 = vmatpush1.bf16.msra.mxu0 0
        %663 = vmatprep.subr.bf16.mxu0 0
        %664 = vmatpush1.bf16.msra.mxu0 0
        %665 = vmatprep.subr.bf16.mxu0 0
        %666 = vmatpush1.bf16.msra.mxu0 0
        %667 = vmatprep.subr.bf16.mxu0 0
        %668 = vmatpush1.bf16.msra.mxu0 0
        %669 = vmatprep.subr.bf16.mxu0 0
        %670 = vmatpush1.bf16.msra.mxu0 0
        %671 = vmatprep.subr.bf16.mxu0 0
        %672 = vmatpush1.bf16.msra.mxu0 0
        %673 = vmatprep.mubr.bf16.mxu0 0
        %674 = vmatmul.mubr.bf16.gmra.mrb[0].mxu0 %v630
        %v675 = vpop.f32.mrb[0].mxu0
        %v676 = vadd.f32 %v594, %v675
        %v677 = vpop.f32.mrb[0].mxu0
        %v678 = vpop.f32.mrb[0].mxu0
        %v679 = vadd.f32 %v594, %v678
        %v680 = vpop.f32.mrb[0].mxu0
        %681 = vmatprep.mubr.bf16.mxu0 0
        %682 = vmatmul.mubr.bf16.gmra.mrb[0].mxu0 %v633
        %v683 = vpop.f32.mrb[0].mxu0
        %v684 = vadd.f32 %v594, %v683
        %v685 = vpop.f32.mrb[0].mxu0
        %v686 = vpop.f32.mrb[0].mxu0
        %v687 = vadd.f32 %v594, %v686
        %v688 = vpop.f32.mrb[0].mxu0
        %689 = vmatprep.mubr.bf16.mxu0 0
        %690 = vmatmul.mubr.bf16.gmra.mrb[0].mxu0 %v636
        %v691 = vpop.f32.mrb[0].mxu0
        %v692 = vadd.f32 %v594, %v691
        %v693 = vpop.f32.mrb[0].mxu0
        %v694 = vpop.f32.mrb[0].mxu0
        %v695 = vadd.f32 %v594, %v694
        %v696 = vpop.f32.mrb[0].mxu0
        %697 = vmatprep.mubr.bf16.mxu0 0
        %698 = vmatmul.mubr.bf16.gmra.mrb[0].mxu0 %v639
        %v699 = vpop.f32.mrb[0].mxu0
        %v700 = vadd.f32 %v594, %v699
        %v701 = vpop.f32.mrb[0].mxu0
        %v702 = vpop.f32.mrb[0].mxu0
        %v703 = vadd.f32 %v594, %v702
        %v704 = vpop.f32.mrb[0].mxu0
        %705 = vdwg.mxu0
        %706 = vst.msk [vmem:[#allocation4] sm:$0xff] %vm628, %v676
        %707 = vst.msk [vmem:[#allocation4 + $0x8] sm:$0xff] %vm628, %v679
        %708 = vst.msk [vmem:[#allocation4 + $0x10] sm:$0xff] %vm628, %v684
        %709 = vst.msk [vmem:[#allocation4 + $0x18] sm:$0xff] %vm628, %v687
        %710 = vst.msk [vmem:[#allocation4 + $0x20] sm:$0xff] %vm628, %v692
        %711 = vst.msk [vmem:[#allocation4 + $0x28] sm:$0xff] %vm628, %v695
        %712 = vst.msk [vmem:[#allocation4 + $0x30] sm:$0xff] %vm628, %v700
        %713 = vst.msk [vmem:[#allocation4 + $0x38] sm:$0xff] %vm628, %v703
        %v714 = vld [vmem:[#allocation4] sm:$0xff]
        %v715 = vld [vmem:[#allocation4 + $0x8] sm:$0xff]
        %v716 = vld [vmem:[#allocation4 + $0x10] sm:$0xff]
        %v717 = vld [vmem:[#allocation4 + $0x18] sm:$0xff]
        %v718 = vld [vmem:[#allocation4 + $0x20] sm:$0xff]
        %v719 = vld [vmem:[#allocation4 + $0x28] sm:$0xff]
        %v720 = vld [vmem:[#allocation4 + $0x30] sm:$0xff]
        %v721 = vld [vmem:[#allocation4 + $0x38] sm:$0xff]
        %722 = vxpose.xlu0.b32.start [1/16] %v714, 128
        %723 = vxpose.xlu0.b32.cont [2/16] %v715, 128
        %724 = vxpose.xlu0.b32.cont [3/16] %v716, 128
        %725 = vxpose.xlu0.b32.cont [4/16] %v717, 128
        %726 = vxpose.xlu0.b32.cont [5/16] %v718, 128
        %727 = vxpose.xlu0.b32.cont [6/16] %v719, 128
        %728 = vxpose.xlu0.b32.cont [7/16] %v720, 128
        %729 = vxpose.xlu0.b32.cont [8/16] %v721, 128
        %730 = vxpose.xlu0.b32.cont [9/16] 0.0, 128
        %731 = vxpose.xlu0.b32.cont [10/16] 0.0, 128
        %732 = vxpose.xlu0.b32.cont [11/16] 0.0, 128
        %733 = vxpose.xlu0.b32.cont [12/16] 0.0, 128
        %734 = vxpose.xlu0.b32.cont [13/16] 0.0, 128
        %735 = vxpose.xlu0.b32.cont [14/16] 0.0, 128
        %736 = vxpose.xlu0.b32.cont [15/16] 0.0, 128
        %737 = vxpose.xlu0.b32.end [16/16] 0.0, 128
        %v738 = vpop.trf.xlu0
        %v739 = vpop.trf.xlu0
        %v740 = vpop.trf.xlu0
        %v741 = vpop.trf.xlu0
        %v742 = vpop.trf.xlu0
        %v743 = vpop.trf.xlu0
        %v744 = vpop.trf.xlu0
        %v745 = vpop.trf.xlu0
        %v746 = vpop.trf.xlu0
        %v747 = vpop.trf.xlu0
        %v748 = vpop.trf.xlu0
        %v749 = vpop.trf.xlu0
        %v750 = vpop.trf.xlu0
        %v751 = vpop.trf.xlu0
        %v752 = vpop.trf.xlu0
        %v753 = vpop.trf.xlu0
        %v754 = vpack.c.bf16 %v738, %v738
        %vm755 = vcmask 519168
        %756 = vst.msk [vmem:[#allocation2] sm:$0xf] %vm755, %v754
        %v757 = vld [vmem:[#allocation4] sm:$0xff]
        %v758 = vld [vmem:[#allocation4 + $0x8] sm:$0xff]
        %v759 = vld [vmem:[#allocation4 + $0x10] sm:$0xff]
        %v760 = vld [vmem:[#allocation4 + $0x18] sm:$0xff]
        %v761 = vld [vmem:[#allocation4 + $0x20] sm:$0xff]
        %v762 = vld [vmem:[#allocation4 + $0x28] sm:$0xff]
        %v763 = vld [vmem:[#allocation4 + $0x30] sm:$0xff]
        %v764 = vld [vmem:[#allocation4 + $0x38] sm:$0xff]
        %773 = vrot.lane.b32.xlu0 %v757, 120
        %v774 = vpop.permute.xlu0 %773
        %775 = vrot.lane.b32.xlu0 %v758, 120
        %v776 = vpop.permute.xlu0 %775
        %777 = vrot.lane.b32.xlu0 %v759, 120
        %v778 = vpop.permute.xlu0 %777
        %779 = vrot.lane.b32.xlu0 %v760, 120
        %v780 = vpop.permute.xlu0 %779
        %781 = vrot.lane.b32.xlu0 %v761, 120
        %v782 = vpop.permute.xlu0 %781
        %783 = vrot.lane.b32.xlu0 %v762, 120
        %v784 = vpop.permute.xlu0 %783
        %785 = vrot.lane.b32.xlu0 %v763, 120
        %v786 = vpop.permute.xlu0 %785
        %787 = vrot.lane.b32.xlu0 %v764, 120
        %v788 = vpop.permute.xlu0 %787
        %797 = vxpose.xlu0.b32.start [1/16] %v774, 128
        %798 = vxpose.xlu0.b32.cont [2/16] %v776, 128
        %799 = vxpose.xlu0.b32.cont [3/16] %v778, 128
        %800 = vxpose.xlu0.b32.cont [4/16] %v780, 128
        %801 = vxpose.xlu0.b32.cont [5/16] %v782, 128
        %802 = vxpose.xlu0.b32.cont [6/16] %v784, 128
        %803 = vxpose.xlu0.b32.cont [7/16] %v786, 128
        %804 = vxpose.xlu0.b32.cont [8/16] %v788, 128
        %805 = vxpose.xlu0.b32.cont [9/16] 0.0, 128
        %806 = vxpose.xlu0.b32.cont [10/16] 0.0, 128
        %807 = vxpose.xlu0.b32.cont [11/16] 0.0, 128
        %808 = vxpose.xlu0.b32.cont [12/16] 0.0, 128
        %809 = vxpose.xlu0.b32.cont [13/16] 0.0, 128
        %810 = vxpose.xlu0.b32.cont [14/16] 0.0, 128
        %811 = vxpose.xlu0.b32.cont [15/16] 0.0, 128
        %812 = vxpose.xlu0.b32.end [16/16] 0.0, 128
        %v813 = vpop.trf.xlu0
        %v814 = vpop.trf.xlu0
        %v815 = vpop.trf.xlu0
        %v816 = vpop.trf.xlu0
        %v817 = vpop.trf.xlu0
        %v818 = vpop.trf.xlu0
        %v819 = vpop.trf.xlu0
        %v820 = vpop.trf.xlu0
        %v821 = vpop.trf.xlu0
        %v822 = vpop.trf.xlu0
        %v823 = vpop.trf.xlu0
        %v824 = vpop.trf.xlu0
        %v825 = vpop.trf.xlu0
        %v826 = vpop.trf.xlu0
        %v827 = vpop.trf.xlu0
        %v828 = vpop.trf.xlu0
        %v829 = vpack.c.bf16 %v813, %v813
        %s830 = scalar_lea.vmem [#allocation2], 4
        %831 = vst.msk [vmem:[%s830] sm:$0xf] %vm755, %v829
        %v832 = vld [vmem:[#allocation4] sm:$0xff]
        %v833 = vld [vmem:[#allocation4 + $0x8] sm:$0xff]
        %v834 = vld [vmem:[#allocation4 + $0x10] sm:$0xff]
        %v835 = vld [vmem:[#allocation4 + $0x18] sm:$0xff]
        %v836 = vld [vmem:[#allocation4 + $0x20] sm:$0xff]
        %v837 = vld [vmem:[#allocation4 + $0x28] sm:$0xff]
        %v838 = vld [vmem:[#allocation4 + $0x30] sm:$0xff]
        %v839 = vld [vmem:[#allocation4 + $0x38] sm:$0xff]
        %848 = vrot.lane.b32.xlu0 %v832, 112
        %v849 = vpop.permute.xlu0 %848
        %850 = vrot.lane.b32.xlu0 %v833, 112
        %v851 = vpop.permute.xlu0 %850
        %852 = vrot.lane.b32.xlu0 %v834, 112
        %v853 = vpop.permute.xlu0 %852
        %854 = vrot.lane.b32.xlu0 %v835, 112
        %v855 = vpop.permute.xlu0 %854
        %856 = vrot.lane.b32.xlu0 %v836, 112
        %v857 = vpop.permute.xlu0 %856
        %858 = vrot.lane.b32.xlu0 %v837, 112
        %v859 = vpop.permute.xlu0 %858
        %860 = vrot.lane.b32.xlu0 %v838, 112
        %v861 = vpop.permute.xlu0 %860
        %862 = vrot.lane.b32.xlu0 %v839, 112
        %v863 = vpop.permute.xlu0 %862
        %872 = vxpose.xlu0.b32.start [1/16] %v849, 128
        %873 = vxpose.xlu0.b32.cont [2/16] %v851, 128
        %874 = vxpose.xlu0.b32.cont [3/16] %v853, 128
        %875 = vxpose.xlu0.b32.cont [4/16] %v855, 128
        %876 = vxpose.xlu0.b32.cont [5/16] %v857, 128
        %877 = vxpose.xlu0.b32.cont [6/16] %v859, 128
        %878 = vxpose.xlu0.b32.cont [7/16] %v861, 128
        %879 = vxpose.xlu0.b32.cont [8/16] %v863, 128
        %880 = vxpose.xlu0.b32.cont [9/16] 0.0, 128
        %881 = vxpose.xlu0.b32.cont [10/16] 0.0, 128
        %882 = vxpose.xlu0.b32.cont [11/16] 0.0, 128
        %883 = vxpose.xlu0.b32.cont [12/16] 0.0, 128
        %884 = vxpose.xlu0.b32.cont [13/16] 0.0, 128
        %885 = vxpose.xlu0.b32.cont [14/16] 0.0, 128
        %886 = vxpose.xlu0.b32.cont [15/16] 0.0, 128
        %887 = vxpose.xlu0.b32.end [16/16] 0.0, 128
        %v888 = vpop.trf.xlu0
        %v889 = vpop.trf.xlu0
        %v890 = vpop.trf.xlu0
        %v891 = vpop.trf.xlu0
        %v892 = vpop.trf.xlu0
        %v893 = vpop.trf.xlu0
        %v894 = vpop.trf.xlu0
        %v895 = vpop.trf.xlu0
        %v896 = vpop.trf.xlu0
        %v897 = vpop.trf.xlu0
        %v898 = vpop.trf.xlu0
        %v899 = vpop.trf.xlu0
        %v900 = vpop.trf.xlu0
        %v901 = vpop.trf.xlu0
        %v902 = vpop.trf.xlu0
        %v903 = vpop.trf.xlu0
        %v904 = vpack.c.bf16 %v888, %v888
        %s905 = scalar_lea.vmem [#allocation2], 8
        %906 = vst.msk [vmem:[%s905] sm:$0xf] %vm755, %v904
        %v907 = vld [vmem:[#allocation4] sm:$0xff]
        %v908 = vld [vmem:[#allocation4 + $0x8] sm:$0xff]
        %v909 = vld [vmem:[#allocation4 + $0x10] sm:$0xff]
        %v910 = vld [vmem:[#allocation4 + $0x18] sm:$0xff]
        %v911 = vld [vmem:[#allocation4 + $0x20] sm:$0xff]
        %v912 = vld [vmem:[#allocation4 + $0x28] sm:$0xff]
        %v913 = vld [vmem:[#allocation4 + $0x30] sm:$0xff]
        %v914 = vld [vmem:[#allocation4 + $0x38] sm:$0xff]
        %923 = vrot.lane.b32.xlu0 %v907, 104
        %v924 = vpop.permute.xlu0 %923
        %925 = vrot.lane.b32.xlu0 %v908, 104
        %v926 = vpop.permute.xlu0 %925
        %927 = vrot.lane.b32.xlu0 %v909, 104
        %v928 = vpop.permute.xlu0 %927
        %929 = vrot.lane.b32.xlu0 %v910, 104
        %v930 = vpop.permute.xlu0 %929
        %931 = vrot.lane.b32.xlu0 %v911, 104
        %v932 = vpop.permute.xlu0 %931
        %933 = vrot.lane.b32.xlu0 %v912, 104
        %v934 = vpop.permute.xlu0 %933
        %935 = vrot.lane.b32.xlu0 %v913, 104
        %v936 = vpop.permute.xlu0 %935
        %937 = vrot.lane.b32.xlu0 %v914, 104
        %v938 = vpop.permute.xlu0 %937
        %947 = vxpose.xlu0.b32.start [1/16] %v924, 128
        %948 = vxpose.xlu0.b32.cont [2/16] %v926, 128
        %949 = vxpose.xlu0.b32.cont [3/16] %v928, 128
        %950 = vxpose.xlu0.b32.cont [4/16] %v930, 128
        %951 = vxpose.xlu0.b32.cont [5/16] %v932, 128
        %952 = vxpose.xlu0.b32.cont [6/16] %v934, 128
        %953 = vxpose.xlu0.b32.cont [7/16] %v936, 128
        %954 = vxpose.xlu0.b32.cont [8/16] %v938, 128
        %955 = vxpose.xlu0.b32.cont [9/16] 0.0, 128
        %956 = vxpose.xlu0.b32.cont [10/16] 0.0, 128
        %957 = vxpose.xlu0.b32.cont [11/16] 0.0, 128
        %958 = vxpose.xlu0.b32.cont [12/16] 0.0, 128
        %959 = vxpose.xlu0.b32.cont [13/16] 0.0, 128
        %960 = vxpose.xlu0.b32.cont [14/16] 0.0, 128
        %961 = vxpose.xlu0.b32.cont [15/16] 0.0, 128
        %962 = vxpose.xlu0.b32.end [16/16] 0.0, 128
        %v963 = vpop.trf.xlu0
        %v964 = vpop.trf.xlu0
        %v965 = vpop.trf.xlu0
        %v966 = vpop.trf.xlu0
        %v967 = vpop.trf.xlu0
        %v968 = vpop.trf.xlu0
        %v969 = vpop.trf.xlu0
        %v970 = vpop.trf.xlu0
        %v971 = vpop.trf.xlu0
        %v972 = vpop.trf.xlu0
        %v973 = vpop.trf.xlu0
        %v974 = vpop.trf.xlu0
        %v975 = vpop.trf.xlu0
        %v976 = vpop.trf.xlu0
        %v977 = vpop.trf.xlu0
        %v978 = vpop.trf.xlu0
        %v979 = vpack.c.bf16 %v963, %v963
        %s980 = scalar_lea.vmem [#allocation2], 12
        %981 = vst.msk [vmem:[%s980] sm:$0xf] %vm755, %v979
        %v982 = vld [vmem:[%s5] sm:$0xf]
        %v983 = vld [vmem:[%s5 + $0x4] sm:$0xf]
        %v984 = vld [vmem:[%s5 + $0x8] sm:$0xf]
        %v985 = vld [vmem:[%s5 + $0xc] sm:$0xf]
        %v986 = vld [vmem:[%s6] sm:$0x1]
        %v988 = vlaneseq
        %v989 = vshrl.u32 %v988, 7
        %v990 = vsub.s32 0, %v989
        %v991 = vrot.slane %v986, %v990
        %v997 = vunpack.c.l.b16 %v982
        %v998 = vunpack.c.l.b16 %v983
        %v999 = vunpack.c.l.b16 %v984
        %v1000 = vunpack.c.l.b16 %v985
        %v1001 = vpack.c.b16 %v998, %v997
        %v1002 = vpack.c.b16 %v1000, %v999
        %1005 = vmatprep.subr.bf16.mxu0 0
        %1006 = vmatpush1.bf16.msra.mxu0 %v1001
        %1007 = vmatprep.subr.bf16.mxu0 0
        %1008 = vmatpush1.bf16.msra.mxu0 %v1002
        %1009 = vmatprep.subr.bf16.mxu0 0
        %1010 = vmatpush1.bf16.msra.mxu0 0
        %1011 = vmatprep.subr.bf16.mxu0 0
        %1012 = vmatpush1.bf16.msra.mxu0 0
        %1013 = vmatprep.subr.bf16.mxu0 0
        %1014 = vmatpush1.bf16.msra.mxu0 0
        %1015 = vmatprep.subr.bf16.mxu0 0
        %1016 = vmatpush1.bf16.msra.mxu0 0
        %1017 = vmatprep.subr.bf16.mxu0 0
        %1018 = vmatpush1.bf16.msra.mxu0 0
        %1019 = vmatprep.subr.bf16.mxu0 0
        %1020 = vmatpush1.bf16.msra.mxu0 0
        %1021 = vmatprep.subr.bf16.mxu0 0
        %1022 = vmatpush1.bf16.msra.mxu0 0
        %1023 = vmatprep.subr.bf16.mxu0 0
        %1024 = vmatpush1.bf16.msra.mxu0 0
        %1025 = vmatprep.subr.bf16.mxu0 0
        %1026 = vmatpush1.bf16.msra.mxu0 0
        %1027 = vmatprep.subr.bf16.mxu0 0
        %1028 = vmatpush1.bf16.msra.mxu0 0
        %1029 = vmatprep.subr.bf16.mxu0 0
        %1030 = vmatpush1.bf16.msra.mxu0 0
        %1031 = vmatprep.subr.bf16.mxu0 0
        %1032 = vmatpush1.bf16.msra.mxu0 0
        %1033 = vmatprep.subr.bf16.mxu0 0
        %1034 = vmatpush1.bf16.msra.mxu0 0
        %1035 = vmatprep.subr.bf16.mxu0 0
        %1036 = vmatpush1.bf16.msra.mxu0 0
        %1037 = vmatprep.mubr.bf16.mxu0 0
        %1038 = vmatmul.mubr.bf16.gmra.mrb[0].mxu0 %v630
        %v1039 = vpop.f32.mrb[0].mxu0
        %v1040 = vadd.f32 %v991, %v1039
        %v1041 = vpop.f32.mrb[0].mxu0
        %v1042 = vpop.f32.mrb[0].mxu0
        %v1043 = vadd.f32 %v991, %v1042
        %v1044 = vpop.f32.mrb[0].mxu0
        %1045 = vmatprep.mubr.bf16.mxu0 0
        %1046 = vmatmul.mubr.bf16.gmra.mrb[0].mxu0 %v633
        %v1047 = vpop.f32.mrb[0].mxu0
        %v1048 = vadd.f32 %v991, %v1047
        %v1049 = vpop.f32.mrb[0].mxu0
        %v1050 = vpop.f32.mrb[0].mxu0
        %v1051 = vadd.f32 %v991, %v1050
        %v1052 = vpop.f32.mrb[0].mxu0
        %1053 = vmatprep.mubr.bf16.mxu0 0
        %1054 = vmatmul.mubr.bf16.gmra.mrb[0].mxu0 %v636
        %v1055 = vpop.f32.mrb[0].mxu0
        %v1056 = vadd.f32 %v991, %v1055
        %v1057 = vpop.f32.mrb[0].mxu0
        %v1058 = vpop.f32.mrb[0].mxu0
        %v1059 = vadd.f32 %v991, %v1058
        %v1060 = vpop.f32.mrb[0].mxu0
        %1061 = vmatprep.mubr.bf16.mxu0 0
        %1062 = vmatmul.mubr.bf16.gmra.mrb[0].mxu0 %v639
        %v1063 = vpop.f32.mrb[0].mxu0
        %v1064 = vadd.f32 %v991, %v1063
        %v1065 = vpop.f32.mrb[0].mxu0
        %v1066 = vpop.f32.mrb[0].mxu0
        %v1067 = vadd.f32 %v991, %v1066
        %v1068 = vpop.f32.mrb[0].mxu0
        %1069 = vdwg.mxu0
        %1070 = vst.msk [vmem:[#allocation4] sm:$0xff] %vm628, %v1040
        %1071 = vst.msk [vmem:[#allocation4 + $0x8] sm:$0xff] %vm628, %v1043
        %1072 = vst.msk [vmem:[#allocation4 + $0x10] sm:$0xff] %vm628, %v1048
        %1073 = vst.msk [vmem:[#allocation4 + $0x18] sm:$0xff] %vm628, %v1051
        %1074 = vst.msk [vmem:[#allocation4 + $0x20] sm:$0xff] %vm628, %v1056
        %1075 = vst.msk [vmem:[#allocation4 + $0x28] sm:$0xff] %vm628, %v1059
        %1076 = vst.msk [vmem:[#allocation4 + $0x30] sm:$0xff] %vm628, %v1064
        %1077 = vst.msk [vmem:[#allocation4 + $0x38] sm:$0xff] %vm628, %v1067
        %v1078 = vld [vmem:[#allocation4] sm:$0xff]
        %v1079 = vld [vmem:[#allocation4 + $0x8] sm:$0xff]
        %v1080 = vld [vmem:[#allocation4 + $0x10] sm:$0xff]
        %v1081 = vld [vmem:[#allocation4 + $0x18] sm:$0xff]
        %v1082 = vld [vmem:[#allocation4 + $0x20] sm:$0xff]
        %v1083 = vld [vmem:[#allocation4 + $0x28] sm:$0xff]
        %v1084 = vld [vmem:[#allocation4 + $0x30] sm:$0xff]
        %v1085 = vld [vmem:[#allocation4 + $0x38] sm:$0xff]
        %v1086 = vpack.c.bf16 %v1079, %v1078
        %v1087 = vpack.c.bf16 %v1081, %v1080
        %v1088 = vpack.c.bf16 %v1083, %v1082
        %v1089 = vpack.c.bf16 %v1085, %v1084
        %vm1090 = vcmask 64512
        %1091 = vst.msk [vmem:[#allocation3] sm:$0xff] %vm1090, %v1086
        %1092 = vst.msk [vmem:[#allocation3 + $0x8] sm:$0xff] %vm1090, %v1087
        %1093 = vst.msk [vmem:[#allocation3 + $0x10] sm:$0xff] %vm1090, %v1088
        %1094 = vst.msk [vmem:[#allocation3 + $0x18] sm:$0xff] %vm1090, %v1089
        %v1095 = vld [vmem:[#allocation4] sm:$0xff]
        %v1096 = vld [vmem:[#allocation4 + $0x8] sm:$0xff]
        %v1097 = vld [vmem:[#allocation4 + $0x10] sm:$0xff]
        %v1098 = vld [vmem:[#allocation4 + $0x18] sm:$0xff]
        %v1099 = vld [vmem:[#allocation4 + $0x20] sm:$0xff]
        %v1100 = vld [vmem:[#allocation4 + $0x28] sm:$0xff]
        %v1101 = vld [vmem:[#allocation4 + $0x30] sm:$0xff]
        %v1102 = vld [vmem:[#allocation4 + $0x38] sm:$0xff]
        %v1103 = vpack.c.bf16 %v1096, %v1095
        %v1104 = vpack.c.bf16 %v1098, %v1097
        %v1105 = vpack.c.bf16 %v1100, %v1099
        %v1106 = vpack.c.bf16 %v1102, %v1101
        %1111 = vrot.lane.b32.xlu0 %v1103, 120
        %v1112 = vpop.permute.xlu0 %1111
        %1113 = vrot.lane.b32.xlu0 %v1104, 120
        %v1114 = vpop.permute.xlu0 %1113
        %1115 = vrot.lane.b32.xlu0 %v1105, 120
        %v1116 = vpop.permute.xlu0 %1115
        %1117 = vrot.lane.b32.xlu0 %v1106, 120
        %v1118 = vpop.permute.xlu0 %1117
        %s1123 = scalar_lea.vmem [#allocation3], 32
        %1124 = vst.msk [vmem:[%s1123] sm:$0xff] %vm1090, %v1112
        %1125 = vst.msk [vmem:[%s1123 + $0x8] sm:$0xff] %vm1090, %v1114
        %1126 = vst.msk [vmem:[%s1123 + $0x10] sm:$0xff] %vm1090, %v1116
        %1127 = vst.msk [vmem:[%s1123 + $0x18] sm:$0xff] %vm1090, %v1118
        %v1128 = vld [vmem:[#allocation4] sm:$0xff]
        %v1129 = vld [vmem:[#allocation4 + $0x8] sm:$0xff]
        %v1130 = vld [vmem:[#allocation4 + $0x10] sm:$0xff]
        %v1131 = vld [vmem:[#allocation4 + $0x18] sm:$0xff]
        %v1132 = vld [vmem:[#allocation4 + $0x20] sm:$0xff]
        %v1133 = vld [vmem:[#allocation4 + $0x28] sm:$0xff]
        %v1134 = vld [vmem:[#allocation4 + $0x30] sm:$0xff]
        %v1135 = vld [vmem:[#allocation4 + $0x38] sm:$0xff]
        %v1136 = vpack.c.bf16 %v1129, %v1128
        %v1137 = vpack.c.bf16 %v1131, %v1130
        %v1138 = vpack.c.bf16 %v1133, %v1132
        %v1139 = vpack.c.bf16 %v1135, %v1134
        %1144 = vrot.lane.b32.xlu0 %v1136, 112
        %v1145 = vpop.permute.xlu0 %1144
        %1146 = vrot.lane.b32.xlu0 %v1137, 112
        %v1147 = vpop.permute.xlu0 %1146
        %1148 = vrot.lane.b32.xlu0 %v1138, 112
        %v1149 = vpop.permute.xlu0 %1148
        %1150 = vrot.lane.b32.xlu0 %v1139, 112
        %v1151 = vpop.permute.xlu0 %1150
        %s1156 = scalar_lea.vmem [#allocation3], 64
        %1157 = vst.msk [vmem:[%s1156] sm:$0xff] %vm1090, %v1145
        %1158 = vst.msk [vmem:[%s1156 + $0x8] sm:$0xff] %vm1090, %v1147
        %1159 = vst.msk [vmem:[%s1156 + $0x10] sm:$0xff] %vm1090, %v1149
        %1160 = vst.msk [vmem:[%s1156 + $0x18] sm:$0xff] %vm1090, %v1151
        %v1161 = vld [vmem:[#allocation4] sm:$0xff]
        %v1162 = vld [vmem:[#allocation4 + $0x8] sm:$0xff]
        %v1163 = vld [vmem:[#allocation4 + $0x10] sm:$0xff]
        %v1164 = vld [vmem:[#allocation4 + $0x18] sm:$0xff]
        %v1165 = vld [vmem:[#allocation4 + $0x20] sm:$0xff]
        %v1166 = vld [vmem:[#allocation4 + $0x28] sm:$0xff]
        %v1167 = vld [vmem:[#allocation4 + $0x30] sm:$0xff]
        %v1168 = vld [vmem:[#allocation4 + $0x38] sm:$0xff]
        %v1169 = vpack.c.bf16 %v1162, %v1161
        %v1170 = vpack.c.bf16 %v1164, %v1163
        %v1171 = vpack.c.bf16 %v1166, %v1165
        %v1172 = vpack.c.bf16 %v1168, %v1167
        %1177 = vrot.lane.b32.xlu0 %v1169, 104
        %v1178 = vpop.permute.xlu0 %1177
        %1179 = vrot.lane.b32.xlu0 %v1170, 104
        %v1180 = vpop.permute.xlu0 %1179
        %1181 = vrot.lane.b32.xlu0 %v1171, 104
        %v1182 = vpop.permute.xlu0 %1181
        %1183 = vrot.lane.b32.xlu0 %v1172, 104
        %v1184 = vpop.permute.xlu0 %1183
        %s1189 = scalar_lea.vmem [#allocation3], 96
        %1190 = vst.msk [vmem:[%s1189] sm:$0xff] %vm1090, %v1178
        %1191 = vst.msk [vmem:[%s1189 + $0x8] sm:$0xff] %vm1090, %v1180
        %1192 = vst.msk [vmem:[%s1189 + $0x10] sm:$0xff] %vm1090, %v1182
        %1193 = vst.msk [vmem:[%s1189 + $0x18] sm:$0xff] %vm1090, %v1184
      $region92: #{tpu_custom_call.1} parent=87 // pred_fallthru
        _
      %s1194 = smul.u32 %s33, 32
      %s1195 = sshra.s32 %s1194, 3
      %s1196 = sand.u32 %s1194, 7
      %s1197 = smul.addr %s1195, 4
      %s1198 = scalar_lea.vmem %s561, %s1197
      %v1199 = vld [vmem:[%s1198] sm:$0xf]
      %v1200 = vld [vmem:[%s1198 + $0x4] sm:$0xf]
      %v1201 = vld [vmem:[%s1198 + $0x8] sm:$0xf]
      %v1202 = vld [vmem:[%s1198 + $0xc] sm:$0xf]
      %v1203 = vunpack.c.l.bf16 %v1199
      %v1204 = vunpack.c.l.bf16 %v1200
      %v1205 = vunpack.c.l.bf16 %v1201
      %v1206 = vunpack.c.l.bf16 %v1202
      %v1207 = vld [vmem:[%s1] sm:$0xf]
      %v1208 = vld [vmem:[%s1 + $0x4] sm:$0xf]
      %v1209 = vld [vmem:[%s1 + $0x8] sm:$0xf]
      %v1210 = vld [vmem:[%s1 + $0xc] sm:$0xf]
      %v1211 = vld [vmem:[%s2] sm:$0x1]
      %v1213 = vlaneseq
      %v1214 = vshrl.u32 %v1213, 7
      %v1215 = vsub.s32 0, %v1214
      %v1216 = vrot.slane %v1211, %v1215
      %v1222 = vunpack.c.l.b16 %v1199
      %v1223 = vunpack.c.l.b16 %v1200
      %v1224 = vunpack.c.l.b16 %v1201
      %v1225 = vunpack.c.l.b16 %v1202
      %v1226 = vpack.c.b16 %v1223, %v1222
      %v1227 = vpack.c.b16 %v1225, %v1224
      %v1232 = vunpack.c.l.b16 %v1207
      %v1233 = vunpack.c.l.b16 %v1208
      %v1234 = vunpack.c.l.b16 %v1209
      %v1235 = vunpack.c.l.b16 %v1210
      %v1236 = vpack.c.b16 %v1233, %v1232
      %v1237 = vpack.c.b16 %v1235, %v1234
      %vm1240 = vcmask 261120
      %v1242 = vsel %vm1240, %v1226, 0
      %v1245 = vsel %vm1240, %v1227, 0
      %1247 = vmatprep.subr.bf16.mxu0 0
      %1248 = vmatpush1.bf16.msra.mxu0 %v1236
      %1249 = vmatprep.subr.bf16.mxu0 0
      %1250 = vmatpush1.bf16.msra.mxu0 %v1237
      %1251 = vmatprep.subr.bf16.mxu0 0
      %1252 = vmatpush1.bf16.msra.mxu0 0
      %1253 = vmatprep.subr.bf16.mxu0 0
      %1254 = vmatpush1.bf16.msra.mxu0 0
      %1255 = vmatprep.subr.bf16.mxu0 0
      %1256 = vmatpush1.bf16.msra.mxu0 0
      %1257 = vmatprep.subr.bf16.mxu0 0
      %1258 = vmatpush1.bf16.msra.mxu0 0
      %1259 = vmatprep.subr.bf16.mxu0 0
      %1260 = vmatpush1.bf16.msra.mxu0 0
      %1261 = vmatprep.subr.bf16.mxu0 0
      %1262 = vmatpush1.bf16.msra.mxu0 0
      %1263 = vmatprep.subr.bf16.mxu0 0
      %1264 = vmatpush1.bf16.msra.mxu0 0
      %1265 = vmatprep.subr.bf16.mxu0 0
      %1266 = vmatpush1.bf16.msra.mxu0 0
      %1267 = vmatprep.subr.bf16.mxu0 0
      %1268 = vmatpush1.bf16.msra.mxu0 0
      %1269 = vmatprep.subr.bf16.mxu0 0
      %1270 = vmatpush1.bf16.msra.mxu0 0
      %1271 = vmatprep.subr.bf16.mxu0 0
      %1272 = vmatpush1.bf16.msra.mxu0 0
      %1273 = vmatprep.subr.bf16.mxu0 0
      %1274 = vmatpush1.bf16.msra.mxu0 0
      %1275 = vmatprep.subr.bf16.mxu0 0
      %1276 = vmatpush1.bf16.msra.mxu0 0
      %1277 = vmatprep.subr.bf16.mxu0 0
      %1278 = vmatpush1.bf16.msra.mxu0 0
      %1279 = vmatprep.mubr.bf16.mxu0 0
      %1280 = vmatmul.mubr.bf16.gmra.mrb[0].mxu0 %v1242
      %v1281 = vpop.f32.mrb[0].mxu0
      %v1282 = vadd.f32 %v1216, %v1281
      %v1283 = vpop.f32.mrb[0].mxu0
      %v1284 = vpop.f32.mrb[0].mxu0
      %v1285 = vadd.f32 %v1216, %v1284
      %v1286 = vpop.f32.mrb[0].mxu0
      %1287 = vmatprep.mubr.bf16.mxu0 0
      %1288 = vmatmul.mubr.bf16.gmra.mrb[0].mxu0 %v1245
      %v1289 = vpop.f32.mrb[0].mxu0
      %v1290 = vadd.f32 %v1216, %v1289
      %v1291 = vpop.f32.mrb[0].mxu0
      %v1292 = vpop.f32.mrb[0].mxu0
      %v1293 = vadd.f32 %v1216, %v1292
      %v1294 = vpop.f32.mrb[0].mxu0
      %1295 = vdwg.mxu0
      %1296 = vst.msk [vmem:[#allocation4] sm:$0xff] %vm1240, %v1282
      %1297 = vst.msk [vmem:[#allocation4 + $0x8] sm:$0xff] %vm1240, %v1285
      %1298 = vst.msk [vmem:[#allocation4 + $0x10] sm:$0xff] %vm1240, %v1290
      %1299 = vst.msk [vmem:[#allocation4 + $0x18] sm:$0xff] %vm1240, %v1293
      %v1300 = vld [vmem:[#allocation4] sm:$0xff]
      %v1301 = vld [vmem:[#allocation4 + $0x8] sm:$0xff]
      %v1302 = vld [vmem:[#allocation4 + $0x10] sm:$0xff]
      %v1303 = vld [vmem:[#allocation4 + $0x18] sm:$0xff]
      %1308 = vrot.lane.b32.xlu0 %v1300, 120
      %v1309 = vpop.permute.xlu0 %1308
      %1310 = vrot.lane.b32.xlu0 %v1301, 120
      %v1311 = vpop.permute.xlu0 %1310
      %1312 = vrot.lane.b32.xlu0 %v1302, 120
      %v1313 = vpop.permute.xlu0 %1312
      %1314 = vrot.lane.b32.xlu0 %v1303, 120
      %v1315 = vpop.permute.xlu0 %1314
      %1320 = vrot.lane.b32.xlu0 %v1300, 112
      %v1321 = vpop.permute.xlu0 %1320
      %1322 = vrot.lane.b32.xlu0 %v1301, 112
      %v1323 = vpop.permute.xlu0 %1322
      %1324 = vrot.lane.b32.xlu0 %v1302, 112
      %v1325 = vpop.permute.xlu0 %1324
      %1326 = vrot.lane.b32.xlu0 %v1303, 112
      %v1327 = vpop.permute.xlu0 %1326
      %1332 = vrot.lane.b32.xlu0 %v1300, 104
      %v1333 = vpop.permute.xlu0 %1332
      %1334 = vrot.lane.b32.xlu0 %v1301, 104
      %v1335 = vpop.permute.xlu0 %1334
      %1336 = vrot.lane.b32.xlu0 %v1302, 104
      %v1337 = vpop.permute.xlu0 %1336
      %1338 = vrot.lane.b32.xlu0 %v1303, 104
      %v1339 = vpop.permute.xlu0 %1338
      %v1344 = vpack.c.bf16 %v1301, %v1300
      %v1345 = vpack.c.bf16 %v1303, %v1302
      %v1346 = vpack.c.bf16 %v1311, %v1309
      %v1347 = vpack.c.bf16 %v1315, %v1313
      %v1348 = vpack.c.bf16 %v1323, %v1321
      %v1349 = vpack.c.bf16 %v1327, %v1325
      %v1350 = vpack.c.bf16 %v1335, %v1333
      %v1351 = vpack.c.bf16 %v1339, %v1337
      %v1352 = vld [vmem:[#allocation2] sm:$0xf]
      %v1353 = vld [vmem:[#allocation2 + $0x4] sm:$0xf]
      %v1354 = vld [vmem:[#allocation2 + $0x8] sm:$0xf]
      %v1355 = vld [vmem:[#allocation2 + $0xc] sm:$0xf]
      %vm1356 = vcmask 64512
      %v1358 = vsel %vm1356, %v1344, 0
      %v1361 = vsel %vm1356, %v1345, 0
      %vm1363 = vcmask 1043456
      %v1365 = vsel %vm1363, %v1352, 0
      %1367 = vmatprep.subr.bf16.mxu0 0
      %1368 = vmatpush1.bf16.msra.mxu0 %v1365
      %1369 = vmatprep.subr.bf16.mxu0 0
      %1370 = vmatpush1.bf16.msra.mxu0 0
      %1371 = vmatprep.subr.bf16.mxu0 0
      %1372 = vmatpush1.bf16.msra.mxu0 0
      %1373 = vmatprep.subr.bf16.mxu0 0
      %1374 = vmatpush1.bf16.msra.mxu0 0
      %1375 = vmatprep.subr.bf16.mxu0 0
      %1376 = vmatpush1.bf16.msra.mxu0 0
      %1377 = vmatprep.subr.bf16.mxu0 0
      %1378 = vmatpush1.bf16.msra.mxu0 0
      %1379 = vmatprep.subr.bf16.mxu0 0
      %1380 = vmatpush1.bf16.msra.mxu0 0
      %1381 = vmatprep.subr.bf16.mxu0 0
      %1382 = vmatpush1.bf16.msra.mxu0 0
      %1383 = vmatprep.subr.bf16.mxu0 0
      %1384 = vmatpush1.bf16.msra.mxu0 0
      %1385 = vmatprep.subr.bf16.mxu0 0
      %1386 = vmatpush1.bf16.msra.mxu0 0
      %1387 = vmatprep.subr.bf16.mxu0 0
      %1388 = vmatpush1.bf16.msra.mxu0 0
      %1389 = vmatprep.subr.bf16.mxu0 0
      %1390 = vmatpush1.bf16.msra.mxu0 0
      %1391 = vmatprep.subr.bf16.mxu0 0
      %1392 = vmatpush1.bf16.msra.mxu0 0
      %1393 = vmatprep.subr.bf16.mxu0 0
      %1394 = vmatpush1.bf16.msra.mxu0 0
      %1395 = vmatprep.subr.bf16.mxu0 0
      %1396 = vmatpush1.bf16.msra.mxu0 0
      %1397 = vmatprep.subr.bf16.mxu0 0
      %1398 = vmatpush1.bf16.msra.mxu0 0
      %1399 = vmatprep.mubr.bf16.mxu0 0
      %1400 = vmatmul.mubr.bf16.gmra.mrb[0].mxu0 %v1358
      %v1401 = vpop.f32.mrb[0].mxu0
      %v1402 = vadd.f32 0.0, %v1401
      %v1403 = vpop.f32.mrb[0].mxu0
      %v1404 = vpop.f32.mrb[0].mxu0
      %v1405 = vadd.f32 0.0, %v1404
      %v1406 = vpop.f32.mrb[0].mxu0
      %1407 = vmatprep.mubr.bf16.mxu0 0
      %1408 = vmatmul.mubr.bf16.gmra.mrb[0].mxu0 %v1361
      %v1409 = vpop.f32.mrb[0].mxu0
      %v1410 = vadd.f32 0.0, %v1409
      %v1411 = vpop.f32.mrb[0].mxu0
      %v1412 = vpop.f32.mrb[0].mxu0
      %v1413 = vadd.f32 0.0, %v1412
      %v1414 = vpop.f32.mrb[0].mxu0
      %1415 = vdwg.mxu0
      %v1417 = vsel %vm1356, %v1346, 0
      %v1420 = vsel %vm1356, %v1347, 0
      %v1423 = vsel %vm1363, %v1353, 0
      %1425 = vmatprep.subr.bf16.mxu0 0
      %1426 = vmatpush1.bf16.msra.mxu0 %v1423
      %1427 = vmatprep.subr.bf16.mxu0 0
      %1428 = vmatpush1.bf16.msra.mxu0 0
      %1429 = vmatprep.subr.bf16.mxu0 0
      %1430 = vmatpush1.bf16.msra.mxu0 0
      %1431 = vmatprep.subr.bf16.mxu0 0
      %1432 = vmatpush1.bf16.msra.mxu0 0
      %1433 = vmatprep.subr.bf16.mxu0 0
      %1434 = vmatpush1.bf16.msra.mxu0 0
      %1435 = vmatprep.subr.bf16.mxu0 0
      %1436 = vmatpush1.bf16.msra.mxu0 0
      %1437 = vmatprep.subr.bf16.mxu0 0
      %1438 = vmatpush1.bf16.msra.mxu0 0
      %1439 = vmatprep.subr.bf16.mxu0 0
      %1440 = vmatpush1.bf16.msra.mxu0 0
      %1441 = vmatprep.subr.bf16.mxu0 0
      %1442 = vmatpush1.bf16.msra.mxu0 0
      %1443 = vmatprep.subr.bf16.mxu0 0
      %1444 = vmatpush1.bf16.msra.mxu0 0
      %1445 = vmatprep.subr.bf16.mxu0 0
      %1446 = vmatpush1.bf16.msra.mxu0 0
      %1447 = vmatprep.subr.bf16.mxu0 0
      %1448 = vmatpush1.bf16.msra.mxu0 0
      %1449 = vmatprep.subr.bf16.mxu0 0
      %1450 = vmatpush1.bf16.msra.mxu0 0
      %1451 = vmatprep.subr.bf16.mxu0 0
      %1452 = vmatpush1.bf16.msra.mxu0 0
      %1453 = vmatprep.subr.bf16.mxu0 0
      %1454 = vmatpush1.bf16.msra.mxu0 0
      %1455 = vmatprep.subr.bf16.mxu0 0
      %1456 = vmatpush1.bf16.msra.mxu0 0
      %1457 = vmatprep.mubr.bf16.mxu0 0
      %1458 = vmatmul.mubr.bf16.gmra.mrb[0].mxu0 %v1417
      %v1459 = vpop.f32.mrb[0].mxu0
      %v1460 = vadd.f32 0.0, %v1459
      %v1461 = vpop.f32.mrb[0].mxu0
      %v1462 = vpop.f32.mrb[0].mxu0
      %v1463 = vadd.f32 0.0, %v1462
      %v1464 = vpop.f32.mrb[0].mxu0
      %1465 = vmatprep.mubr.bf16.mxu0 0
      %1466 = vmatmul.mubr.bf16.gmra.mrb[0].mxu0 %v1420
      %v1467 = vpop.f32.mrb[0].mxu0
      %v1468 = vadd.f32 0.0, %v1467
      %v1469 = vpop.f32.mrb[0].mxu0
      %v1470 = vpop.f32.mrb[0].mxu0
      %v1471 = vadd.f32 0.0, %v1470
      %v1472 = vpop.f32.mrb[0].mxu0
      %1473 = vdwg.mxu0
      %v1475 = vsel %vm1356, %v1348, 0
      %v1478 = vsel %vm1356, %v1349, 0
      %v1481 = vsel %vm1363, %v1354, 0
      %1483 = vmatprep.subr.bf16.mxu0 0
      %1484 = vmatpush1.bf16.msra.mxu0 %v1481
      %1485 = vmatprep.subr.bf16.mxu0 0
      %1486 = vmatpush1.bf16.msra.mxu0 0
      %1487 = vmatprep.subr.bf16.mxu0 0
      %1488 = vmatpush1.bf16.msra.mxu0 0
      %1489 = vmatprep.subr.bf16.mxu0 0
      %1490 = vmatpush1.bf16.msra.mxu0 0
      %1491 = vmatprep.subr.bf16.mxu0 0
      %1492 = vmatpush1.bf16.msra.mxu0 0
      %1493 = vmatprep.subr.bf16.mxu0 0
      %1494 = vmatpush1.bf16.msra.mxu0 0
      %1495 = vmatprep.subr.bf16.mxu0 0
      %1496 = vmatpush1.bf16.msra.mxu0 0
      %1497 = vmatprep.subr.bf16.mxu0 0
      %1498 = vmatpush1.bf16.msra.mxu0 0
      %1499 = vmatprep.subr.bf16.mxu0 0
      %1500 = vmatpush1.bf16.msra.mxu0 0
      %1501 = vmatprep.subr.bf16.mxu0 0
      %1502 = vmatpush1.bf16.msra.mxu0 0
      %1503 = vmatprep.subr.bf16.mxu0 0
      %1504 = vmatpush1.bf16.msra.mxu0 0
      %1505 = vmatprep.subr.bf16.mxu0 0
      %1506 = vmatpush1.bf16.msra.mxu0 0
      %1507 = vmatprep.subr.bf16.mxu0 0
      %1508 = vmatpush1.bf16.msra.mxu0 0
      %1509 = vmatprep.subr.bf16.mxu0 0
      %1510 = vmatpush1.bf16.msra.mxu0 0
      %1511 = vmatprep.subr.bf16.mxu0 0
      %1512 = vmatpush1.bf16.msra.mxu0 0
      %1513 = vmatprep.subr.bf16.mxu0 0
      %1514 = vmatpush1.bf16.msra.mxu0 0
      %1515 = vmatprep.mubr.bf16.mxu0 0
      %1516 = vmatmul.mubr.bf16.gmra.mrb[0].mxu0 %v1475
      %v1517 = vpop.f32.mrb[0].mxu0
      %v1518 = vadd.f32 0.0, %v1517
      %v1519 = vpop.f32.mrb[0].mxu0
      %v1520 = vpop.f32.mrb[0].mxu0
      %v1521 = vadd.f32 0.0, %v1520
      %v1522 = vpop.f32.mrb[0].mxu0
      %1523 = vmatprep.mubr.bf16.mxu0 0
      %1524 = vmatmul.mubr.bf16.gmra.mrb[0].mxu0 %v1478
      %v1525 = vpop.f32.mrb[0].mxu0
      %v1526 = vadd.f32 0.0, %v1525
      %v1527 = vpop.f32.mrb[0].mxu0
      %v1528 = vpop.f32.mrb[0].mxu0
      %v1529 = vadd.f32 0.0, %v1528
      %v1530 = vpop.f32.mrb[0].mxu0
      %1531 = vdwg.mxu0
      %v1533 = vsel %vm1356, %v1350, 0
      %v1536 = vsel %vm1356, %v1351, 0
      %v1539 = vsel %vm1363, %v1355, 0
      %1541 = vmatprep.subr.bf16.mxu0 0
      %1542 = vmatpush1.bf16.msra.mxu0 %v1539
      %1543 = vmatprep.subr.bf16.mxu0 0
      %1544 = vmatpush1.bf16.msra.mxu0 0
      %1545 = vmatprep.subr.bf16.mxu0 0
      %1546 = vmatpush1.bf16.msra.mxu0 0
      %1547 = vmatprep.subr.bf16.mxu0 0
      %1548 = vmatpush1.bf16.msra.mxu0 0
      %1549 = vmatprep.subr.bf16.mxu0 0
      %1550 = vmatpush1.bf16.msra.mxu0 0
      %1551 = vmatprep.subr.bf16.mxu0 0
      %1552 = vmatpush1.bf16.msra.mxu0 0
      %1553 = vmatprep.subr.bf16.mxu0 0
      %1554 = vmatpush1.bf16.msra.mxu0 0
      %1555 = vmatprep.subr.bf16.mxu0 0
      %1556 = vmatpush1.bf16.msra.mxu0 0
      %1557 = vmatprep.subr.bf16.mxu0 0
      %1558 = vmatpush1.bf16.msra.mxu0 0
      %1559 = vmatprep.subr.bf16.mxu0 0
      %1560 = vmatpush1.bf16.msra.mxu0 0
      %1561 = vmatprep.subr.bf16.mxu0 0
      %1562 = vmatpush1.bf16.msra.mxu0 0
      %1563 = vmatprep.subr.bf16.mxu0 0
      %1564 = vmatpush1.bf16.msra.mxu0 0
      %1565 = vmatprep.subr.bf16.mxu0 0
      %1566 = vmatpush1.bf16.msra.mxu0 0
      %1567 = vmatprep.subr.bf16.mxu0 0
      %1568 = vmatpush1.bf16.msra.mxu0 0
      %1569 = vmatprep.subr.bf16.mxu0 0
      %1570 = vmatpush1.bf16.msra.mxu0 0
      %1571 = vmatprep.subr.bf16.mxu0 0
      %1572 = vmatpush1.bf16.msra.mxu0 0
      %1573 = vmatprep.mubr.bf16.mxu0 0
      %1574 = vmatmul.mubr.bf16.gmra.mrb[0].mxu0 %v1533
      %v1575 = vpop.f32.mrb[0].mxu0
      %v1576 = vadd.f32 0.0, %v1575
      %v1577 = vpop.f32.mrb[0].mxu0
      %v1578 = vpop.f32.mrb[0].mxu0
      %v1579 = vadd.f32 0.0, %v1578
      %v1580 = vpop.f32.mrb[0].mxu0
      %1581 = vmatprep.mubr.bf16.mxu0 0
      %1582 = vmatmul.mubr.bf16.gmra.mrb[0].mxu0 %v1536
      %v1583 = vpop.f32.mrb[0].mxu0
      %v1584 = vadd.f32 0.0, %v1583
      %v1585 = vpop.f32.mrb[0].mxu0
      %v1586 = vpop.f32.mrb[0].mxu0
      %v1587 = vadd.f32 0.0, %v1586
      %v1588 = vpop.f32.mrb[0].mxu0
      %1589 = vdwg.mxu0
      %vm1590 = vcmask 523264
      %v1591 = vsel %vm1590, %v1402, -inf
      %1592 = vmax.xlane.f32.xlu0 %v1591
      %v1593 = vpop.xlane.xlu0 %1592
      %v1594 = vsel %vm1590, %v1405, -inf
      %1595 = vmax.xlane.f32.xlu0 %v1594
      %v1596 = vpop.xlane.xlu0 %1595
      %v1597 = vsel %vm1590, %v1410, -inf
      %1598 = vmax.xlane.f32.xlu0 %v1597
      %v1599 = vpop.xlane.xlu0 %1598
      %v1600 = vsel %vm1590, %v1413, -inf
      %1601 = vmax.xlane.f32.xlu0 %v1600
      %v1602 = vpop.xlane.xlu0 %1601
      %v1603 = vsel %vm1590, %v1460, -inf
      %1604 = vmax.xlane.f32.xlu0 %v1603
      %v1605 = vpop.xlane.xlu0 %1604
      %v1606 = vsel %vm1590, %v1463, -inf
      %1607 = vmax.xlane.f32.xlu0 %v1606
      %v1608 = vpop.xlane.xlu0 %1607
      %v1609 = vsel %vm1590, %v1468, -inf
      %1610 = vmax.xlane.f32.xlu0 %v1609
      %v1611 = vpop.xlane.xlu0 %1610
      %v1612 = vsel %vm1590, %v1471, -inf
      %1613 = vmax.xlane.f32.xlu0 %v1612
      %v1614 = vpop.xlane.xlu0 %1613
      %v1615 = vsel %vm1590, %v1518, -inf
      %1616 = vmax.xlane.f32.xlu0 %v1615
      %v1617 = vpop.xlane.xlu0 %1616
      %v1618 = vsel %vm1590, %v1521, -inf
      %1619 = vmax.xlane.f32.xlu0 %v1618
      %v1620 = vpop.xlane.xlu0 %1619
      %v1621 = vsel %vm1590, %v1526, -inf
      %1622 = vmax.xlane.f32.xlu0 %v1621
      %v1623 = vpop.xlane.xlu0 %1622
      %v1624 = vsel %vm1590, %v1529, -inf
      %1625 = vmax.xlane.f32.xlu0 %v1624
      %v1626 = vpop.xlane.xlu0 %1625
      %v1627 = vsel %vm1590, %v1576, -inf
      %1628 = vmax.xlane.f32.xlu0 %v1627
      %v1629 = vpop.xlane.xlu0 %1628
      %v1630 = vsel %vm1590, %v1579, -inf
      %1631 = vmax.xlane.f32.xlu0 %v1630
      %v1632 = vpop.xlane.xlu0 %1631
      %v1633 = vsel %vm1590, %v1584, -inf
      %1634 = vmax.xlane.f32.xlu0 %v1633
      %v1635 = vpop.xlane.xlu0 %1634
      %v1636 = vsel %vm1590, %v1587, -inf
      %1637 = vmax.xlane.f32.xlu0 %v1636
      %v1638 = vpop.xlane.xlu0 %1637
      %v1639 = vsub.f32 %v1402, %v1593
      %v1640 = vsub.f32 %v1405, %v1596
      %v1641 = vsub.f32 %v1410, %v1599
      %v1642 = vsub.f32 %v1413, %v1602
      %v1643 = vsub.f32 %v1460, %v1605
      %v1644 = vsub.f32 %v1463, %v1608
      %v1645 = vsub.f32 %v1468, %v1611
      %v1646 = vsub.f32 %v1471, %v1614
      %v1647 = vsub.f32 %v1518, %v1617
      %v1648 = vsub.f32 %v1521, %v1620
      %v1649 = vsub.f32 %v1526, %v1623
      %v1650 = vsub.f32 %v1529, %v1626
      %v1651 = vsub.f32 %v1576, %v1629
      %v1652 = vsub.f32 %v1579, %v1632
      %v1653 = vsub.f32 %v1584, %v1635
      %v1654 = vsub.f32 %v1587, %v1638
      %v1655 = vmul.f32 %v1639, 1.442695
      %v1656 = vpow.pop %v1655
      %v1657 = vmul.f32 %v1640, 1.442695
      %v1658 = vpow.pop %v1657
      %v1659 = vmul.f32 %v1641, 1.442695
      %v1660 = vpow.pop %v1659
      %v1661 = vmul.f32 %v1642, 1.442695
      %v1662 = vpow.pop %v1661
      %v1663 = vmul.f32 %v1643, 1.442695
      %v1664 = vpow.pop %v1663
      %v1665 = vmul.f32 %v1644, 1.442695
      %v1666 = vpow.pop %v1665
      %v1667 = vmul.f32 %v1645, 1.442695
      %v1668 = vpow.pop %v1667
      %v1669 = vmul.f32 %v1646, 1.442695
      %v1670 = vpow.pop %v1669
      %v1671 = vmul.f32 %v1647, 1.442695
      %v1672 = vpow.pop %v1671
      %v1673 = vmul.f32 %v1648, 1.442695
      %v1674 = vpow.pop %v1673
      %v1675 = vmul.f32 %v1649, 1.442695
      %v1676 = vpow.pop %v1675
      %v1677 = vmul.f32 %v1650, 1.442695
      %v1678 = vpow.pop %v1677
      %v1679 = vmul.f32 %v1651, 1.442695
      %v1680 = vpow.pop %v1679
      %v1681 = vmul.f32 %v1652, 1.442695
      %v1682 = vpow.pop %v1681
      %v1683 = vmul.f32 %v1653, 1.442695
      %v1684 = vpow.pop %v1683
      %v1685 = vmul.f32 %v1654, 1.442695
      %v1686 = vpow.pop %v1685
      %v1687 = vsel %vm1590, %v1656, 0.0
      %1688 = vadd.xlane.f32.xlu0 %v1687
      %v1689 = vpop.xlane.xlu0 %1688
      %v1690 = vsel %vm1590, %v1658, 0.0
      %1691 = vadd.xlane.f32.xlu0 %v1690
      %v1692 = vpop.xlane.xlu0 %1691
      %v1693 = vsel %vm1590, %v1660, 0.0
      %1694 = vadd.xlane.f32.xlu0 %v1693
      %v1695 = vpop.xlane.xlu0 %1694
      %v1696 = vsel %vm1590, %v1662, 0.0
      %1697 = vadd.xlane.f32.xlu0 %v1696
      %v1698 = vpop.xlane.xlu0 %1697
      %v1699 = vsel %vm1590, %v1664, 0.0
      %1700 = vadd.xlane.f32.xlu0 %v1699
      %v1701 = vpop.xlane.xlu0 %1700
      %v1702 = vsel %vm1590, %v1666, 0.0
      %1703 = vadd.xlane.f32.xlu0 %v1702
      %v1704 = vpop.xlane.xlu0 %1703
      %v1705 = vsel %vm1590, %v1668, 0.0
      %1706 = vadd.xlane.f32.xlu0 %v1705
      %v1707 = vpop.xlane.xlu0 %1706
      %v1708 = vsel %vm1590, %v1670, 0.0
      %1709 = vadd.xlane.f32.xlu0 %v1708
      %v1710 = vpop.xlane.xlu0 %1709
      %v1711 = vsel %vm1590, %v1672, 0.0
      %1712 = vadd.xlane.f32.xlu0 %v1711
      %v1713 = vpop.xlane.xlu0 %1712
      %v1714 = vsel %vm1590, %v1674, 0.0
      %1715 = vadd.xlane.f32.xlu0 %v1714
      %v1716 = vpop.xlane.xlu0 %1715
      %v1717 = vsel %vm1590, %v1676, 0.0
      %1718 = vadd.xlane.f32.xlu0 %v1717
      %v1719 = vpop.xlane.xlu0 %1718
      %v1720 = vsel %vm1590, %v1678, 0.0
      %1721 = vadd.xlane.f32.xlu0 %v1720
      %v1722 = vpop.xlane.xlu0 %1721
      %v1723 = vsel %vm1590, %v1680, 0.0
      %1724 = vadd.xlane.f32.xlu0 %v1723
      %v1725 = vpop.xlane.xlu0 %1724
      %v1726 = vsel %vm1590, %v1682, 0.0
      %1727 = vadd.xlane.f32.xlu0 %v1726
      %v1728 = vpop.xlane.xlu0 %1727
      %v1729 = vsel %vm1590, %v1684, 0.0
      %1730 = vadd.xlane.f32.xlu0 %v1729
      %v1731 = vpop.xlane.xlu0 %1730
      %v1732 = vsel %vm1590, %v1686, 0.0
      %1733 = vadd.xlane.f32.xlu0 %v1732
      %v1734 = vpop.xlane.xlu0 %1733
      %v1735 = vrcp.pop %v1689
      %v1736 = vrcp.pop %v1692
      %v1737 = vrcp.pop %v1695
      %v1738 = vrcp.pop %v1698
      %v1739 = vrcp.pop %v1701
      %v1740 = vrcp.pop %v1704
      %v1741 = vrcp.pop %v1707
      %v1742 = vrcp.pop %v1710
      %v1743 = vrcp.pop %v1713
      %v1744 = vrcp.pop %v1716
      %v1745 = vrcp.pop %v1719
      %v1746 = vrcp.pop %v1722
      %v1747 = vrcp.pop %v1725
      %v1748 = vrcp.pop %v1728
      %v1749 = vrcp.pop %v1731
      %v1750 = vrcp.pop %v1734
      %v1751 = vmul.f32 %v1656, %v1735
      %v1752 = vmul.f32 %v1658, %v1736
      %v1753 = vmul.f32 %v1660, %v1737
      %v1754 = vmul.f32 %v1662, %v1738
      %v1755 = vmul.f32 %v1664, %v1739
      %v1756 = vmul.f32 %v1666, %v1740
      %v1757 = vmul.f32 %v1668, %v1741
      %v1758 = vmul.f32 %v1670, %v1742
      %v1759 = vmul.f32 %v1672, %v1743
      %v1760 = vmul.f32 %v1674, %v1744
      %v1761 = vmul.f32 %v1676, %v1745
      %v1762 = vmul.f32 %v1678, %v1746
      %v1763 = vmul.f32 %v1680, %v1747
      %v1764 = vmul.f32 %v1682, %v1748
      %v1765 = vmul.f32 %v1684, %v1749
      %v1766 = vmul.f32 %v1686, %v1750
      %v1767 = vpack.c.bf16 %v1752, %v1751
      %v1768 = vpack.c.bf16 %v1754, %v1753
      %v1769 = vpack.c.bf16 %v1756, %v1755
      %v1770 = vpack.c.bf16 %v1758, %v1757
      %v1771 = vpack.c.bf16 %v1760, %v1759
      %v1772 = vpack.c.bf16 %v1762, %v1761
      %v1773 = vpack.c.bf16 %v1764, %v1763
      %v1774 = vpack.c.bf16 %v1766, %v1765
      %v1775 = vld [vmem:[#allocation3] sm:$0xff]
      %v1776 = vld [vmem:[#allocation3 + $0x8] sm:$0xff]
      %v1777 = vld [vmem:[#allocation3 + $0x10] sm:$0xff]
      %v1778 = vld [vmem:[#allocation3 + $0x18] sm:$0xff]
      %v1779 = vld [vmem:[#allocation3 + $0x20] sm:$0xff]
      %v1780 = vld [vmem:[#allocation3 + $0x28] sm:$0xff]
      %v1781 = vld [vmem:[#allocation3 + $0x30] sm:$0xff]
      %v1782 = vld [vmem:[#allocation3 + $0x38] sm:$0xff]
      %v1783 = vld [vmem:[#allocation3 + $0x40] sm:$0xff]
      %v1784 = vld [vmem:[#allocation3 + $0x48] sm:$0xff]
      %v1785 = vld [vmem:[#allocation3 + $0x50] sm:$0xff]
      %v1786 = vld [vmem:[#allocation3 + $0x58] sm:$0xff]
      %v1787 = vld [vmem:[#allocation3 + $0x60] sm:$0xff]
      %v1788 = vld [vmem:[#allocation3 + $0x68] sm:$0xff]
      %v1789 = vld [vmem:[#allocation3 + $0x70] sm:$0xff]
      %v1790 = vld [vmem:[#allocation3 + $0x78] sm:$0xff]
      %v1792 = vsel %vm1590, %v1767, 0
      %v1795 = vsel %vm1590, %v1768, 0
      %1797 = vmatprep.subr.bf16.mxu0 0
      %1798 = vmatpush1.bf16.msra.mxu0 %v1775
      %1799 = vmatprep.subr.bf16.mxu0 0
      %1800 = vmatpush1.bf16.msra.mxu0 %v1776
      %1801 = vmatprep.subr.bf16.mxu0 0
      %1802 = vmatpush1.bf16.msra.mxu0 %v1777
      %1803 = vmatprep.subr.bf16.mxu0 0
      %1804 = vmatpush1.bf16.msra.mxu0 %v1778
      %1805 = vmatprep.subr.bf16.mxu0 0
      %1806 = vmatpush1.bf16.msra.mxu0 0
      %1807 = vmatprep.subr.bf16.mxu0 0
      %1808 = vmatpush1.bf16.msra.mxu0 0
      %1809 = vmatprep.subr.bf16.mxu0 0
      %1810 = vmatpush1.bf16.msra.mxu0 0
      %1811 = vmatprep.subr.bf16.mxu0 0
      %1812 = vmatpush1.bf16.msra.mxu0 0
      %1813 = vmatprep.subr.bf16.mxu0 0
      %1814 = vmatpush1.bf16.msra.mxu0 0
      %1815 = vmatprep.subr.bf16.mxu0 0
      %1816 = vmatpush1.bf16.msra.mxu0 0
      %1817 = vmatprep.subr.bf16.mxu0 0
      %1818 = vmatpush1.bf16.msra.mxu0 0
      %1819 = vmatprep.subr.bf16.mxu0 0
      %1820 = vmatpush1.bf16.msra.mxu0 0
      %1821 = vmatprep.subr.bf16.mxu0 0
      %1822 = vmatpush1.bf16.msra.mxu0 0
      %1823 = vmatprep.subr.bf16.mxu0 0
      %1824 = vmatpush1.bf16.msra.mxu0 0
      %1825 = vmatprep.subr.bf16.mxu0 0
      %1826 = vmatpush1.bf16.msra.mxu0 0
      %1827 = vmatprep.subr.bf16.mxu0 0
      %1828 = vmatpush1.bf16.msra.mxu0 0
      %1829 = vmatprep.mubr.bf16.mxu0 0
      %1830 = vmatmul.mubr.bf16.gmra.mrb[0].mxu0 %v1792
      %v1831 = vpop.f32.mrb[0].mxu0
      %v1832 = vadd.f32 0.0, %v1831
      %v1833 = vpop.f32.mrb[0].mxu0
      %v1834 = vpop.f32.mrb[0].mxu0
      %v1835 = vadd.f32 0.0, %v1834
      %v1836 = vpop.f32.mrb[0].mxu0
      %1837 = vmatprep.mubr.bf16.mxu0 0
      %1838 = vmatmul.mubr.bf16.gmra.mrb[0].mxu0 %v1795
      %v1839 = vpop.f32.mrb[0].mxu0
      %v1840 = vadd.f32 0.0, %v1839
      %v1841 = vpop.f32.mrb[0].mxu0
      %v1842 = vpop.f32.mrb[0].mxu0
      %v1843 = vadd.f32 0.0, %v1842
      %v1844 = vpop.f32.mrb[0].mxu0
      %1845 = vdwg.mxu0
      %v1847 = vsel %vm1590, %v1769, 0
      %v1850 = vsel %vm1590, %v1770, 0
      %1852 = vmatprep.subr.bf16.mxu0 0
      %1853 = vmatpush1.bf16.msra.mxu0 %v1779
      %1854 = vmatprep.subr.bf16.mxu0 0
      %1855 = vmatpush1.bf16.msra.mxu0 %v1780
      %1856 = vmatprep.subr.bf16.mxu0 0
      %1857 = vmatpush1.bf16.msra.mxu0 %v1781
      %1858 = vmatprep.subr.bf16.mxu0 0
      %1859 = vmatpush1.bf16.msra.mxu0 %v1782
      %1860 = vmatprep.subr.bf16.mxu0 0
      %1861 = vmatpush1.bf16.msra.mxu0 0
      %1862 = vmatprep.subr.bf16.mxu0 0
      %1863 = vmatpush1.bf16.msra.mxu0 0
      %1864 = vmatprep.subr.bf16.mxu0 0
      %1865 = vmatpush1.bf16.msra.mxu0 0
      %1866 = vmatprep.subr.bf16.mxu0 0
      %1867 = vmatpush1.bf16.msra.mxu0 0
      %1868 = vmatprep.subr.bf16.mxu0 0
      %1869 = vmatpush1.bf16.msra.mxu0 0
      %1870 = vmatprep.subr.bf16.mxu0 0
      %1871 = vmatpush1.bf16.msra.mxu0 0
      %1872 = vmatprep.subr.bf16.mxu0 0
      %1873 = vmatpush1.bf16.msra.mxu0 0
      %1874 = vmatprep.subr.bf16.mxu0 0
      %1875 = vmatpush1.bf16.msra.mxu0 0
      %1876 = vmatprep.subr.bf16.mxu0 0
      %1877 = vmatpush1.bf16.msra.mxu0 0
      %1878 = vmatprep.subr.bf16.mxu0 0
      %1879 = vmatpush1.bf16.msra.mxu0 0
      %1880 = vmatprep.subr.bf16.mxu0 0
      %1881 = vmatpush1.bf16.msra.mxu0 0
      %1882 = vmatprep.subr.bf16.mxu0 0
      %1883 = vmatpush1.bf16.msra.mxu0 0
      %1884 = vmatprep.mubr.bf16.mxu0 0
      %1885 = vmatmul.mubr.bf16.gmra.mrb[0].mxu0 %v1847
      %v1886 = vpop.f32.mrb[0].mxu0
      %v1887 = vadd.f32 0.0, %v1886
      %v1888 = vpop.f32.mrb[0].mxu0
      %v1889 = vpop.f32.mrb[0].mxu0
      %v1890 = vadd.f32 0.0, %v1889
      %v1891 = vpop.f32.mrb[0].mxu0
      %1892 = vmatprep.mubr.bf16.mxu0 0
      %1893 = vmatmul.mubr.bf16.gmra.mrb[0].mxu0 %v1850
      %v1894 = vpop.f32.mrb[0].mxu0
      %v1895 = vadd.f32 0.0, %v1894
      %v1896 = vpop.f32.mrb[0].mxu0
      %v1897 = vpop.f32.mrb[0].mxu0
      %v1898 = vadd.f32 0.0, %v1897
      %v1899 = vpop.f32.mrb[0].mxu0
      %1900 = vdwg.mxu0
      %v1902 = vsel %vm1590, %v1771, 0
      %v1905 = vsel %vm1590, %v1772, 0
      %1907 = vmatprep.subr.bf16.mxu0 0
      %1908 = vmatpush1.bf16.msra.mxu0 %v1783
      %1909 = vmatprep.subr.bf16.mxu0 0
      %1910 = vmatpush1.bf16.msra.mxu0 %v1784
      %1911 = vmatprep.subr.bf16.mxu0 0
      %1912 = vmatpush1.bf16.msra.mxu0 %v1785
      %1913 = vmatprep.subr.bf16.mxu0 0
      %1914 = vmatpush1.bf16.msra.mxu0 %v1786
      %1915 = vmatprep.subr.bf16.mxu0 0
      %1916 = vmatpush1.bf16.msra.mxu0 0
      %1917 = vmatprep.subr.bf16.mxu0 0
      %1918 = vmatpush1.bf16.msra.mxu0 0
      %1919 = vmatprep.subr.bf16.mxu0 0
      %1920 = vmatpush1.bf16.msra.mxu0 0
      %1921 = vmatprep.subr.bf16.mxu0 0
      %1922 = vmatpush1.bf16.msra.mxu0 0
      %1923 = vmatprep.subr.bf16.mxu0 0
      %1924 = vmatpush1.bf16.msra.mxu0 0
      %1925 = vmatprep.subr.bf16.mxu0 0
      %1926 = vmatpush1.bf16.msra.mxu0 0
      %1927 = vmatprep.subr.bf16.mxu0 0
      %1928 = vmatpush1.bf16.msra.mxu0 0
      %1929 = vmatprep.subr.bf16.mxu0 0
      %1930 = vmatpush1.bf16.msra.mxu0 0
      %1931 = vmatprep.subr.bf16.mxu0 0
      %1932 = vmatpush1.bf16.msra.mxu0 0
      %1933 = vmatprep.subr.bf16.mxu0 0
      %1934 = vmatpush1.bf16.msra.mxu0 0
      %1935 = vmatprep.subr.bf16.mxu0 0
      %1936 = vmatpush1.bf16.msra.mxu0 0
      %1937 = vmatprep.subr.bf16.mxu0 0
      %1938 = vmatpush1.bf16.msra.mxu0 0
      %1939 = vmatprep.mubr.bf16.mxu0 0
      %1940 = vmatmul.mubr.bf16.gmra.mrb[0].mxu0 %v1902
      %v1941 = vpop.f32.mrb[0].mxu0
      %v1942 = vadd.f32 0.0, %v1941
      %v1943 = vpop.f32.mrb[0].mxu0
      %v1944 = vpop.f32.mrb[0].mxu0
      %v1945 = vadd.f32 0.0, %v1944
      %v1946 = vpop.f32.mrb[0].mxu0
      %1947 = vmatprep.mubr.bf16.mxu0 0
      %1948 = vmatmul.mubr.bf16.gmra.mrb[0].mxu0 %v1905
      %v1949 = vpop.f32.mrb[0].mxu0
      %v1950 = vadd.f32 0.0, %v1949
      %v1951 = vpop.f32.mrb[0].mxu0
      %v1952 = vpop.f32.mrb[0].mxu0
      %v1953 = vadd.f32 0.0, %v1952
      %v1954 = vpop.f32.mrb[0].mxu0
      %1955 = vdwg.mxu0
      %v1957 = vsel %vm1590, %v1773, 0
      %v1960 = vsel %vm1590, %v1774, 0
      %1962 = vmatprep.subr.bf16.mxu0 0
      %1963 = vmatpush1.bf16.msra.mxu0 %v1787
      %1964 = vmatprep.subr.bf16.mxu0 0
      %1965 = vmatpush1.bf16.msra.mxu0 %v1788
      %1966 = vmatprep.subr.bf16.mxu0 0
      %1967 = vmatpush1.bf16.msra.mxu0 %v1789
      %1968 = vmatprep.subr.bf16.mxu0 0
      %1969 = vmatpush1.bf16.msra.mxu0 %v1790
      %1970 = vmatprep.subr.bf16.mxu0 0
      %1971 = vmatpush1.bf16.msra.mxu0 0
      %1972 = vmatprep.subr.bf16.mxu0 0
      %1973 = vmatpush1.bf16.msra.mxu0 0
      %1974 = vmatprep.subr.bf16.mxu0 0
      %1975 = vmatpush1.bf16.msra.mxu0 0
      %1976 = vmatprep.subr.bf16.mxu0 0
      %1977 = vmatpush1.bf16.msra.mxu0 0
      %1978 = vmatprep.subr.bf16.mxu0 0
      %1979 = vmatpush1.bf16.msra.mxu0 0
      %1980 = vmatprep.subr.bf16.mxu0 0
      %1981 = vmatpush1.bf16.msra.mxu0 0
      %1982 = vmatprep.subr.bf16.mxu0 0
      %1983 = vmatpush1.bf16.msra.mxu0 0
      %1984 = vmatprep.subr.bf16.mxu0 0
      %1985 = vmatpush1.bf16.msra.mxu0 0
      %1986 = vmatprep.subr.bf16.mxu0 0
      %1987 = vmatpush1.bf16.msra.mxu0 0
      %1988 = vmatprep.subr.bf16.mxu0 0
      %1989 = vmatpush1.bf16.msra.mxu0 0
      %1990 = vmatprep.subr.bf16.mxu0 0
      %1991 = vmatpush1.bf16.msra.mxu0 0
      %1992 = vmatprep.subr.bf16.mxu0 0
      %1993 = vmatpush1.bf16.msra.mxu0 0
      %1994 = vmatprep.mubr.bf16.mxu0 0
      %1995 = vmatmul.mubr.bf16.gmra.mrb[0].mxu0 %v1957
      %v1996 = vpop.f32.mrb[0].mxu0
      %v1997 = vadd.f32 0.0, %v1996
      %v1998 = vpop.f32.mrb[0].mxu0
      %v1999 = vpop.f32.mrb[0].mxu0
      %v2000 = vadd.f32 0.0, %v1999
      %v2001 = vpop.f32.mrb[0].mxu0
      %2002 = vmatprep.mubr.bf16.mxu0 0
      %2003 = vmatmul.mubr.bf16.gmra.mrb[0].mxu0 %v1960
      %v2004 = vpop.f32.mrb[0].mxu0
      %v2005 = vadd.f32 0.0, %v2004
      %v2006 = vpop.f32.mrb[0].mxu0
      %v2007 = vpop.f32.mrb[0].mxu0
      %v2008 = vadd.f32 0.0, %v2007
      %v2009 = vpop.f32.mrb[0].mxu0
      %2010 = vdwg.mxu0
      %2011 = vst.msk [vmem:[#allocation4] sm:$0xff] %vm1356, %v1832
      %2012 = vst.msk [vmem:[#allocation4 + $0x8] sm:$0xff] %vm1356, %v1835
      %2013 = vst.msk [vmem:[#allocation4 + $0x10] sm:$0xff] %vm1356, %v1840
      %2014 = vst.msk [vmem:[#allocation4 + $0x18] sm:$0xff] %vm1356, %v1843
      %2019 = vrot.lane.b32.xlu0 %v1887, 8
      %v2020 = vpop.permute.xlu0 %2019
      %2021 = vrot.lane.b32.xlu0 %v1890, 8
      %v2022 = vpop.permute.xlu0 %2021
      %2023 = vrot.lane.b32.xlu0 %v1895, 8
      %v2024 = vpop.permute.xlu0 %2023
      %2025 = vrot.lane.b32.xlu0 %v1898, 8
      %v2026 = vpop.permute.xlu0 %2025
      %vm2031 = vcmask 130112
      %2032 = vst.msk [vmem:[#allocation4] sm:$0xff] %vm2031, %v2020
      %2033 = vst.msk [vmem:[#allocation4 + $0x8] sm:$0xff] %vm2031, %v2022
      %2034 = vst.msk [vmem:[#allocation4 + $0x10] sm:$0xff] %vm2031, %v2024
      %2035 = vst.msk [vmem:[#allocation4 + $0x18] sm:$0xff] %vm2031, %v2026
      %2040 = vrot.lane.b32.xlu0 %v1942, 16
      %v2041 = vpop.permute.xlu0 %2040
      %2042 = vrot.lane.b32.xlu0 %v1945, 16
      %v2043 = vpop.permute.xlu0 %2042
      %2044 = vrot.lane.b32.xlu0 %v1950, 16
      %v2045 = vpop.permute.xlu0 %2044
      %2046 = vrot.lane.b32.xlu0 %v1953, 16
      %v2047 = vpop.permute.xlu0 %2046
      %vm2052 = vcmask 195712
      %2053 = vst.msk [vmem:[#allocation4] sm:$0xff] %vm2052, %v2041
      %2054 = vst.msk [vmem:[#allocation4 + $0x8] sm:$0xff] %vm2052, %v2043
      %2055 = vst.msk [vmem:[#allocation4 + $0x10] sm:$0xff] %vm2052, %v2045
      %2056 = vst.msk [vmem:[#allocation4 + $0x18] sm:$0xff] %vm2052, %v2047
      %2061 = vrot.lane.b32.xlu0 %v1997, 24
      %v2062 = vpop.permute.xlu0 %2061
      %2063 = vrot.lane.b32.xlu0 %v2000, 24
      %v2064 = vpop.permute.xlu0 %2063
      %2065 = vrot.lane.b32.xlu0 %v2005, 24
      %v2066 = vpop.permute.xlu0 %2065
      %2067 = vrot.lane.b32.xlu0 %v2008, 24
      %v2068 = vpop.permute.xlu0 %2067
      %vm2073 = vcmask 261312
      %2074 = vst.msk [vmem:[#allocation4] sm:$0xff] %vm2073, %v2062
      %2075 = vst.msk [vmem:[#allocation4 + $0x8] sm:$0xff] %vm2073, %v2064
      %2076 = vst.msk [vmem:[#allocation4 + $0x10] sm:$0xff] %vm2073, %v2066
      %2077 = vst.msk [vmem:[#allocation4 + $0x18] sm:$0xff] %vm2073, %v2068
      %v2078 = vld [vmem:[#allocation4] sm:$0xff]
      %v2079 = vld [vmem:[#allocation4 + $0x8] sm:$0xff]
      %v2080 = vld [vmem:[#allocation4 + $0x10] sm:$0xff]
      %v2081 = vld [vmem:[#allocation4 + $0x18] sm:$0xff]
      %v2082 = vpack.c.bf16 %v2079, %v2078
      %v2083 = vpack.c.bf16 %v2081, %v2080
      %v2084 = vld [vmem:[%s7] sm:$0xf]
      %v2085 = vld [vmem:[%s7 + $0x4] sm:$0xf]
      %v2086 = vld [vmem:[%s7 + $0x8] sm:$0xf]
      %v2087 = vld [vmem:[%s7 + $0xc] sm:$0xf]
      %v2088 = vld [vmem:[%s8] sm:$0x1]
      %v2090 = vlaneseq
      %v2091 = vshrl.u32 %v2090, 7
      %v2092 = vsub.s32 0, %v2091
      %v2093 = vrot.slane %v2088, %v2092
      %v2099 = vunpack.c.l.b16 %v2084
      %v2100 = vunpack.c.l.b16 %v2085
      %v2101 = vunpack.c.l.b16 %v2086
      %v2102 = vunpack.c.l.b16 %v2087
      %v2103 = vpack.c.b16 %v2100, %v2099
      %v2104 = vpack.c.b16 %v2102, %v2101
      %v2108 = vsel %vm1240, %v2082, 0
      %v2111 = vsel %vm1240, %v2083, 0
      %2113 = vmatprep.subr.bf16.mxu0 0
      %2114 = vmatpush1.bf16.msra.mxu0 %v2103
      %2115 = vmatprep.subr.bf16.mxu0 0
      %2116 = vmatpush1.bf16.msra.mxu0 %v2104
      %2117 = vmatprep.subr.bf16.mxu0 0
      %2118 = vmatpush1.bf16.msra.mxu0 0
      %2119 = vmatprep.subr.bf16.mxu0 0
      %2120 = vmatpush1.bf16.msra.mxu0 0
      %2121 = vmatprep.subr.bf16.mxu0 0
      %2122 = vmatpush1.bf16.msra.mxu0 0
      %2123 = vmatprep.subr.bf16.mxu0 0
      %2124 = vmatpush1.bf16.msra.mxu0 0
      %2125 = vmatprep.subr.bf16.mxu0 0
      %2126 = vmatpush1.bf16.msra.mxu0 0
      %2127 = vmatprep.subr.bf16.mxu0 0
      %2128 = vmatpush1.bf16.msra.mxu0 0
      %2129 = vmatprep.subr.bf16.mxu0 0
      %2130 = vmatpush1.bf16.msra.mxu0 0
      %2131 = vmatprep.subr.bf16.mxu0 0
      %2132 = vmatpush1.bf16.msra.mxu0 0
      %2133 = vmatprep.subr.bf16.mxu0 0
      %2134 = vmatpush1.bf16.msra.mxu0 0
      %2135 = vmatprep.subr.bf16.mxu0 0
      %2136 = vmatpush1.bf16.msra.mxu0 0
      %2137 = vmatprep.subr.bf16.mxu0 0
      %2138 = vmatpush1.bf16.msra.mxu0 0
      %2139 = vmatprep.subr.bf16.mxu0 0
      %2140 = vmatpush1.bf16.msra.mxu0 0
      %2141 = vmatprep.subr.bf16.mxu0 0
      %2142 = vmatpush1.bf16.msra.mxu0 0
      %2143 = vmatprep.subr.bf16.mxu0 0
      %2144 = vmatpush1.bf16.msra.mxu0 0
      %2145 = vmatprep.mubr.bf16.mxu0 0
      %2146 = vmatmul.mubr.bf16.gmra.mrb[0].mxu0 %v2108
      %v2147 = vpop.f32.mrb[0].mxu0
      %v2148 = vadd.f32 %v2093, %v2147
      %v2149 = vpop.f32.mrb[0].mxu0
      %v2150 = vpop.f32.mrb[0].mxu0
      %v2151 = vadd.f32 %v2093, %v2150
      %v2152 = vpop.f32.mrb[0].mxu0
      %2153 = vmatprep.mubr.bf16.mxu0 0
      %2154 = vmatmul.mubr.bf16.gmra.mrb[0].mxu0 %v2111
      %v2155 = vpop.f32.mrb[0].mxu0
      %v2156 = vadd.f32 %v2093, %v2155
      %v2157 = vpop.f32.mrb[0].mxu0
      %v2158 = vpop.f32.mrb[0].mxu0
      %v2159 = vadd.f32 %v2093, %v2158
      %v2160 = vpop.f32.mrb[0].mxu0
      %2161 = vdwg.mxu0
      %v2162 = vadd.f32 %v1203, %v2148
      %v2163 = vadd.f32 %v1204, %v2151
      %v2164 = vadd.f32 %v1205, %v2156
      %v2165 = vadd.f32 %v1206, %v2159
      %v2166 = vld [vmem:[%s9] sm:$0x1]
      %v2167 = vld [vmem:[%s10] sm:$0x1]
      %v2168 = vsel %vm1240, %v2162, 0.0
      %2169 = vadd.xlane.f32.xlu0 %v2168
      %v2170 = vpop.xlane.xlu0 %2169
      %v2171 = vsel %vm1240, %v2163, 0.0
      %2172 = vadd.xlane.f32.xlu0 %v2171
      %v2173 = vpop.xlane.xlu0 %2172
      %v2174 = vsel %vm1240, %v2164, 0.0
      %2175 = vadd.xlane.f32.xlu0 %v2174
      %v2176 = vpop.xlane.xlu0 %2175
      %v2177 = vsel %vm1240, %v2165, 0.0
      %2178 = vadd.xlane.f32.xlu0 %v2177
      %v2179 = vpop.xlane.xlu0 %2178
      %v2180 = vrcp.pop 32.0
      %v2181 = vmul.f32 %v2170, %v2180
      %v2182 = vmul.f32 %v2173, %v2180
      %v2183 = vmul.f32 %v2176, %v2180
      %v2184 = vmul.f32 %v2179, %v2180
      %v2185 = vsub.f32 %v2162, %v2181
      %v2186 = vsub.f32 %v2163, %v2182
      %v2187 = vsub.f32 %v2164, %v2183
      %v2188 = vsub.f32 %v2165, %v2184
      %v2189 = vmul.f32 %v2185, %v2185
      %v2190 = vmul.f32 %v2186, %v2186
      %v2191 = vmul.f32 %v2187, %v2187
      %v2192 = vmul.f32 %v2188, %v2188
      %v2193 = vsel %vm1240, %v2189, 0.0
      %2194 = vadd.xlane.f32.xlu0 %v2193
      %v2195 = vpop.xlane.xlu0 %2194
      %v2196 = vsel %vm1240, %v2190, 0.0
      %2197 = vadd.xlane.f32.xlu0 %v2196
      %v2198 = vpop.xlane.xlu0 %2197
      %v2199 = vsel %vm1240, %v2191, 0.0
      %2200 = vadd.xlane.f32.xlu0 %v2199
      %v2201 = vpop.xlane.xlu0 %2200
      %v2202 = vsel %vm1240, %v2192, 0.0
      %2203 = vadd.xlane.f32.xlu0 %v2202
      %v2204 = vpop.xlane.xlu0 %2203
      %v2205 = vmul.f32 %v2195, %v2180
      %v2206 = vmul.f32 %v2198, %v2180
      %v2207 = vmul.f32 %v2201, %v2180
      %v2208 = vmul.f32 %v2204, %v2180
      %v2209 = vadd.f32 %v2205, 1e-05
      %v2210 = vadd.f32 %v2206, 1e-05
      %v2211 = vadd.f32 %v2207, 1e-05
      %v2212 = vadd.f32 %v2208, 1e-05
      %v2213 = vrsqrt.pop %v2209
      %v2214 = vrsqrt.pop %v2210
      %v2215 = vrsqrt.pop %v2211
      %v2216 = vrsqrt.pop %v2212
      %v2217 = vmul.f32 %v2185, %v2213
      %v2218 = vmul.f32 %v2186, %v2214
      %v2219 = vmul.f32 %v2187, %v2215
      %v2220 = vmul.f32 %v2188, %v2216
      %v2222 = vlaneseq
      %v2223 = vshrl.u32 %v2222, 7
      %v2224 = vsub.s32 0, %v2223
      %v2225 = vrot.slane %v2166, %v2224
      %v2227 = vmul.f32 %v2217, %v2225
      %v2228 = vmul.f32 %v2218, %v2225
      %v2229 = vmul.f32 %v2219, %v2225
      %v2230 = vmul.f32 %v2220, %v2225
      %v2232 = vlaneseq
      %v2233 = vshrl.u32 %v2232, 7
      %v2234 = vsub.s32 0, %v2233
      %v2235 = vrot.slane %v2167, %v2234
      %v2237 = vadd.f32 %v2227, %v2235
      %v2238 = vadd.f32 %v2228, %v2235
      %v2239 = vadd.f32 %v2229, %v2235
      %v2240 = vadd.f32 %v2230, %v2235
      %v2241 = vpack.c.bf16 %v2238, %v2237
      %v2242 = vpack.c.bf16 %v2240, %v2239
      %v2243 = vld [vmem:[%s11] sm:$0xf]
      %v2244 = vld [vmem:[%s11 + $0x4] sm:$0xf]
      %v2245 = vld [vmem:[%s11 + $0x8] sm:$0xf]
      %v2246 = vld [vmem:[%s11 + $0xc] sm:$0xf]
      %v2247 = vld [vmem:[%s12] sm:$0x1]
      %v2249 = vlaneseq
      %v2250 = vshrl.u32 %v2249, 7
      %v2251 = vsub.s32 0, %v2250
      %v2252 = vrot.slane %v2247, %v2251
      %v2258 = vunpack.c.l.b16 %v2243
      %v2259 = vunpack.c.l.b16 %v2244
      %v2260 = vunpack.c.l.b16 %v2245
      %v2261 = vunpack.c.l.b16 %v2246
      %v2262 = vpack.c.b16 %v2259, %v2258
      %v2263 = vpack.c.b16 %v2261, %v2260
      %v2267 = vsel %vm1240, %v2241, 0
      %v2270 = vsel %vm1240, %v2242, 0
      %2272 = vmatprep.subr.bf16.mxu0 0
      %2273 = vmatpush1.bf16.msra.mxu0 %v2262
      %2274 = vmatprep.subr.bf16.mxu0 0
      %2275 = vmatpush1.bf16.msra.mxu0 %v2263
      %2276 = vmatprep.subr.bf16.mxu0 0
      %2277 = vmatpush1.bf16.msra.mxu0 0
      %2278 = vmatprep.subr.bf16.mxu0 0
      %2279 = vmatpush1.bf16.msra.mxu0 0
      %2280 = vmatprep.subr.bf16.mxu0 0
      %2281 = vmatpush1.bf16.msra.mxu0 0
      %2282 = vmatprep.subr.bf16.mxu0 0
      %2283 = vmatpush1.bf16.msra.mxu0 0
      %2284 = vmatprep.subr.bf16.mxu0 0
      %2285 = vmatpush1.bf16.msra.mxu0 0
      %2286 = vmatprep.subr.bf16.mxu0 0
      %2287 = vmatpush1.bf16.msra.mxu0 0
      %2288 = vmatprep.subr.bf16.mxu0 0
      %2289 = vmatpush1.bf16.msra.mxu0 0
      %2290 = vmatprep.subr.bf16.mxu0 0
      %2291 = vmatpush1.bf16.msra.mxu0 0
      %2292 = vmatprep.subr.bf16.mxu0 0
      %2293 = vmatpush1.bf16.msra.mxu0 0
      %2294 = vmatprep.subr.bf16.mxu0 0
      %2295 = vmatpush1.bf16.msra.mxu0 0
      %2296 = vmatprep.subr.bf16.mxu0 0
      %2297 = vmatpush1.bf16.msra.mxu0 0
      %2298 = vmatprep.subr.bf16.mxu0 0
      %2299 = vmatpush1.bf16.msra.mxu0 0
      %2300 = vmatprep.subr.bf16.mxu0 0
      %2301 = vmatpush1.bf16.msra.mxu0 0
      %2302 = vmatprep.subr.bf16.mxu0 0
      %2303 = vmatpush1.bf16.msra.mxu0 0
      %2304 = vmatprep.mubr.bf16.mxu0 0
      %2305 = vmatmul.mubr.bf16.gmra.mrb[0].mxu0 %v2267
      %v2306 = vpop.f32.mrb[0].mxu0
      %v2307 = vadd.f32 %v2252, %v2306
      %v2308 = vpop.f32.mrb[0].mxu0
      %v2309 = vpop.f32.mrb[0].mxu0
      %v2310 = vadd.f32 %v2252, %v2309
      %v2311 = vpop.f32.mrb[0].mxu0
      %2312 = vmatprep.mubr.bf16.mxu0 0
      %2313 = vmatmul.mubr.bf16.gmra.mrb[0].mxu0 %v2270
      %v2314 = vpop.f32.mrb[0].mxu0
      %v2315 = vadd.f32 %v2252, %v2314
      %v2316 = vpop.f32.mrb[0].mxu0
      %v2317 = vpop.f32.mrb[0].mxu0
      %v2318 = vadd.f32 %v2252, %v2317
      %v2319 = vpop.f32.mrb[0].mxu0
      %2320 = vdwg.mxu0
      %v2321 = vmul.f32 %v2307, 0.5
      %v2322 = vmul.f32 %v2310, 0.5
      %v2323 = vmul.f32 %v2315, 0.5
      %v2324 = vmul.f32 %v2318, 0.5
      %v2325 = vmul.f32 %v2307, 0.70710677
      %v2326 = vmul.f32 %v2310, 0.70710677
      %v2327 = vmul.f32 %v2315, 0.70710677
      %v2328 = vmul.f32 %v2318, 0.70710677
      %vm2329 = vcmp.lt.f32.partialorder %v2325, 0.0
      %vm2330 = vcmp.lt.f32.partialorder %v2326, 0.0
      %vm2331 = vcmp.lt.f32.partialorder %v2327, 0.0
      %vm2332 = vcmp.lt.f32.partialorder %v2328, 0.0
      %v2333 = vsel %vm2329, -1.0, 1.0
      %v2334 = vsel %vm2330, -1.0, 1.0
      %v2335 = vsel %vm2331, -1.0, 1.0
      %v2336 = vsel %vm2332, -1.0, 1.0
      %v2337 = vand.u32 2147483647, %v2325
      %v2338 = vand.u32 2147483647, %v2326
      %v2339 = vand.u32 2147483647, %v2327
      %v2340 = vand.u32 2147483647, %v2328
      %v2341 = vmul.f32 %v2337, 0.3275911
      %v2342 = vmul.f32 %v2338, 0.3275911
      %v2343 = vmul.f32 %v2339, 0.3275911
      %v2344 = vmul.f32 %v2340, 0.3275911
      %v2345 = vadd.f32 %v2341, 1.0
      %v2346 = vadd.f32 %v2342, 1.0
      %v2347 = vadd.f32 %v2343, 1.0
      %v2348 = vadd.f32 %v2344, 1.0
      %v2349 = vrcp.pop %v2345
      %v2350 = vmul.f32 1.0, %v2349
      %v2351 = vrcp.pop %v2346
      %v2352 = vmul.f32 1.0, %v2351
      %v2353 = vrcp.pop %v2347
      %v2354 = vmul.f32 1.0, %v2353
      %v2355 = vrcp.pop %v2348
      %v2356 = vmul.f32 1.0, %v2355
      %v2357 = vmul.f32 %v2350, 1.0614054
      %v2358 = vmul.f32 %v2352, 1.0614054
      %v2359 = vmul.f32 %v2354, 1.0614054
      %v2360 = vmul.f32 %v2356, 1.0614054
      %v2361 = vadd.f32 %v2357, -1.4531521
      %v2362 = vadd.f32 %v2358, -1.4531521
      %v2363 = vadd.f32 %v2359, -1.4531521
      %v2364 = vadd.f32 %v2360, -1.4531521
      %v2365 = vmul.f32 %v2361, %v2350
      %v2366 = vmul.f32 %v2362, %v2352
      %v2367 = vmul.f32 %v2363, %v2354
      %v2368 = vmul.f32 %v2364, %v2356
      %v2369 = vadd.f32 %v2365, 1.4214138
      %v2370 = vadd.f32 %v2366, 1.4214138
      %v2371 = vadd.f32 %v2367, 1.4214138
      %v2372 = vadd.f32 %v2368, 1.4214138
      %v2373 = vmul.f32 %v2369, %v2350
      %v2374 = vmul.f32 %v2370, %v2352
      %v2375 = vmul.f32 %v2371, %v2354
      %v2376 = vmul.f32 %v2372, %v2356
      %v2377 = vadd.f32 %v2373, -0.28449672
      %v2378 = vadd.f32 %v2374, -0.28449672
      %v2379 = vadd.f32 %v2375, -0.28449672
      %v2380 = vadd.f32 %v2376, -0.28449672
      %v2381 = vmul.f32 %v2377, %v2350
      %v2382 = vmul.f32 %v2378, %v2352
      %v2383 = vmul.f32 %v2379, %v2354
      %v2384 = vmul.f32 %v2380, %v2356
      %v2385 = vadd.f32 %v2381, 0.2548296
      %v2386 = vadd.f32 %v2382, 0.2548296
      %v2387 = vadd.f32 %v2383, 0.2548296
      %v2388 = vadd.f32 %v2384, 0.2548296
      %v2389 = vmul.f32 %v2385, %v2350
      %v2390 = vmul.f32 %v2386, %v2352
      %v2391 = vmul.f32 %v2387, %v2354
      %v2392 = vmul.f32 %v2388, %v2356
      %v2393 = vsub.f32 0.0, %v2337
      %v2394 = vsub.f32 0.0, %v2338
      %v2395 = vsub.f32 0.0, %v2339
      %v2396 = vsub.f32 0.0, %v2340
      %v2397 = vmul.f32 %v2393, %v2337
      %v2398 = vmul.f32 %v2394, %v2338
      %v2399 = vmul.f32 %v2395, %v2339
      %v2400 = vmul.f32 %v2396, %v2340
      %v2401 = vmul.f32 %v2397, 1.442695
      %v2402 = vpow.pop %v2401
      %v2403 = vmul.f32 %v2398, 1.442695
      %v2404 = vpow.pop %v2403
      %v2405 = vmul.f32 %v2399, 1.442695
      %v2406 = vpow.pop %v2405
      %v2407 = vmul.f32 %v2400, 1.442695
      %v2408 = vpow.pop %v2407
      %v2409 = vmul.f32 %v2389, %v2402
      %v2410 = vmul.f32 %v2390, %v2404
      %v2411 = vmul.f32 %v2391, %v2406
      %v2412 = vmul.f32 %v2392, %v2408
      %v2413 = vsub.f32 1.0, %v2409
      %v2414 = vsub.f32 1.0, %v2410
      %v2415 = vsub.f32 1.0, %v2411
      %v2416 = vsub.f32 1.0, %v2412
      %v2417 = vmul.f32 %v2333, %v2413
      %v2418 = vmul.f32 %v2334, %v2414
      %v2419 = vmul.f32 %v2335, %v2415
      %v2420 = vmul.f32 %v2336, %v2416
      %v2421 = vadd.f32 %v2417, 1.0
      %v2422 = vadd.f32 %v2418, 1.0
      %v2423 = vadd.f32 %v2419, 1.0
      %v2424 = vadd.f32 %v2420, 1.0
      %v2425 = vmul.f32 %v2321, %v2421
      %v2426 = vmul.f32 %v2322, %v2422
      %v2427 = vmul.f32 %v2323, %v2423
      %v2428 = vmul.f32 %v2324, %v2424
      %v2429 = vpack.c.bf16 %v2426, %v2425
      %v2430 = vpack.c.bf16 %v2428, %v2427
      %v2431 = vld [vmem:[%s13] sm:$0xf]
      %v2432 = vld [vmem:[%s13 + $0x4] sm:$0xf]
      %v2433 = vld [vmem:[%s13 + $0x8] sm:$0xf]
      %v2434 = vld [vmem:[%s13 + $0xc] sm:$0xf]
      %v2435 = vld [vmem:[%s13 + $0x10] sm:$0xf]
      %v2436 = vld [vmem:[%s13 + $0x14] sm:$0xf]
      %v2437 = vld [vmem:[%s13 + $0x18] sm:$0xf]
      %v2438 = vld [vmem:[%s13 + $0x1c] sm:$0xf]
      %v2439 = vld [vmem:[%s13 + $0x20] sm:$0xf]
      %v2440 = vld [vmem:[%s13 + $0x24] sm:$0xf]
      %v2441 = vld [vmem:[%s13 + $0x28] sm:$0xf]
      %v2442 = vld [vmem:[%s13 + $0x2c] sm:$0xf]
      %v2443 = vld [vmem:[%s13 + $0x30] sm:$0xf]
      %v2444 = vld [vmem:[%s13 + $0x34] sm:$0xf]
      %v2445 = vld [vmem:[%s13 + $0x38] sm:$0xf]
      %v2446 = vld [vmem:[%s13 + $0x3c] sm:$0xf]
      %v2447 = vld [vmem:[%s14] sm:$0x1]
      %v2449 = vlaneseq
      %v2450 = vshrl.u32 %v2449, 7
      %v2451 = vsub.s32 0, %v2450
      %v2452 = vrot.slane %v2447, %v2451
      %v2470 = vunpack.c.l.b16 %v2431
      %v2471 = vunpack.c.l.b16 %v2432
      %v2472 = vunpack.c.l.b16 %v2433
      %v2473 = vunpack.c.l.b16 %v2434
      %v2474 = vunpack.c.l.b16 %v2435
      %v2475 = vunpack.c.l.b16 %v2436
      %v2476 = vunpack.c.l.b16 %v2437
      %v2477 = vunpack.c.l.b16 %v2438
      %v2478 = vunpack.c.l.b16 %v2439
      %v2479 = vunpack.c.l.b16 %v2440
      %v2480 = vunpack.c.l.b16 %v2441
      %v2481 = vunpack.c.l.b16 %v2442
      %v2482 = vunpack.c.l.b16 %v2443
      %v2483 = vunpack.c.l.b16 %v2444
      %v2484 = vunpack.c.l.b16 %v2445
      %v2485 = vunpack.c.l.b16 %v2446
      %v2486 = vpack.c.b16 %v2471, %v2470
      %v2487 = vpack.c.b16 %v2473, %v2472
      %v2488 = vpack.c.b16 %v2475, %v2474
      %v2489 = vpack.c.b16 %v2477, %v2476
      %v2490 = vpack.c.b16 %v2479, %v2478
      %v2491 = vpack.c.b16 %v2481, %v2480
      %v2492 = vpack.c.b16 %v2483, %v2482
      %v2493 = vpack.c.b16 %v2485, %v2484
      %2502 = vmatprep.subr.bf16.mxu0 0
      %2503 = vmatpush1.bf16.msra.mxu0 %v2486
      %2504 = vmatprep.subr.bf16.mxu0 0
      %2505 = vmatpush1.bf16.msra.mxu0 %v2487
      %2506 = vmatprep.subr.bf16.mxu0 0
      %2507 = vmatpush1.bf16.msra.mxu0 %v2488
      %2508 = vmatprep.subr.bf16.mxu0 0
      %2509 = vmatpush1.bf16.msra.mxu0 %v2489
      %2510 = vmatprep.subr.bf16.mxu0 0
      %2511 = vmatpush1.bf16.msra.mxu0 %v2490
      %2512 = vmatprep.subr.bf16.mxu0 0
      %2513 = vmatpush1.bf16.msra.mxu0 %v2491
      %2514 = vmatprep.subr.bf16.mxu0 0
      %2515 = vmatpush1.bf16.msra.mxu0 %v2492
      %2516 = vmatprep.subr.bf16.mxu0 0
      %2517 = vmatpush1.bf16.msra.mxu0 %v2493
      %2518 = vmatprep.subr.bf16.mxu0 0
      %2519 = vmatpush1.bf16.msra.mxu0 0
      %2520 = vmatprep.subr.bf16.mxu0 0
      %2521 = vmatpush1.bf16.msra.mxu0 0
      %2522 = vmatprep.subr.bf16.mxu0 0
      %2523 = vmatpush1.bf16.msra.mxu0 0
      %2524 = vmatprep.subr.bf16.mxu0 0
      %2525 = vmatpush1.bf16.msra.mxu0 0
      %2526 = vmatprep.subr.bf16.mxu0 0
      %2527 = vmatpush1.bf16.msra.mxu0 0
      %2528 = vmatprep.subr.bf16.mxu0 0
      %2529 = vmatpush1.bf16.msra.mxu0 0
      %2530 = vmatprep.subr.bf16.mxu0 0
      %2531 = vmatpush1.bf16.msra.mxu0 0
      %2532 = vmatprep.subr.bf16.mxu0 0
      %2533 = vmatpush1.bf16.msra.mxu0 0
      %2534 = vmatprep.mubr.bf16.mxu0 0
      %2535 = vmatmul.mubr.bf16.gmra.mrb[0].mxu0 %v2429
      %v2536 = vpop.f32.mrb[0].mxu0
      %v2537 = vadd.f32 %v2452, %v2536
      %v2538 = vpop.f32.mrb[0].mxu0
      %v2539 = vpop.f32.mrb[0].mxu0
      %v2540 = vadd.f32 %v2452, %v2539
      %v2541 = vpop.f32.mrb[0].mxu0
      %2542 = vmatprep.mubr.bf16.mxu0 0
      %2543 = vmatmul.mubr.bf16.gmra.mrb[0].mxu0 %v2430
      %v2544 = vpop.f32.mrb[0].mxu0
      %v2545 = vadd.f32 %v2452, %v2544
      %v2546 = vpop.f32.mrb[0].mxu0
      %v2547 = vpop.f32.mrb[0].mxu0
      %v2548 = vadd.f32 %v2452, %v2547
      %v2549 = vpop.f32.mrb[0].mxu0
      %2550 = vdwg.mxu0
      %v2551 = vadd.f32 %v2237, %v2537
      %v2552 = vadd.f32 %v2238, %v2540
      %v2553 = vadd.f32 %v2239, %v2545
      %v2554 = vadd.f32 %v2240, %v2548
      %v2555 = vld [vmem:[%s15] sm:$0x1]
      %v2556 = vld [vmem:[%s16] sm:$0x1]
      %v2557 = vsel %vm1240, %v2551, 0.0
      %2558 = vadd.xlane.f32.xlu0 %v2557
      %v2559 = vpop.xlane.xlu0 %2558
      %v2560 = vsel %vm1240, %v2552, 0.0
      %2561 = vadd.xlane.f32.xlu0 %v2560
      %v2562 = vpop.xlane.xlu0 %2561
      %v2563 = vsel %vm1240, %v2553, 0.0
      %2564 = vadd.xlane.f32.xlu0 %v2563
      %v2565 = vpop.xlane.xlu0 %2564
      %v2566 = vsel %vm1240, %v2554, 0.0
      %2567 = vadd.xlane.f32.xlu0 %v2566
      %v2568 = vpop.xlane.xlu0 %2567
      %v2569 = vmul.f32 %v2559, %v2180
      %v2570 = vmul.f32 %v2562, %v2180
      %v2571 = vmul.f32 %v2565, %v2180
      %v2572 = vmul.f32 %v2568, %v2180
      %v2573 = vsub.f32 %v2551, %v2569
      %v2574 = vsub.f32 %v2552, %v2570
      %v2575 = vsub.f32 %v2553, %v2571
      %v2576 = vsub.f32 %v2554, %v2572
      %v2577 = vmul.f32 %v2573, %v2573
      %v2578 = vmul.f32 %v2574, %v2574
      %v2579 = vmul.f32 %v2575, %v2575
      %v2580 = vmul.f32 %v2576, %v2576
      %v2581 = vsel %vm1240, %v2577, 0.0
      %2582 = vadd.xlane.f32.xlu0 %v2581
      %v2583 = vpop.xlane.xlu0 %2582
      %v2584 = vsel %vm1240, %v2578, 0.0
      %2585 = vadd.xlane.f32.xlu0 %v2584
      %v2586 = vpop.xlane.xlu0 %2585
      %v2587 = vsel %vm1240, %v2579, 0.0
      %2588 = vadd.xlane.f32.xlu0 %v2587
      %v2589 = vpop.xlane.xlu0 %2588
      %v2590 = vsel %vm1240, %v2580, 0.0
      %2591 = vadd.xlane.f32.xlu0 %v2590
      %v2592 = vpop.xlane.xlu0 %2591
      %v2593 = vmul.f32 %v2583, %v2180
      %v2594 = vmul.f32 %v2586, %v2180
      %v2595 = vmul.f32 %v2589, %v2180
      %v2596 = vmul.f32 %v2592, %v2180
      %v2597 = vadd.f32 %v2593, 1e-05
      %v2598 = vadd.f32 %v2594, 1e-05
      %v2599 = vadd.f32 %v2595, 1e-05
      %v2600 = vadd.f32 %v2596, 1e-05
      %v2601 = vrsqrt.pop %v2597
      %v2602 = vrsqrt.pop %v2598
      %v2603 = vrsqrt.pop %v2599
      %v2604 = vrsqrt.pop %v2600
      %v2605 = vmul.f32 %v2573, %v2601
      %v2606 = vmul.f32 %v2574, %v2602
      %v2607 = vmul.f32 %v2575, %v2603
      %v2608 = vmul.f32 %v2576, %v2604
      %v2610 = vlaneseq
      %v2611 = vshrl.u32 %v2610, 7
      %v2612 = vsub.s32 0, %v2611
      %v2613 = vrot.slane %v2555, %v2612
      %v2615 = vmul.f32 %v2605, %v2613
      %v2616 = vmul.f32 %v2606, %v2613
      %v2617 = vmul.f32 %v2607, %v2613
      %v2618 = vmul.f32 %v2608, %v2613
      %v2620 = vlaneseq
      %v2621 = vshrl.u32 %v2620, 7
      %v2622 = vsub.s32 0, %v2621
      %v2623 = vrot.slane %v2556, %v2622
      %v2625 = vadd.f32 %v2615, %v2623
      %v2626 = vadd.f32 %v2616, %v2623
      %v2627 = vadd.f32 %v2617, %v2623
      %v2628 = vadd.f32 %v2618, %v2623
      %2629 = vst.msk [vmem:[%s570] sm:$0xff] %vm1240, %v2625
      %2630 = vst.msk [vmem:[%s570 + $0x8] sm:$0xff] %vm1240, %v2626
      %2631 = vst.msk [vmem:[%s570 + $0x10] sm:$0xff] %vm1240, %v2627
      %2632 = vst.msk [vmem:[%s570 + $0x18] sm:$0xff] %vm1240, %v2628
      %s2633 = smul.u32 4, %s33
      %p2634 = scmp.lt.s32.totalorder %s32, 1
      %s2635 = scalar_select %p2634, %s32, 1
      %p2636 = scmp.lt.s32.totalorder %s2633, 7
      %s2637 = scalar_select %p2636, %s2633, 7
      %s2638 = smul.addr %s2635, 8
      %s2639 = sadd.s32 %s2637, %s2638
      %s2640 = smul.addr %s2639, 8
      %s2641 = scalar_lea.vmem %s17, %s2640
      // Predicated region
      $region93: #{tpu_custom_call.1} parent=87 // pred_check
        %p2642 = pneg %p422
      $region94: #{tpu_custom_call.1} parent=87 // pred_check_branch
        %2644 = sbr.rel (%p2642) target = $region96
      $region95: #{tpu_custom_call.1} parent=87 // pred_region
        %s2645 = smul.u32 4, %s33
      $region96: #{tpu_custom_call.1} parent=87 // pred_fallthru
        _
    $region88: #{tpu_custom_call.1} parent=5 // pred_fallthru
      _
    %p2646 = scmp.le.s32.totalorder 2, %s23
    // Predicated region
    $region97: #{tpu_custom_call.1} parent=5 // pred_check
      %p2647 = pneg %p2646
    $region98: #{tpu_custom_call.1} parent=5 // pred_check_branch
      %2649 = sbr.rel (%p2647) target = $region100
    $region99: #{tpu_custom_call.1} parent=5 // pred_region
      %s2650 = ssub.s32 %s23, 2
      // Predicated region
      $region101: #{tpu_custom_call.1} parent=99 // pred_check
        %p2651 = pneg %p428
      $region102: #{tpu_custom_call.1} parent=99 // pred_check_branch
        %2653 = sbr.rel (%p2651) target = $region104
      $region103: #{tpu_custom_call.1} parent=99 // pred_region
        %s2654 = smul.u32 4, %s35
        %p2655 = scmp.lt.s32.totalorder %s34, 1
        %s2656 = scalar_select %p2655, %s34, 1
        %p2657 = scmp.lt.s32.totalorder %s2654, 7
        %s2658 = scalar_select %p2657, %s2654, 7
        %s2659 = smul.addr %s2656, 8
        %s2660 = sadd.s32 %s2658, %s2659
        %s2661 = smul.addr %s2660, 8
        %s2662 = scalar_lea.vmem %s17, %s2661
      $region104: #{tpu_custom_call.1} parent=99 // pred_fallthru
        _
    $region100: #{tpu_custom_call.1} parent=5 // pred_fallthru
      _
  $region6: #{tpu_custom_call.1} parent=0 // loop_footer
    %s27 = sadd.s32 1, %s23
  $region7: #{tpu_custom_call.1} parent=0 // loop_footer_branch
    %22 = sbr.rel target = $region3
  $region8: #{tpu_custom_call.1} parent=0 // loop_exit
    _

// kernel: tpu_custom_call.1
$region0: #{tpu_custom_call.1}
  #allocation0 [shape = 'u32[]', space=smem, size = 0x4, offset = 0x4, fixed_abs, tag = 'smem constant byte address 0x4 - core index']
  #allocation1 [shape = 'u32[144,128]{1,0:T(1,128)}', space=vmem, size = 0x12000, scoped, tag = 'internal scratch']
  #allocation2 [shape = 'bf16[4,8,64]{2,1,0:T(8,128)(2,1)}', space=vmem, size = 0x2000, scoped, tag = 'scratch operand']
  #allocation3 [shape = 'bf16[4,64,8]{2,1,0:T(16,128)(2,1)}', space=vmem, size = 0x10000, scoped, tag = 'scratch operand']
  #allocation4 [shape = 'f32[64,32]{1,0:T(8,128)}', space=vmem, size = 0x8000, scoped, tag = 'scratch operand']
  %s0 = inlined_call_operand.vmem [shape: bf16[2,64,32], index: 0, kind: input, shape index: {}]
  %s1 = inlined_call_operand.vmem [shape: bf16[32,32], index: 1, kind: input, shape index: {}]
  %s2 = inlined_call_operand.vmem [shape: f32[1,32], index: 2, kind: input, shape index: {}]
  %s3 = inlined_call_operand.vmem [shape: bf16[32,32], index: 3, kind: input, shape index: {}]
  %s4 = inlined_call_operand.vmem [shape: f32[1,32], index: 4, kind: input, shape index: {}]
  %s5 = inlined_call_operand.vmem [shape: bf16[32,32], index: 5, kind: input, shape index: {}]
  %s6 = inlined_call_operand.vmem [shape: f32[1,32], index: 6, kind: input, shape index: {}]
  %s7 = inlined_call_operand.vmem [shape: bf16[32,32], index: 7, kind: input, shape index: {}]
  %s8 = inlined_call_operand.vmem [shape: f32[1,32], index: 8, kind: input, shape index: {}]
  %s9 = inlined_call_operand.vmem [shape: f32[1,32], index: 9, kind: input, shape index: {}]
  %s10 = inlined_call_operand.vmem [shape: f32[1,32], index: 10, kind: input, shape index: {}]
  %s11 = inlined_call_operand.vmem [shape: bf16[32,128], index: 11, kind: input, shape index: {}]
  %s12 = inlined_call_operand.vmem [shape: f32[1,128], index: 12, kind: input, shape index: {}]
  %s13 = inlined_call_operand.vmem [shape: bf16[128,32], index: 13, kind: input, shape index: {}]
  %s14 = inlined_call_operand.vmem [shape: f32[1,32], index: 14, kind: input, shape index: {}]
  %s15 = inlined_call_operand.vmem [shape: f32[1,32], index: 15, kind: input, shape index: {}]
  %s16 = inlined_call_operand.vmem [shape: f32[1,32], index: 16, kind: input, shape index: {}]
  %s17 = inlined_call_operand.vmem [shape: f32[2,64,32], index: 17, kind: output, shape index: {}]
  %s18 = sld [smem:[#allocation0]]
  $region105: #{tpu_custom_call.1} parent=0
    _
  %s20 = ssub.s32 1, %s18
  %s21 = scalar_select 0, %s20, %s18
  loop: start=0, step=1, limit=6
  $region2: #{tpu_custom_call.1} parent=0 // loop_pre_header
    _
  $region3: #{tpu_custom_call.1} parent=0 // loop_header
    %s23 = sphi 0, %s27
    %p24 = scmp.ge.s32.totalorder %s23, 6
    %s30 = sphi 0, %s42
    %s31 = sphi 0, %s38
    %s32 = sphi 0, %s30
    %s33 = sphi 0, %s31
    %s34 = sphi 0, %s32
    %s35 = sphi 0, %s33
    %s45 = sphi 0, %s47
    %s48 = sphi 0, %s45
    %s49 = sphi 0, %s48
    %s65 = sphi 0, %s49
    %s69 = sphi 0, %s69
    %s71 = sphi 0, %s69
    %s72 = sphi 0, %s71
    %s86 = sphi 0, %s72
    %s90 = sphi 0, %s90
    %s92 = sphi 0, %s90
    %s93 = sphi 0, %s92
    %s107 = sphi 0, %s93
    %s111 = sphi 0, %s111
    %s113 = sphi 0, %s111
    %s114 = sphi 0, %s113
    %s128 = sphi 0, %s114
    %s132 = sphi 0, %s132
    %s134 = sphi 0, %s132
    %s135 = sphi 0, %s134
    %s149 = sphi 0, %s135
    %s153 = sphi 0, %s153
    %s155 = sphi 0, %s153
    %s156 = sphi 0, %s155
    %s170 = sphi 0, %s156
    %s174 = sphi 0, %s174
    %s176 = sphi 0, %s174
    %s177 = sphi 0, %s176
    %s191 = sphi 0, %s177
    %s195 = sphi 0, %s195
    %s197 = sphi 0, %s195
    %s198 = sphi 0, %s197
    %s212 = sphi 0, %s198
    %s216 = sphi 0, %s216
    %s218 = sphi 0, %s216
    %s219 = sphi 0, %s218
    %s233 = sphi 0, %s219
    %s237 = sphi 0, %s237
    %s239 = sphi 0, %s237
    %s240 = sphi 0, %s239
    %s254 = sphi 0, %s240
    %s258 = sphi 0, %s258
    %s260 = sphi 0, %s258
    %s261 = sphi 0, %s260
    %s275 = sphi 0, %s261
    %s279 = sphi 0, %s279
    %s281 = sphi 0, %s279
    %s282 = sphi 0, %s281
    %s296 = sphi 0, %s282
    %s300 = sphi 0, %s300
    %s302 = sphi 0, %s300
    %s303 = sphi 0, %s302
    %s317 = sphi 0, %s303
    %s321 = sphi 0, %s321
    %s323 = sphi 0, %s321
    %s324 = sphi 0, %s323
    %s338 = sphi 0, %s324
    %s342 = sphi 0, %s342
    %s344 = sphi 0, %s342
    %s345 = sphi 0, %s344
    %s359 = sphi 0, %s345
    %s363 = sphi 0, %s363
    %s365 = sphi 0, %s363
    %s366 = sphi 0, %s365
    %s380 = sphi 0, %s366
    %s384 = sphi 0, %s384
    %s386 = sphi 0, %s384
    %s387 = sphi 0, %s386
    %s401 = sphi 0, %s387
    %s409 = sphi 0, %s411
    %s412 = sphi 0, %s409
    %s413 = sphi 0, %s412
    %s429 = sphi 0, %s413
  $region4: #{tpu_custom_call.1} parent=0 // loop_header_branch
    %26 = sbr.rel (%p24) target = $region8
  $region5: #{tpu_custom_call.1} parent=0 // loop_body
    %s28 = ssub.s32 %s23, 1
    %s29 = ssub.s32 %s23, 2
    %s36 = sadd.s32 1, %s31
    %p37 = scmp.ge.s32.totalorder %s36, 2
    %s38 = scalar_select %p37, 0, %s36
    %s39 = sadd.s32 1, %s30
    %s40 = scalar_select %p37, %s39, %s30
    %p41 = scmp.ge.s32.totalorder %s40, 2
    %s42 = scalar_select %p41, 0, %s40
    %s43 = ssub.s32 %s30, %s42
    %p44 = scmp.eq.s32.totalorder %s43, 0
    %s46 = sadd.s32 %s45, 1
    %s47 = scalar_select %p44, %s45, %s46
    %p50 = pneg %p44
    %p51 = scmp.eq.s32.totalorder %s23, 3
    %p52 = por %p50, %p51
    %p53 = scmp.ne.s32.totalorder %s45, %s48
    %p54 = scmp.eq.s32.totalorder %s23, 0
    %p55 = por %p53, %p54
    %p56 = scmp.ne.s32.totalorder %s45, %s48
    %p57 = scmp.eq.s32.totalorder %s28, 3
    %p58 = por %p56, %p57
    %p59 = scmp.ne.s32.totalorder %s48, %s49
    %p60 = scmp.eq.s32.totalorder %s28, 0
    %p61 = por %p59, %p60
    %p62 = scmp.ne.s32.totalorder %s48, %s49
    %p63 = scmp.eq.s32.totalorder %s29, 3
    %p64 = por %p62, %p63
    %p66 = scmp.ne.s32.totalorder %s49, %s65
    %p67 = scmp.eq.s32.totalorder %s29, 0
    %p68 = por %p66, %p67
    %s70 = sadd.s32 %s69, 1
    %p73 = scmp.eq.s32.totalorder %s23, 3
    %p74 = scmp.ne.s32.totalorder %s69, %s71
    %p75 = scmp.eq.s32.totalorder %s23, 0
    %p76 = por %p74, %p75
    %p77 = scmp.ne.s32.totalorder %s69, %s71
    %p78 = scmp.eq.s32.totalorder %s28, 3
    %p79 = por %p77, %p78
    %p80 = scmp.ne.s32.totalorder %s71, %s72
    %p81 = scmp.eq.s32.totalorder %s28, 0
    %p82 = por %p80, %p81
    %p83 = scmp.ne.s32.totalorder %s71, %s72
    %p84 = scmp.eq.s32.totalorder %s29, 3
    %p85 = por %p83, %p84
    %p87 = scmp.ne.s32.totalorder %s72, %s86
    %p88 = scmp.eq.s32.totalorder %s29, 0
    %p89 = por %p87, %p88
    %s91 = sadd.s32 %s90, 1
    %p94 = scmp.eq.s32.totalorder %s23, 3
    %p95 = scmp.ne.s32.totalorder %s90, %s92
    %p96 = scmp.eq.s32.totalorder %s23, 0
    %p97 = por %p95, %p96
    %p98 = scmp.ne.s32.totalorder %s90, %s92
    %p99 = scmp.eq.s32.totalorder %s28, 3
    %p100 = por %p98, %p99
    %p101 = scmp.ne.s32.totalorder %s92, %s93
    %p102 = scmp.eq.s32.totalorder %s28, 0
    %p103 = por %p101, %p102
    %p104 = scmp.ne.s32.totalorder %s92, %s93
    %p105 = scmp.eq.s32.totalorder %s29, 3
    %p106 = por %p104, %p105
    %p108 = scmp.ne.s32.totalorder %s93, %s107
    %p109 = scmp.eq.s32.totalorder %s29, 0
    %p110 = por %p108, %p109
    %s112 = sadd.s32 %s111, 1
    %p115 = scmp.eq.s32.totalorder %s23, 3
    %p116 = scmp.ne.s32.totalorder %s111, %s113
    %p117 = scmp.eq.s32.totalorder %s23, 0
    %p118 = por %p116, %p117
    %p119 = scmp.ne.s32.totalorder %s111, %s113
    %p120 = scmp.eq.s32.totalorder %s28, 3
    %p121 = por %p119, %p120
    %p122 = scmp.ne.s32.totalorder %s113, %s114
    %p123 = scmp.eq.s32.totalorder %s28, 0
    %p124 = por %p122, %p123
    %p125 = scmp.ne.s32.totalorder %s113, %s114
    %p126 = scmp.eq.s32.totalorder %s29, 3
    %p127 = por %p125, %p126
    %p129 = scmp.ne.s32.totalorder %s114, %s128
    %p130 = scmp.eq.s32.totalorder %s29, 0
    %p131 = por %p129, %p130
    %s133 = sadd.s32 %s132, 1
    %p136 = scmp.eq.s32.totalorder %s23, 3
    %p137 = scmp.ne.s32.totalorder %s132, %s134
    %p138 = scmp.eq.s32.totalorder %s23, 0
    %p139 = por %p137, %p138
    %p140 = scmp.ne.s32.totalorder %s132, %s134
    %p141 = scmp.eq.s32.totalorder %s28, 3
    %p142 = por %p140, %p141
    %p143 = scmp.ne.s32.totalorder %s134, %s135
    %p144 = scmp.eq.s32.totalorder %s28, 0
    %p145 = por %p143, %p144
    %p146 = scmp.ne.s32.totalorder %s134, %s135
    %p147 = scmp.eq.s32.totalorder %s29, 3
    %p148 = por %p146, %p147
    %p150 = scmp.ne.s32.totalorder %s135, %s149
    %p151 = scmp.eq.s32.totalorder %s29, 0
    %p152 = por %p150, %p151
    %s154 = sadd.s32 %s153, 1
    %p157 = scmp.eq.s32.totalorder %s23, 3
    %p158 = scmp.ne.s32.totalorder %s153, %s155
    %p159 = scmp.eq.s32.totalorder %s23, 0
    %p160 = por %p158, %p159
    %p161 = scmp.ne.s32.totalorder %s153, %s155
    %p162 = scmp.eq.s32.totalorder %s28, 3
    %p163 = por %p161, %p162
    %p164 = scmp.ne.s32.totalorder %s155, %s156
    %p165 = scmp.eq.s32.totalorder %s28, 0
    %p166 = por %p164, %p165
    %p167 = scmp.ne.s32.totalorder %s155, %s156
    %p168 = scmp.eq.s32.totalorder %s29, 3
    %p169 = por %p167, %p168
    %p171 = scmp.ne.s32.totalorder %s156, %s170
    %p172 = scmp.eq.s32.totalorder %s29, 0
    %p173 = por %p171, %p172
    %s175 = sadd.s32 %s174, 1
    %p178 = scmp.eq.s32.totalorder %s23, 3
    %p179 = scmp.ne.s32.totalorder %s174, %s176
    %p180 = scmp.eq.s32.totalorder %s23, 0
    %p181 = por %p179, %p180
    %p182 = scmp.ne.s32.totalorder %s174, %s176
    %p183 = scmp.eq.s32.totalorder %s28, 3
    %p184 = por %p182, %p183
    %p185 = scmp.ne.s32.totalorder %s176, %s177
    %p186 = scmp.eq.s32.totalorder %s28, 0
    %p187 = por %p185, %p186
    %p188 = scmp.ne.s32.totalorder %s176, %s177
    %p189 = scmp.eq.s32.totalorder %s29, 3
    %p190 = por %p188, %p189
    %p192 = scmp.ne.s32.totalorder %s177, %s191
    %p193 = scmp.eq.s32.totalorder %s29, 0
    %p194 = por %p192, %p193
    %s196 = sadd.s32 %s195, 1
    %p199 = scmp.eq.s32.totalorder %s23, 3
    %p200 = scmp.ne.s32.totalorder %s195, %s197
    %p201 = scmp.eq.s32.totalorder %s23, 0
    %p202 = por %p200, %p201
    %p203 = scmp.ne.s32.totalorder %s195, %s197
    %p204 = scmp.eq.s32.totalorder %s28, 3
    %p205 = por %p203, %p204
    %p206 = scmp.ne.s32.totalorder %s197, %s198
    %p207 = scmp.eq.s32.totalorder %s28, 0
    %p208 = por %p206, %p207
    %p209 = scmp.ne.s32.totalorder %s197, %s198
    %p210 = scmp.eq.s32.totalorder %s29, 3
    %p211 = por %p209, %p210
    %p213 = scmp.ne.s32.totalorder %s198, %s212
    %p214 = scmp.eq.s32.totalorder %s29, 0
    %p215 = por %p213, %p214
    %s217 = sadd.s32 %s216, 1
    %p220 = scmp.eq.s32.totalorder %s23, 3
    %p221 = scmp.ne.s32.totalorder %s216, %s218
    %p222 = scmp.eq.s32.totalorder %s23, 0
    %p223 = por %p221, %p222
    %p224 = scmp.ne.s32.totalorder %s216, %s218
    %p225 = scmp.eq.s32.totalorder %s28, 3
    %p226 = por %p224, %p225
    %p227 = scmp.ne.s32.totalorder %s218, %s219
    %p228 = scmp.eq.s32.totalorder %s28, 0
    %p229 = por %p227, %p228
    %p230 = scmp.ne.s32.totalorder %s218, %s219
    %p231 = scmp.eq.s32.totalorder %s29, 3
    %p232 = por %p230, %p231
    %p234 = scmp.ne.s32.totalorder %s219, %s233
    %p235 = scmp.eq.s32.totalorder %s29, 0
    %p236 = por %p234, %p235
    %s238 = sadd.s32 %s237, 1
    %p241 = scmp.eq.s32.totalorder %s23, 3
    %p242 = scmp.ne.s32.totalorder %s237, %s239
    %p243 = scmp.eq.s32.totalorder %s23, 0
    %p244 = por %p242, %p243
    %p245 = scmp.ne.s32.totalorder %s237, %s239
    %p246 = scmp.eq.s32.totalorder %s28, 3
    %p247 = por %p245, %p246
    %p248 = scmp.ne.s32.totalorder %s239, %s240
    %p249 = scmp.eq.s32.totalorder %s28, 0
    %p250 = por %p248, %p249
    %p251 = scmp.ne.s32.totalorder %s239, %s240
    %p252 = scmp.eq.s32.totalorder %s29, 3
    %p253 = por %p251, %p252
    %p255 = scmp.ne.s32.totalorder %s240, %s254
    %p256 = scmp.eq.s32.totalorder %s29, 0
    %p257 = por %p255, %p256
    %s259 = sadd.s32 %s258, 1
    %p262 = scmp.eq.s32.totalorder %s23, 3
    %p263 = scmp.ne.s32.totalorder %s258, %s260
    %p264 = scmp.eq.s32.totalorder %s23, 0
    %p265 = por %p263, %p264
    %p266 = scmp.ne.s32.totalorder %s258, %s260
    %p267 = scmp.eq.s32.totalorder %s28, 3
    %p268 = por %p266, %p267
    %p269 = scmp.ne.s32.totalorder %s260, %s261
    %p270 = scmp.eq.s32.totalorder %s28, 0
    %p271 = por %p269, %p270
    %p272 = scmp.ne.s32.totalorder %s260, %s261
    %p273 = scmp.eq.s32.totalorder %s29, 3
    %p274 = por %p272, %p273
    %p276 = scmp.ne.s32.totalorder %s261, %s275
    %p277 = scmp.eq.s32.totalorder %s29, 0
    %p278 = por %p276, %p277
    %s280 = sadd.s32 %s279, 1
    %p283 = scmp.eq.s32.totalorder %s23, 3
    %p284 = scmp.ne.s32.totalorder %s279, %s281
    %p285 = scmp.eq.s32.totalorder %s23, 0
    %p286 = por %p284, %p285
    %p287 = scmp.ne.s32.totalorder %s279, %s281
    %p288 = scmp.eq.s32.totalorder %s28, 3
    %p289 = por %p287, %p288
    %p290 = scmp.ne.s32.totalorder %s281, %s282
    %p291 = scmp.eq.s32.totalorder %s28, 0
    %p292 = por %p290, %p291
    %p293 = scmp.ne.s32.totalorder %s281, %s282
    %p294 = scmp.eq.s32.totalorder %s29, 3
    %p295 = por %p293, %p294
    %p297 = scmp.ne.s32.totalorder %s282, %s296
    %p298 = scmp.eq.s32.totalorder %s29, 0
    %p299 = por %p297, %p298
    %s301 = sadd.s32 %s300, 1
    %p304 = scmp.eq.s32.totalorder %s23, 3
    %p305 = scmp.ne.s32.totalorder %s300, %s302
    %p306 = scmp.eq.s32.totalorder %s23, 0
    %p307 = por %p305, %p306
    %p308 = scmp.ne.s32.totalorder %s300, %s302
    %p309 = scmp.eq.s32.totalorder %s28, 3
    %p310 = por %p308, %p309
    %p311 = scmp.ne.s32.totalorder %s302, %s303
    %p312 = scmp.eq.s32.totalorder %s28, 0
    %p313 = por %p311, %p312
    %p314 = scmp.ne.s32.totalorder %s302, %s303
    %p315 = scmp.eq.s32.totalorder %s29, 3
    %p316 = por %p314, %p315
    %p318 = scmp.ne.s32.totalorder %s303, %s317
    %p319 = scmp.eq.s32.totalorder %s29, 0
    %p320 = por %p318, %p319
    %s322 = sadd.s32 %s321, 1
    %p325 = scmp.eq.s32.totalorder %s23, 3
    %p326 = scmp.ne.s32.totalorder %s321, %s323
    %p327 = scmp.eq.s32.totalorder %s23, 0
    %p328 = por %p326, %p327
    %p329 = scmp.ne.s32.totalorder %s321, %s323
    %p330 = scmp.eq.s32.totalorder %s28, 3
    %p331 = por %p329, %p330
    %p332 = scmp.ne.s32.totalorder %s323, %s324
    %p333 = scmp.eq.s32.totalorder %s28, 0
    %p334 = por %p332, %p333
    %p335 = scmp.ne.s32.totalorder %s323, %s324
    %p336 = scmp.eq.s32.totalorder %s29, 3
    %p337 = por %p335, %p336
    %p339 = scmp.ne.s32.totalorder %s324, %s338
    %p340 = scmp.eq.s32.totalorder %s29, 0
    %p341 = por %p339, %p340
    %s343 = sadd.s32 %s342, 1
    %p346 = scmp.eq.s32.totalorder %s23, 3
    %p347 = scmp.ne.s32.totalorder %s342, %s344
    %p348 = scmp.eq.s32.totalorder %s23, 0
    %p349 = por %p347, %p348
    %p350 = scmp.ne.s32.totalorder %s342, %s344
    %p351 = scmp.eq.s32.totalorder %s28, 3
    %p352 = por %p350, %p351
    %p353 = scmp.ne.s32.totalorder %s344, %s345
    %p354 = scmp.eq.s32.totalorder %s28, 0
    %p355 = por %p353, %p354
    %p356 = scmp.ne.s32.totalorder %s344, %s345
    %p357 = scmp.eq.s32.totalorder %s29, 3
    %p358 = por %p356, %p357
    %p360 = scmp.ne.s32.totalorder %s345, %s359
    %p361 = scmp.eq.s32.totalorder %s29, 0
    %p362 = por %p360, %p361
    %s364 = sadd.s32 %s363, 1
    %p367 = scmp.eq.s32.totalorder %s23, 3
    %p368 = scmp.ne.s32.totalorder %s363, %s365
    %p369 = scmp.eq.s32.totalorder %s23, 0
    %p370 = por %p368, %p369
    %p371 = scmp.ne.s32.totalorder %s363, %s365
    %p372 = scmp.eq.s32.totalorder %s28, 3
    %p373 = por %p371, %p372
    %p374 = scmp.ne.s32.totalorder %s365, %s366
    %p375 = scmp.eq.s32.totalorder %s28, 0
    %p376 = por %p374, %p375
    %p377 = scmp.ne.s32.totalorder %s365, %s366
    %p378 = scmp.eq.s32.totalorder %s29, 3
    %p379 = por %p377, %p378
    %p381 = scmp.ne.s32.totalorder %s366, %s380
    %p382 = scmp.eq.s32.totalorder %s29, 0
    %p383 = por %p381, %p382
    %s385 = sadd.s32 %s384, 1
    %p388 = scmp.eq.s32.totalorder %s23, 3
    %p389 = scmp.ne.s32.totalorder %s384, %s386
    %p390 = scmp.eq.s32.totalorder %s23, 0
    %p391 = por %p389, %p390
    %p392 = scmp.ne.s32.totalorder %s384, %s386
    %p393 = scmp.eq.s32.totalorder %s28, 3
    %p394 = por %p392, %p393
    %p395 = scmp.ne.s32.totalorder %s386, %s387
    %p396 = scmp.eq.s32.totalorder %s28, 0
    %p397 = por %p395, %p396
    %p398 = scmp.ne.s32.totalorder %s386, %s387
    %p399 = scmp.eq.s32.totalorder %s29, 3
    %p400 = por %p398, %p399
    %p402 = scmp.ne.s32.totalorder %s387, %s401
    %p403 = scmp.eq.s32.totalorder %s29, 0
    %p404 = por %p402, %p403
    %s405 = ssub.s32 %s30, %s42
    %s406 = ssub.s32 %s31, %s38
    %s407 = sor.u32 %s405, %s406
    %p408 = scmp.eq.s32.totalorder %s407, 0
    %s410 = sadd.s32 %s409, 1
    %s411 = scalar_select %p408, %s409, %s410
    %p414 = pneg %p408
    %p415 = scmp.eq.s32.totalorder %s23, 3
    %p416 = por %p414, %p415
    %p417 = scmp.ne.s32.totalorder %s409, %s412
    %p418 = scmp.eq.s32.totalorder %s23, 0
    %p419 = por %p417, %p418
    %p420 = scmp.ne.s32.totalorder %s409, %s412
    %p421 = scmp.eq.s32.totalorder %s28, 3
    %p422 = por %p420, %p421
    %p423 = scmp.ne.s32.totalorder %s412, %s413
    %p424 = scmp.eq.s32.totalorder %s28, 0
    %p425 = por %p423, %p424
    %p426 = scmp.ne.s32.totalorder %s412, %s413
    %p427 = scmp.eq.s32.totalorder %s29, 3
    %p428 = por %p426, %p427
    %p430 = scmp.ne.s32.totalorder %s413, %s429
    %p431 = scmp.eq.s32.totalorder %s29, 0
    %p432 = por %p430, %p431
    %p433 = scmp.le.s32.totalorder 1, %s23
    %p434 = scmp.lt.s32.totalorder %s23, 5
    %p435 = pnand %p433, %p434
    %p436 = pneg %p435
    // Predicated region
    $region9: #{tpu_custom_call.1} parent=5 // pred_check
      _
    $region10: #{tpu_custom_call.1} parent=5 // pred_check_branch
      %438 = sbr.rel (%p435) target = $region12
    $region11: #{tpu_custom_call.1} parent=5 // pred_region
      %s439 = ssub.s32 %s23, 1
      // Predicated region
      $region13: #{tpu_custom_call.1} parent=11 // pred_check
        %p440 = pneg %p82
      $region14: #{tpu_custom_call.1} parent=11 // pred_check_branch
        %442 = sbr.rel (%p440) target = $region16
      $region15: #{tpu_custom_call.1} parent=11 // pred_region
        _
      $region16: #{tpu_custom_call.1} parent=11 // pred_fallthru
        _
      // Predicated region
      $region17: #{tpu_custom_call.1} parent=11 // pred_check
        %p443 = pneg %p103
      $region18: #{tpu_custom_call.1} parent=11 // pred_check_branch
        %445 = sbr.rel (%p443) target = $region20
      $region19: #{tpu_custom_call.1} parent=11 // pred_region
        _
      $region20: #{tpu_custom_call.1} parent=11 // pred_fallthru
        _
      // Predicated region
      $region21: #{tpu_custom_call.1} parent=11 // pred_check
        %p446 = pneg %p124
      $region22: #{tpu_custom_call.1} parent=11 // pred_check_branch
        %448 = sbr.rel (%p446) target = $region24
      $region23: #{tpu_custom_call.1} parent=11 // pred_region
        _
      $region24: #{tpu_custom_call.1} parent=11 // pred_fallthru
        _
      // Predicated region
      $region25: #{tpu_custom_call.1} parent=11 // pred_check
        %p449 = pneg %p145
      $region26: #{tpu_custom_call.1} parent=11 // pred_check_branch
        %451 = sbr.rel (%p449) target = $region28
      $region27: #{tpu_custom_call.1} parent=11 // pred_region
        _
      $region28: #{tpu_custom_call.1} parent=11 // pred_fallthru
        _
      // Predicated region
      $region29: #{tpu_custom_call.1} parent=11 // pred_check
        %p452 = pneg %p166
      $region30: #{tpu_custom_call.1} parent=11 // pred_check_branch
        %454 = sbr.rel (%p452) target = $region32
      $region31: #{tpu_custom_call.1} parent=11 // pred_region
        _
      $region32: #{tpu_custom_call.1} parent=11 // pred_fallthru
        _
      // Predicated region
      $region33: #{tpu_custom_call.1} parent=11 // pred_check
        %p455 = pneg %p187
      $region34: #{tpu_custom_call.1} parent=11 // pred_check_branch
        %457 = sbr.rel (%p455) target = $region36
      $region35: #{tpu_custom_call.1} parent=11 // pred_region
        _
      $region36: #{tpu_custom_call.1} parent=11 // pred_fallthru
        _
      // Predicated region
      $region37: #{tpu_custom_call.1} parent=11 // pred_check
        %p458 = pneg %p208
      $region38: #{tpu_custom_call.1} parent=11 // pred_check_branch
        %460 = sbr.rel (%p458) target = $region40
      $region39: #{tpu_custom_call.1} parent=11 // pred_region
        _
      $region40: #{tpu_custom_call.1} parent=11 // pred_fallthru
        _
      // Predicated region
      $region41: #{tpu_custom_call.1} parent=11 // pred_check
        %p461 = pneg %p229
      $region42: #{tpu_custom_call.1} parent=11 // pred_check_branch
        %463 = sbr.rel (%p461) target = $region44
      $region43: #{tpu_custom_call.1} parent=11 // pred_region
        _
      $region44: #{tpu_custom_call.1} parent=11 // pred_fallthru
        _
      // Predicated region
      $region45: #{tpu_custom_call.1} parent=11 // pred_check
        %p464 = pneg %p250
      $region46: #{tpu_custom_call.1} parent=11 // pred_check_branch
        %466 = sbr.rel (%p464) target = $region48
      $region47: #{tpu_custom_call.1} parent=11 // pred_region
        _
      $region48: #{tpu_custom_call.1} parent=11 // pred_fallthru
        _
      // Predicated region
      $region49: #{tpu_custom_call.1} parent=11 // pred_check
        %p467 = pneg %p271
      $region50: #{tpu_custom_call.1} parent=11 // pred_check_branch
        %469 = sbr.rel (%p467) target = $region52
      $region51: #{tpu_custom_call.1} parent=11 // pred_region
        _
      $region52: #{tpu_custom_call.1} parent=11 // pred_fallthru
        _
      // Predicated region
      $region53: #{tpu_custom_call.1} parent=11 // pred_check
        %p470 = pneg %p292
      $region54: #{tpu_custom_call.1} parent=11 // pred_check_branch
        %472 = sbr.rel (%p470) target = $region56
      $region55: #{tpu_custom_call.1} parent=11 // pred_region
        _
      $region56: #{tpu_custom_call.1} parent=11 // pred_fallthru
        _
      // Predicated region
      $region57: #{tpu_custom_call.1} parent=11 // pred_check
        %p473 = pneg %p313
      $region58: #{tpu_custom_call.1} parent=11 // pred_check_branch
        %475 = sbr.rel (%p473) target = $region60
      $region59: #{tpu_custom_call.1} parent=11 // pred_region
        _
      $region60: #{tpu_custom_call.1} parent=11 // pred_fallthru
        _
      // Predicated region
      $region61: #{tpu_custom_call.1} parent=11 // pred_check
        %p476 = pneg %p334
      $region62: #{tpu_custom_call.1} parent=11 // pred_check_branch
        %478 = sbr.rel (%p476) target = $region64
      $region63: #{tpu_custom_call.1} parent=11 // pred_region
        _
      $region64: #{tpu_custom_call.1} parent=11 // pred_fallthru
        _
      // Predicated region
      $region65: #{tpu_custom_call.1} parent=11 // pred_check
        %p479 = pneg %p355
      $region66: #{tpu_custom_call.1} parent=11 // pred_check_branch
        %481 = sbr.rel (%p479) target = $region68
      $region67: #{tpu_custom_call.1} parent=11 // pred_region
        _
      $region68: #{tpu_custom_call.1} parent=11 // pred_fallthru
        _
      // Predicated region
      $region69: #{tpu_custom_call.1} parent=11 // pred_check
        %p482 = pneg %p376
      $region70: #{tpu_custom_call.1} parent=11 // pred_check_branch
        %484 = sbr.rel (%p482) target = $region72
      $region71: #{tpu_custom_call.1} parent=11 // pred_region
        _
      $region72: #{tpu_custom_call.1} parent=11 // pred_fallthru
        _
      // Predicated region
      $region73: #{tpu_custom_call.1} parent=11 // pred_check
        %p485 = pneg %p397
      $region74: #{tpu_custom_call.1} parent=11 // pred_check_branch
        %487 = sbr.rel (%p485) target = $region76
      $region75: #{tpu_custom_call.1} parent=11 // pred_region
        _
      $region76: #{tpu_custom_call.1} parent=11 // pred_fallthru
        _
    $region12: #{tpu_custom_call.1} parent=5 // pred_fallthru
      _
    %p488 = scmp.lt.s32.totalorder %s23, 4
    // Predicated region
    $region77: #{tpu_custom_call.1} parent=5 // pred_check
      %p489 = pneg %p488
    $region78: #{tpu_custom_call.1} parent=5 // pred_check_branch
      %491 = sbr.rel (%p489) target = $region80
    $region79: #{tpu_custom_call.1} parent=5 // pred_region
      // Predicated region
      $region81: #{tpu_custom_call.1} parent=79 // pred_check
        %p492 = pneg %p55
      $region82: #{tpu_custom_call.1} parent=79 // pred_check_branch
        %494 = sbr.rel (%p492) target = $region84
      $region83: #{tpu_custom_call.1} parent=79 // pred_region
        %p495 = scmp.lt.s32.totalorder %s30, 1
        %s496 = scalar_select %p495, %s30, 1
        %s497 = smul.addr %s496, 8
        %s498 = smul.addr %s497, 4
        %s499 = scalar_lea.vmem %s0, %s498
      $region84: #{tpu_custom_call.1} parent=79 // pred_fallthru
        _
    $region80: #{tpu_custom_call.1} parent=5 // pred_fallthru
      _
    %p500 = scmp.le.s32.totalorder 1, %s23
    %p501 = scmp.lt.s32.totalorder %s23, 5
    %p502 = pnand %p500, %p501
    %p503 = pneg %p502
    // Predicated region
    $region85: #{tpu_custom_call.1} parent=5 // pred_check
      _
    $region86: #{tpu_custom_call.1} parent=5 // pred_check_branch
      %505 = sbr.rel (%p502) target = $region88
    $region87: #{tpu_custom_call.1} parent=5 // pred_region
      %s506 = ssub.s32 %s23, 1
      %p507 = scmp.lt.s32.totalorder %s32, 1
      %s508 = scalar_select %p507, %s32, 1
      %s509 = smul.addr %s508, 8
      %s510 = smul.addr %s509, 4
      %s511 = scalar_lea.vmem %s0, %s510
      %p512 = pneg %p61
      %p513 = pneg %p58
      %p514 = pneg %p82
      %p515 = pneg %p79
      %p516 = pneg %p103
      %p517 = pneg %p100
      %p518 = pneg %p124
      %p519 = pneg %p121
      %p520 = pneg %p145
      %p521 = pneg %p142
      %p522 = pneg %p166
      %p523 = pneg %p163
      %p524 = pneg %p187
      %p525 = pneg %p184
      %p526 = pneg %p208
      %p527 = pneg %p205
      %p528 = pneg %p229
      %p529 = pneg %p226
      %p530 = pneg %p250
      %p531 = pneg %p247
      %p532 = pneg %p271
      %p533 = pneg %p268
      %p534 = pneg %p292
      %p535 = pneg %p289
      %p536 = pneg %p313
      %p537 = pneg %p310
      %p538 = pneg %p334
      %p539 = pneg %p331
      %p540 = pneg %p355
      %p541 = pneg %p352
      %p542 = pneg %p376
      %p543 = pneg %p373
      %p544 = pneg %p397
      %p545 = pneg %p394
      %p546 = pneg %p425
      %p547 = pneg %p422
      %s548 = smul.u32 4, %s33
      %p549 = scmp.lt.s32.totalorder %s32, 1
      %s550 = scalar_select %p549, %s32, 1
      %p551 = scmp.lt.s32.totalorder %s548, 7
      %s552 = scalar_select %p551, %s548, 7
      %s553 = smul.addr %s550, 8
      %s554 = sadd.s32 %s552, %s553
      %s555 = smul.addr %s554, 8
      %s556 = scalar_lea.vmem %s17, %s555
      %p557 = scmp.lt.s32.totalorder %s32, 1
      %s558 = scalar_select %p557, %s32, 1
      %s559 = smul.addr %s558, 8
      %s560 = smul.addr %s559, 4
      %s561 = scalar_lea.vmem %s0, %s560
      %s562 = smul.u32 4, %s33
      %p563 = scmp.lt.s32.totalorder %s32, 1
      %s564 = scalar_select %p563, %s32, 1
      %p565 = scmp.lt.s32.totalorder %s562, 7
      %s566 = scalar_select %p565, %s562, 7
      %s567 = smul.addr %s564, 8
      %s568 = sadd.s32 %s566, %s567
      %s569 = smul.addr %s568, 8
      %s570 = scalar_lea.vmem %s17, %s569
      %s571 = smul.u32 4, %s33
      %p573 = scmp.eq.s32.totalorder %s33, 0
      // Predicated region
      $region89: #{tpu_custom_call.1} parent=87 // pred_check
        %p574 = pneg %p573
      $region90: #{tpu_custom_call.1} parent=87 // pred_check_branch
        %576 = sbr.rel (%p574) target = $region92
      $region91: #{tpu_custom_call.1} parent=87 // pred_region
        %v577 = vld [vmem:[%s561] sm:$0xf]
        %v578 = vld [vmem:[%s561 + $0x4] sm:$0xf]
        %v579 = vld [vmem:[%s561 + $0x8] sm:$0xf]
        %v580 = vld [vmem:[%s561 + $0xc] sm:$0xf]
        %v581 = vld [vmem:[%s561 + $0x10] sm:$0xf]
        %v582 = vld [vmem:[%s561 + $0x14] sm:$0xf]
        %v583 = vld [vmem:[%s561 + $0x18] sm:$0xf]
        %v584 = vld [vmem:[%s561 + $0x1c] sm:$0xf]
        %v585 = vld [vmem:[%s3] sm:$0xf]
        %v586 = vld [vmem:[%s3 + $0x4] sm:$0xf]
        %v587 = vld [vmem:[%s3 + $0x8] sm:$0xf]
        %v588 = vld [vmem:[%s3 + $0xc] sm:$0xf]
        %v589 = vld [vmem:[%s4] sm:$0x1]
        %v591 = vlaneseq
        %v592 = vshrl.u32 %v591, 7
        %v593 = vsub.s32 0, %v592
        %v594 = vrot.slane %v589, %v593
        %v604 = vunpack.c.l.b16 %v577
        %v605 = vunpack.c.l.b16 %v578
        %v606 = vunpack.c.l.b16 %v579
        %v607 = vunpack.c.l.b16 %v580
        %v608 = vunpack.c.l.b16 %v581
        %v609 = vunpack.c.l.b16 %v582
        %v610 = vunpack.c.l.b16 %v583
        %v611 = vunpack.c.l.b16 %v584
        %v612 = vpack.c.b16 %v605, %v604
        %v613 = vpack.c.b16 %v607, %v606
        %v614 = vpack.c.b16 %v609, %v608
        %v615 = vpack.c.b16 %v611, %v610
        %v620 = vunpack.c.l.b16 %v585
        %v621 = vunpack.c.l.b16 %v586
        %v622 = vunpack.c.l.b16 %v587
        %v623 = vunpack.c.l.b16 %v588
        %v624 = vpack.c.b16 %v621, %v620
        %v625 = vpack.c.b16 %v623, %v622
        %vm628 = vcmask 261120
        %v630 = vsel %vm628, %v612, 0
        %v633 = vsel %vm628, %v613, 0
        %v636 = vsel %vm628, %v614, 0
        %v639 = vsel %vm628, %v615, 0
        %641 = vmatprep.subr.bf16.mxu0 0
        %642 = vmatpush1.bf16.msra.mxu0 %v624
        %643 = vmatprep.subr.bf16.mxu0 0
        %644 = vmatpush1.bf16.msra.mxu0 %v625
        %645 = vmatprep.subr.bf16.mxu0 0
        %646 = vmatpush1.bf16.msra.mxu0 0
        %647 = vmatprep.subr.bf16.mxu0 0
        %648 = vmatpush1.bf16.msra.mxu0 0
        %649 = vmatprep.subr.bf16.mxu0 0
        %650 = vmatpush1.bf16.msra.mxu0 0
        %651 = vmatprep.subr.bf16.mxu0 0
        %652 = vmatpush1.bf16.msra.mxu0 0
        %653 = vmatprep.subr.bf16.mxu0 0
        %654 = vmatpush1.bf16.msra.mxu0 0
        %655 = vmatprep.subr.bf16.mxu0 0
        %656 = vmatpush1.bf16.msra.mxu0 0
        %657 = vmatprep.subr.bf16.mxu0 0
        %658 = vmatpush1.bf16.msra.mxu0 0
        %659 = vmatprep.subr.bf16.mxu0 0
        %660 = vmatpush1.bf16.msra.mxu0 0
        %661 = vmatprep.subr.bf16.mxu0 0
        %662 = vmatpush1.bf16.msra.mxu0 0
        %663 = vmatprep.subr.bf16.mxu0 0
        %664 = vmatpush1.bf16.msra.mxu0 0
        %665 = vmatprep.subr.bf16.mxu0 0
        %666 = vmatpush1.bf16.msra.mxu0 0
        %667 = vmatprep.subr.bf16.mxu0 0
        %668 = vmatpush1.bf16.msra.mxu0 0
        %669 = vmatprep.subr.bf16.mxu0 0
        %670 = vmatpush1.bf16.msra.mxu0 0
        %671 = vmatprep.subr.bf16.mxu0 0
        %672 = vmatpush1.bf16.msra.mxu0 0
        %673 = vmatprep.mubr.bf16.mxu0 0
        %674 = vmatmul.mubr.bf16.gmra.mrb[0].mxu0 %v630
        %v675 = vpop.f32.mrb[0].mxu0
        %v676 = vadd.f32 %v594, %v675
        %v677 = vpop.f32.mrb[0].mxu0
        %v678 = vpop.f32.mrb[0].mxu0
        %v679 = vadd.f32 %v594, %v678
        %v680 = vpop.f32.mrb[0].mxu0
        %681 = vmatprep.mubr.bf16.mxu0 0
        %682 = vmatmul.mubr.bf16.gmra.mrb[0].mxu0 %v633
        %v683 = vpop.f32.mrb[0].mxu0
        %v684 = vadd.f32 %v594, %v683
        %v685 = vpop.f32.mrb[0].mxu0
        %v686 = vpop.f32.mrb[0].mxu0
        %v687 = vadd.f32 %v594, %v686
        %v688 = vpop.f32.mrb[0].mxu0
        %689 = vmatprep.mubr.bf16.mxu0 0
        %690 = vmatmul.mubr.bf16.gmra.mrb[0].mxu0 %v636
        %v691 = vpop.f32.mrb[0].mxu0
        %v692 = vadd.f32 %v594, %v691
        %v693 = vpop.f32.mrb[0].mxu0
        %v694 = vpop.f32.mrb[0].mxu0
        %v695 = vadd.f32 %v594, %v694
        %v696 = vpop.f32.mrb[0].mxu0
        %697 = vmatprep.mubr.bf16.mxu0 0
        %698 = vmatmul.mubr.bf16.gmra.mrb[0].mxu0 %v639
        %v699 = vpop.f32.mrb[0].mxu0
        %v700 = vadd.f32 %v594, %v699
        %v701 = vpop.f32.mrb[0].mxu0
        %v702 = vpop.f32.mrb[0].mxu0
        %v703 = vadd.f32 %v594, %v702
        %v704 = vpop.f32.mrb[0].mxu0
        %705 = vdwg.mxu0
        %706 = vst.msk [vmem:[#allocation4] sm:$0xff] %vm628, %v676
        %707 = vst.msk [vmem:[#allocation4 + $0x8] sm:$0xff] %vm628, %v679
        %708 = vst.msk [vmem:[#allocation4 + $0x10] sm:$0xff] %vm628, %v684
        %709 = vst.msk [vmem:[#allocation4 + $0x18] sm:$0xff] %vm628, %v687
        %710 = vst.msk [vmem:[#allocation4 + $0x20] sm:$0xff] %vm628, %v692
        %711 = vst.msk [vmem:[#allocation4 + $0x28] sm:$0xff] %vm628, %v695
        %712 = vst.msk [vmem:[#allocation4 + $0x30] sm:$0xff] %vm628, %v700
        %713 = vst.msk [vmem:[#allocation4 + $0x38] sm:$0xff] %vm628, %v703
        %v714 = vld [vmem:[#allocation4] sm:$0xff]
        %v715 = vld [vmem:[#allocation4 + $0x8] sm:$0xff]
        %v716 = vld [vmem:[#allocation4 + $0x10] sm:$0xff]
        %v717 = vld [vmem:[#allocation4 + $0x18] sm:$0xff]
        %v718 = vld [vmem:[#allocation4 + $0x20] sm:$0xff]
        %v719 = vld [vmem:[#allocation4 + $0x28] sm:$0xff]
        %v720 = vld [vmem:[#allocation4 + $0x30] sm:$0xff]
        %v721 = vld [vmem:[#allocation4 + $0x38] sm:$0xff]
        %722 = vxpose.xlu0.b32.start [1/16] %v714, 128
        %723 = vxpose.xlu0.b32.cont [2/16] %v715, 128
        %724 = vxpose.xlu0.b32.cont [3/16] %v716, 128
        %725 = vxpose.xlu0.b32.cont [4/16] %v717, 128
        %726 = vxpose.xlu0.b32.cont [5/16] %v718, 128
        %727 = vxpose.xlu0.b32.cont [6/16] %v719, 128
        %728 = vxpose.xlu0.b32.cont [7/16] %v720, 128
        %729 = vxpose.xlu0.b32.cont [8/16] %v721, 128
        %730 = vxpose.xlu0.b32.cont [9/16] 0.0, 128
        %731 = vxpose.xlu0.b32.cont [10/16] 0.0, 128
        %732 = vxpose.xlu0.b32.cont [11/16] 0.0, 128
        %733 = vxpose.xlu0.b32.cont [12/16] 0.0, 128
        %734 = vxpose.xlu0.b32.cont [13/16] 0.0, 128
        %735 = vxpose.xlu0.b32.cont [14/16] 0.0, 128
        %736 = vxpose.xlu0.b32.cont [15/16] 0.0, 128
        %737 = vxpose.xlu0.b32.end [16/16] 0.0, 128
        %v738 = vpop.trf.xlu0
        %v739 = vpop.trf.xlu0
        %v740 = vpop.trf.xlu0
        %v741 = vpop.trf.xlu0
        %v742 = vpop.trf.xlu0
        %v743 = vpop.trf.xlu0
        %v744 = vpop.trf.xlu0
        %v745 = vpop.trf.xlu0
        %v746 = vpop.trf.xlu0
        %v747 = vpop.trf.xlu0
        %v748 = vpop.trf.xlu0
        %v749 = vpop.trf.xlu0
        %v750 = vpop.trf.xlu0
        %v751 = vpop.trf.xlu0
        %v752 = vpop.trf.xlu0
        %v753 = vpop.trf.xlu0
        %v754 = vpack.c.bf16 %v738, %v738
        %vm755 = vcmask 519168
        %756 = vst.msk [vmem:[#allocation2] sm:$0xf] %vm755, %v754
        %v757 = vld [vmem:[#allocation4] sm:$0xff]
        %v758 = vld [vmem:[#allocation4 + $0x8] sm:$0xff]
        %v759 = vld [vmem:[#allocation4 + $0x10] sm:$0xff]
        %v760 = vld [vmem:[#allocation4 + $0x18] sm:$0xff]
        %v761 = vld [vmem:[#allocation4 + $0x20] sm:$0xff]
        %v762 = vld [vmem:[#allocation4 + $0x28] sm:$0xff]
        %v763 = vld [vmem:[#allocation4 + $0x30] sm:$0xff]
        %v764 = vld [vmem:[#allocation4 + $0x38] sm:$0xff]
        %773 = vrot.lane.b32.xlu0 %v757, 120
        %v774 = vpop.permute.xlu0 %773
        %775 = vrot.lane.b32.xlu0 %v758, 120
        %v776 = vpop.permute.xlu0 %775
        %777 = vrot.lane.b32.xlu0 %v759, 120
        %v778 = vpop.permute.xlu0 %777
        %779 = vrot.lane.b32.xlu0 %v760, 120
        %v780 = vpop.permute.xlu0 %779
        %781 = vrot.lane.b32.xlu0 %v761, 120
        %v782 = vpop.permute.xlu0 %781
        %783 = vrot.lane.b32.xlu0 %v762, 120
        %v784 = vpop.permute.xlu0 %783
        %785 = vrot.lane.b32.xlu0 %v763, 120
        %v786 = vpop.permute.xlu0 %785
        %787 = vrot.lane.b32.xlu0 %v764, 120
        %v788 = vpop.permute.xlu0 %787
        %797 = vxpose.xlu0.b32.start [1/16] %v774, 128
        %798 = vxpose.xlu0.b32.cont [2/16] %v776, 128
        %799 = vxpose.xlu0.b32.cont [3/16] %v778, 128
        %800 = vxpose.xlu0.b32.cont [4/16] %v780, 128
        %801 = vxpose.xlu0.b32.cont [5/16] %v782, 128
        %802 = vxpose.xlu0.b32.cont [6/16] %v784, 128
        %803 = vxpose.xlu0.b32.cont [7/16] %v786, 128
        %804 = vxpose.xlu0.b32.cont [8/16] %v788, 128
        %805 = vxpose.xlu0.b32.cont [9/16] 0.0, 128
        %806 = vxpose.xlu0.b32.cont [10/16] 0.0, 128
        %807 = vxpose.xlu0.b32.cont [11/16] 0.0, 128
        %808 = vxpose.xlu0.b32.cont [12/16] 0.0, 128
        %809 = vxpose.xlu0.b32.cont [13/16] 0.0, 128
        %810 = vxpose.xlu0.b32.cont [14/16] 0.0, 128
        %811 = vxpose.xlu0.b32.cont [15/16] 0.0, 128
        %812 = vxpose.xlu0.b32.end [16/16] 0.0, 128
        %v813 = vpop.trf.xlu0
        %v814 = vpop.trf.xlu0
        %v815 = vpop.trf.xlu0
        %v816 = vpop.trf.xlu0
        %v817 = vpop.trf.xlu0
        %v818 = vpop.trf.xlu0
        %v819 = vpop.trf.xlu0
        %v820 = vpop.trf.xlu0
        %v821 = vpop.trf.xlu0
        %v822 = vpop.trf.xlu0
        %v823 = vpop.trf.xlu0
        %v824 = vpop.trf.xlu0
        %v825 = vpop.trf.xlu0
        %v826 = vpop.trf.xlu0
        %v827 = vpop.trf.xlu0
        %v828 = vpop.trf.xlu0
        %v829 = vpack.c.bf16 %v813, %v813
        %s830 = scalar_lea.vmem [#allocation2], 4
        %831 = vst.msk [vmem:[%s830] sm:$0xf] %vm755, %v829
        %v832 = vld [vmem:[#allocation4] sm:$0xff]
        %v833 = vld [vmem:[#allocation4 + $0x8] sm:$0xff]
        %v834 = vld [vmem:[#allocation4 + $0x10] sm:$0xff]
        %v835 = vld [vmem:[#allocation4 + $0x18] sm:$0xff]
        %v836 = vld [vmem:[#allocation4 + $0x20] sm:$0xff]
        %v837 = vld [vmem:[#allocation4 + $0x28] sm:$0xff]
        %v838 = vld [vmem:[#allocation4 + $0x30] sm:$0xff]
        %v839 = vld [vmem:[#allocation4 + $0x38] sm:$0xff]
        %848 = vrot.lane.b32.xlu0 %v832, 112
        %v849 = vpop.permute.xlu0 %848
        %850 = vrot.lane.b32.xlu0 %v833, 112
        %v851 = vpop.permute.xlu0 %850
        %852 = vrot.lane.b32.xlu0 %v834, 112
        %v853 = vpop.permute.xlu0 %852
        %854 = vrot.lane.b32.xlu0 %v835, 112
        %v855 = vpop.permute.xlu0 %854
        %856 = vrot.lane.b32.xlu0 %v836, 112
        %v857 = vpop.permute.xlu0 %856
        %858 = vrot.lane.b32.xlu0 %v837, 112
        %v859 = vpop.permute.xlu0 %858
        %860 = vrot.lane.b32.xlu0 %v838, 112
        %v861 = vpop.permute.xlu0 %860
        %862 = vrot.lane.b32.xlu0 %v839, 112
        %v863 = vpop.permute.xlu0 %862
        %872 = vxpose.xlu0.b32.start [1/16] %v849, 128
        %873 = vxpose.xlu0.b32.cont [2/16] %v851, 128
        %874 = vxpose.xlu0.b32.cont [3/16] %v853, 128
        %875 = vxpose.xlu0.b32.cont [4/16] %v855, 128
        %876 = vxpose.xlu0.b32.cont [5/16] %v857, 128
        %877 = vxpose.xlu0.b32.cont [6/16] %v859, 128
        %878 = vxpose.xlu0.b32.cont [7/16] %v861, 128
        %879 = vxpose.xlu0.b32.cont [8/16] %v863, 128
        %880 = vxpose.xlu0.b32.cont [9/16] 0.0, 128
        %881 = vxpose.xlu0.b32.cont [10/16] 0.0, 128
        %882 = vxpose.xlu0.b32.cont [11/16] 0.0, 128
        %883 = vxpose.xlu0.b32.cont [12/16] 0.0, 128
        %884 = vxpose.xlu0.b32.cont [13/16] 0.0, 128
        %885 = vxpose.xlu0.b32.cont [14/16] 0.0, 128
        %886 = vxpose.xlu0.b32.cont [15/16] 0.0, 128
        %887 = vxpose.xlu0.b32.end [16/16] 0.0, 128
        %v888 = vpop.trf.xlu0
        %v889 = vpop.trf.xlu0
        %v890 = vpop.trf.xlu0
        %v891 = vpop.trf.xlu0
        %v892 = vpop.trf.xlu0
        %v893 = vpop.trf.xlu0
        %v894 = vpop.trf.xlu0
        %v895 = vpop.trf.xlu0
        %v896 = vpop.trf.xlu0
        %v897 = vpop.trf.xlu0
        %v898 = vpop.trf.xlu0
        %v899 = vpop.trf.xlu0
        %v900 = vpop.trf.xlu0
        %v901 = vpop.trf.xlu0
        %v902 = vpop.trf.xlu0
        %v903 = vpop.trf.xlu0
        %v904 = vpack.c.bf16 %v888, %v888
        %s905 = scalar_lea.vmem [#allocation2], 8
        %906 = vst.msk [vmem:[%s905] sm:$0xf] %vm755, %v904
        %v907 = vld [vmem:[#allocation4] sm:$0xff]
        %v908 = vld [vmem:[#allocation4 + $0x8] sm:$0xff]
        %v909 = vld [vmem:[#allocation4 + $0x10] sm:$0xff]
        %v910 = vld [vmem:[#allocation4 + $0x18] sm:$0xff]
        %v911 = vld [vmem:[#allocation4 + $0x20] sm:$0xff]
        %v912 = vld [vmem:[#allocation4 + $0x28] sm:$0xff]
        %v913 = vld [vmem:[#allocation4 + $0x30] sm:$0xff]
        %v914 = vld [vmem:[#allocation4 + $0x38] sm:$0xff]
        %923 = vrot.lane.b32.xlu0 %v907, 104
        %v924 = vpop.permute.xlu0 %923
        %925 = vrot.lane.b32.xlu0 %v908, 104
        %v926 = vpop.permute.xlu0 %925
        %927 = vrot.lane.b32.xlu0 %v909, 104
        %v928 = vpop.permute.xlu0 %927
        %929 = vrot.lane.b32.xlu0 %v910, 104
        %v930 = vpop.permute.xlu0 %929
        %931 = vrot.lane.b32.xlu0 %v911, 104
        %v932 = vpop.permute.xlu0 %931
        %933 = vrot.lane.b32.xlu0 %v912, 104
        %v934 = vpop.permute.xlu0 %933
        %935 = vrot.lane.b32.xlu0 %v913, 104
        %v936 = vpop.permute.xlu0 %935
        %937 = vrot.lane.b32.xlu0 %v914, 104
        %v938 = vpop.permute.xlu0 %937
        %947 = vxpose.xlu0.b32.start [1/16] %v924, 128
        %948 = vxpose.xlu0.b32.cont [2/16] %v926, 128
        %949 = vxpose.xlu0.b32.cont [3/16] %v928, 128
        %950 = vxpose.xlu0.b32.cont [4/16] %v930, 128
        %951 = vxpose.xlu0.b32.cont [5/16] %v932, 128
        %952 = vxpose.xlu0.b32.cont [6/16] %v934, 128
        %953 = vxpose.xlu0.b32.cont [7/16] %v936, 128
        %954 = vxpose.xlu0.b32.cont [8/16] %v938, 128
        %955 = vxpose.xlu0.b32.cont [9/16] 0.0, 128
        %956 = vxpose.xlu0.b32.cont [10/16] 0.0, 128
        %957 = vxpose.xlu0.b32.cont [11/16] 0.0, 128
        %958 = vxpose.xlu0.b32.cont [12/16] 0.0, 128
        %959 = vxpose.xlu0.b32.cont [13/16] 0.0, 128
        %960 = vxpose.xlu0.b32.cont [14/16] 0.0, 128
        %961 = vxpose.xlu0.b32.cont [15/16] 0.0, 128
        %962 = vxpose.xlu0.b32.end [16/16] 0.0, 128
        %v963 = vpop.trf.xlu0
        %v964 = vpop.trf.xlu0
        %v965 = vpop.trf.xlu0
        %v966 = vpop.trf.xlu0
        %v967 = vpop.trf.xlu0
        %v968 = vpop.trf.xlu0
        %v969 = vpop.trf.xlu0
        %v970 = vpop.trf.xlu0
        %v971 = vpop.trf.xlu0
        %v972 = vpop.trf.xlu0
        %v973 = vpop.trf.xlu0
        %v974 = vpop.trf.xlu0
        %v975 = vpop.trf.xlu0
        %v976 = vpop.trf.xlu0
        %v977 = vpop.trf.xlu0
        %v978 = vpop.trf.xlu0
        %v979 = vpack.c.bf16 %v963, %v963
        %s980 = scalar_lea.vmem [#allocation2], 12
        %981 = vst.msk [vmem:[%s980] sm:$0xf] %vm755, %v979
        %v982 = vld [vmem:[%s5] sm:$0xf]
        %v983 = vld [vmem:[%s5 + $0x4] sm:$0xf]
        %v984 = vld [vmem:[%s5 + $0x8] sm:$0xf]
        %v985 = vld [vmem:[%s5 + $0xc] sm:$0xf]
        %v986 = vld [vmem:[%s6] sm:$0x1]
        %v988 = vlaneseq
        %v989 = vshrl.u32 %v988, 7
        %v990 = vsub.s32 0, %v989
        %v991 = vrot.slane %v986, %v990
        %v997 = vunpack.c.l.b16 %v982
        %v998 = vunpack.c.l.b16 %v983
        %v999 = vunpack.c.l.b16 %v984
        %v1000 = vunpack.c.l.b16 %v985
        %v1001 = vpack.c.b16 %v998, %v997
        %v1002 = vpack.c.b16 %v1000, %v999
        %1005 = vmatprep.subr.bf16.mxu0 0
        %1006 = vmatpush1.bf16.msra.mxu0 %v1001
        %1007 = vmatprep.subr.bf16.mxu0 0
        %1008 = vmatpush1.bf16.msra.mxu0 %v1002
        %1009 = vmatprep.subr.bf16.mxu0 0
        %1010 = vmatpush1.bf16.msra.mxu0 0
        %1011 = vmatprep.subr.bf16.mxu0 0
        %1012 = vmatpush1.bf16.msra.mxu0 0
        %1013 = vmatprep.subr.bf16.mxu0 0
        %1014 = vmatpush1.bf16.msra.mxu0 0
        %1015 = vmatprep.subr.bf16.mxu0 0
        %1016 = vmatpush1.bf16.msra.mxu0 0
        %1017 = vmatprep.subr.bf16.mxu0 0
        %1018 = vmatpush1.bf16.msra.mxu0 0
        %1019 = vmatprep.subr.bf16.mxu0 0
        %1020 = vmatpush1.bf16.msra.mxu0 0
        %1021 = vmatprep.subr.bf16.mxu0 0
        %1022 = vmatpush1.bf16.msra.mxu0 0
        %1023 = vmatprep.subr.bf16.mxu0 0
        %1024 = vmatpush1.bf16.msra.mxu0 0
        %1025 = vmatprep.subr.bf16.mxu0 0
        %1026 = vmatpush1.bf16.msra.mxu0 0
        %1027 = vmatprep.subr.bf16.mxu0 0
        %1028 = vmatpush1.bf16.msra.mxu0 0
        %1029 = vmatprep.subr.bf16.mxu0 0
        %1030 = vmatpush1.bf16.msra.mxu0 0
        %1031 = vmatprep.subr.bf16.mxu0 0
        %1032 = vmatpush1.bf16.msra.mxu0 0
        %1033 = vmatprep.subr.bf16.mxu0 0
        %1034 = vmatpush1.bf16.msra.mxu0 0
        %1035 = vmatprep.subr.bf16.mxu0 0
        %1036 = vmatpush1.bf16.msra.mxu0 0
        %1037 = vmatprep.mubr.bf16.mxu0 0
        %1038 = vmatmul.mubr.bf16.gmra.mrb[0].mxu0 %v630
        %v1039 = vpop.f32.mrb[0].mxu0
        %v1040 = vadd.f32 %v991, %v1039
        %v1041 = vpop.f32.mrb[0].mxu0
        %v1042 = vpop.f32.mrb[0].mxu0
        %v1043 = vadd.f32 %v991, %v1042
        %v1044 = vpop.f32.mrb[0].mxu0
        %1045 = vmatprep.mubr.bf16.mxu0 0
        %1046 = vmatmul.mubr.bf16.gmra.mrb[0].mxu0 %v633
        %v1047 = vpop.f32.mrb[0].mxu0
        %v1048 = vadd.f32 %v991, %v1047
        %v1049 = vpop.f32.mrb[0].mxu0
        %v1050 = vpop.f32.mrb[0].mxu0
        %v1051 = vadd.f32 %v991, %v1050
        %v1052 = vpop.f32.mrb[0].mxu0
        %1053 = vmatprep.mubr.bf16.mxu0 0
        %1054 = vmatmul.mubr.bf16.gmra.mrb[0].mxu0 %v636
        %v1055 = vpop.f32.mrb[0].mxu0
        %v1056 = vadd.f32 %v991, %v1055
        %v1057 = vpop.f32.mrb[0].mxu0
        %v1058 = vpop.f32.mrb[0].mxu0
        %v1059 = vadd.f32 %v991, %v1058
        %v1060 = vpop.f32.mrb[0].mxu0
        %1061 = vmatprep.mubr.bf16.mxu0 0
        %1062 = vmatmul.mubr.bf16.gmra.mrb[0].mxu0 %v639
        %v1063 = vpop.f32.mrb[0].mxu0
        %v1064 = vadd.f32 %v991, %v1063
        %v1065 = vpop.f32.mrb[0].mxu0
        %v1066 = vpop.f32.mrb[0].mxu0
        %v1067 = vadd.f32 %v991, %v1066
        %v1068 = vpop.f32.mrb[0].mxu0
        %1069 = vdwg.mxu0
        %1070 = vst.msk [vmem:[#allocation4] sm:$0xff] %vm628, %v1040
        %1071 = vst.msk [vmem:[#allocation4 + $0x8] sm:$0xff] %vm628, %v1043
        %1072 = vst.msk [vmem:[#allocation4 + $0x10] sm:$0xff] %vm628, %v1048
        %1073 = vst.msk [vmem:[#allocation4 + $0x18] sm:$0xff] %vm628, %v1051
        %1074 = vst.msk [vmem:[#allocation4 + $0x20] sm:$0xff] %vm628, %v1056
        %1075 = vst.msk [vmem:[#allocation4 + $0x28] sm:$0xff] %vm628, %v1059
        %1076 = vst.msk [vmem:[#allocation4 + $0x30] sm:$0xff] %vm628, %v1064
        %1077 = vst.msk [vmem:[#allocation4 + $0x38] sm:$0xff] %vm628, %v1067
        %v1078 = vld [vmem:[#allocation4] sm:$0xff]
        %v1079 = vld [vmem:[#allocation4 + $0x8] sm:$0xff]
        %v1080 = vld [vmem:[#allocation4 + $0x10] sm:$0xff]
        %v1081 = vld [vmem:[#allocation4 + $0x18] sm:$0xff]
        %v1082 = vld [vmem:[#allocation4 + $0x20] sm:$0xff]
        %v1083 = vld [vmem:[#allocation4 + $0x28] sm:$0xff]
        %v1084 = vld [vmem:[#allocation4 + $0x30] sm:$0xff]
        %v1085 = vld [vmem:[#allocation4 + $0x38] sm:$0xff]
        %v1086 = vpack.c.bf16 %v1079, %v1078
        %v1087 = vpack.c.bf16 %v1081, %v1080
        %v1088 = vpack.c.bf16 %v1083, %v1082
        %v1089 = vpack.c.bf16 %v1085, %v1084
        %vm1090 = vcmask 64512
        %1091 = vst.msk [vmem:[#allocation3] sm:$0xff] %vm1090, %v1086
        %1092 = vst.msk [vmem:[#allocation3 + $0x8] sm:$0xff] %vm1090, %v1087
        %1093 = vst.msk [vmem:[#allocation3 + $0x10] sm:$0xff] %vm1090, %v1088
        %1094 = vst.msk [vmem:[#allocation3 + $0x18] sm:$0xff] %vm1090, %v1089
        %v1095 = vld [vmem:[#allocation4] sm:$0xff]
        %v1096 = vld [vmem:[#allocation4 + $0x8] sm:$0xff]
        %v1097 = vld [vmem:[#allocation4 + $0x10] sm:$0xff]
        %v1098 = vld [vmem:[#allocation4 + $0x18] sm:$0xff]
        %v1099 = vld [vmem:[#allocation4 + $0x20] sm:$0xff]
        %v1100 = vld [vmem:[#allocation4 + $0x28] sm:$0xff]
        %v1101 = vld [vmem:[#allocation4 + $0x30] sm:$0xff]
        %v1102 = vld [vmem:[#allocation4 + $0x38] sm:$0xff]
        %v1103 = vpack.c.bf16 %v1096, %v1095
        %v1104 = vpack.c.bf16 %v1098, %v1097
        %v1105 = vpack.c.bf16 %v1100, %v1099
        %v1106 = vpack.c.bf16 %v1102, %v1101
        %1111 = vrot.lane.b32.xlu0 %v1103, 120
        %v1112 = vpop.permute.xlu0 %1111
        %1113 = vrot.lane.b32.xlu0 %v1104, 120
        %v1114 = vpop.permute.xlu0 %1113
        %1115 = vrot.lane.b32.xlu0 %v1105, 120
        %v1116 = vpop.permute.xlu0 %1115
        %1117 = vrot.lane.b32.xlu0 %v1106, 120
        %v1118 = vpop.permute.xlu0 %1117
        %s1123 = scalar_lea.vmem [#allocation3], 32
        %1124 = vst.msk [vmem:[%s1123] sm:$0xff] %vm1090, %v1112
        %1125 = vst.msk [vmem:[%s1123 + $0x8] sm:$0xff] %vm1090, %v1114
        %1126 = vst.msk [vmem:[%s1123 + $0x10] sm:$0xff] %vm1090, %v1116
        %1127 = vst.msk [vmem:[%s1123 + $0x18] sm:$0xff] %vm1090, %v1118
        %v1128 = vld [vmem:[#allocation4] sm:$0xff]
        %v1129 = vld [vmem:[#allocation4 + $0x8] sm:$0xff]
        %v1130 = vld [vmem:[#allocation4 + $0x10] sm:$0xff]
        %v1131 = vld [vmem:[#allocation4 + $0x18] sm:$0xff]
        %v1132 = vld [vmem:[#allocation4 + $0x20] sm:$0xff]
        %v1133 = vld [vmem:[#allocation4 + $0x28] sm:$0xff]
        %v1134 = vld [vmem:[#allocation4 + $0x30] sm:$0xff]
        %v1135 = vld [vmem:[#allocation4 + $0x38] sm:$0xff]
        %v1136 = vpack.c.bf16 %v1129, %v1128
        %v1137 = vpack.c.bf16 %v1131, %v1130
        %v1138 = vpack.c.bf16 %v1133, %v1132
        %v1139 = vpack.c.bf16 %v1135, %v1134
        %1144 = vrot.lane.b32.xlu0 %v1136, 112
        %v1145 = vpop.permute.xlu0 %1144
        %1146 = vrot.lane.b32.xlu0 %v1137, 112
        %v1147 = vpop.permute.xlu0 %1146
        %1148 = vrot.lane.b32.xlu0 %v1138, 112
        %v1149 = vpop.permute.xlu0 %1148
        %1150 = vrot.lane.b32.xlu0 %v1139, 112
        %v1151 = vpop.permute.xlu0 %1150
        %s1156 = scalar_lea.vmem [#allocation3], 64
        %1157 = vst.msk [vmem:[%s1156] sm:$0xff] %vm1090, %v1145
        %1158 = vst.msk [vmem:[%s1156 + $0x8] sm:$0xff] %vm1090, %v1147
        %1159 = vst.msk [vmem:[%s1156 + $0x10] sm:$0xff] %vm1090, %v1149
        %1160 = vst.msk [vmem:[%s1156 + $0x18] sm:$0xff] %vm1090, %v1151
        %v1161 = vld [vmem:[#allocation4] sm:$0xff]
        %v1162 = vld [vmem:[#allocation4 + $0x8] sm:$0xff]
        %v1163 = vld [vmem:[#allocation4 + $0x10] sm:$0xff]
        %v1164 = vld [vmem:[#allocation4 + $0x18] sm:$0xff]
        %v1165 = vld [vmem:[#allocation4 + $0x20] sm:$0xff]
        %v1166 = vld [vmem:[#allocation4 + $0x28] sm:$0xff]
        %v1167 = vld [vmem:[#allocation4 + $0x30] sm:$0xff]
        %v1168 = vld [vmem:[#allocation4 + $0x38] sm:$0xff]
        %v1169 = vpack.c.bf16 %v1162, %v1161
        %v1170 = vpack.c.bf16 %v1164, %v1163
        %v1171 = vpack.c.bf16 %v1166, %v1165
        %v1172 = vpack.c.bf16 %v1168, %v1167
        %1177 = vrot.lane.b32.xlu0 %v1169, 104
        %v1178 = vpop.permute.xlu0 %1177
        %1179 = vrot.lane.b32.xlu0 %v1170, 104
        %v1180 = vpop.permute.xlu0 %1179
        %1181 = vrot.lane.b32.xlu0 %v1171, 104
        %v1182 = vpop.permute.xlu0 %1181
        %1183 = vrot.lane.b32.xlu0 %v1172, 104
        %v1184 = vpop.permute.xlu0 %1183
        %s1189 = scalar_lea.vmem [#allocation3], 96
        %1190 = vst.msk [vmem:[%s1189] sm:$0xff] %vm1090, %v1178
        %1191 = vst.msk [vmem:[%s1189 + $0x8] sm:$0xff] %vm1090, %v1180
        %1192 = vst.msk [vmem:[%s1189 + $0x10] sm:$0xff] %vm1090, %v1182
        %1193 = vst.msk [vmem:[%s1189 + $0x18] sm:$0xff] %vm1090, %v1184
      $region92: #{tpu_custom_call.1} parent=87 // pred_fallthru
        _
      %s1194 = smul.u32 %s33, 32
      %s1195 = sshra.s32 %s1194, 3
      %s1196 = sand.u32 %s1194, 7
      %s1197 = smul.addr %s1195, 4
      %s1198 = scalar_lea.vmem %s561, %s1197
      %v1199 = vld [vmem:[%s1198] sm:$0xf]
      %v1200 = vld [vmem:[%s1198 + $0x4] sm:$0xf]
      %v1201 = vld [vmem:[%s1198 + $0x8] sm:$0xf]
      %v1202 = vld [vmem:[%s1198 + $0xc] sm:$0xf]
      %v1203 = vunpack.c.l.bf16 %v1199
      %v1204 = vunpack.c.l.bf16 %v1200
      %v1205 = vunpack.c.l.bf16 %v1201
      %v1206 = vunpack.c.l.bf16 %v1202
      %v1207 = vld [vmem:[%s1] sm:$0xf]
      %v1208 = vld [vmem:[%s1 + $0x4] sm:$0xf]
      %v1209 = vld [vmem:[%s1 + $0x8] sm:$0xf]
      %v1210 = vld [vmem:[%s1 + $0xc] sm:$0xf]
      %v1211 = vld [vmem:[%s2] sm:$0x1]
      %v1213 = vlaneseq
      %v1214 = vshrl.u32 %v1213, 7
      %v1215 = vsub.s32 0, %v1214
      %v1216 = vrot.slane %v1211, %v1215
      %v1222 = vunpack.c.l.b16 %v1199
      %v1223 = vunpack.c.l.b16 %v1200
      %v1224 = vunpack.c.l.b16 %v1201
      %v1225 = vunpack.c.l.b16 %v1202
      %v1226 = vpack.c.b16 %v1223, %v1222
      %v1227 = vpack.c.b16 %v1225, %v1224
      %v1232 = vunpack.c.l.b16 %v1207
      %v1233 = vunpack.c.l.b16 %v1208
      %v1234 = vunpack.c.l.b16 %v1209
      %v1235 = vunpack.c.l.b16 %v1210
      %v1236 = vpack.c.b16 %v1233, %v1232
      %v1237 = vpack.c.b16 %v1235, %v1234
      %vm1240 = vcmask 261120
      %v1242 = vsel %vm1240, %v1226, 0
      %v1245 = vsel %vm1240, %v1227, 0
      %1247 = vmatprep.subr.bf16.mxu0 0
      %1248 = vmatpush1.bf16.msra.mxu0 %v1236
      %1249 = vmatprep.subr.bf16.mxu0 0
      %1250 = vmatpush1.bf16.msra.mxu0 %v1237
      %1251 = vmatprep.subr.bf16.mxu0 0
      %1252 = vmatpush1.bf16.msra.mxu0 0
      %1253 = vmatprep.subr.bf16.mxu0 0
      %1254 = vmatpush1.bf16.msra.mxu0 0
      %1255 = vmatprep.subr.bf16.mxu0 0
      %1256 = vmatpush1.bf16.msra.mxu0 0
      %1257 = vmatprep.subr.bf16.mxu0 0
      %1258 = vmatpush1.bf16.msra.mxu0 0
      %1259 = vmatprep.subr.bf16.mxu0 0
      %1260 = vmatpush1.bf16.msra.mxu0 0
      %1261 = vmatprep.subr.bf16.mxu0 0
      %1262 = vmatpush1.bf16.msra.mxu0 0
      %1263 = vmatprep.subr.bf16.mxu0 0
      %1264 = vmatpush1.bf16.msra.mxu0 0
      %1265 = vmatprep.subr.bf16.mxu0 0
      %1266 = vmatpush1.bf16.msra.mxu0 0
      %1267 = vmatprep.subr.bf16.mxu0 0
      %1268 = vmatpush1.bf16.msra.mxu0 0
      %1269 = vmatprep.subr.bf16.mxu0 0
      %1270 = vmatpush1.bf16.msra.mxu0 0
      %1271 = vmatprep.subr.bf16.mxu0 0
      %1272 = vmatpush1.bf16.msra.mxu0 0
      %1273 = vmatprep.subr.bf16.mxu0 0
      %1274 = vmatpush1.bf16.msra.mxu0 0
      %1275 = vmatprep.subr.bf16.mxu0 0
      %1276 = vmatpush1.bf16.msra.mxu0 0
      %1277 = vmatprep.subr.bf16.mxu0 0
      %1278 = vmatpush1.bf16.msra.mxu0 0
      %1279 = vmatprep.mubr.bf16.mxu0 0
      %1280 = vmatmul.mubr.bf16.gmra.mrb[0].mxu0 %v1242
      %v1281 = vpop.f32.mrb[0].mxu0
      %v1282 = vadd.f32 %v1216, %v1281
      %v1283 = vpop.f32.mrb[0].mxu0
      %v1284 = vpop.f32.mrb[0].mxu0
      %v1285 = vadd.f32 %v1216, %v1284
      %v1286 = vpop.f32.mrb[0].mxu0
      %1287 = vmatprep.mubr.bf16.mxu0 0
      %1288 = vmatmul.mubr.bf16.gmra.mrb[0].mxu0 %v1245
      %v1289 = vpop.f32.mrb[0].mxu0
      %v1290 = vadd.f32 %v1216, %v1289
      %v1291 = vpop.f32.mrb[0].mxu0
      %v1292 = vpop.f32.mrb[0].mxu0
      %v1293 = vadd.f32 %v1216, %v1292
      %v1294 = vpop.f32.mrb[0].mxu0
      %1295 = vdwg.mxu0
      %1296 = vst.msk [vmem:[#allocation4] sm:$0xff] %vm1240, %v1282
      %1297 = vst.msk [vmem:[#allocation4 + $0x8] sm:$0xff] %vm1240, %v1285
      %1298 = vst.msk [vmem:[#allocation4 + $0x10] sm:$0xff] %vm1240, %v1290
      %1299 = vst.msk [vmem:[#allocation4 + $0x18] sm:$0xff] %vm1240, %v1293
      %v1300 = vld [vmem:[#allocation4] sm:$0xff]
      %v1301 = vld [vmem:[#allocation4 + $0x8] sm:$0xff]
      %v1302 = vld [vmem:[#allocation4 + $0x10] sm:$0xff]
      %v1303 = vld [vmem:[#allocation4 + $0x18] sm:$0xff]
      %1308 = vrot.lane.b32.xlu0 %v1300, 120
      %v1309 = vpop.permute.xlu0 %1308
      %1310 = vrot.lane.b32.xlu0 %v1301, 120
      %v1311 = vpop.permute.xlu0 %1310
      %1312 = vrot.lane.b32.xlu0 %v1302, 120
      %v1313 = vpop.permute.xlu0 %1312
      %1314 = vrot.lane.b32.xlu0 %v1303, 120
      %v1315 = vpop.permute.xlu0 %1314
      %1320 = vrot.lane.b32.xlu0 %v1300, 112
      %v1321 = vpop.permute.xlu0 %1320
      %1322 = vrot.lane.b32.xlu0 %v1301, 112
      %v1323 = vpop.permute.xlu0 %1322
      %1324 = vrot.lane.b32.xlu0 %v1302, 112
      %v1325 = vpop.permute.xlu0 %1324
      %1326 = vrot.lane.b32.xlu0 %v1303, 112
      %v1327 = vpop.permute.xlu0 %1326
      %1332 = vrot.lane.b32.xlu0 %v1300, 104
      %v1333 = vpop.permute.xlu0 %1332
      %1334 = vrot.lane.b32.xlu0 %v1301, 104
      %v1335 = vpop.permute.xlu0 %1334
      %1336 = vrot.lane.b32.xlu0 %v1302, 104
      %v1337 = vpop.permute.xlu0 %1336
      %1338 = vrot.lane.b32.xlu0 %v1303, 104
      %v1339 = vpop.permute.xlu0 %1338
      %v1344 = vpack.c.bf16 %v1301, %v1300
      %v1345 = vpack.c.bf16 %v1303, %v1302
      %v1346 = vpack.c.bf16 %v1311, %v1309
      %v1347 = vpack.c.bf16 %v1315, %v1313
      %v1348 = vpack.c.bf16 %v1323, %v1321
      %v1349 = vpack.c.bf16 %v1327, %v1325
      %v1350 = vpack.c.bf16 %v1335, %v1333
      %v1351 = vpack.c.bf16 %v1339, %v1337
      %v1352 = vld [vmem:[#allocation2] sm:$0xf]
      %v1353 = vld [vmem:[#allocation2 + $0x4] sm:$0xf]
      %v1354 = vld [vmem:[#allocation2 + $0x8] sm:$0xf]
      %v1355 = vld [vmem:[#allocation2 + $0xc] sm:$0xf]
      %vm1356 = vcmask 64512
      %v1358 = vsel %vm1356, %v1344, 0
      %v1361 = vsel %vm1356, %v1345, 0
      %vm1363 = vcmask 1043456
      %v1365 = vsel %vm1363, %v1352, 0
      %1367 = vmatprep.subr.bf16.mxu0 0
      %1368 = vmatpush1.bf16.msra.mxu0 %v1365
      %1369 = vmatprep.subr.bf16.mxu0 0
      %1370 = vmatpush1.bf16.msra.mxu0 0
      %1371 = vmatprep.subr.bf16.mxu0 0
      %1372 = vmatpush1.bf16.msra.mxu0 0
      %1373 = vmatprep.subr.bf16.mxu0 0
      %1374 = vmatpush1.bf16.msra.mxu0 0
      %1375 = vmatprep.subr.bf16.mxu0 0
      %1376 = vmatpush1.bf16.msra.mxu0 0
      %1377 = vmatprep.subr.bf16.mxu0 0
      %1378 = vmatpush1.bf16.msra.mxu0 0
      %1379 = vmatprep.subr.bf16.mxu0 0
      %1380 = vmatpush1.bf16.msra.mxu0 0
      %1381 = vmatprep.subr.bf16.mxu0 0
      %1382 = vmatpush1.bf16.msra.mxu0 0
      %1383 = vmatprep.subr.bf16.mxu0 0
      %1384 = vmatpush1.bf16.msra.mxu0 0
      %1385 = vmatprep.subr.bf16.mxu0 0
      %1386 = vmatpush1.bf16.msra.mxu0 0
      %1387 = vmatprep.subr.bf16.mxu0 0
      %1388 = vmatpush1.bf16.msra.mxu0 0
      %1389 = vmatprep.subr.bf16.mxu0 0
      %1390 = vmatpush1.bf16.msra.mxu0 0
      %1391 = vmatprep.subr.bf16.mxu0 0
      %1392 = vmatpush1.bf16.msra.mxu0 0
      %1393 = vmatprep.subr.bf16.mxu0 0
      %1394 = vmatpush1.bf16.msra.mxu0 0
      %1395 = vmatprep.subr.bf16.mxu0 0
      %1396 = vmatpush1.bf16.msra.mxu0 0
      %1397 = vmatprep.subr.bf16.mxu0 0
      %1398 = vmatpush1.bf16.msra.mxu0 0
      %1399 = vmatprep.mubr.bf16.mxu0 0
      %1400 = vmatmul.mubr.bf16.gmra.mrb[0].mxu0 %v1358
      %v1401 = vpop.f32.mrb[0].mxu0
      %v1402 = vadd.f32 0.0, %v1401
      %v1403 = vpop.f32.mrb[0].mxu0
      %v1404 = vpop.f32.mrb[0].mxu0
      %v1405 = vadd.f32 0.0, %v1404
      %v1406 = vpop.f32.mrb[0].mxu0
      %1407 = vmatprep.mubr.bf16.mxu0 0
      %1408 = vmatmul.mubr.bf16.gmra.mrb[0].mxu0 %v1361
      %v1409 = vpop.f32.mrb[0].mxu0
      %v1410 = vadd.f32 0.0, %v1409
      %v1411 = vpop.f32.mrb[0].mxu0
      %v1412 = vpop.f32.mrb[0].mxu0
      %v1413 = vadd.f32 0.0, %v1412
      %v1414 = vpop.f32.mrb[0].mxu0
      %1415 = vdwg.mxu0
      %v1417 = vsel %vm1356, %v1346, 0
      %v1420 = vsel %vm1356, %v1347, 0
      %v1423 = vsel %vm1363, %v1353, 0
      %1425 = vmatprep.subr.bf16.mxu0 0
      %1426 = vmatpush1.bf16.msra.mxu0 %v1423
      %1427 = vmatprep.subr.bf16.mxu0 0
      %1428 = vmatpush1.bf16.msra.mxu0 0
      %1429 = vmatprep.subr.bf16.mxu0 0
      %1430 = vmatpush1.bf16.msra.mxu0 0
      %1431 = vmatprep.subr.bf16.mxu0 0
      %1432 = vmatpush1.bf16.msra.mxu0 0
      %1433 = vmatprep.subr.bf16.mxu0 0
      %1434 = vmatpush1.bf16.msra.mxu0 0
      %1435 = vmatprep.subr.bf16.mxu0 0
      %1436 = vmatpush1.bf16.msra.mxu0 0
      %1437 = vmatprep.subr.bf16.mxu0 0
      %1438 = vmatpush1.bf16.msra.mxu0 0
      %1439 = vmatprep.subr.bf16.mxu0 0
      %1440 = vmatpush1.bf16.msra.mxu0 0
      %1441 = vmatprep.subr.bf16.mxu0 0
      %1442 = vmatpush1.bf16.msra.mxu0 0
      %1443 = vmatprep.subr.bf16.mxu0 0
      %1444 = vmatpush1.bf16.msra.mxu0 0
      %1445 = vmatprep.subr.bf16.mxu0 0
      %1446 = vmatpush1.bf16.msra.mxu0 0
      %1447 = vmatprep.subr.bf16.mxu0 0
      %1448 = vmatpush1.bf16.msra.mxu0 0
      %1449 = vmatprep.subr.bf16.mxu0 0
      %1450 = vmatpush1.bf16.msra.mxu0 0
      %1451 = vmatprep.subr.bf16.mxu0 0
      %1452 = vmatpush1.bf16.msra.mxu0 0
      %1453 = vmatprep.subr.bf16.mxu0 0
      %1454 = vmatpush1.bf16.msra.mxu0 0
      %1455 = vmatprep.subr.bf16.mxu0 0
      %1456 = vmatpush1.bf16.msra.mxu0 0
      %1457 = vmatprep.mubr.bf16.mxu0 0
      %1458 = vmatmul.mubr.bf16.gmra.mrb[0].mxu0 %v1417
      %v1459 = vpop.f32.mrb[0].mxu0
      %v1460 = vadd.f32 0.0, %v1459
      %v1461 = vpop.f32.mrb[0].mxu0
      %v1462 = vpop.f32.mrb[0].mxu0
      %v1463 = vadd.f32 0.0, %v1462
      %v1464 = vpop.f32.mrb[0].mxu0
      %1465 = vmatprep.mubr.bf16.mxu0 0
      %1466 = vmatmul.mubr.bf16.gmra.mrb[0].mxu0 %v1420
      %v1467 = vpop.f32.mrb[0].mxu0
      %v1468 = vadd.f32 0.0, %v1467
      %v1469 = vpop.f32.mrb[0].mxu0
      %v1470 = vpop.f32.mrb[0].mxu0
      %v1471 = vadd.f32 0.0, %v1470
      %v1472 = vpop.f32.mrb[0].mxu0
      %1473 = vdwg.mxu0
      %v1475 = vsel %vm1356, %v1348, 0
      %v1478 = vsel %vm1356, %v1349, 0
      %v1481 = vsel %vm1363, %v1354, 0
      %1483 = vmatprep.subr.bf16.mxu0 0
      %1484 = vmatpush1.bf16.msra.mxu0 %v1481
      %1485 = vmatprep.subr.bf16.mxu0 0
      %1486 = vmatpush1.bf16.msra.mxu0 0
      %1487 = vmatprep.subr.bf16.mxu0 0
      %1488 = vmatpush1.bf16.msra.mxu0 0
      %1489 = vmatprep.subr.bf16.mxu0 0
      %1490 = vmatpush1.bf16.msra.mxu0 0
      %1491 = vmatprep.subr.bf16.mxu0 0
      %1492 = vmatpush1.bf16.msra.mxu0 0
      %1493 = vmatprep.subr.bf16.mxu0 0
      %1494 = vmatpush1.bf16.msra.mxu0 0
      %1495 = vmatprep.subr.bf16.mxu0 0
      %1496 = vmatpush1.bf16.msra.mxu0 0
      %1497 = vmatprep.subr.bf16.mxu0 0
      %1498 = vmatpush1.bf16.msra.mxu0 0
      %1499 = vmatprep.subr.bf16.mxu0 0
      %1500 = vmatpush1.bf16.msra.mxu0 0
      %1501 = vmatprep.subr.bf16.mxu0 0
      %1502 = vmatpush1.bf16.msra.mxu0 0
      %1503 = vmatprep.subr.bf16.mxu0 0
      %1504 = vmatpush1.bf16.msra.mxu0 0
      %1505 = vmatprep.subr.bf16.mxu0 0
      %1506 = vmatpush1.bf16.msra.mxu0 0
      %1507 = vmatprep.subr.bf16.mxu0 0
      %1508 = vmatpush1.bf16.msra.mxu0 0
      %1509 = vmatprep.subr.bf16.mxu0 0
      %1510 = vmatpush1.bf16.msra.mxu0 0
      %1511 = vmatprep.subr.bf16.mxu0 0
      %1512 = vmatpush1.bf16.msra.mxu0 0
      %1513 = vmatprep.subr.bf16.mxu0 0
      %1514 = vmatpush1.bf16.msra.mxu0 0
      %1515 = vmatprep.mubr.bf16.mxu0 0
      %1516 = vmatmul.mubr.bf16.gmra.mrb[0].mxu0 %v1475
      %v1517 = vpop.f32.mrb[0].mxu0
      %v1518 = vadd.f32 0.0, %v1517
      %v1519 = vpop.f32.mrb[0].mxu0
      %v1520 = vpop.f32.mrb[0].mxu0
      %v1521 = vadd.f32 0.0, %v1520
      %v1522 = vpop.f32.mrb[0].mxu0
      %1523 = vmatprep.mubr.bf16.mxu0 0
      %1524 = vmatmul.mubr.bf16.gmra.mrb[0].mxu0 %v1478
      %v1525 = vpop.f32.mrb[0].mxu0
      %v1526 = vadd.f32 0.0, %v1525
      %v1527 = vpop.f32.mrb[0].mxu0
      %v1528 = vpop.f32.mrb[0].mxu0
      %v1529 = vadd.f32 0.0, %v1528
      %v1530 = vpop.f32.mrb[0].mxu0
      %1531 = vdwg.mxu0
      %v1533 = vsel %vm1356, %v1350, 0
      %v1536 = vsel %vm1356, %v1351, 0
      %v1539 = vsel %vm1363, %v1355, 0
      %1541 = vmatprep.subr.bf16.mxu0 0
      %1542 = vmatpush1.bf16.msra.mxu0 %v1539
      %1543 = vmatprep.subr.bf16.mxu0 0
      %1544 = vmatpush1.bf16.msra.mxu0 0
      %1545 = vmatprep.subr.bf16.mxu0 0
      %1546 = vmatpush1.bf16.msra.mxu0 0
      %1547 = vmatprep.subr.bf16.mxu0 0
      %1548 = vmatpush1.bf16.msra.mxu0 0
      %1549 = vmatprep.subr.bf16.mxu0 0
      %1550 = vmatpush1.bf16.msra.mxu0 0
      %1551 = vmatprep.subr.bf16.mxu0 0
      %1552 = vmatpush1.bf16.msra.mxu0 0
      %1553 = vmatprep.subr.bf16.mxu0 0
      %1554 = vmatpush1.bf16.msra.mxu0 0
      %1555 = vmatprep.subr.bf16.mxu0 0
      %1556 = vmatpush1.bf16.msra.mxu0 0
      %1557 = vmatprep.subr.bf16.mxu0 0
      %1558 = vmatpush1.bf16.msra.mxu0 0
      %1559 = vmatprep.subr.bf16.mxu0 0
      %1560 = vmatpush1.bf16.msra.mxu0 0
      %1561 = vmatprep.subr.bf16.mxu0 0
      %1562 = vmatpush1.bf16.msra.mxu0 0
      %1563 = vmatprep.subr.bf16.mxu0 0
      %1564 = vmatpush1.bf16.msra.mxu0 0
      %1565 = vmatprep.subr.bf16.mxu0 0
      %1566 = vmatpush1.bf16.msra.mxu0 0
      %1567 = vmatprep.subr.bf16.mxu0 0
      %1568 = vmatpush1.bf16.msra.mxu0 0
      %1569 = vmatprep.subr.bf16.mxu0 0
      %1570 = vmatpush1.bf16.msra.mxu0 0
      %1571 = vmatprep.subr.bf16.mxu0 0
      %1572 = vmatpush1.bf16.msra.mxu0 0
      %1573 = vmatprep.mubr.bf16.mxu0 0
      %1574 = vmatmul.mubr.bf16.gmra.mrb[0].mxu0 %v1533
      %v1575 = vpop.f32.mrb[0].mxu0
      %v1576 = vadd.f32 0.0, %v1575
      %v1577 = vpop.f32.mrb[0].mxu0
      %v1578 = vpop.f32.mrb[0].mxu0
      %v1579 = vadd.f32 0.0, %v1578
      %v1580 = vpop.f32.mrb[0].mxu0
      %1581 = vmatprep.mubr.bf16.mxu0 0
      %1582 = vmatmul.mubr.bf16.gmra.mrb[0].mxu0 %v1536
      %v1583 = vpop.f32.mrb[0].mxu0
      %v1584 = vadd.f32 0.0, %v1583
      %v1585 = vpop.f32.mrb[0].mxu0
      %v1586 = vpop.f32.mrb[0].mxu0
      %v1587 = vadd.f32 0.0, %v1586
      %v1588 = vpop.f32.mrb[0].mxu0
      %1589 = vdwg.mxu0
      %vm1590 = vcmask 523264
      %v1591 = vsel %vm1590, %v1402, -inf
      %1592 = vmax.xlane.f32.xlu0 %v1591
      %v1593 = vpop.xlane.xlu0 %1592
      %v1594 = vsel %vm1590, %v1405, -inf
      %1595 = vmax.xlane.f32.xlu0 %v1594
      %v1596 = vpop.xlane.xlu0 %1595
      %v1597 = vsel %vm1590, %v1410, -inf
      %1598 = vmax.xlane.f32.xlu0 %v1597
      %v1599 = vpop.xlane.xlu0 %1598
      %v1600 = vsel %vm1590, %v1413, -inf
      %1601 = vmax.xlane.f32.xlu0 %v1600
      %v1602 = vpop.xlane.xlu0 %1601
      %v1603 = vsel %vm1590, %v1460, -inf
      %1604 = vmax.xlane.f32.xlu0 %v1603
      %v1605 = vpop.xlane.xlu0 %1604
      %v1606 = vsel %vm1590, %v1463, -inf
      %1607 = vmax.xlane.f32.xlu0 %v1606
      %v1608 = vpop.xlane.xlu0 %1607
      %v1609 = vsel %vm1590, %v1468, -inf
      %1610 = vmax.xlane.f32.xlu0 %v1609
      %v1611 = vpop.xlane.xlu0 %1610
      %v1612 = vsel %vm1590, %v1471, -inf
      %1613 = vmax.xlane.f32.xlu0 %v1612
      %v1614 = vpop.xlane.xlu0 %1613
      %v1615 = vsel %vm1590, %v1518, -inf
      %1616 = vmax.xlane.f32.xlu0 %v1615
      %v1617 = vpop.xlane.xlu0 %1616
      %v1618 = vsel %vm1590, %v1521, -inf
      %1619 = vmax.xlane.f32.xlu0 %v1618
      %v1620 = vpop.xlane.xlu0 %1619
      %v1621 = vsel %vm1590, %v1526, -inf
      %1622 = vmax.xlane.f32.xlu0 %v1621
      %v1623 = vpop.xlane.xlu0 %1622
      %v1624 = vsel %vm1590, %v1529, -inf
      %1625 = vmax.xlane.f32.xlu0 %v1624
      %v1626 = vpop.xlane.xlu0 %1625
      %v1627 = vsel %vm1590, %v1576, -inf
      %1628 = vmax.xlane.f32.xlu0 %v1627
      %v1629 = vpop.xlane.xlu0 %1628
      %v1630 = vsel %vm1590, %v1579, -inf
      %1631 = vmax.xlane.f32.xlu0 %v1630
      %v1632 = vpop.xlane.xlu0 %1631
      %v1633 = vsel %vm1590, %v1584, -inf
      %1634 = vmax.xlane.f32.xlu0 %v1633
      %v1635 = vpop.xlane.xlu0 %1634
      %v1636 = vsel %vm1590, %v1587, -inf
      %1637 = vmax.xlane.f32.xlu0 %v1636
      %v1638 = vpop.xlane.xlu0 %1637
      %v1639 = vsub.f32 %v1402, %v1593
      %v1640 = vsub.f32 %v1405, %v1596
      %v1641 = vsub.f32 %v1410, %v1599
      %v1642 = vsub.f32 %v1413, %v1602
      %v1643 = vsub.f32 %v1460, %v1605
      %v1644 = vsub.f32 %v1463, %v1608
      %v1645 = vsub.f32 %v1468, %v1611
      %v1646 = vsub.f32 %v1471, %v1614
      %v1647 = vsub.f32 %v1518, %v1617
      %v1648 = vsub.f32 %v1521, %v1620
      %v1649 = vsub.f32 %v1526, %v1623
      %v1650 = vsub.f32 %v1529, %v1626
      %v1651 = vsub.f32 %v1576, %v1629
      %v1652 = vsub.f32 %v1579, %v1632
      %v1653 = vsub.f32 %v1584, %v1635
      %v1654 = vsub.f32 %v1587, %v1638
      %v1655 = vmul.f32 %v1639, 1.442695
      %v1656 = vpow.pop %v1655
      %v1657 = vmul.f32 %v1640, 1.442695
      %v1658 = vpow.pop %v1657
      %v1659 = vmul.f32 %v1641, 1.442695
      %v1660 = vpow.pop %v1659
      %v1661 = vmul.f32 %v1642, 1.442695
      %v1662 = vpow.pop %v1661
      %v1663 = vmul.f32 %v1643, 1.442695
      %v1664 = vpow.pop %v1663
      %v1665 = vmul.f32 %v1644, 1.442695
      %v1666 = vpow.pop %v1665
      %v1667 = vmul.f32 %v1645, 1.442695
      %v1668 = vpow.pop %v1667
      %v1669 = vmul.f32 %v1646, 1.442695
      %v1670 = vpow.pop %v1669
      %v1671 = vmul.f32 %v1647, 1.442695
      %v1672 = vpow.pop %v1671
      %v1673 = vmul.f32 %v1648, 1.442695
      %v1674 = vpow.pop %v1673
      %v1675 = vmul.f32 %v1649, 1.442695
      %v1676 = vpow.pop %v1675
      %v1677 = vmul.f32 %v1650, 1.442695
      %v1678 = vpow.pop %v1677
      %v1679 = vmul.f32 %v1651, 1.442695
      %v1680 = vpow.pop %v1679
      %v1681 = vmul.f32 %v1652, 1.442695
      %v1682 = vpow.pop %v1681
      %v1683 = vmul.f32 %v1653, 1.442695
      %v1684 = vpow.pop %v1683
      %v1685 = vmul.f32 %v1654, 1.442695
      %v1686 = vpow.pop %v1685
      %v1687 = vsel %vm1590, %v1656, 0.0
      %1688 = vadd.xlane.f32.xlu0 %v1687
      %v1689 = vpop.xlane.xlu0 %1688
      %v1690 = vsel %vm1590, %v1658, 0.0
      %1691 = vadd.xlane.f32.xlu0 %v1690
      %v1692 = vpop.xlane.xlu0 %1691
      %v1693 = vsel %vm1590, %v1660, 0.0
      %1694 = vadd.xlane.f32.xlu0 %v1693
      %v1695 = vpop.xlane.xlu0 %1694
      %v1696 = vsel %vm1590, %v1662, 0.0
      %1697 = vadd.xlane.f32.xlu0 %v1696
      %v1698 = vpop.xlane.xlu0 %1697
      %v1699 = vsel %vm1590, %v1664, 0.0
      %1700 = vadd.xlane.f32.xlu0 %v1699
      %v1701 = vpop.xlane.xlu0 %1700
      %v1702 = vsel %vm1590, %v1666, 0.0
      %1703 = vadd.xlane.f32.xlu0 %v1702
      %v1704 = vpop.xlane.xlu0 %1703
      %v1705 = vsel %vm1590, %v1668, 0.0
      %1706 = vadd.xlane.f32.xlu0 %v1705
      %v1707 = vpop.xlane.xlu0 %1706
      %v1708 = vsel %vm1590, %v1670, 0.0
      %1709 = vadd.xlane.f32.xlu0 %v1708
      %v1710 = vpop.xlane.xlu0 %1709
      %v1711 = vsel %vm1590, %v1672, 0.0
      %1712 = vadd.xlane.f32.xlu0 %v1711
      %v1713 = vpop.xlane.xlu0 %1712
      %v1714 = vsel %vm1590, %v1674, 0.0
      %1715 = vadd.xlane.f32.xlu0 %v1714
      %v1716 = vpop.xlane.xlu0 %1715
      %v1717 = vsel %vm1590, %v1676, 0.0
      %1718 = vadd.xlane.f32.xlu0 %v1717
      %v1719 = vpop.xlane.xlu0 %1718
      %v1720 = vsel %vm1590, %v1678, 0.0
      %1721 = vadd.xlane.f32.xlu0 %v1720
      %v1722 = vpop.xlane.xlu0 %1721
      %v1723 = vsel %vm1590, %v1680, 0.0
      %1724 = vadd.xlane.f32.xlu0 %v1723
      %v1725 = vpop.xlane.xlu0 %1724
      %v1726 = vsel %vm1590, %v1682, 0.0
      %1727 = vadd.xlane.f32.xlu0 %v1726
      %v1728 = vpop.xlane.xlu0 %1727
      %v1729 = vsel %vm1590, %v1684, 0.0
      %1730 = vadd.xlane.f32.xlu0 %v1729
      %v1731 = vpop.xlane.xlu0 %1730
      %v1732 = vsel %vm1590, %v1686, 0.0
      %1733 = vadd.xlane.f32.xlu0 %v1732
      %v1734 = vpop.xlane.xlu0 %1733
      %v1735 = vrcp.pop %v1689
      %v1736 = vrcp.pop %v1692
      %v1737 = vrcp.pop %v1695
      %v1738 = vrcp.pop %v1698
      %v1739 = vrcp.pop %v1701
      %v1740 = vrcp.pop %v1704
      %v1741 = vrcp.pop %v1707
      %v1742 = vrcp.pop %v1710
      %v1743 = vrcp.pop %v1713
      %v1744 = vrcp.pop %v1716
      %v1745 = vrcp.pop %v1719
      %v1746 = vrcp.pop %v1722
      %v1747 = vrcp.pop %v1725
      %v1748 = vrcp.pop %v1728
      %v1749 = vrcp.pop %v1731
      %v1750 = vrcp.pop %v1734
      %v1751 = vmul.f32 %v1656, %v1735
      %v1752 = vmul.f32 %v1658, %v1736
      %v1753 = vmul.f32 %v1660, %v1737
      %v1754 = vmul.f32 %v1662, %v1738
      %v1755 = vmul.f32 %v1664, %v1739
      %v1756 = vmul.f32 %v1666, %v1740
      %v1757 = vmul.f32 %v1668, %v1741
      %v1758 = vmul.f32 %v1670, %v1742
      %v1759 = vmul.f32 %v1672, %v1743
      %v1760 = vmul.f32 %v1674, %v1744
      %v1761 = vmul.f32 %v1676, %v1745
      %v1762 = vmul.f32 %v1678, %v1746
      %v1763 = vmul.f32 %v1680, %v1747
      %v1764 = vmul.f32 %v1682, %v1748
      %v1765 = vmul.f32 %v1684, %v1749
      %v1766 = vmul.f32 %v1686, %v1750
      %v1767 = vpack.c.bf16 %v1752, %v1751
      %v1768 = vpack.c.bf16 %v1754, %v1753
      %v1769 = vpack.c.bf16 %v1756, %v1755
      %v1770 = vpack.c.bf16 %v1758, %v1757
      %v1771 = vpack.c.bf16 %v1760, %v1759
      %v1772 = vpack.c.bf16 %v1762, %v1761
      %v1773 = vpack.c.bf16 %v1764, %v1763
      %v1774 = vpack.c.bf16 %v1766, %v1765
      %v1775 = vld [vmem:[#allocation3] sm:$0xff]
      %v1776 = vld [vmem:[#allocation3 + $0x8] sm:$0xff]
      %v1777 = vld [vmem:[#allocation3 + $0x10] sm:$0xff]
      %v1778 = vld [vmem:[#allocation3 + $0x18] sm:$0xff]
      %v1779 = vld [vmem:[#allocation3 + $0x20] sm:$0xff]
      %v1780 = vld [vmem:[#allocation3 + $0x28] sm:$0xff]
      %v1781 = vld [vmem:[#allocation3 + $0x30] sm:$0xff]
      %v1782 = vld [vmem:[#allocation3 + $0x38] sm:$0xff]
      %v1783 = vld [vmem:[#allocation3 + $0x40] sm:$0xff]
      %v1784 = vld [vmem:[#allocation3 + $0x48] sm:$0xff]
      %v1785 = vld [vmem:[#allocation3 + $0x50] sm:$0xff]
      %v1786 = vld [vmem:[#allocation3 + $0x58] sm:$0xff]
      %v1787 = vld [vmem:[#allocation3 + $0x60] sm:$0xff]
      %v1788 = vld [vmem:[#allocation3 + $0x68] sm:$0xff]
      %v1789 = vld [vmem:[#allocation3 + $0x70] sm:$0xff]
      %v1790 = vld [vmem:[#allocation3 + $0x78] sm:$0xff]
      %v1792 = vsel %vm1590, %v1767, 0
      %v1795 = vsel %vm1590, %v1768, 0
      %1797 = vmatprep.subr.bf16.mxu0 0
      %1798 = vmatpush1.bf16.msra.mxu0 %v1775
      %1799 = vmatprep.subr.bf16.mxu0 0
      %1800 = vmatpush1.bf16.msra.mxu0 %v1776
      %1801 = vmatprep.subr.bf16.mxu0 0
      %1802 = vmatpush1.bf16.msra.mxu0 %v1777
      %1803 = vmatprep.subr.bf16.mxu0 0
      %1804 = vmatpush1.bf16.msra.mxu0 %v1778
      %1805 = vmatprep.subr.bf16.mxu0 0
      %1806 = vmatpush1.bf16.msra.mxu0 0
      %1807 = vmatprep.subr.bf16.mxu0 0
      %1808 = vmatpush1.bf16.msra.mxu0 0
      %1809 = vmatprep.subr.bf16.mxu0 0
      %1810 = vmatpush1.bf16.msra.mxu0 0
      %1811 = vmatprep.subr.bf16.mxu0 0
      %1812 = vmatpush1.bf16.msra.mxu0 0
      %1813 = vmatprep.subr.bf16.mxu0 0
      %1814 = vmatpush1.bf16.msra.mxu0 0
      %1815 = vmatprep.subr.bf16.mxu0 0
      %1816 = vmatpush1.bf16.msra.mxu0 0
      %1817 = vmatprep.subr.bf16.mxu0 0
      %1818 = vmatpush1.bf16.msra.mxu0 0
      %1819 = vmatprep.subr.bf16.mxu0 0
      %1820 = vmatpush1.bf16.msra.mxu0 0
      %1821 = vmatprep.subr.bf16.mxu0 0
      %1822 = vmatpush1.bf16.msra.mxu0 0
      %1823 = vmatprep.subr.bf16.mxu0 0
      %1824 = vmatpush1.bf16.msra.mxu0 0
      %1825 = vmatprep.subr.bf16.mxu0 0
      %1826 = vmatpush1.bf16.msra.mxu0 0
      %1827 = vmatprep.subr.bf16.mxu0 0
      %1828 = vmatpush1.bf16.msra.mxu0 0
      %1829 = vmatprep.mubr.bf16.mxu0 0
      %1830 = vmatmul.mubr.bf16.gmra.mrb[0].mxu0 %v1792
      %v1831 = vpop.f32.mrb[0].mxu0
      %v1832 = vadd.f32 0.0, %v1831
      %v1833 = vpop.f32.mrb[0].mxu0
      %v1834 = vpop.f32.mrb[0].mxu0
      %v1835 = vadd.f32 0.0, %v1834
      %v1836 = vpop.f32.mrb[0].mxu0
      %1837 = vmatprep.mubr.bf16.mxu0 0
      %1838 = vmatmul.mubr.bf16.gmra.mrb[0].mxu0 %v1795
      %v1839 = vpop.f32.mrb[0].mxu0
      %v1840 = vadd.f32 0.0, %v1839
      %v1841 = vpop.f32.mrb[0].mxu0
      %v1842 = vpop.f32.mrb[0].mxu0
      %v1843 = vadd.f32 0.0, %v1842
      %v1844 = vpop.f32.mrb[0].mxu0
      %1845 = vdwg.mxu0
      %v1847 = vsel %vm1590, %v1769, 0
      %v1850 = vsel %vm1590, %v1770, 0
      %1852 = vmatprep.subr.bf16.mxu0 0
      %1853 = vmatpush1.bf16.msra.mxu0 %v1779
      %1854 = vmatprep.subr.bf16.mxu0 0
      %1855 = vmatpush1.bf16.msra.mxu0 %v1780
      %1856 = vmatprep.subr.bf16.mxu0 0
      %1857 = vmatpush1.bf16.msra.mxu0 %v1781
      %1858 = vmatprep.subr.bf16.mxu0 0
      %1859 = vmatpush1.bf16.msra.mxu0 %v1782
      %1860 = vmatprep.subr.bf16.mxu0 0
      %1861 = vmatpush1.bf16.msra.mxu0 0
      %1862 = vmatprep.subr.bf16.mxu0 0
      %1863 = vmatpush1.bf16.msra.mxu0 0
      %1864 = vmatprep.subr.bf16.mxu0 0
      %1865 = vmatpush1.bf16.msra.mxu0 0
      %1866 = vmatprep.subr.bf16.mxu0 0
      %1867 = vmatpush1.bf16.msra.mxu0 0
      %1868 = vmatprep.subr.bf16.mxu0 0
      %1869 = vmatpush1.bf16.msra.mxu0 0
      %1870 = vmatprep.subr.bf16.mxu0 0
      %1871 = vmatpush1.bf16.msra.mxu0 0
      %1872 = vmatprep.subr.bf16.mxu0 0
      %1873 = vmatpush1.bf16.msra.mxu0 0
      %1874 = vmatprep.subr.bf16.mxu0 0
      %1875 = vmatpush1.bf16.msra.mxu0 0
      %1876 = vmatprep.subr.bf16.mxu0 0
      %1877 = vmatpush1.bf16.msra.mxu0 0
      %1878 = vmatprep.subr.bf16.mxu0 0
      %1879 = vmatpush1.bf16.msra.mxu0 0
      %1880 = vmatprep.subr.bf16.mxu0 0
      %1881 = vmatpush1.bf16.msra.mxu0 0
      %1882 = vmatprep.subr.bf16.mxu0 0
      %1883 = vmatpush1.bf16.msra.mxu0 0
      %1884 = vmatprep.mubr.bf16.mxu0 0
      %1885 = vmatmul.mubr.bf16.gmra.mrb[0].mxu0 %v1847
      %v1886 = vpop.f32.mrb[0].mxu0
      %v1887 = vadd.f32 0.0, %v1886
      %v1888 = vpop.f32.mrb[0].mxu0
      %v1889 = vpop.f32.mrb[0].mxu0
      %v1890 = vadd.f32 0.0, %v1889
      %v1891 = vpop.f32.mrb[0].mxu0
      %1892 = vmatprep.mubr.bf16.mxu0 0
      %1893 = vmatmul.mubr.bf16.gmra.mrb[0].mxu0 %v1850
      %v1894 = vpop.f32.mrb[0].mxu0
      %v1895 = vadd.f32 0.0, %v1894
      %v1896 = vpop.f32.mrb[0].mxu0
      %v1897 = vpop.f32.mrb[0].mxu0
      %v1898 = vadd.f32 0.0, %v1897
      %v1899 = vpop.f32.mrb[0].mxu0
      %1900 = vdwg.mxu0
      %v1902 = vsel %vm1590, %v1771, 0
      %v1905 = vsel %vm1590, %v1772, 0
      %1907 = vmatprep.subr.bf16.mxu0 0
      %1908 = vmatpush1.bf16.msra.mxu0 %v1783
      %1909 = vmatprep.subr.bf16.mxu0 0
      %1910 = vmatpush1.bf16.msra.mxu0 %v1784
      %1911 = vmatprep.subr.bf16.mxu0 0
      %1912 = vmatpush1.bf16.msra.mxu0 %v1785
      %1913 = vmatprep.subr.bf16.mxu0 0
      %1914 = vmatpush1.bf16.msra.mxu0 %v1786
      %1915 = vmatprep.subr.bf16.mxu0 0
      %1916 = vmatpush1.bf16.msra.mxu0 0
      %1917 = vmatprep.subr.bf16.mxu0 0
      %1918 = vmatpush1.bf16.msra.mxu0 0
      %1919 = vmatprep.subr.bf16.mxu0 0
      %1920 = vmatpush1.bf16.msra.mxu0 0
      %1921 = vmatprep.subr.bf16.mxu0 0
      %1922 = vmatpush1.bf16.msra.mxu0 0
      %1923 = vmatprep.subr.bf16.mxu0 0
      %1924 = vmatpush1.bf16.msra.mxu0 0
      %1925 = vmatprep.subr.bf16.mxu0 0
      %1926 = vmatpush1.bf16.msra.mxu0 0
      %1927 = vmatprep.subr.bf16.mxu0 0
      %1928 = vmatpush1.bf16.msra.mxu0 0
      %1929 = vmatprep.subr.bf16.mxu0 0
      %1930 = vmatpush1.bf16.msra.mxu0 0
      %1931 = vmatprep.subr.bf16.mxu0 0
      %1932 = vmatpush1.bf16.msra.mxu0 0
      %1933 = vmatprep.subr.bf16.mxu0 0
      %1934 = vmatpush1.bf16.msra.mxu0 0
      %1935 = vmatprep.subr.bf16.mxu0 0
      %1936 = vmatpush1.bf16.msra.mxu0 0
      %1937 = vmatprep.subr.bf16.mxu0 0
      %1938 = vmatpush1.bf16.msra.mxu0 0
      %1939 = vmatprep.mubr.bf16.mxu0 0
      %1940 = vmatmul.mubr.bf16.gmra.mrb[0].mxu0 %v1902
      %v1941 = vpop.f32.mrb[0].mxu0
      %v1942 = vadd.f32 0.0, %v1941
      %v1943 = vpop.f32.mrb[0].mxu0
      %v1944 = vpop.f32.mrb[0].mxu0
      %v1945 = vadd.f32 0.0, %v1944
      %v1946 = vpop.f32.mrb[0].mxu0
      %1947 = vmatprep.mubr.bf16.mxu0 0
      %1948 = vmatmul.mubr.bf16.gmra.mrb[0].mxu0 %v1905
      %v1949 = vpop.f32.mrb[0].mxu0
      %v1950 = vadd.f32 0.0, %v1949
      %v1951 = vpop.f32.mrb[0].mxu0
      %v1952 = vpop.f32.mrb[0].mxu0
      %v1953 = vadd.f32 0.0, %v1952
      %v1954 = vpop.f32.mrb[0].mxu0
      %1955 = vdwg.mxu0
      %v1957 = vsel %vm1590, %v1773, 0
      %v1960 = vsel %vm1590, %v1774, 0
      %1962 = vmatprep.subr.bf16.mxu0 0
      %1963 = vmatpush1.bf16.msra.mxu0 %v1787
      %1964 = vmatprep.subr.bf16.mxu0 0
      %1965 = vmatpush1.bf16.msra.mxu0 %v1788
      %1966 = vmatprep.subr.bf16.mxu0 0
      %1967 = vmatpush1.bf16.msra.mxu0 %v1789
      %1968 = vmatprep.subr.bf16.mxu0 0
      %1969 = vmatpush1.bf16.msra.mxu0 %v1790
      %1970 = vmatprep.subr.bf16.mxu0 0
      %1971 = vmatpush1.bf16.msra.mxu0 0
      %1972 = vmatprep.subr.bf16.mxu0 0
      %1973 = vmatpush1.bf16.msra.mxu0 0
      %1974 = vmatprep.subr.bf16.mxu0 0
      %1975 = vmatpush1.bf16.msra.mxu0 0
      %1976 = vmatprep.subr.bf16.mxu0 0
      %1977 = vmatpush1.bf16.msra.mxu0 0
      %1978 = vmatprep.subr.bf16.mxu0 0
      %1979 = vmatpush1.bf16.msra.mxu0 0
      %1980 = vmatprep.subr.bf16.mxu0 0
      %1981 = vmatpush1.bf16.msra.mxu0 0
      %1982 = vmatprep.subr.bf16.mxu0 0
      %1983 = vmatpush1.bf16.msra.mxu0 0
      %1984 = vmatprep.subr.bf16.mxu0 0
      %1985 = vmatpush1.bf16.msra.mxu0 0
      %1986 = vmatprep.subr.bf16.mxu0 0
      %1987 = vmatpush1.bf16.msra.mxu0 0
      %1988 = vmatprep.subr.bf16.mxu0 0
      %1989 = vmatpush1.bf16.msra.mxu0 0
      %1990 = vmatprep.subr.bf16.mxu0 0
      %1991 = vmatpush1.bf16.msra.mxu0 0
      %1992 = vmatprep.subr.bf16.mxu0 0
      %1993 = vmatpush1.bf16.msra.mxu0 0
      %1994 = vmatprep.mubr.bf16.mxu0 0
      %1995 = vmatmul.mubr.bf16.gmra.mrb[0].mxu0 %v1957
      %v1996 = vpop.f32.mrb[0].mxu0
      %v1997 = vadd.f32 0.0, %v1996
      %v1998 = vpop.f32.mrb[0].mxu0
      %v1999 = vpop.f32.mrb[0].mxu0
      %v2000 = vadd.f32 0.0, %v1999
      %v2001 = vpop.f32.mrb[0].mxu0
      %2002 = vmatprep.mubr.bf16.mxu0 0
      %2003 = vmatmul.mubr.bf16.gmra.mrb[0].mxu0 %v1960
      %v2004 = vpop.f32.mrb[0].mxu0
      %v2005 = vadd.f32 0.0, %v2004
      %v2006 = vpop.f32.mrb[0].mxu0
      %v2007 = vpop.f32.mrb[0].mxu0
      %v2008 = vadd.f32 0.0, %v2007
      %v2009 = vpop.f32.mrb[0].mxu0
      %2010 = vdwg.mxu0
      %2011 = vst.msk [vmem:[#allocation4] sm:$0xff] %vm1356, %v1832
      %2012 = vst.msk [vmem:[#allocation4 + $0x8] sm:$0xff] %vm1356, %v1835
      %2013 = vst.msk [vmem:[#allocation4 + $0x10] sm:$0xff] %vm1356, %v1840
      %2014 = vst.msk [vmem:[#allocation4 + $0x18] sm:$0xff] %vm1356, %v1843
      %2019 = vrot.lane.b32.xlu0 %v1887, 8
      %v2020 = vpop.permute.xlu0 %2019
      %2021 = vrot.lane.b32.xlu0 %v1890, 8
      %v2022 = vpop.permute.xlu0 %2021
      %2023 = vrot.lane.b32.xlu0 %v1895, 8
      %v2024 = vpop.permute.xlu0 %2023
      %2025 = vrot.lane.b32.xlu0 %v1898, 8
      %v2026 = vpop.permute.xlu0 %2025
      %vm2031 = vcmask 130112
      %2032 = vst.msk [vmem:[#allocation4] sm:$0xff] %vm2031, %v2020
      %2033 = vst.msk [vmem:[#allocation4 + $0x8] sm:$0xff] %vm2031, %v2022
      %2034 = vst.msk [vmem:[#allocation4 + $0x10] sm:$0xff] %vm2031, %v2024
      %2035 = vst.msk [vmem:[#allocation4 + $0x18] sm:$0xff] %vm2031, %v2026
      %2040 = vrot.lane.b32.xlu0 %v1942, 16
      %v2041 = vpop.permute.xlu0 %2040
      %2042 = vrot.lane.b32.xlu0 %v1945, 16
      %v2043 = vpop.permute.xlu0 %2042
      %2044 = vrot.lane.b32.xlu0 %v1950, 16
      %v2045 = vpop.permute.xlu0 %2044
      %2046 = vrot.lane.b32.xlu0 %v1953, 16
      %v2047 = vpop.permute.xlu0 %2046
      %vm2052 = vcmask 195712
      %2053 = vst.msk [vmem:[#allocation4] sm:$0xff] %vm2052, %v2041
      %2054 = vst.msk [vmem:[#allocation4 + $0x8] sm:$0xff] %vm2052, %v2043
      %2055 = vst.msk [vmem:[#allocation4 + $0x10] sm:$0xff] %vm2052, %v2045
      %2056 = vst.msk [vmem:[#allocation4 + $0x18] sm:$0xff] %vm2052, %v2047
      %2061 = vrot.lane.b32.xlu0 %v1997, 24
      %v2062 = vpop.permute.xlu0 %2061
      %2063 = vrot.lane.b32.xlu0 %v2000, 24
      %v2064 = vpop.permute.xlu0 %2063
      %2065 = vrot.lane.b32.xlu0 %v2005, 24
      %v2066 = vpop.permute.xlu0 %2065
      %2067 = vrot.lane.b32.xlu0 %v2008, 24
      %v2068 = vpop.permute.xlu0 %2067
      %vm2073 = vcmask 261312
      %2074 = vst.msk [vmem:[#allocation4] sm:$0xff] %vm2073, %v2062
      %2075 = vst.msk [vmem:[#allocation4 + $0x8] sm:$0xff] %vm2073, %v2064
      %2076 = vst.msk [vmem:[#allocation4 + $0x10] sm:$0xff] %vm2073, %v2066
      %2077 = vst.msk [vmem:[#allocation4 + $0x18] sm:$0xff] %vm2073, %v2068
      %v2078 = vld [vmem:[#allocation4] sm:$0xff]
      %v2079 = vld [vmem:[#allocation4 + $0x8] sm:$0xff]
      %v2080 = vld [vmem:[#allocation4 + $0x10] sm:$0xff]
      %v2081 = vld [vmem:[#allocation4 + $0x18] sm:$0xff]
      %v2082 = vpack.c.bf16 %v2079, %v2078
      %v2083 = vpack.c.bf16 %v2081, %v2080
      %v2084 = vld [vmem:[%s7] sm:$0xf]
      %v2085 = vld [vmem:[%s7 + $0x4] sm:$0xf]
      %v2086 = vld [vmem:[%s7 + $0x8] sm:$0xf]
      %v2087 = vld [vmem:[%s7 + $0xc] sm:$0xf]
      %v2088 = vld [vmem:[%s8] sm:$0x1]
      %v2090 = vlaneseq
      %v2091 = vshrl.u32 %v2090, 7
      %v2092 = vsub.s32 0, %v2091
      %v2093 = vrot.slane %v2088, %v2092
      %v2099 = vunpack.c.l.b16 %v2084
      %v2100 = vunpack.c.l.b16 %v2085
      %v2101 = vunpack.c.l.b16 %v2086
      %v2102 = vunpack.c.l.b16 %v2087
      %v2103 = vpack.c.b16 %v2100, %v2099
      %v2104 = vpack.c.b16 %v2102, %v2101
      %v2108 = vsel %vm1240, %v2082, 0
      %v2111 = vsel %vm1240, %v2083, 0
      %2113 = vmatprep.subr.bf16.mxu0 0
      %2114 = vmatpush1.bf16.msra.mxu0 %v2103
      %2115 = vmatprep.subr.bf16.mxu0 0
      %2116 = vmatpush1.bf16.msra.mxu0 %v2104
      %2117 = vmatprep.subr.bf16.mxu0 0
      %2118 = vmatpush1.bf16.msra.mxu0 0
      %2119 = vmatprep.subr.bf16.mxu0 0
      %2120 = vmatpush1.bf16.msra.mxu0 0
      %2121 = vmatprep.subr.bf16.mxu0 0
      %2122 = vmatpush1.bf16.msra.mxu0 0
      %2123 = vmatprep.subr.bf16.mxu0 0
      %2124 = vmatpush1.bf16.msra.mxu0 0
      %2125 = vmatprep.subr.bf16.mxu0 0
      %2126 = vmatpush1.bf16.msra.mxu0 0
      %2127 = vmatprep.subr.bf16.mxu0 0
      %2128 = vmatpush1.bf16.msra.mxu0 0
      %2129 = vmatprep.subr.bf16.mxu0 0
      %2130 = vmatpush1.bf16.msra.mxu0 0
      %2131 = vmatprep.subr.bf16.mxu0 0
      %2132 = vmatpush1.bf16.msra.mxu0 0
      %2133 = vmatprep.subr.bf16.mxu0 0
      %2134 = vmatpush1.bf16.msra.mxu0 0
      %2135 = vmatprep.subr.bf16.mxu0 0
      %2136 = vmatpush1.bf16.msra.mxu0 0
      %2137 = vmatprep.subr.bf16.mxu0 0
      %2138 = vmatpush1.bf16.msra.mxu0 0
      %2139 = vmatprep.subr.bf16.mxu0 0
      %2140 = vmatpush1.bf16.msra.mxu0 0
      %2141 = vmatprep.subr.bf16.mxu0 0
      %2142 = vmatpush1.bf16.msra.mxu0 0
      %2143 = vmatprep.subr.bf16.mxu0 0
      %2144 = vmatpush1.bf16.msra.mxu0 0
      %2145 = vmatprep.mubr.bf16.mxu0 0
      %2146 = vmatmul.mubr.bf16.gmra.mrb[0].mxu0 %v2108
      %v2147 = vpop.f32.mrb[0].mxu0
      %v2148 = vadd.f32 %v2093, %v2147
      %v2149 = vpop.f32.mrb[0].mxu0
      %v2150 = vpop.f32.mrb[0].mxu0
      %v2151 = vadd.f32 %v2093, %v2150
      %v2152 = vpop.f32.mrb[0].mxu0
      %2153 = vmatprep.mubr.bf16.mxu0 0
      %2154 = vmatmul.mubr.bf16.gmra.mrb[0].mxu0 %v2111
      %v2155 = vpop.f32.mrb[0].mxu0
      %v2156 = vadd.f32 %v2093, %v2155
      %v2157 = vpop.f32.mrb[0].mxu0
      %v2158 = vpop.f32.mrb[0].mxu0
      %v2159 = vadd.f32 %v2093, %v2158
      %v2160 = vpop.f32.mrb[0].mxu0
      %2161 = vdwg.mxu0
      %v2162 = vadd.f32 %v1203, %v2148
      %v2163 = vadd.f32 %v1204, %v2151
      %v2164 = vadd.f32 %v1205, %v2156
      %v2165 = vadd.f32 %v1206, %v2159
      %v2166 = vld [vmem:[%s9] sm:$0x1]
      %v2167 = vld [vmem:[%s10] sm:$0x1]
      %v2168 = vsel %vm1240, %v2162, 0.0
      %2169 = vadd.xlane.f32.xlu0 %v2168
      %v2170 = vpop.xlane.xlu0 %2169
      %v2171 = vsel %vm1240, %v2163, 0.0
      %2172 = vadd.xlane.f32.xlu0 %v2171
      %v2173 = vpop.xlane.xlu0 %2172
      %v2174 = vsel %vm1240, %v2164, 0.0
      %2175 = vadd.xlane.f32.xlu0 %v2174
      %v2176 = vpop.xlane.xlu0 %2175
      %v2177 = vsel %vm1240, %v2165, 0.0
      %2178 = vadd.xlane.f32.xlu0 %v2177
      %v2179 = vpop.xlane.xlu0 %2178
      %v2180 = vrcp.pop 32.0
      %v2181 = vmul.f32 %v2170, %v2180
      %v2182 = vmul.f32 %v2173, %v2180
      %v2183 = vmul.f32 %v2176, %v2180
      %v2184 = vmul.f32 %v2179, %v2180
      %v2185 = vsub.f32 %v2162, %v2181
      %v2186 = vsub.f32 %v2163, %v2182
      %v2187 = vsub.f32 %v2164, %v2183
      %v2188 = vsub.f32 %v2165, %v2184
      %v2189 = vmul.f32 %v2185, %v2185
      %v2190 = vmul.f32 %v2186, %v2186
      %v2191 = vmul.f32 %v2187, %v2187
      %v2192 = vmul.f32 %v2188, %v2188
      %v2193 = vsel %vm1240, %v2189, 0.0
      %2194 = vadd.xlane.f32.xlu0 %v2193
      %v2195 = vpop.xlane.xlu0 %2194
      %v2196 = vsel %vm1240, %v2190, 0.0
      %2197 = vadd.xlane.f32.xlu0 %v2196
      %v2198 = vpop.xlane.xlu0 %2197
      %v2199 = vsel %vm1240, %v2191, 0.0
      %2200 = vadd.xlane.f32.xlu0 %v2199
      %v2201 = vpop.xlane.xlu0 %2200
      %v2202 = vsel %vm1240, %v2192, 0.0
      %2203 = vadd.xlane.f32.xlu0 %v2202
      %v2204 = vpop.xlane.xlu0 %2203
      %v2205 = vmul.f32 %v2195, %v2180
      %v2206 = vmul.f32 %v2198, %v2180
      %v2207 = vmul.f32 %v2201, %v2180
      %v2208 = vmul.f32 %v2204, %v2180
      %v2209 = vadd.f32 %v2205, 1e-05
      %v2210 = vadd.f32 %v2206, 1e-05
      %v2211 = vadd.f32 %v2207, 1e-05
      %v2212 = vadd.f32 %v2208, 1e-05
      %v2213 = vrsqrt.pop %v2209
      %v2214 = vrsqrt.pop %v2210
      %v2215 = vrsqrt.pop %v2211
      %v2216 = vrsqrt.pop %v2212
      %v2217 = vmul.f32 %v2185, %v2213
      %v2218 = vmul.f32 %v2186, %v2214
      %v2219 = vmul.f32 %v2187, %v2215
      %v2220 = vmul.f32 %v2188, %v2216
      %v2222 = vlaneseq
      %v2223 = vshrl.u32 %v2222, 7
      %v2224 = vsub.s32 0, %v2223
      %v2225 = vrot.slane %v2166, %v2224
      %v2227 = vmul.f32 %v2217, %v2225
      %v2228 = vmul.f32 %v2218, %v2225
      %v2229 = vmul.f32 %v2219, %v2225
      %v2230 = vmul.f32 %v2220, %v2225
      %v2232 = vlaneseq
      %v2233 = vshrl.u32 %v2232, 7
      %v2234 = vsub.s32 0, %v2233
      %v2235 = vrot.slane %v2167, %v2234
      %v2237 = vadd.f32 %v2227, %v2235
      %v2238 = vadd.f32 %v2228, %v2235
      %v2239 = vadd.f32 %v2229, %v2235
      %v2240 = vadd.f32 %v2230, %v2235
      %v2241 = vpack.c.bf16 %v2238, %v2237
      %v2242 = vpack.c.bf16 %v2240, %v2239
      %v2243 = vld [vmem:[%s11] sm:$0xf]
      %v2244 = vld [vmem:[%s11 + $0x4] sm:$0xf]
      %v2245 = vld [vmem:[%s11 + $0x8] sm:$0xf]
      %v2246 = vld [vmem:[%s11 + $0xc] sm:$0xf]
      %v2247 = vld [vmem:[%s12] sm:$0x1]
      %v2249 = vlaneseq
      %v2250 = vshrl.u32 %v2249, 7
      %v2251 = vsub.s32 0, %v2250
      %v2252 = vrot.slane %v2247, %v2251
      %v2258 = vunpack.c.l.b16 %v2243
      %v2259 = vunpack.c.l.b16 %v2244
      %v2260 = vunpack.c.l.b16 %v2245
      %v2261 = vunpack.c.l.b16 %v2246
      %v2262 = vpack.c.b16 %v2259, %v2258
      %v2263 = vpack.c.b16 %v2261, %v2260
      %v2267 = vsel %vm1240, %v2241, 0
      %v2270 = vsel %vm1240, %v2242, 0
      %2272 = vmatprep.subr.bf16.mxu0 0
      %2273 = vmatpush1.bf16.msra.mxu0 %v2262
      %2274 = vmatprep.subr.bf16.mxu0 0
      %2275 = vmatpush1.bf16.msra.mxu0 %v2263
      %2276 = vmatprep.subr.bf16.mxu0 0
      %2277 = vmatpush1.bf16.msra.mxu0 0
      %2278 = vmatprep.subr.bf16.mxu0 0
      %2279 = vmatpush1.bf16.msra.mxu0 0
      %2280 = vmatprep.subr.bf16.mxu0 0
      %2281 = vmatpush1.bf16.msra.mxu0 0
      %2282 = vmatprep.subr.bf16.mxu0 0
      %2283 = vmatpush1.bf16.msra.mxu0 0
      %2284 = vmatprep.subr.bf16.mxu0 0
      %2285 = vmatpush1.bf16.msra.mxu0 0
      %2286 = vmatprep.subr.bf16.mxu0 0
      %2287 = vmatpush1.bf16.msra.mxu0 0
      %2288 = vmatprep.subr.bf16.mxu0 0
      %2289 = vmatpush1.bf16.msra.mxu0 0
      %2290 = vmatprep.subr.bf16.mxu0 0
      %2291 = vmatpush1.bf16.msra.mxu0 0
      %2292 = vmatprep.subr.bf16.mxu0 0
      %2293 = vmatpush1.bf16.msra.mxu0 0
      %2294 = vmatprep.subr.bf16.mxu0 0
      %2295 = vmatpush1.bf16.msra.mxu0 0
      %2296 = vmatprep.subr.bf16.mxu0 0
      %2297 = vmatpush1.bf16.msra.mxu0 0
      %2298 = vmatprep.subr.bf16.mxu0 0
      %2299 = vmatpush1.bf16.msra.mxu0 0
      %2300 = vmatprep.subr.bf16.mxu0 0
      %2301 = vmatpush1.bf16.msra.mxu0 0
      %2302 = vmatprep.subr.bf16.mxu0 0
      %2303 = vmatpush1.bf16.msra.mxu0 0
      %2304 = vmatprep.mubr.bf16.mxu0 0
      %2305 = vmatmul.mubr.bf16.gmra.mrb[0].mxu0 %v2267
      %v2306 = vpop.f32.mrb[0].mxu0
      %v2307 = vadd.f32 %v2252, %v2306
      %v2308 = vpop.f32.mrb[0].mxu0
      %v2309 = vpop.f32.mrb[0].mxu0
      %v2310 = vadd.f32 %v2252, %v2309
      %v2311 = vpop.f32.mrb[0].mxu0
      %2312 = vmatprep.mubr.bf16.mxu0 0
      %2313 = vmatmul.mubr.bf16.gmra.mrb[0].mxu0 %v2270
      %v2314 = vpop.f32.mrb[0].mxu0
      %v2315 = vadd.f32 %v2252, %v2314
      %v2316 = vpop.f32.mrb[0].mxu0
      %v2317 = vpop.f32.mrb[0].mxu0
      %v2318 = vadd.f32 %v2252, %v2317
      %v2319 = vpop.f32.mrb[0].mxu0
      %2320 = vdwg.mxu0
      %v2321 = vmul.f32 %v2307, 0.5
      %v2322 = vmul.f32 %v2310, 0.5
      %v2323 = vmul.f32 %v2315, 0.5
      %v2324 = vmul.f32 %v2318, 0.5
      %v2325 = vmul.f32 %v2307, 0.70710677
      %v2326 = vmul.f32 %v2310, 0.70710677
      %v2327 = vmul.f32 %v2315, 0.70710677
      %v2328 = vmul.f32 %v2318, 0.70710677
      %vm2329 = vcmp.lt.f32.partialorder %v2325, 0.0
      %vm2330 = vcmp.lt.f32.partialorder %v2326, 0.0
      %vm2331 = vcmp.lt.f32.partialorder %v2327, 0.0
      %vm2332 = vcmp.lt.f32.partialorder %v2328, 0.0
      %v2333 = vsel %vm2329, -1.0, 1.0
      %v2334 = vsel %vm2330, -1.0, 1.0
      %v2335 = vsel %vm2331, -1.0, 1.0
      %v2336 = vsel %vm2332, -1.0, 1.0
      %v2337 = vand.u32 2147483647, %v2325
      %v2338 = vand.u32 2147483647, %v2326
      %v2339 = vand.u32 2147483647, %v2327
      %v2340 = vand.u32 2147483647, %v2328
      %v2341 = vmul.f32 %v2337, 0.3275911
      %v2342 = vmul.f32 %v2338, 0.3275911
      %v2343 = vmul.f32 %v2339, 0.3275911
      %v2344 = vmul.f32 %v2340, 0.3275911
      %v2345 = vadd.f32 %v2341, 1.0
      %v2346 = vadd.f32 %v2342, 1.0
      %v2347 = vadd.f32 %v2343, 1.0
      %v2348 = vadd.f32 %v2344, 1.0
      %v2349 = vrcp.pop %v2345
      %v2350 = vmul.f32 1.0, %v2349
      %v2351 = vrcp.pop %v2346
      %v2352 = vmul.f32 1.0, %v2351
      %v2353 = vrcp.pop %v2347
      %v2354 = vmul.f32 1.0, %v2353
      %v2355 = vrcp.pop %v2348
      %v2356 = vmul.f32 1.0, %v2355
      %v2357 = vmul.f32 %v2350, 1.0614054
      %v2358 = vmul.f32 %v2352, 1.0614054
      %v2359 = vmul.f32 %v2354, 1.0614054
      %v2360 = vmul.f32 %v2356, 1.0614054
      %v2361 = vadd.f32 %v2357, -1.4531521
      %v2362 = vadd.f32 %v2358, -1.4531521
      %v2363 = vadd.f32 %v2359, -1.4531521
      %v2364 = vadd.f32 %v2360, -1.4531521
      %v2365 = vmul.f32 %v2361, %v2350
      %v2366 = vmul.f32 %v2362, %v2352
      %v2367 = vmul.f32 %v2363, %v2354
      %v2368 = vmul.f32 %v2364, %v2356
      %v2369 = vadd.f32 %v2365, 1.4214138
      %v2370 = vadd.f32 %v2366, 1.4214138
      %v2371 = vadd.f32 %v2367, 1.4214138
      %v2372 = vadd.f32 %v2368, 1.4214138
      %v2373 = vmul.f32 %v2369, %v2350
      %v2374 = vmul.f32 %v2370, %v2352
      %v2375 = vmul.f32 %v2371, %v2354
      %v2376 = vmul.f32 %v2372, %v2356
      %v2377 = vadd.f32 %v2373, -0.28449672
      %v2378 = vadd.f32 %v2374, -0.28449672
      %v2379 = vadd.f32 %v2375, -0.28449672
      %v2380 = vadd.f32 %v2376, -0.28449672
      %v2381 = vmul.f32 %v2377, %v2350
      %v2382 = vmul.f32 %v2378, %v2352
      %v2383 = vmul.f32 %v2379, %v2354
      %v2384 = vmul.f32 %v2380, %v2356
      %v2385 = vadd.f32 %v2381, 0.2548296
      %v2386 = vadd.f32 %v2382, 0.2548296
      %v2387 = vadd.f32 %v2383, 0.2548296
      %v2388 = vadd.f32 %v2384, 0.2548296
      %v2389 = vmul.f32 %v2385, %v2350
      %v2390 = vmul.f32 %v2386, %v2352
      %v2391 = vmul.f32 %v2387, %v2354
      %v2392 = vmul.f32 %v2388, %v2356
      %v2393 = vsub.f32 0.0, %v2337
      %v2394 = vsub.f32 0.0, %v2338
      %v2395 = vsub.f32 0.0, %v2339
      %v2396 = vsub.f32 0.0, %v2340
      %v2397 = vmul.f32 %v2393, %v2337
      %v2398 = vmul.f32 %v2394, %v2338
      %v2399 = vmul.f32 %v2395, %v2339
      %v2400 = vmul.f32 %v2396, %v2340
      %v2401 = vmul.f32 %v2397, 1.442695
      %v2402 = vpow.pop %v2401
      %v2403 = vmul.f32 %v2398, 1.442695
      %v2404 = vpow.pop %v2403
      %v2405 = vmul.f32 %v2399, 1.442695
      %v2406 = vpow.pop %v2405
      %v2407 = vmul.f32 %v2400, 1.442695
      %v2408 = vpow.pop %v2407
      %v2409 = vmul.f32 %v2389, %v2402
      %v2410 = vmul.f32 %v2390, %v2404
      %v2411 = vmul.f32 %v2391, %v2406
      %v2412 = vmul.f32 %v2392, %v2408
      %v2413 = vsub.f32 1.0, %v2409
      %v2414 = vsub.f32 1.0, %v2410
      %v2415 = vsub.f32 1.0, %v2411
      %v2416 = vsub.f32 1.0, %v2412
      %v2417 = vmul.f32 %v2333, %v2413
      %v2418 = vmul.f32 %v2334, %v2414
      %v2419 = vmul.f32 %v2335, %v2415
      %v2420 = vmul.f32 %v2336, %v2416
      %v2421 = vadd.f32 %v2417, 1.0
      %v2422 = vadd.f32 %v2418, 1.0
      %v2423 = vadd.f32 %v2419, 1.0
      %v2424 = vadd.f32 %v2420, 1.0
      %v2425 = vmul.f32 %v2321, %v2421
      %v2426 = vmul.f32 %v2322, %v2422
      %v2427 = vmul.f32 %v2323, %v2423
      %v2428 = vmul.f32 %v2324, %v2424
      %v2429 = vpack.c.bf16 %v2426, %v2425
      %v2430 = vpack.c.bf16 %v2428, %v2427
      %v2431 = vld [vmem:[%s13] sm:$0xf]
      %v2432 = vld [vmem:[%s13 + $0x4] sm:$0xf]
      %v2433 = vld [vmem:[%s13 + $0x8] sm:$0xf]
      %v2434 = vld [vmem:[%s13 + $0xc] sm:$0xf]
      %v2435 = vld [vmem:[%s13 + $0x10] sm:$0xf]
      %v2436 = vld [vmem:[%s13 + $0x14] sm:$0xf]
      %v2437 = vld [vmem:[%s13 + $0x18] sm:$0xf]
      %v2438 = vld [vmem:[%s13 + $0x1c] sm:$0xf]
      %v2439 = vld [vmem:[%s13 + $0x20] sm:$0xf]
      %v2440 = vld [vmem:[%s13 + $0x24] sm:$0xf]
      %v2441 = vld [vmem:[%s13 + $0x28] sm:$0xf]
      %v2442 = vld [vmem:[%s13 + $0x2c] sm:$0xf]
      %v2443 = vld [vmem:[%s13 + $0x30] sm:$0xf]
      %v2444 = vld [vmem:[%s13 + $0x34] sm:$0xf]
      %v2445 = vld [vmem:[%s13 + $0x38] sm:$0xf]
      %v2446 = vld [vmem:[%s13 + $0x3c] sm:$0xf]
      %v2447 = vld [vmem:[%s14] sm:$0x1]
      %v2449 = vlaneseq
      %v2450 = vshrl.u32 %v2449, 7
      %v2451 = vsub.s32 0, %v2450
      %v2452 = vrot.slane %v2447, %v2451
      %v2470 = vunpack.c.l.b16 %v2431
      %v2471 = vunpack.c.l.b16 %v2432
      %v2472 = vunpack.c.l.b16 %v2433
      %v2473 = vunpack.c.l.b16 %v2434
      %v2474 = vunpack.c.l.b16 %v2435
      %v2475 = vunpack.c.l.b16 %v2436
      %v2476 = vunpack.c.l.b16 %v2437
      %v2477 = vunpack.c.l.b16 %v2438
      %v2478 = vunpack.c.l.b16 %v2439
      %v2479 = vunpack.c.l.b16 %v2440
      %v2480 = vunpack.c.l.b16 %v2441
      %v2481 = vunpack.c.l.b16 %v2442
      %v2482 = vunpack.c.l.b16 %v2443
      %v2483 = vunpack.c.l.b16 %v2444
      %v2484 = vunpack.c.l.b16 %v2445
      %v2485 = vunpack.c.l.b16 %v2446
      %v2486 = vpack.c.b16 %v2471, %v2470
      %v2487 = vpack.c.b16 %v2473, %v2472
      %v2488 = vpack.c.b16 %v2475, %v2474
      %v2489 = vpack.c.b16 %v2477, %v2476
      %v2490 = vpack.c.b16 %v2479, %v2478
      %v2491 = vpack.c.b16 %v2481, %v2480
      %v2492 = vpack.c.b16 %v2483, %v2482
      %v2493 = vpack.c.b16 %v2485, %v2484
      %2502 = vmatprep.subr.bf16.mxu0 0
      %2503 = vmatpush1.bf16.msra.mxu0 %v2486
      %2504 = vmatprep.subr.bf16.mxu0 0
      %2505 = vmatpush1.bf16.msra.mxu0 %v2487
      %2506 = vmatprep.subr.bf16.mxu0 0
      %2507 = vmatpush1.bf16.msra.mxu0 %v2488
      %2508 = vmatprep.subr.bf16.mxu0 0
      %2509 = vmatpush1.bf16.msra.mxu0 %v2489
      %2510 = vmatprep.subr.bf16.mxu0 0
      %2511 = vmatpush1.bf16.msra.mxu0 %v2490
      %2512 = vmatprep.subr.bf16.mxu0 0
      %2513 = vmatpush1.bf16.msra.mxu0 %v2491
      %2514 = vmatprep.subr.bf16.mxu0 0
      %2515 = vmatpush1.bf16.msra.mxu0 %v2492
      %2516 = vmatprep.subr.bf16.mxu0 0
      %2517 = vmatpush1.bf16.msra.mxu0 %v2493
      %2518 = vmatprep.subr.bf16.mxu0 0
      %2519 = vmatpush1.bf16.msra.mxu0 0
      %2520 = vmatprep.subr.bf16.mxu0 0
      %2521 = vmatpush1.bf16.msra.mxu0 0
      %2522 = vmatprep.subr.bf16.mxu0 0
      %2523 = vmatpush1.bf16.msra.mxu0 0
      %2524 = vmatprep.subr.bf16.mxu0 0
      %2525 = vmatpush1.bf16.msra.mxu0 0
      %2526 = vmatprep.subr.bf16.mxu0 0
      %2527 = vmatpush1.bf16.msra.mxu0 0
      %2528 = vmatprep.subr.bf16.mxu0 0
      %2529 = vmatpush1.bf16.msra.mxu0 0
      %2530 = vmatprep.subr.bf16.mxu0 0
      %2531 = vmatpush1.bf16.msra.mxu0 0
      %2532 = vmatprep.subr.bf16.mxu0 0
      %2533 = vmatpush1.bf16.msra.mxu0 0
      %2534 = vmatprep.mubr.bf16.mxu0 0
      %2535 = vmatmul.mubr.bf16.gmra.mrb[0].mxu0 %v2429
      %v2536 = vpop.f32.mrb[0].mxu0
      %v2537 = vadd.f32 %v2452, %v2536
      %v2538 = vpop.f32.mrb[0].mxu0
      %v2539 = vpop.f32.mrb[0].mxu0
      %v2540 = vadd.f32 %v2452, %v2539
      %v2541 = vpop.f32.mrb[0].mxu0
      %2542 = vmatprep.mubr.bf16.mxu0 0
      %2543 = vmatmul.mubr.bf16.gmra.mrb[0].mxu0 %v2430
      %v2544 = vpop.f32.mrb[0].mxu0
      %v2545 = vadd.f32 %v2452, %v2544
      %v2546 = vpop.f32.mrb[0].mxu0
      %v2547 = vpop.f32.mrb[0].mxu0
      %v2548 = vadd.f32 %v2452, %v2547
      %v2549 = vpop.f32.mrb[0].mxu0
      %2550 = vdwg.mxu0
      %v2551 = vadd.f32 %v2237, %v2537
      %v2552 = vadd.f32 %v2238, %v2540
      %v2553 = vadd.f32 %v2239, %v2545
      %v2554 = vadd.f32 %v2240, %v2548
      %v2555 = vld [vmem:[%s15] sm:$0x1]
      %v2556 = vld [vmem:[%s16] sm:$0x1]
      %v2557 = vsel %vm1240, %v2551, 0.0
      %2558 = vadd.xlane.f32.xlu0 %v2557
      %v2559 = vpop.xlane.xlu0 %2558
      %v2560 = vsel %vm1240, %v2552, 0.0
      %2561 = vadd.xlane.f32.xlu0 %v2560
      %v2562 = vpop.xlane.xlu0 %2561
      %v2563 = vsel %vm1240, %v2553, 0.0
      %2564 = vadd.xlane.f32.xlu0 %v2563
      %v2565 = vpop.xlane.xlu0 %2564
      %v2566 = vsel %vm1240, %v2554, 0.0
      %2567 = vadd.xlane.f32.xlu0 %v2566
      %v2568 = vpop.xlane.xlu0 %2567
      %v2569 = vmul.f32 %v2559, %v2180
      %v2570 = vmul.f32 %v2562, %v2180
      %v2571 = vmul.f32 %v2565, %v2180
      %v2572 = vmul.f32 %v2568, %v2180
      %v2573 = vsub.f32 %v2551, %v2569
      %v2574 = vsub.f32 %v2552, %v2570
      %v2575 = vsub.f32 %v2553, %v2571
      %v2576 = vsub.f32 %v2554, %v2572
      %v2577 = vmul.f32 %v2573, %v2573
      %v2578 = vmul.f32 %v2574, %v2574
      %v2579 = vmul.f32 %v2575, %v2575
      %v2580 = vmul.f32 %v2576, %v2576
      %v2581 = vsel %vm1240, %v2577, 0.0
      %2582 = vadd.xlane.f32.xlu0 %v2581
      %v2583 = vpop.xlane.xlu0 %2582
      %v2584 = vsel %vm1240, %v2578, 0.0
      %2585 = vadd.xlane.f32.xlu0 %v2584
      %v2586 = vpop.xlane.xlu0 %2585
      %v2587 = vsel %vm1240, %v2579, 0.0
      %2588 = vadd.xlane.f32.xlu0 %v2587
      %v2589 = vpop.xlane.xlu0 %2588
      %v2590 = vsel %vm1240, %v2580, 0.0
      %2591 = vadd.xlane.f32.xlu0 %v2590
      %v2592 = vpop.xlane.xlu0 %2591
      %v2593 = vmul.f32 %v2583, %v2180
      %v2594 = vmul.f32 %v2586, %v2180
      %v2595 = vmul.f32 %v2589, %v2180
      %v2596 = vmul.f32 %v2592, %v2180
      %v2597 = vadd.f32 %v2593, 1e-05
      %v2598 = vadd.f32 %v2594, 1e-05
      %v2599 = vadd.f32 %v2595, 1e-05
      %v2600 = vadd.f32 %v2596, 1e-05
      %v2601 = vrsqrt.pop %v2597
      %v2602 = vrsqrt.pop %v2598
      %v2603 = vrsqrt.pop %v2599
      %v2604 = vrsqrt.pop %v2600
      %v2605 = vmul.f32 %v2573, %v2601
      %v2606 = vmul.f32 %v2574, %v2602
      %v2607 = vmul.f32 %v2575, %v2603
      %v2608 = vmul.f32 %v2576, %v2604
      %v2610 = vlaneseq
      %v2611 = vshrl.u32 %v2610, 7
      %v2612 = vsub.s32 0, %v2611
      %v2613 = vrot.slane %v2555, %v2612
      %v2615 = vmul.f32 %v2605, %v2613
      %v2616 = vmul.f32 %v2606, %v2613
      %v2617 = vmul.f32 %v2607, %v2613
      %v2618 = vmul.f32 %v2608, %v2613
      %v2620 = vlaneseq
      %v2621 = vshrl.u32 %v2620, 7
      %v2622 = vsub.s32 0, %v2621
      %v2623 = vrot.slane %v2556, %v2622
      %v2625 = vadd.f32 %v2615, %v2623
      %v2626 = vadd.f32 %v2616, %v2623
      %v2627 = vadd.f32 %v2617, %v2623
      %v2628 = vadd.f32 %v2618, %v2623
      %2629 = vst.msk [vmem:[%s570] sm:$0xff] %vm1240, %v2625
      %2630 = vst.msk [vmem:[%s570 + $0x8] sm:$0xff] %vm1240, %v2626
      %2631 = vst.msk [vmem:[%s570 + $0x10] sm:$0xff] %vm1240, %v2627
      %2632 = vst.msk [vmem:[%s570 + $0x18] sm:$0xff] %vm1240, %v2628
      %s2633 = smul.u32 4, %s33
      %p2634 = scmp.lt.s32.totalorder %s32, 1
      %s2635 = scalar_select %p2634, %s32, 1
      %p2636 = scmp.lt.s32.totalorder %s2633, 7
      %s2637 = scalar_select %p2636, %s2633, 7
      %s2638 = smul.addr %s2635, 8
      %s2639 = sadd.s32 %s2637, %s2638
      %s2640 = smul.addr %s2639, 8
      %s2641 = scalar_lea.vmem %s17, %s2640
      // Predicated region
      $region93: #{tpu_custom_call.1} parent=87 // pred_check
        %p2642 = pneg %p422
      $region94: #{tpu_custom_call.1} parent=87 // pred_check_branch
        %2644 = sbr.rel (%p2642) target = $region96
      $region95: #{tpu_custom_call.1} parent=87 // pred_region
        %s2645 = smul.u32 4, %s33
      $region96: #{tpu_custom_call.1} parent=87 // pred_fallthru
        _
    $region88: #{tpu_custom_call.1} parent=5 // pred_fallthru
      _
    %p2646 = scmp.le.s32.totalorder 2, %s23
    // Predicated region
    $region97: #{tpu_custom_call.1} parent=5 // pred_check
      %p2647 = pneg %p2646
    $region98: #{tpu_custom_call.1} parent=5 // pred_check_branch
      %2649 = sbr.rel (%p2647) target = $region100
    $region99: #{tpu_custom_call.1} parent=5 // pred_region
      %s2650 = ssub.s32 %s23, 2
      // Predicated region
      $region101: #{tpu_custom_call.1} parent=99 // pred_check
        %p2651 = pneg %p428
      $region102: #{tpu_custom_call.1} parent=99 // pred_check_branch
        %2653 = sbr.rel (%p2651) target = $region104
      $region103: #{tpu_custom_call.1} parent=99 // pred_region
        %s2654 = smul.u32 4, %s35
        %p2655 = scmp.lt.s32.totalorder %s34, 1
        %s2656 = scalar_select %p2655, %s34, 1
        %p2657 = scmp.lt.s32.totalorder %s2654, 7
        %s2658 = scalar_select %p2657, %s2654, 7
        %s2659 = smul.addr %s2656, 8
        %s2660 = sadd.s32 %s2658, %s2659
        %s2661 = smul.addr %s2660, 8
        %s2662 = scalar_lea.vmem %s17, %s2661
      $region104: #{tpu_custom_call.1} parent=99 // pred_fallthru
        _
    $region100: #{tpu_custom_call.1} parent=5 // pred_fallthru
      _
  $region6: #{tpu_custom_call.1} parent=0 // loop_footer
    %s27 = sadd.s32 1, %s23
  $region7: #{tpu_custom_call.1} parent=0 // loop_footer_branch
    %22 = sbr.rel target = $region3
  $region8: #{tpu_custom_call.1} parent=0 // loop_exit
    _

</llo_original>
